<compile_context>
chip_gen: v5e
topology: v5e:2x2
jax: 0.10.0
libtpu: 0.0.40
codegen_flags: <defaults>
</compile_context>

<pallas_src>
import math
import functools

import jax
import jax.numpy as jnp
from jax import lax
from jax.experimental import pallas as pl
from jax.experimental.pallas import tpu as pltpu

_SQRT2 = math.sqrt(2.0)
_HP = jax.lax.Precision.HIGHEST   # only used by the pure-JAX reference


# ----------------------------------------------------------------------------------
# Polyphase helpers
# ----------------------------------------------------------------------------------
def _phase_taps(pd, ph, pw):
    """Taps for final-output parity (pd, ph, pw) of the k=3 s=2 p=1 ConvTranspose.

    Returns a list of (ad, ah, aw, tap) where ad/ah/aw in {0,1} pick the xq slab
    at offset j/j+1 (xq is the input front-padded by one zero voxel per dim) and
    `tap` indexes the flattened 3x3x3 transposed-conv weight (kd*9 + kh*3 + kw).
    Per dim:  parity 1 (odd final index)  -> center tap on xq[j+1]
              parity 0 (even final index) -> xq[j]*w[2] + xq[j+1]*w[0]
    """
    per_dim = lambda p: [(1, 1)] if p == 1 else [(0, 2), (1, 0)]
    taps = []
    for ad, kd in per_dim(pd):
        for ah, kh in per_dim(ph):
            for aw, kw in per_dim(pw):
                taps.append((ad, ah, aw, kd * 9 + kh * 3 + kw))
    return taps


def _keep_mask(ph, pw, shape):
    """Boolean mask (True = keep) zeroing the F.pad border row/col, or None."""
    keep = None
    if ph == 0:                                   # final h index 2k+0 == 0 at k == 0
        keep = lax.broadcasted_iota(jnp.int32, shape, 0) > 0
    if pw == 0:                                   # final w index 2l+0 == 0 at l == 0
        m = lax.broadcasted_iota(jnp.int32, shape, 1) > 0
        keep = m if keep is None else jnp.logical_and(keep, m)
    return keep


# ----------------------------------------------------------------------------------
# Kernel 1 (pass 1): per-(n, c) sum / sum-of-squares of the conv1 output
# ----------------------------------------------------------------------------------
def _stats_kernel(xlo_ref, xhi_ref, wt_ref, sum_ref, sq_ref, *, H, W, C):
    j = pl.program_id(1)

    @pl.when(j == 0)
    def _():
        sum_ref[...] = jnp.zeros_like(sum_ref)
        sq_ref[...] = jnp.zeros_like(sq_ref)

    xlo = xlo_ref[0, 0]                           # (H+1, W+1, C)  = xq[n, j]
    xhi = xhi_ref[0, 0]                           # (H+1, W+1, C)  = xq[n, j+1]
    xsel = (xlo, xhi)

    s1 = jnp.zeros((1, 1, C), jnp.float32)
    s2 = jnp.zeros((1, 1, C), jnp.float32)
    for pd in (0, 1):
        t1 = jnp.zeros((1, 1, C), jnp.float32)
        t2 = jnp.zeros((1, 1, C), jnp.float32)
        for ph in (0, 1):
            for pw in (0, 1):
                z = jnp.zeros((H, W, C), jnp.float32)
                for ad, ah, aw, tap in _phase_taps(pd, ph, pw):
                    z = z + xsel[ad][ah:ah + H, aw:aw + W, :] * wt_ref[tap, :]
                keep = _keep_mask(ph, pw, (H, W, C))
                if keep is not None:              # exclude F.pad border positions
                    z = jnp.where(keep, z, 0.0)
                t1 = t1 + jnp.sum(z, axis=(0, 1), keepdims=True)
                t2 = t2 + jnp.sum(z * z, axis=(0, 1), keepdims=True)
        if pd == 0:                               # pd==0 slab at j==0 is the pad border
            dmask = (j > 0).astype(jnp.float32)
            t1 = t1 * dmask
            t2 = t2 * dmask
        s1 = s1 + t1
        s2 = s2 + t2

    sum_ref[...] = sum_ref[...] + s1
    sq_ref[...] = sq_ref[...] + s2


def conv1_stats(xq, wt, *, N, D, H, W, C):
    kern = functools.partial(_stats_kernel, H=H, W=W, C=C)
    xspec_lo = pl.BlockSpec((1, 1, H + 1, W + 1, C), lambda n, j: (n, j, 0, 0, 0))
    xspec_hi = pl.BlockSpec((1, 1, H + 1, W + 1, C), lambda n, j: (n, j + 1, 0, 0, 0))
    sspec = pl.BlockSpec((1, 1, C), lambda n, j: (n, 0, 0))
    return pl.pallas_call(
        kern,
        out_shape=(jax.ShapeDtypeStruct((N, 1, C), jnp.float32),
                   jax.ShapeDtypeStruct((N, 1, C), jnp.float32)),
        grid=(N, D),
        in_specs=[xspec_lo, xspec_hi,
                  pl.BlockSpec((27, C), lambda n, j: (0, 0))],
        out_specs=(sspec, sspec),
        compiler_params=pltpu.CompilerParams(
            dimension_semantics=("parallel", "arbitrary"),
            vmem_limit_bytes=64 * 1024 * 1024),
    )(xq, xq, wt)


# ----------------------------------------------------------------------------------
# Kernel 2 (pass 2): polyphase conv1 + GroupNorm + conv2 + GELU + conv3 + res_conv
# ----------------------------------------------------------------------------------
def _fused_kernel(xlo_ref, xhi_ref, wt_ref, mu_ref, rs_ref,
                  w2_ref, b2_ref, w3_ref, b3_ref, wr_ref, o_ref,
                  *, H, W, C, Cout):
    j = pl.program_id(1)
    xlo = xlo_ref[0, 0]                           # (H+1, W+1, C)  = xq[n, j]
    xhi = xhi_ref[0, 0]                           # (H+1, W+1, C)  = xq[n, j+1]
    xsel = (xlo, xhi)
    mu = mu_ref[0]                                # (1, C)
    rs = rs_ref[0]                                # (1, C)

    for pd in (0, 1):
        for ph in (0, 1):
            for pw in (0, 1):
                p = 4 * pd + 2 * ph + pw
                # depthwise transposed conv, polyphase: <= 8 taps for this parity
                z = jnp.zeros((H, W, C), jnp.float32)
                for ad, ah, aw, tap in _phase_taps(pd, ph, pw):
                    z = z + xsel[ad][ah:ah + H, aw:aw + W, :] * wt_ref[tap, :]
                # GroupNorm(num_groups=C) normalize; affine already folded into w2/b2
                z = (z - mu) * rs
                zr = z.reshape(H * W, C)
                # conv2 -> exact GELU -> conv3 on the MXU (default precision, f32 acc)
                h = jnp.dot(zr, w2_ref[...], preferred_element_type=jnp.float32) + b2_ref[...]
                h = 0.5 * h * (1.0 + lax.erf(h / _SQRT2))
                y = jnp.dot(h, w3_ref[...], preferred_element_type=jnp.float32) + b3_ref[...]
                if (pd, ph, pw) == (1, 1, 1):
                    # res_conv (ConvTranspose 1x1x1 stride 2) lands on the all-odd parity
                    xc = xhi[1:1 + H, 1:1 + W, :].reshape(H * W, C)
                    y = y + jnp.dot(xc, wr_ref[...], preferred_element_type=jnp.float32)
                y = y.reshape(H, W, Cout)
                # zero the F.pad border (final index 0 along each spatial dim)
                keep = _keep_mask(ph, pw, (H, W, Cout))
                if keep is not None:
                    y = jnp.where(keep, y, 0.0)
                if pd == 0:
                    y = jnp.where(j > 0, y, 0.0)
                o_ref[0, 0, p, :, :, :] = y.astype(o_ref.dtype)


def fused_forward(xq, wt, mean, rstd, w2g, b2g, w3m, b3p, wrm,
                  *, N, D, H, W, C, E, Cout):
    kern = functools.partial(_fused_kernel, H=H, W=W, C=C, Cout=Cout)
    xspec_lo = pl.BlockSpec((1, 1, H + 1, W + 1, C), lambda n, j: (n, j, 0, 0, 0))
    xspec_hi = pl.BlockSpec((1, 1, H + 1, W + 1, C), lambda n, j: (n, j + 1, 0, 0, 0))
    stat_spec = pl.BlockSpec((1, 1, C), lambda n, j: (n, 0, 0))
    return pl.pallas_call(
        kern,
        out_shape=jax.ShapeDtypeStruct((N, D, 8, H, W, Cout), jnp.float32),
        grid=(N, D),
        in_specs=[
            xspec_lo, xspec_hi,
            pl.BlockSpec((27, C), lambda n, j: (0, 0)),
            stat_spec, stat_spec,
            pl.BlockSpec((C, E), lambda n, j: (0, 0)),
            pl.BlockSpec((1, E), lambda n, j: (0, 0)),
            pl.BlockSpec((E, Cout), lambda n, j: (0, 0)),
            pl.BlockSpec((1, Cout), lambda n, j: (0, 0)),
            pl.BlockSpec((C, Cout), lambda n, j: (0, 0)),
        ],
        out_specs=pl.BlockSpec((1, 1, 8, H, W, Cout),
                               lambda n, j: (n, j, 0, 0, 0, 0)),
        compiler_params=pltpu.CompilerParams(
            dimension_semantics=("parallel", "parallel"),
            vmem_limit_bytes=64 * 1024 * 1024),
    )(xq, xq, wt, mean, rstd, w2g, b2g, w3m, b3p, wrm)


# ----------------------------------------------------------------------------------
# Full forward (wrapper): NCDHW in, NCDHW out
# ----------------------------------------------------------------------------------
def mednext_up_block_forward(x_ncdhw, p):
    N, C, D, H, W = x_ncdhw.shape
    E = p['w2'].shape[0]
    Cout = p['w3'].shape[0]

    x = jnp.transpose(x_ncdhw, (0, 2, 3, 4, 1)).astype(jnp.float32)     # NDHWC
    # 1-voxel zero pad at the FRONT of each spatial dim: xq[:, a, b, c] = x[:, a-1, b-1, c-1]
    xq = jnp.pad(x, ((0, 0), (1, 0), (1, 0), (1, 0), (0, 0)))

    # depthwise ConvTranspose taps, flattened to (27, C).  conv1 bias cancels exactly
    # in the following per-channel GroupNorm, so it never enters the kernels.
    wt = p['w1'][:, 0].reshape(C, 27).T

    # ---- pass 1: per-(n, c) sum / sum-of-squares of the transposed-conv output ----
    sums, sqs = conv1_stats(xq, wt, N=N, D=D, H=H, W=W, C=C)
    cnt = float((2 * D - 1) * (2 * H - 1) * (2 * W - 1))
    mean = sums / cnt                                                   # (N, 1, C)
    var = jnp.maximum(sqs / cnt - mean * mean, 0.0)
    rstd = lax.rsqrt(var + 1e-5)

    # ---- fold GroupNorm affine into conv2; fold res_conv bias into conv3 bias -----
    w2m = p['w2'].reshape(E, C).T                                       # (C, E)
    w2g = w2m * p['gamma'][:, None]
    b2g = (p['b2'] + p['beta'] @ w2m)[None, :]                          # (1, E)
    w3m = p['w3'].reshape(Cout, E).T                                    # (E, Cout)
    b3p = (p['b3'] + p['br'])[None, :]                                  # (1, Cout)
    wrm = p['wr'].reshape(C, Cout)                                      # (C, Cout)

    # ---- pass 2: fused polyphase conv1 + GN + conv2 + GELU + conv3 + residual -----
    out_poly = fused_forward(xq, wt, mean, rstd, w2g, b2g, w3m, b3p, wrm,
                             N=N, D=D, H=H, W=W, C=C, E=E, Cout=Cout)

    # interleave the 8 parities: (N, D, 2,2,2, H, W, Cout) -> (N, Cout, 2D, 2H, 2W)
    out = out_poly.reshape(N, D, 2, 2, 2, H, W, Cout)
    out = jnp.transpose(out, (0, 7, 1, 2, 5, 3, 6, 4))
    return out.reshape(N, Cout, 2 * D, 2 * H, 2 * W)


# ----------------------------------------------------------------------------------
# Deterministic parameter init (shapes follow the torch module's __init__)
# ----------------------------------------------------------------------------------
def init_params(key, C, Cout, exp_r):
    E = exp_r * C
    ks = jax.random.split(key, 10)
    s = 0.1
    return dict(
        w1=jax.random.normal(ks[0], (C, 1, 3, 3, 3), jnp.float32) * s,     # conv1 (depthwise ConvT)
        b1=jax.random.normal(ks[1], (C,), jnp.float32) * s,
        gamma=1.0 + jax.random.normal(ks[2], (C,), jnp.float32) * s,       # GroupNorm affine
        beta=jax.random.normal(ks[3], (C,), jnp.float32) * s,
        w2=jax.random.normal(ks[4], (E, C, 1, 1, 1), jnp.float32) * s,     # conv2 1x1x1
        b2=jax.random.normal(ks[5], (E,), jnp.float32) * s,
        w3=jax.random.normal(ks[6], (Cout, E, 1, 1, 1), jnp.float32) * s,  # conv3 1x1x1
        b3=jax.random.normal(ks[7], (Cout,), jnp.float32) * s,
        wr=jax.random.normal(ks[8], (C, Cout, 1, 1, 1), jnp.float32) * s,  # res_conv (ConvT k=1 s=2)
        br=jax.random.normal(ks[9], (Cout,), jnp.float32) * s,
    )


# ----------------------------------------------------------------------------------
# Pure-JAX reference (mirrors the PyTorch forward) for the correctness check
# ----------------------------------------------------------------------------------
def reference_forward(x, p):
    N, C, D, H, W = x.shape
    E = p['w2'].shape[0]
    Cout = p['w3'].shape[0]
    y = lax.conv_general_dilated(
        x, jnp.flip(p['w1'], (2, 3, 4)), window_strides=(1, 1, 1),
        padding=[(1, 1)] * 3, lhs_dilation=(2, 2, 2),
        dimension_numbers=('NCDHW', 'OIDHW', 'NCDHW'),
        feature_group_count=C, precision=_HP)
    y = y + p['b1'][None, :, None, None, None]
    mean = jnp.mean(y, axis=(2, 3, 4), keepdims=True)
    var = jnp.mean((y - mean) ** 2, axis=(2, 3, 4), keepdims=True)
    y = (y - mean) * lax.rsqrt(var + 1e-5)
    y = y * p['gamma'][None, :, None, None, None] + p['beta'][None, :, None, None, None]
    h = jnp.einsum('ncdhw,ec->nedhw', y, p['w2'].reshape(E, C), precision=_HP)
    h = h + p['b2'][None, :, None, None, None]
    h = 0.5 * h * (1.0 + lax.erf(h / _SQRT2))
    x1 = jnp.einsum('nedhw,oe->nodhw', h, p['w3'].reshape(Cout, E), precision=_HP)
    x1 = x1 + p['b3'][None, :, None, None, None]
    x1 = jnp.pad(x1, ((0, 0), (0, 0), (1, 0), (1, 0), (1, 0)))
    Do, Ho, Wo = 2 * D - 1, 2 * H - 1, 2 * W - 1
    res = jnp.zeros((N, Cout, Do, Ho, Wo), jnp.float32) + p['br'][None, :, None, None, None]
    res = res.at[:, :, ::2, ::2, ::2].add(
        jnp.einsum('ncdhw,co->nodhw', x, p['wr'].reshape(C, Cout), precision=_HP))
    res = jnp.pad(res, ((0, 0), (0, 0), (1, 0), (1, 0), (1, 0)))
    return x1 + res


if __name__ == "__main__":
    key = jax.random.PRNGKey(0)
    N, C, D, H, W = 2, 8, 8, 8, 8
    exp_r, Cout = 2, 4
    kp, kx = jax.random.split(key)
    params = init_params(kp, C, Cout, exp_r)
    x = jax.random.normal(kx, (N, C, D, H, W), jnp.float32)

    out = jax.block_until_ready(jax.jit(mednext_up_block_forward)(x, params))
    assert out.shape == (N, Cout, 2 * D, 2 * H, 2 * W), out.shape

    ref = reference_forward(x, params)
    # Kernel matmuls run at default MXU precision (bf16 multiplies, f32 accumulation),
    # while the reference uses full-f32 precision, hence the looser tolerance.
    if not bool(jnp.allclose(out, ref, atol=3e-2, rtol=3e-2)):
        max_err = float(jnp.max(jnp.abs(out - ref)))
        raise AssertionError(f"Pallas result mismatch vs reference, max abs err = {max_err}")
    print("KERNEL_OK")
</pallas_src>

<mosaic_0001>
module attributes {stable_mosaic.version = 11 : i64} {
  func.func @_stats_kernel(%arg0: i32, %arg1: i32, %arg2: memref<1x1x9x9x8xf32, #tpu.memory_space<vmem>>, %arg3: memref<1x1x9x9x8xf32, #tpu.memory_space<vmem>>, %arg4: memref<27x8xf32, #tpu.memory_space<vmem>>, %arg5: memref<1x1x8xf32, #tpu.memory_space<vmem>>, %arg6: memref<1x1x8xf32, #tpu.memory_space<vmem>>) attributes {dimension_semantics = [#tpu.dimension_semantics<parallel>, #tpu.dimension_semantics<arbitrary>], iteration_bounds = array<i64: 2, 8>, scalar_prefetch = 0 : i64, scratch_operands = 0 : i64, tpu.core_type = #tpu.core_type<tc>, window_params = [{transform_indices = @transform_0, window_bounds = array<i64: 1, 1, 9, 9, 8>}, {transform_indices = @transform_1, window_bounds = array<i64: 1, 1, 9, 9, 8>}, {pipeline_mode = #tpu.pipeline_mode<synchronous>, transform_indices = @transform_2, window_bounds = array<i64: 27, 8>}, {transform_indices = @transform_3, window_bounds = array<i64: 1, 1, 8>}, {transform_indices = @transform_4, window_bounds = array<i64: 1, 1, 8>}]} {
    %c0_i32 = arith.constant 0 : i32
    %0 = arith.cmpi eq, %arg1, %c0_i32 : i32
    %1 = arith.extui %0 : i1 to i32
    %c0_i32_0 = arith.constant 0 : i32
    %2 = arith.cmpi ne, %1, %c0_i32_0 : i32
    scf.if %2 {
      %cst_94 = arith.constant 0.000000e+00 : f32
      %321 = vector.broadcast %cst_94 : f32 to vector<1x1x8xf32>
      %c0_95 = arith.constant 0 : index
      %c0_96 = arith.constant 0 : index
      %c0_97 = arith.constant 0 : index
      %322 = vector.load %arg5[%c0_95, %c0_96, %c0_97] : memref<1x1x8xf32, #tpu.memory_space<vmem>>, vector<1x1x8xf32>
      tpu.vector_store %arg5[%c0_95, %c0_96, %c0_97], %321 {strides = array<i32>} : memref<1x1x8xf32, #tpu.memory_space<vmem>>, vector<1x1x8xf32>,
      %cst_98 = arith.constant 0.000000e+00 : f32
      %323 = vector.broadcast %cst_98 : f32 to vector<1x1x8xf32>
      %c0_99 = arith.constant 0 : index
      %c0_100 = arith.constant 0 : index
      %c0_101 = arith.constant 0 : index
      %324 = vector.load %arg6[%c0_99, %c0_100, %c0_101] : memref<1x1x8xf32, #tpu.memory_space<vmem>>, vector<1x1x8xf32>
      tpu.vector_store %arg6[%c0_99, %c0_100, %c0_101], %323 {strides = array<i32>} : memref<1x1x8xf32, #tpu.memory_space<vmem>>, vector<1x1x8xf32>,
    } else {
    }
    %c0 = arith.constant 0 : index
    %c0_1 = arith.constant 0 : index
    %c0_2 = arith.constant 0 : index
    %c0_3 = arith.constant 0 : index
    %c0_4 = arith.constant 0 : index
    %3 = vector.load %arg2[%c0, %c0_1, %c0_2, %c0_3, %c0_4] : memref<1x1x9x9x8xf32, #tpu.memory_space<vmem>>, vector<1x1x9x9x8xf32>
    %4 = vector.shape_cast %3 : vector<1x1x9x9x8xf32> to vector<9x9x8xf32>
    %c0_5 = arith.constant 0 : index
    %c0_6 = arith.constant 0 : index
    %c0_7 = arith.constant 0 : index
    %c0_8 = arith.constant 0 : index
    %c0_9 = arith.constant 0 : index
    %5 = vector.load %arg3[%c0_5, %c0_6, %c0_7, %c0_8, %c0_9] : memref<1x1x9x9x8xf32, #tpu.memory_space<vmem>>, vector<1x1x9x9x8xf32>
    %6 = vector.shape_cast %5 : vector<1x1x9x9x8xf32> to vector<9x9x8xf32>
    %cst = arith.constant 0.000000e+00 : f32
    %7 = vector.broadcast %cst : f32 to vector<1x1x8xf32>
    %cst_10 = arith.constant 0.000000e+00 : f32
    %8 = vector.broadcast %cst_10 : f32 to vector<1x1x8xf32>
    %cst_11 = arith.constant 0.000000e+00 : f32
    %9 = vector.broadcast %cst_11 : f32 to vector<1x1x8xf32>
    %cst_12 = arith.constant 0.000000e+00 : f32
    %10 = vector.broadcast %cst_12 : f32 to vector<1x1x8xf32>
    %cst_13 = arith.constant 0.000000e+00 : f32
    %11 = vector.broadcast %cst_13 : f32 to vector<8x8x8xf32>
    %12 = vector.extract_strided_slice %4 {offsets = [0, 0, 0], sizes = [8, 8, 8], strides = [1, 1, 1]} : vector<9x9x8xf32> to vector<8x8x8xf32>
    %c26 = arith.constant 26 : index
    %c0_14 = arith.constant 0 : index
    %13 = vector.load %arg4[%c26, %c0_14] : memref<27x8xf32, #tpu.memory_space<vmem>>, vector<1x8xf32>
    %14 = vector.shape_cast %13 : vector<1x8xf32> to vector<8xf32>
    %15 = vector.shape_cast %14 : vector<8xf32> to vector<1x1x8xf32>
    %16 = vector.broadcast %15 : vector<1x1x8xf32> to vector<8x8x8xf32>
    %17 = arith.mulf %12, %16 : vector<8x8x8xf32>
    %18 = arith.addf %11, %17 : vector<8x8x8xf32>
    %19 = vector.extract_strided_slice %4 {offsets = [0, 1, 0], sizes = [8, 8, 8], strides = [1, 1, 1]} : vector<9x9x8xf32> to vector<8x8x8xf32>
    %c24 = arith.constant 24 : index
    %c0_15 = arith.constant 0 : index
    %20 = vector.load %arg4[%c24, %c0_15] : memref<27x8xf32, #tpu.memory_space<vmem>>, vector<1x8xf32>
    %21 = vector.shape_cast %20 : vector<1x8xf32> to vector<8xf32>
    %22 = vector.shape_cast %21 : vector<8xf32> to vector<1x1x8xf32>
    %23 = vector.broadcast %22 : vector<1x1x8xf32> to vector<8x8x8xf32>
    %24 = arith.mulf %19, %23 : vector<8x8x8xf32>
    %25 = arith.addf %18, %24 : vector<8x8x8xf32>
    %26 = vector.extract_strided_slice %4 {offsets = [1, 0, 0], sizes = [8, 8, 8], strides = [1, 1, 1]} : vector<9x9x8xf32> to vector<8x8x8xf32>
    %c20 = arith.constant 20 : index
    %c0_16 = arith.constant 0 : index
    %27 = vector.load %arg4[%c20, %c0_16] : memref<27x8xf32, #tpu.memory_space<vmem>>, vector<1x8xf32>
    %28 = vector.shape_cast %27 : vector<1x8xf32> to vector<8xf32>
    %29 = vector.shape_cast %28 : vector<8xf32> to vector<1x1x8xf32>
    %30 = vector.broadcast %29 : vector<1x1x8xf32> to vector<8x8x8xf32>
    %31 = arith.mulf %26, %30 : vector<8x8x8xf32>
    %32 = arith.addf %25, %31 : vector<8x8x8xf32>
    %33 = vector.extract_strided_slice %4 {offsets = [1, 1, 0], sizes = [8, 8, 8], strides = [1, 1, 1]} : vector<9x9x8xf32> to vector<8x8x8xf32>
    %c18 = arith.constant 18 : index
    %c0_17 = arith.constant 0 : index
    %34 = vector.load %arg4[%c18, %c0_17] : memref<27x8xf32, #tpu.memory_space<vmem>>, vector<1x8xf32>
    %35 = vector.shape_cast %34 : vector<1x8xf32> to vector<8xf32>
    %36 = vector.shape_cast %35 : vector<8xf32> to vector<1x1x8xf32>
    %37 = vector.broadcast %36 : vector<1x1x8xf32> to vector<8x8x8xf32>
    %38 = arith.mulf %33, %37 : vector<8x8x8xf32>
    %39 = arith.addf %32, %38 : vector<8x8x8xf32>
    %40 = vector.extract_strided_slice %6 {offsets = [0, 0, 0], sizes = [8, 8, 8], strides = [1, 1, 1]} : vector<9x9x8xf32> to vector<8x8x8xf32>
    %c8 = arith.constant 8 : index
    %c0_18 = arith.constant 0 : index
    %41 = vector.load %arg4[%c8, %c0_18] : memref<27x8xf32, #tpu.memory_space<vmem>>, vector<1x8xf32>
    %42 = vector.shape_cast %41 : vector<1x8xf32> to vector<8xf32>
    %43 = vector.shape_cast %42 : vector<8xf32> to vector<1x1x8xf32>
    %44 = vector.broadcast %43 : vector<1x1x8xf32> to vector<8x8x8xf32>
    %45 = arith.mulf %40, %44 : vector<8x8x8xf32>
    %46 = arith.addf %39, %45 : vector<8x8x8xf32>
    %47 = vector.extract_strided_slice %6 {offsets = [0, 1, 0], sizes = [8, 8, 8], strides = [1, 1, 1]} : vector<9x9x8xf32> to vector<8x8x8xf32>
    %c6 = arith.constant 6 : index
    %c0_19 = arith.constant 0 : index
    %48 = vector.load %arg4[%c6, %c0_19] : memref<27x8xf32, #tpu.memory_space<vmem>>, vector<1x8xf32>
    %49 = vector.shape_cast %48 : vector<1x8xf32> to vector<8xf32>
    %50 = vector.shape_cast %49 : vector<8xf32> to vector<1x1x8xf32>
    %51 = vector.broadcast %50 : vector<1x1x8xf32> to vector<8x8x8xf32>
    %52 = arith.mulf %47, %51 : vector<8x8x8xf32>
    %53 = arith.addf %46, %52 : vector<8x8x8xf32>
    %54 = vector.extract_strided_slice %6 {offsets = [1, 0, 0], sizes = [8, 8, 8], strides = [1, 1, 1]} : vector<9x9x8xf32> to vector<8x8x8xf32>
    %c2 = arith.constant 2 : index
    %c0_20 = arith.constant 0 : index
    %55 = vector.load %arg4[%c2, %c0_20] : memref<27x8xf32, #tpu.memory_space<vmem>>, vector<1x8xf32>
    %56 = vector.shape_cast %55 : vector<1x8xf32> to vector<8xf32>
    %57 = vector.shape_cast %56 : vector<8xf32> to vector<1x1x8xf32>
    %58 = vector.broadcast %57 : vector<1x1x8xf32> to vector<8x8x8xf32>
    %59 = arith.mulf %54, %58 : vector<8x8x8xf32>
    %60 = arith.addf %53, %59 : vector<8x8x8xf32>
    %61 = vector.extract_strided_slice %6 {offsets = [1, 1, 0], sizes = [8, 8, 8], strides = [1, 1, 1]} : vector<9x9x8xf32> to vector<8x8x8xf32>
    %c0_21 = arith.constant 0 : index
    %c0_22 = arith.constant 0 : index
    %62 = vector.load %arg4[%c0_21, %c0_22] : memref<27x8xf32, #tpu.memory_space<vmem>>, vector<1x8xf32>
    %63 = vector.shape_cast %62 : vector<1x8xf32> to vector<8xf32>
    %64 = vector.shape_cast %63 : vector<8xf32> to vector<1x1x8xf32>
    %65 = vector.broadcast %64 : vector<1x1x8xf32> to vector<8x8x8xf32>
    %66 = arith.mulf %61, %65 : vector<8x8x8xf32>
    %67 = arith.addf %60, %66 : vector<8x8x8xf32>
    %68 = tpu.iota {dimensions = array<i32: 0>} : vector<8x8x8xi32>
    %c0_i32_23 = arith.constant 0 : i32
    %69 = vector.broadcast %c0_i32_23 : i32 to vector<8x8x8xi32>
    %70 = arith.cmpi sgt, %68, %69 : vector<8x8x8xi32>
    %71 = tpu.iota {dimensions = array<i32: 1>} : vector<8x8x8xi32>
    %c0_i32_24 = arith.constant 0 : i32
    %72 = vector.broadcast %c0_i32_24 : i32 to vector<8x8x8xi32>
    %73 = arith.cmpi sgt, %71, %72 : vector<8x8x8xi32>
    %74 = arith.andi %70, %73 : vector<8x8x8xi1>
    %cst_25 = arith.constant 0.000000e+00 : f32
    %75 = vector.broadcast %cst_25 : f32 to vector<8x8x8xf32>
    %76 = arith.select %74, %67, %75 : vector<8x8x8xi1>, vector<8x8x8xf32>
    %cst_26 = arith.constant dense<0.000000e+00> : vector<8xf32>
    %77 = vector.multi_reduction <add>, %76, %cst_26 [0, 1] : vector<8x8x8xf32> to vector<8xf32>
    %78 = vector.shape_cast %77 : vector<8xf32> to vector<1x1x8xf32>
    %79 = arith.addf %9, %78 : vector<1x1x8xf32>
    %80 = arith.mulf %76, %76 : vector<8x8x8xf32>
    %cst_27 = arith.constant dense<0.000000e+00> : vector<8xf32>
    %81 = vector.multi_reduction <add>, %80, %cst_27 [0, 1] : vector<8x8x8xf32> to vector<8xf32>
    %82 = vector.shape_cast %81 : vector<8xf32> to vector<1x1x8xf32>
    %83 = arith.addf %10, %82 : vector<1x1x8xf32>
    %cst_28 = arith.constant 0.000000e+00 : f32
    %84 = vector.broadcast %cst_28 : f32 to vector<8x8x8xf32>
    %85 = vector.extract_strided_slice %4 {offsets = [0, 1, 0], sizes = [8, 8, 8], strides = [1, 1, 1]} : vector<9x9x8xf32> to vector<8x8x8xf32>
    %c25 = arith.constant 25 : index
    %c0_29 = arith.constant 0 : index
    %86 = vector.load %arg4[%c25, %c0_29] : memref<27x8xf32, #tpu.memory_space<vmem>>, vector<1x8xf32>
    %87 = vector.shape_cast %86 : vector<1x8xf32> to vector<8xf32>
    %88 = vector.shape_cast %87 : vector<8xf32> to vector<1x1x8xf32>
    %89 = vector.broadcast %88 : vector<1x1x8xf32> to vector<8x8x8xf32>
    %90 = arith.mulf %85, %89 : vector<8x8x8xf32>
    %91 = arith.addf %84, %90 : vector<8x8x8xf32>
    %92 = vector.extract_strided_slice %4 {offsets = [1, 1, 0], sizes = [8, 8, 8], strides = [1, 1, 1]} : vector<9x9x8xf32> to vector<8x8x8xf32>
    %c19 = arith.constant 19 : index
    %c0_30 = arith.constant 0 : index
    %93 = vector.load %arg4[%c19, %c0_30] : memref<27x8xf32, #tpu.memory_space<vmem>>, vector<1x8xf32>
    %94 = vector.shape_cast %93 : vector<1x8xf32> to vector<8xf32>
    %95 = vector.shape_cast %94 : vector<8xf32> to vector<1x1x8xf32>
    %96 = vector.broadcast %95 : vector<1x1x8xf32> to vector<8x8x8xf32>
    %97 = arith.mulf %92, %96 : vector<8x8x8xf32>
    %98 = arith.addf %91, %97 : vector<8x8x8xf32>
    %99 = vector.extract_strided_slice %6 {offsets = [0, 1, 0], sizes = [8, 8, 8], strides = [1, 1, 1]} : vector<9x9x8xf32> to vector<8x8x8xf32>
    %c7 = arith.constant 7 : index
    %c0_31 = arith.constant 0 : index
    %100 = vector.load %arg4[%c7, %c0_31] : memref<27x8xf32, #tpu.memory_space<vmem>>, vector<1x8xf32>
    %101 = vector.shape_cast %100 : vector<1x8xf32> to vector<8xf32>
    %102 = vector.shape_cast %101 : vector<8xf32> to vector<1x1x8xf32>
    %103 = vector.broadcast %102 : vector<1x1x8xf32> to vector<8x8x8xf32>
    %104 = arith.mulf %99, %103 : vector<8x8x8xf32>
    %105 = arith.addf %98, %104 : vector<8x8x8xf32>
    %106 = vector.extract_strided_slice %6 {offsets = [1, 1, 0], sizes = [8, 8, 8], strides = [1, 1, 1]} : vector<9x9x8xf32> to vector<8x8x8xf32>
    %c1 = arith.constant 1 : index
    %c0_32 = arith.constant 0 : index
    %107 = vector.load %arg4[%c1, %c0_32] : memref<27x8xf32, #tpu.memory_space<vmem>>, vector<1x8xf32>
    %108 = vector.shape_cast %107 : vector<1x8xf32> to vector<8xf32>
    %109 = vector.shape_cast %108 : vector<8xf32> to vector<1x1x8xf32>
    %110 = vector.broadcast %109 : vector<1x1x8xf32> to vector<8x8x8xf32>
    %111 = arith.mulf %106, %110 : vector<8x8x8xf32>
    %112 = arith.addf %105, %111 : vector<8x8x8xf32>
    %113 = tpu.iota {dimensions = array<i32: 0>} : vector<8x8x8xi32>
    %c0_i32_33 = arith.constant 0 : i32
    %114 = vector.broadcast %c0_i32_33 : i32 to vector<8x8x8xi32>
    %115 = arith.cmpi sgt, %113, %114 : vector<8x8x8xi32>
    %cst_34 = arith.constant 0.000000e+00 : f32
    %116 = vector.broadcast %cst_34 : f32 to vector<8x8x8xf32>
    %117 = arith.select %115, %112, %116 : vector<8x8x8xi1>, vector<8x8x8xf32>
    %cst_35 = arith.constant dense<0.000000e+00> : vector<8xf32>
    %118 = vector.multi_reduction <add>, %117, %cst_35 [0, 1] : vector<8x8x8xf32> to vector<8xf32>
    %119 = vector.shape_cast %118 : vector<8xf32> to vector<1x1x8xf32>
    %120 = arith.addf %79, %119 : vector<1x1x8xf32>
    %121 = arith.mulf %117, %117 : vector<8x8x8xf32>
    %cst_36 = arith.constant dense<0.000000e+00> : vector<8xf32>
    %122 = vector.multi_reduction <add>, %121, %cst_36 [0, 1] : vector<8x8x8xf32> to vector<8xf32>
    %123 = vector.shape_cast %122 : vector<8xf32> to vector<1x1x8xf32>
    %124 = arith.addf %83, %123 : vector<1x1x8xf32>
    %cst_37 = arith.constant 0.000000e+00 : f32
    %125 = vector.broadcast %cst_37 : f32 to vector<8x8x8xf32>
    %126 = vector.extract_strided_slice %4 {offsets = [1, 0, 0], sizes = [8, 8, 8], strides = [1, 1, 1]} : vector<9x9x8xf32> to vector<8x8x8xf32>
    %c23 = arith.constant 23 : index
    %c0_38 = arith.constant 0 : index
    %127 = vector.load %arg4[%c23, %c0_38] : memref<27x8xf32, #tpu.memory_space<vmem>>, vector<1x8xf32>
    %128 = vector.shape_cast %127 : vector<1x8xf32> to vector<8xf32>
    %129 = vector.shape_cast %128 : vector<8xf32> to vector<1x1x8xf32>
    %130 = vector.broadcast %129 : vector<1x1x8xf32> to vector<8x8x8xf32>
    %131 = arith.mulf %126, %130 : vector<8x8x8xf32>
    %132 = arith.addf %125, %131 : vector<8x8x8xf32>
    %133 = vector.extract_strided_slice %4 {offsets = [1, 1, 0], sizes = [8, 8, 8], strides = [1, 1, 1]} : vector<9x9x8xf32> to vector<8x8x8xf32>
    %c21 = arith.constant 21 : index
    %c0_39 = arith.constant 0 : index
    %134 = vector.load %arg4[%c21, %c0_39] : memref<27x8xf32, #tpu.memory_space<vmem>>, vector<1x8xf32>
    %135 = vector.shape_cast %134 : vector<1x8xf32> to vector<8xf32>
    %136 = vector.shape_cast %135 : vector<8xf32> to vector<1x1x8xf32>
    %137 = vector.broadcast %136 : vector<1x1x8xf32> to vector<8x8x8xf32>
    %138 = arith.mulf %133, %137 : vector<8x8x8xf32>
    %139 = arith.addf %132, %138 : vector<8x8x8xf32>
    %140 = vector.extract_strided_slice %6 {offsets = [1, 0, 0], sizes = [8, 8, 8], strides = [1, 1, 1]} : vector<9x9x8xf32> to vector<8x8x8xf32>
    %c5 = arith.constant 5 : index
    %c0_40 = arith.constant 0 : index
    %141 = vector.load %arg4[%c5, %c0_40] : memref<27x8xf32, #tpu.memory_space<vmem>>, vector<1x8xf32>
    %142 = vector.shape_cast %141 : vector<1x8xf32> to vector<8xf32>
    %143 = vector.shape_cast %142 : vector<8xf32> to vector<1x1x8xf32>
    %144 = vector.broadcast %143 : vector<1x1x8xf32> to vector<8x8x8xf32>
    %145 = arith.mulf %140, %144 : vector<8x8x8xf32>
    %146 = arith.addf %139, %145 : vector<8x8x8xf32>
    %147 = vector.extract_strided_slice %6 {offsets = [1, 1, 0], sizes = [8, 8, 8], strides = [1, 1, 1]} : vector<9x9x8xf32> to vector<8x8x8xf32>
    %c3 = arith.constant 3 : index
    %c0_41 = arith.constant 0 : index
    %148 = vector.load %arg4[%c3, %c0_41] : memref<27x8xf32, #tpu.memory_space<vmem>>, vector<1x8xf32>
    %149 = vector.shape_cast %148 : vector<1x8xf32> to vector<8xf32>
    %150 = vector.shape_cast %149 : vector<8xf32> to vector<1x1x8xf32>
    %151 = vector.broadcast %150 : vector<1x1x8xf32> to vector<8x8x8xf32>
    %152 = arith.mulf %147, %151 : vector<8x8x8xf32>
    %153 = arith.addf %146, %152 : vector<8x8x8xf32>
    %154 = tpu.iota {dimensions = array<i32: 1>} : vector<8x8x8xi32>
    %c0_i32_42 = arith.constant 0 : i32
    %155 = vector.broadcast %c0_i32_42 : i32 to vector<8x8x8xi32>
    %156 = arith.cmpi sgt, %154, %155 : vector<8x8x8xi32>
    %cst_43 = arith.constant 0.000000e+00 : f32
    %157 = vector.broadcast %cst_43 : f32 to vector<8x8x8xf32>
    %158 = arith.select %156, %153, %157 : vector<8x8x8xi1>, vector<8x8x8xf32>
    %cst_44 = arith.constant dense<0.000000e+00> : vector<8xf32>
    %159 = vector.multi_reduction <add>, %158, %cst_44 [0, 1] : vector<8x8x8xf32> to vector<8xf32>
    %160 = vector.shape_cast %159 : vector<8xf32> to vector<1x1x8xf32>
    %161 = arith.addf %120, %160 : vector<1x1x8xf32>
    %162 = arith.mulf %158, %158 : vector<8x8x8xf32>
    %cst_45 = arith.constant dense<0.000000e+00> : vector<8xf32>
    %163 = vector.multi_reduction <add>, %162, %cst_45 [0, 1] : vector<8x8x8xf32> to vector<8xf32>
    %164 = vector.shape_cast %163 : vector<8xf32> to vector<1x1x8xf32>
    %165 = arith.addf %124, %164 : vector<1x1x8xf32>
    %cst_46 = arith.constant 0.000000e+00 : f32
    %166 = vector.broadcast %cst_46 : f32 to vector<8x8x8xf32>
    %167 = vector.extract_strided_slice %4 {offsets = [1, 1, 0], sizes = [8, 8, 8], strides = [1, 1, 1]} : vector<9x9x8xf32> to vector<8x8x8xf32>
    %c22 = arith.constant 22 : index
    %c0_47 = arith.constant 0 : index
    %168 = vector.load %arg4[%c22, %c0_47] : memref<27x8xf32, #tpu.memory_space<vmem>>, vector<1x8xf32>
    %169 = vector.shape_cast %168 : vector<1x8xf32> to vector<8xf32>
    %170 = vector.shape_cast %169 : vector<8xf32> to vector<1x1x8xf32>
    %171 = vector.broadcast %170 : vector<1x1x8xf32> to vector<8x8x8xf32>
    %172 = arith.mulf %167, %171 : vector<8x8x8xf32>
    %173 = arith.addf %166, %172 : vector<8x8x8xf32>
    %174 = vector.extract_strided_slice %6 {offsets = [1, 1, 0], sizes = [8, 8, 8], strides = [1, 1, 1]} : vector<9x9x8xf32> to vector<8x8x8xf32>
    %c4 = arith.constant 4 : index
    %c0_48 = arith.constant 0 : index
    %175 = vector.load %arg4[%c4, %c0_48] : memref<27x8xf32, #tpu.memory_space<vmem>>, vector<1x8xf32>
    %176 = vector.shape_cast %175 : vector<1x8xf32> to vector<8xf32>
    %177 = vector.shape_cast %176 : vector<8xf32> to vector<1x1x8xf32>
    %178 = vector.broadcast %177 : vector<1x1x8xf32> to vector<8x8x8xf32>
    %179 = arith.mulf %174, %178 : vector<8x8x8xf32>
    %180 = arith.addf %173, %179 : vector<8x8x8xf32>
    %cst_49 = arith.constant dense<0.000000e+00> : vector<8xf32>
    %181 = vector.multi_reduction <add>, %180, %cst_49 [0, 1] : vector<8x8x8xf32> to vector<8xf32>
    %182 = vector.shape_cast %181 : vector<8xf32> to vector<1x1x8xf32>
    %183 = arith.addf %161, %182 : vector<1x1x8xf32>
    %184 = arith.mulf %180, %180 : vector<8x8x8xf32>
    %cst_50 = arith.constant dense<0.000000e+00> : vector<8xf32>
    %185 = vector.multi_reduction <add>, %184, %cst_50 [0, 1] : vector<8x8x8xf32> to vector<8xf32>
    %186 = vector.shape_cast %185 : vector<8xf32> to vector<1x1x8xf32>
    %187 = arith.addf %165, %186 : vector<1x1x8xf32>
    %c0_i32_51 = arith.constant 0 : i32
    %188 = arith.cmpi sgt, %arg1, %c0_i32_51 : i32
    %189 = arith.extui %188 : i1 to i32
    %190 = arith.sitofp %189 : i32 to f32
    %191 = vector.broadcast %190 : f32 to vector<1x1x8xf32>
    %192 = arith.mulf %183, %191 : vector<1x1x8xf32>
    %193 = vector.broadcast %190 : f32 to vector<1x1x8xf32>
    %194 = arith.mulf %187, %193 : vector<1x1x8xf32>
    %195 = arith.addf %7, %192 : vector<1x1x8xf32>
    %196 = arith.addf %8, %194 : vector<1x1x8xf32>
    %cst_52 = arith.constant 0.000000e+00 : f32
    %197 = vector.broadcast %cst_52 : f32 to vector<1x1x8xf32>
    %cst_53 = arith.constant 0.000000e+00 : f32
    %198 = vector.broadcast %cst_53 : f32 to vector<1x1x8xf32>
    %cst_54 = arith.constant 0.000000e+00 : f32
    %199 = vector.broadcast %cst_54 : f32 to vector<8x8x8xf32>
    %200 = vector.extract_strided_slice %6 {offsets = [0, 0, 0], sizes = [8, 8, 8], strides = [1, 1, 1]} : vector<9x9x8xf32> to vector<8x8x8xf32>
    %c17 = arith.constant 17 : index
    %c0_55 = arith.constant 0 : index
    %201 = vector.load %arg4[%c17, %c0_55] : memref<27x8xf32, #tpu.memory_space<vmem>>, vector<1x8xf32>
    %202 = vector.shape_cast %201 : vector<1x8xf32> to vector<8xf32>
    %203 = vector.shape_cast %202 : vector<8xf32> to vector<1x1x8xf32>
    %204 = vector.broadcast %203 : vector<1x1x8xf32> to vector<8x8x8xf32>
    %205 = arith.mulf %200, %204 : vector<8x8x8xf32>
    %206 = arith.addf %199, %205 : vector<8x8x8xf32>
    %207 = vector.extract_strided_slice %6 {offsets = [0, 1, 0], sizes = [8, 8, 8], strides = [1, 1, 1]} : vector<9x9x8xf32> to vector<8x8x8xf32>
    %c15 = arith.constant 15 : index
    %c0_56 = arith.constant 0 : index
    %208 = vector.load %arg4[%c15, %c0_56] : memref<27x8xf32, #tpu.memory_space<vmem>>, vector<1x8xf32>
    %209 = vector.shape_cast %208 : vector<1x8xf32> to vector<8xf32>
    %210 = vector.shape_cast %209 : vector<8xf32> to vector<1x1x8xf32>
    %211 = vector.broadcast %210 : vector<1x1x8xf32> to vector<8x8x8xf32>
    %212 = arith.mulf %207, %211 : vector<8x8x8xf32>
    %213 = arith.addf %206, %212 : vector<8x8x8xf32>
    %214 = vector.extract_strided_slice %6 {offsets = [1, 0, 0], sizes = [8, 8, 8], strides = [1, 1, 1]} : vector<9x9x8xf32> to vector<8x8x8xf32>
    %c11 = arith.constant 11 : index
    %c0_57 = arith.constant 0 : index
    %215 = vector.load %arg4[%c11, %c0_57] : memref<27x8xf32, #tpu.memory_space<vmem>>, vector<1x8xf32>
    %216 = vector.shape_cast %215 : vector<1x8xf32> to vector<8xf32>
    %217 = vector.shape_cast %216 : vector<8xf32> to vector<1x1x8xf32>
    %218 = vector.broadcast %217 : vector<1x1x8xf32> to vector<8x8x8xf32>
    %219 = arith.mulf %214, %218 : vector<8x8x8xf32>
    %220 = arith.addf %213, %219 : vector<8x8x8xf32>
    %221 = vector.extract_strided_slice %6 {offsets = [1, 1, 0], sizes = [8, 8, 8], strides = [1, 1, 1]} : vector<9x9x8xf32> to vector<8x8x8xf32>
    %c9 = arith.constant 9 : index
    %c0_58 = arith.constant 0 : index
    %222 = vector.load %arg4[%c9, %c0_58] : memref<27x8xf32, #tpu.memory_space<vmem>>, vector<1x8xf32>
    %223 = vector.shape_cast %222 : vector<1x8xf32> to vector<8xf32>
    %224 = vector.shape_cast %223 : vector<8xf32> to vector<1x1x8xf32>
    %225 = vector.broadcast %224 : vector<1x1x8xf32> to vector<8x8x8xf32>
    %226 = arith.mulf %221, %225 : vector<8x8x8xf32>
    %227 = arith.addf %220, %226 : vector<8x8x8xf32>
    %228 = tpu.iota {dimensions = array<i32: 0>} : vector<8x8x8xi32>
    %c0_i32_59 = arith.constant 0 : i32
    %229 = vector.broadcast %c0_i32_59 : i32 to vector<8x8x8xi32>
    %230 = arith.cmpi sgt, %228, %229 : vector<8x8x8xi32>
    %231 = tpu.iota {dimensions = array<i32: 1>} : vector<8x8x8xi32>
    %c0_i32_60 = arith.constant 0 : i32
    %232 = vector.broadcast %c0_i32_60 : i32 to vector<8x8x8xi32>
    %233 = arith.cmpi sgt, %231, %232 : vector<8x8x8xi32>
    %234 = arith.andi %230, %233 : vector<8x8x8xi1>
    %cst_61 = arith.constant 0.000000e+00 : f32
    %235 = vector.broadcast %cst_61 : f32 to vector<8x8x8xf32>
    %236 = arith.select %234, %227, %235 : vector<8x8x8xi1>, vector<8x8x8xf32>
    %cst_62 = arith.constant dense<0.000000e+00> : vector<8xf32>
    %237 = vector.multi_reduction <add>, %236, %cst_62 [0, 1] : vector<8x8x8xf32> to vector<8xf32>
    %238 = vector.shape_cast %237 : vector<8xf32> to vector<1x1x8xf32>
    %239 = arith.addf %197, %238 : vector<1x1x8xf32>
    %240 = arith.mulf %236, %236 : vector<8x8x8xf32>
    %cst_63 = arith.constant dense<0.000000e+00> : vector<8xf32>
    %241 = vector.multi_reduction <add>, %240, %cst_63 [0, 1] : vector<8x8x8xf32> to vector<8xf32>
    %242 = vector.shape_cast %241 : vector<8xf32> to vector<1x1x8xf32>
    %243 = arith.addf %198, %242 : vector<1x1x8xf32>
    %cst_64 = arith.constant 0.000000e+00 : f32
    %244 = vector.broadcast %cst_64 : f32 to vector<8x8x8xf32>
    %245 = vector.extract_strided_slice %6 {offsets = [0, 1, 0], sizes = [8, 8, 8], strides = [1, 1, 1]} : vector<9x9x8xf32> to vector<8x8x8xf32>
    %c16 = arith.constant 16 : index
    %c0_65 = arith.constant 0 : index
    %246 = vector.load %arg4[%c16, %c0_65] : memref<27x8xf32, #tpu.memory_space<vmem>>, vector<1x8xf32>
    %247 = vector.shape_cast %246 : vector<1x8xf32> to vector<8xf32>
    %248 = vector.shape_cast %247 : vector<8xf32> to vector<1x1x8xf32>
    %249 = vector.broadcast %248 : vector<1x1x8xf32> to vector<8x8x8xf32>
    %250 = arith.mulf %245, %249 : vector<8x8x8xf32>
    %251 = arith.addf %244, %250 : vector<8x8x8xf32>
    %252 = vector.extract_strided_slice %6 {offsets = [1, 1, 0], sizes = [8, 8, 8], strides = [1, 1, 1]} : vector<9x9x8xf32> to vector<8x8x8xf32>
    %c10 = arith.constant 10 : index
    %c0_66 = arith.constant 0 : index
    %253 = vector.load %arg4[%c10, %c0_66] : memref<27x8xf32, #tpu.memory_space<vmem>>, vector<1x8xf32>
    %254 = vector.shape_cast %253 : vector<1x8xf32> to vector<8xf32>
    %255 = vector.shape_cast %254 : vector<8xf32> to vector<1x1x8xf32>
    %256 = vector.broadcast %255 : vector<1x1x8xf32> to vector<8x8x8xf32>
    %257 = arith.mulf %252, %256 : vector<8x8x8xf32>
    %258 = arith.addf %251, %257 : vector<8x8x8xf32>
    %259 = tpu.iota {dimensions = array<i32: 0>} : vector<8x8x8xi32>
    %c0_i32_67 = arith.constant 0 : i32
    %260 = vector.broadcast %c0_i32_67 : i32 to vector<8x8x8xi32>
    %261 = arith.cmpi sgt, %259, %260 : vector<8x8x8xi32>
    %cst_68 = arith.constant 0.000000e+00 : f32
    %262 = vector.broadcast %cst_68 : f32 to vector<8x8x8xf32>
    %263 = arith.select %261, %258, %262 : vector<8x8x8xi1>, vector<8x8x8xf32>
    %cst_69 = arith.constant dense<0.000000e+00> : vector<8xf32>
    %264 = vector.multi_reduction <add>, %263, %cst_69 [0, 1] : vector<8x8x8xf32> to vector<8xf32>
    %265 = vector.shape_cast %264 : vector<8xf32> to vector<1x1x8xf32>
    %266 = arith.addf %239, %265 : vector<1x1x8xf32>
    %267 = arith.mulf %263, %263 : vector<8x8x8xf32>
    %cst_70 = arith.constant dense<0.000000e+00> : vector<8xf32>
    %268 = vector.multi_reduction <add>, %267, %cst_70 [0, 1] : vector<8x8x8xf32> to vector<8xf32>
    %269 = vector.shape_cast %268 : vector<8xf32> to vector<1x1x8xf32>
    %270 = arith.addf %243, %269 : vector<1x1x8xf32>
    %cst_71 = arith.constant 0.000000e+00 : f32
    %271 = vector.broadcast %cst_71 : f32 to vector<8x8x8xf32>
    %272 = vector.extract_strided_slice %6 {offsets = [1, 0, 0], sizes = [8, 8, 8], strides = [1, 1, 1]} : vector<9x9x8xf32> to vector<8x8x8xf32>
    %c14 = arith.constant 14 : index
    %c0_72 = arith.constant 0 : index
    %273 = vector.load %arg4[%c14, %c0_72] : memref<27x8xf32, #tpu.memory_space<vmem>>, vector<1x8xf32>
    %274 = vector.shape_cast %273 : vector<1x8xf32> to vector<8xf32>
    %275 = vector.shape_cast %274 : vector<8xf32> to vector<1x1x8xf32>
    %276 = vector.broadcast %275 : vector<1x1x8xf32> to vector<8x8x8xf32>
    %277 = arith.mulf %272, %276 : vector<8x8x8xf32>
    %278 = arith.addf %271, %277 : vector<8x8x8xf32>
    %279 = vector.extract_strided_slice %6 {offsets = [1, 1, 0], sizes = [8, 8, 8], strides = [1, 1, 1]} : vector<9x9x8xf32> to vector<8x8x8xf32>
    %c12 = arith.constant 12 : index
    %c0_73 = arith.constant 0 : index
    %280 = vector.load %arg4[%c12, %c0_73] : memref<27x8xf32, #tpu.memory_space<vmem>>, vector<1x8xf32>
    %281 = vector.shape_cast %280 : vector<1x8xf32> to vector<8xf32>
    %282 = vector.shape_cast %281 : vector<8xf32> to vector<1x1x8xf32>
    %283 = vector.broadcast %282 : vector<1x1x8xf32> to vector<8x8x8xf32>
    %284 = arith.mulf %279, %283 : vector<8x8x8xf32>
    %285 = arith.addf %278, %284 : vector<8x8x8xf32>
    %286 = tpu.iota {dimensions = array<i32: 1>} : vector<8x8x8xi32>
    %c0_i32_74 = arith.constant 0 : i32
    %287 = vector.broadcast %c0_i32_74 : i32 to vector<8x8x8xi32>
    %288 = arith.cmpi sgt, %286, %287 : vector<8x8x8xi32>
    %cst_75 = arith.constant 0.000000e+00 : f32
    %289 = vector.broadcast %cst_75 : f32 to vector<8x8x8xf32>
    %290 = arith.select %288, %285, %289 : vector<8x8x8xi1>, vector<8x8x8xf32>
    %cst_76 = arith.constant dense<0.000000e+00> : vector<8xf32>
    %291 = vector.multi_reduction <add>, %290, %cst_76 [0, 1] : vector<8x8x8xf32> to vector<8xf32>
    %292 = vector.shape_cast %291 : vector<8xf32> to vector<1x1x8xf32>
    %293 = arith.addf %266, %292 : vector<1x1x8xf32>
    %294 = arith.mulf %290, %290 : vector<8x8x8xf32>
    %cst_77 = arith.constant dense<0.000000e+00> : vector<8xf32>
    %295 = vector.multi_reduction <add>, %294, %cst_77 [0, 1] : vector<8x8x8xf32> to vector<8xf32>
    %296 = vector.shape_cast %295 : vector<8xf32> to vector<1x1x8xf32>
    %297 = arith.addf %270, %296 : vector<1x1x8xf32>
    %cst_78 = arith.constant 0.000000e+00 : f32
    %298 = vector.broadcast %cst_78 : f32 to vector<8x8x8xf32>
    %299 = vector.extract_strided_slice %6 {offsets = [1, 1, 0], sizes = [8, 8, 8], strides = [1, 1, 1]} : vector<9x9x8xf32> to vector<8x8x8xf32>
    %c13 = arith.constant 13 : index
    %c0_79 = arith.constant 0 : index
    %300 = vector.load %arg4[%c13, %c0_79] : memref<27x8xf32, #tpu.memory_space<vmem>>, vector<1x8xf32>
    %301 = vector.shape_cast %300 : vector<1x8xf32> to vector<8xf32>
    %302 = vector.shape_cast %301 : vector<8xf32> to vector<1x1x8xf32>
    %303 = vector.broadcast %302 : vector<1x1x8xf32> to vector<8x8x8xf32>
    %304 = arith.mulf %299, %303 : vector<8x8x8xf32>
    %305 = arith.addf %298, %304 : vector<8x8x8xf32>
    %cst_80 = arith.constant dense<0.000000e+00> : vector<8xf32>
    %306 = vector.multi_reduction <add>, %305, %cst_80 [0, 1] : vector<8x8x8xf32> to vector<8xf32>
    %307 = vector.shape_cast %306 : vector<8xf32> to vector<1x1x8xf32>
    %308 = arith.addf %293, %307 : vector<1x1x8xf32>
    %309 = arith.mulf %305, %305 : vector<8x8x8xf32>
    %cst_81 = arith.constant dense<0.000000e+00> : vector<8xf32>
    %310 = vector.multi_reduction <add>, %309, %cst_81 [0, 1] : vector<8x8x8xf32> to vector<8xf32>
    %311 = vector.shape_cast %310 : vector<8xf32> to vector<1x1x8xf32>
    %312 = arith.addf %297, %311 : vector<1x1x8xf32>
    %313 = arith.addf %195, %308 : vector<1x1x8xf32>
    %314 = arith.addf %196, %312 : vector<1x1x8xf32>
    %c0_82 = arith.constant 0 : index
    %c0_83 = arith.constant 0 : index
    %c0_84 = arith.constant 0 : index
    %315 = vector.load %arg5[%c0_82, %c0_83, %c0_84] : memref<1x1x8xf32, #tpu.memory_space<vmem>>, vector<1x1x8xf32>
    %316 = arith.addf %315, %313 : vector<1x1x8xf32>
    %c0_85 = arith.constant 0 : index
    %c0_86 = arith.constant 0 : index
    %c0_87 = arith.constant 0 : index
    %317 = vector.load %arg5[%c0_85, %c0_86, %c0_87] : memref<1x1x8xf32, #tpu.memory_space<vmem>>, vector<1x1x8xf32>
    tpu.vector_store %arg5[%c0_85, %c0_86, %c0_87], %316 {strides = array<i32>} : memref<1x1x8xf32, #tpu.memory_space<vmem>>, vector<1x1x8xf32>,
    %c0_88 = arith.constant 0 : index
    %c0_89 = arith.constant 0 : index
    %c0_90 = arith.constant 0 : index
    %318 = vector.load %arg6[%c0_88, %c0_89, %c0_90] : memref<1x1x8xf32, #tpu.memory_space<vmem>>, vector<1x1x8xf32>
    %319 = arith.addf %318, %314 : vector<1x1x8xf32>
    %c0_91 = arith.constant 0 : index
    %c0_92 = arith.constant 0 : index
    %c0_93 = arith.constant 0 : index
    %320 = vector.load %arg6[%c0_91, %c0_92, %c0_93] : memref<1x1x8xf32, #tpu.memory_space<vmem>>, vector<1x1x8xf32>
    tpu.vector_store %arg6[%c0_91, %c0_92, %c0_93], %319 {strides = array<i32>} : memref<1x1x8xf32, #tpu.memory_space<vmem>>, vector<1x1x8xf32>,
    return
  }
  func.func @transform_0(%arg0: i32, %arg1: i32) -> (i32, i32, i32, i32, i32) {
    %c0_i32 = arith.constant 0 : i32
    %c0_i32_0 = arith.constant 0 : i32
    %c0_i32_1 = arith.constant 0 : i32
    %c0_i32_2 = arith.constant 0 : i32
    return %arg0, %arg1, %c0_i32, %c0_i32_0, %c0_i32_1 : i32, i32, i32, i32, i32
  }
  func.func @transform_1(%arg0: i32, %arg1: i32) -> (i32, i32, i32, i32, i32) {
    %c1_i32 = arith.constant 1 : i32
    %0 = arith.addi %arg1, %c1_i32 : i32
    %c0_i32 = arith.constant 0 : i32
    %c0_i32_0 = arith.constant 0 : i32
    %c0_i32_1 = arith.constant 0 : i32
    %c0_i32_2 = arith.constant 0 : i32
    return %arg0, %0, %c0_i32, %c0_i32_0, %c0_i32_1 : i32, i32, i32, i32, i32
  }
  func.func @transform_2(%arg0: i32, %arg1: i32) -> (i32, i32) {
    %c0_i32 = arith.constant 0 : i32
    %c0_i32_0 = arith.constant 0 : i32
    %c0_i32_1 = arith.constant 0 : i32
    return %c0_i32, %c0_i32_0 : i32, i32
  }
  func.func @transform_3(%arg0: i32, %arg1: i32) -> (i32, i32, i32) {
    %c0_i32 = arith.constant 0 : i32
    %c0_i32_0 = arith.constant 0 : i32
    %c0_i32_1 = arith.constant 0 : i32
    return %arg0, %c0_i32, %c0_i32_0 : i32, i32, i32
  }
  func.func @transform_4(%arg0: i32, %arg1: i32) -> (i32, i32, i32) {
    %c0_i32 = arith.constant 0 : i32
    %c0_i32_0 = arith.constant 0 : i32
    %c0_i32_1 = arith.constant 0 : i32
    return %arg0, %c0_i32, %c0_i32_0 : i32, i32, i32
  }
}

module attributes {stable_mosaic.version = 11 : i64} {
  func.func @_fused_kernel(%arg0: i32, %arg1: i32, %arg2: memref<1x1x9x9x8xf32, #tpu.memory_space<vmem>>, %arg3: memref<1x1x9x9x8xf32, #tpu.memory_space<vmem>>, %arg4: memref<27x8xf32, #tpu.memory_space<vmem>>, %arg5: memref<1x1x8xf32, #tpu.memory_space<vmem>>, %arg6: memref<1x1x8xf32, #tpu.memory_space<vmem>>, %arg7: memref<8x16xf32, #tpu.memory_space<vmem>>, %arg8: memref<1x16xf32, #tpu.memory_space<vmem>>, %arg9: memref<16x4xf32, #tpu.memory_space<vmem>>, %arg10: memref<1x4xf32, #tpu.memory_space<vmem>>, %arg11: memref<8x4xf32, #tpu.memory_space<vmem>>, %arg12: memref<1x1x8x8x8x4xf32, #tpu.memory_space<vmem>>) attributes {dimension_semantics = [#tpu.dimension_semantics<parallel>, #tpu.dimension_semantics<parallel>], iteration_bounds = array<i64: 2, 8>, scalar_prefetch = 0 : i64, scratch_operands = 0 : i64, tpu.core_type = #tpu.core_type<tc>, window_params = [{transform_indices = @transform_0, window_bounds = array<i64: 1, 1, 9, 9, 8>}, {transform_indices = @transform_1, window_bounds = array<i64: 1, 1, 9, 9, 8>}, {pipeline_mode = #tpu.pipeline_mode<synchronous>, transform_indices = @transform_2, window_bounds = array<i64: 27, 8>}, {transform_indices = @transform_3, window_bounds = array<i64: 1, 1, 8>}, {transform_indices = @transform_4, window_bounds = array<i64: 1, 1, 8>}, {pipeline_mode = #tpu.pipeline_mode<synchronous>, transform_indices = @transform_5, window_bounds = array<i64: 8, 16>}, {pipeline_mode = #tpu.pipeline_mode<synchronous>, transform_indices = @transform_6, window_bounds = array<i64: 1, 16>}, {pipeline_mode = #tpu.pipeline_mode<synchronous>, transform_indices = @transform_7, window_bounds = array<i64: 16, 4>}, {pipeline_mode = #tpu.pipeline_mode<synchronous>, transform_indices = @transform_8, window_bounds = array<i64: 1, 4>}, {pipeline_mode = #tpu.pipeline_mode<synchronous>, transform_indices = @transform_9, window_bounds = array<i64: 8, 4>}, {transform_indices = @transform_10, window_bounds = array<i64: 1, 1, 8, 8, 8, 4>}]} {
    %c0 = arith.constant 0 : index
    %c0_0 = arith.constant 0 : index
    %c0_1 = arith.constant 0 : index
    %c0_2 = arith.constant 0 : index
    %c0_3 = arith.constant 0 : index
    %0 = vector.load %arg2[%c0, %c0_0, %c0_1, %c0_2, %c0_3] : memref<1x1x9x9x8xf32, #tpu.memory_space<vmem>>, vector<1x1x9x9x8xf32>
    %1 = vector.shape_cast %0 : vector<1x1x9x9x8xf32> to vector<9x9x8xf32>
    %c0_4 = arith.constant 0 : index
    %c0_5 = arith.constant 0 : index
    %c0_6 = arith.constant 0 : index
    %c0_7 = arith.constant 0 : index
    %c0_8 = arith.constant 0 : index
    %2 = vector.load %arg3[%c0_4, %c0_5, %c0_6, %c0_7, %c0_8] : memref<1x1x9x9x8xf32, #tpu.memory_space<vmem>>, vector<1x1x9x9x8xf32>
    %3 = vector.shape_cast %2 : vector<1x1x9x9x8xf32> to vector<9x9x8xf32>
    %c0_9 = arith.constant 0 : index
    %c0_10 = arith.constant 0 : index
    %c0_11 = arith.constant 0 : index
    %4 = vector.load %arg5[%c0_9, %c0_10, %c0_11] : memref<1x1x8xf32, #tpu.memory_space<vmem>>, vector<1x1x8xf32>
    %5 = vector.shape_cast %4 : vector<1x1x8xf32> to vector<1x8xf32>
    %c0_12 = arith.constant 0 : index
    %c0_13 = arith.constant 0 : index
    %c0_14 = arith.constant 0 : index
    %6 = vector.load %arg6[%c0_12, %c0_13, %c0_14] : memref<1x1x8xf32, #tpu.memory_space<vmem>>, vector<1x1x8xf32>
    %7 = vector.shape_cast %6 : vector<1x1x8xf32> to vector<1x8xf32>
    %cst = arith.constant 0.000000e+00 : f32
    %8 = vector.broadcast %cst : f32 to vector<8x8x8xf32>
    %9 = vector.extract_strided_slice %1 {offsets = [0, 0, 0], sizes = [8, 8, 8], strides = [1, 1, 1]} : vector<9x9x8xf32> to vector<8x8x8xf32>
    %c26 = arith.constant 26 : index
    %c0_15 = arith.constant 0 : index
    %10 = vector.load %arg4[%c26, %c0_15] : memref<27x8xf32, #tpu.memory_space<vmem>>, vector<1x8xf32>
    %11 = vector.shape_cast %10 : vector<1x8xf32> to vector<8xf32>
    %12 = vector.shape_cast %11 : vector<8xf32> to vector<1x1x8xf32>
    %13 = vector.broadcast %12 : vector<1x1x8xf32> to vector<8x8x8xf32>
    %14 = arith.mulf %9, %13 : vector<8x8x8xf32>
    %15 = arith.addf %8, %14 : vector<8x8x8xf32>
    %16 = vector.extract_strided_slice %1 {offsets = [0, 1, 0], sizes = [8, 8, 8], strides = [1, 1, 1]} : vector<9x9x8xf32> to vector<8x8x8xf32>
    %c24 = arith.constant 24 : index
    %c0_16 = arith.constant 0 : index
    %17 = vector.load %arg4[%c24, %c0_16] : memref<27x8xf32, #tpu.memory_space<vmem>>, vector<1x8xf32>
    %18 = vector.shape_cast %17 : vector<1x8xf32> to vector<8xf32>
    %19 = vector.shape_cast %18 : vector<8xf32> to vector<1x1x8xf32>
    %20 = vector.broadcast %19 : vector<1x1x8xf32> to vector<8x8x8xf32>
    %21 = arith.mulf %16, %20 : vector<8x8x8xf32>
    %22 = arith.addf %15, %21 : vector<8x8x8xf32>
    %23 = vector.extract_strided_slice %1 {offsets = [1, 0, 0], sizes = [8, 8, 8], strides = [1, 1, 1]} : vector<9x9x8xf32> to vector<8x8x8xf32>
    %c20 = arith.constant 20 : index
    %c0_17 = arith.constant 0 : index
    %24 = vector.load %arg4[%c20, %c0_17] : memref<27x8xf32, #tpu.memory_space<vmem>>, vector<1x8xf32>
    %25 = vector.shape_cast %24 : vector<1x8xf32> to vector<8xf32>
    %26 = vector.shape_cast %25 : vector<8xf32> to vector<1x1x8xf32>
    %27 = vector.broadcast %26 : vector<1x1x8xf32> to vector<8x8x8xf32>
    %28 = arith.mulf %23, %27 : vector<8x8x8xf32>
    %29 = arith.addf %22, %28 : vector<8x8x8xf32>
    %30 = vector.extract_strided_slice %1 {offsets = [1, 1, 0], sizes = [8, 8, 8], strides = [1, 1, 1]} : vector<9x9x8xf32> to vector<8x8x8xf32>
    %c18 = arith.constant 18 : index
    %c0_18 = arith.constant 0 : index
    %31 = vector.load %arg4[%c18, %c0_18] : memref<27x8xf32, #tpu.memory_space<vmem>>, vector<1x8xf32>
    %32 = vector.shape_cast %31 : vector<1x8xf32> to vector<8xf32>
    %33 = vector.shape_cast %32 : vector<8xf32> to vector<1x1x8xf32>
    %34 = vector.broadcast %33 : vector<1x1x8xf32> to vector<8x8x8xf32>
    %35 = arith.mulf %30, %34 : vector<8x8x8xf32>
    %36 = arith.addf %29, %35 : vector<8x8x8xf32>
    %37 = vector.extract_strided_slice %3 {offsets = [0, 0, 0], sizes = [8, 8, 8], strides = [1, 1, 1]} : vector<9x9x8xf32> to vector<8x8x8xf32>
    %c8 = arith.constant 8 : index
    %c0_19 = arith.constant 0 : index
    %38 = vector.load %arg4[%c8, %c0_19] : memref<27x8xf32, #tpu.memory_space<vmem>>, vector<1x8xf32>
    %39 = vector.shape_cast %38 : vector<1x8xf32> to vector<8xf32>
    %40 = vector.shape_cast %39 : vector<8xf32> to vector<1x1x8xf32>
    %41 = vector.broadcast %40 : vector<1x1x8xf32> to vector<8x8x8xf32>
    %42 = arith.mulf %37, %41 : vector<8x8x8xf32>
    %43 = arith.addf %36, %42 : vector<8x8x8xf32>
    %44 = vector.extract_strided_slice %3 {offsets = [0, 1, 0], sizes = [8, 8, 8], strides = [1, 1, 1]} : vector<9x9x8xf32> to vector<8x8x8xf32>
    %c6 = arith.constant 6 : index
    %c0_20 = arith.constant 0 : index
    %45 = vector.load %arg4[%c6, %c0_20] : memref<27x8xf32, #tpu.memory_space<vmem>>, vector<1x8xf32>
    %46 = vector.shape_cast %45 : vector<1x8xf32> to vector<8xf32>
    %47 = vector.shape_cast %46 : vector<8xf32> to vector<1x1x8xf32>
    %48 = vector.broadcast %47 : vector<1x1x8xf32> to vector<8x8x8xf32>
    %49 = arith.mulf %44, %48 : vector<8x8x8xf32>
    %50 = arith.addf %43, %49 : vector<8x8x8xf32>
    %51 = vector.extract_strided_slice %3 {offsets = [1, 0, 0], sizes = [8, 8, 8], strides = [1, 1, 1]} : vector<9x9x8xf32> to vector<8x8x8xf32>
    %c2 = arith.constant 2 : index
    %c0_21 = arith.constant 0 : index
    %52 = vector.load %arg4[%c2, %c0_21] : memref<27x8xf32, #tpu.memory_space<vmem>>, vector<1x8xf32>
    %53 = vector.shape_cast %52 : vector<1x8xf32> to vector<8xf32>
    %54 = vector.shape_cast %53 : vector<8xf32> to vector<1x1x8xf32>
    %55 = vector.broadcast %54 : vector<1x1x8xf32> to vector<8x8x8xf32>
    %56 = arith.mulf %51, %55 : vector<8x8x8xf32>
    %57 = arith.addf %50, %56 : vector<8x8x8xf32>
    %58 = vector.extract_strided_slice %3 {offsets = [1, 1, 0], sizes = [8, 8, 8], strides = [1, 1, 1]} : vector<9x9x8xf32> to vector<8x8x8xf32>
    %c0_22 = arith.constant 0 : index
    %c0_23 = arith.constant 0 : index
    %59 = vector.load %arg4[%c0_22, %c0_23] : memref<27x8xf32, #tpu.memory_space<vmem>>, vector<1x8xf32>
    %60 = vector.shape_cast %59 : vector<1x8xf32> to vector<8xf32>
    %61 = vector.shape_cast %60 : vector<8xf32> to vector<1x1x8xf32>
    %62 = vector.broadcast %61 : vector<1x1x8xf32> to vector<8x8x8xf32>
    %63 = arith.mulf %58, %62 : vector<8x8x8xf32>
    %64 = arith.addf %57, %63 : vector<8x8x8xf32>
    %65 = vector.shape_cast %5 : vector<1x8xf32> to vector<1x1x8xf32>
    %66 = vector.broadcast %65 : vector<1x1x8xf32> to vector<8x8x8xf32>
    %67 = arith.subf %64, %66 : vector<8x8x8xf32>
    %68 = vector.shape_cast %7 : vector<1x8xf32> to vector<1x1x8xf32>
    %69 = vector.broadcast %68 : vector<1x1x8xf32> to vector<8x8x8xf32>
    %70 = arith.mulf %67, %69 : vector<8x8x8xf32>
    %71 = vector.shape_cast %70 : vector<8x8x8xf32> to vector<64x8xf32>
    %c0_24 = arith.constant 0 : index
    %c0_25 = arith.constant 0 : index
    %72 = vector.load %arg7[%c0_24, %c0_25] : memref<8x16xf32, #tpu.memory_space<vmem>>, vector<8x16xf32>
    %cst_26 = arith.constant dense<0.000000e+00> : vector<64x16xf32>
    %73 = tpu.matmul %71, %72, %cst_26 {dimension_numbers = #tpu.dot_dimension_numbers<[1], [0], [0], [1], [0, 0, 1, 1], [], []>} : vector<64x8xf32>, vector<8x16xf32>, vector<64x16xf32> -> vector<64x16xf32>
    %c0_27 = arith.constant 0 : index
    %c0_28 = arith.constant 0 : index
    %74 = vector.load %arg8[%c0_27, %c0_28] : memref<1x16xf32, #tpu.memory_space<vmem>>, vector<1x16xf32>
    %75 = vector.broadcast %74 : vector<1x16xf32> to vector<64x16xf32>
    %76 = arith.addf %73, %75 : vector<64x16xf32>
    %cst_29 = arith.constant 5.000000e-01 : f32
    %77 = vector.broadcast %cst_29 : f32 to vector<64x16xf32>
    %78 = arith.mulf %77, %76 : vector<64x16xf32>
    %cst_30 = arith.constant 1.41421354 : f32
    %79 = vector.broadcast %cst_30 : f32 to vector<64x16xf32>
    %80 = arith.divf %76, %79 : vector<64x16xf32>
    %81 = math.erf %80 : vector<64x16xf32>
    %cst_31 = arith.constant 1.000000e+00 : f32
    %82 = vector.broadcast %cst_31 : f32 to vector<64x16xf32>
    %83 = arith.addf %82, %81 : vector<64x16xf32>
    %84 = arith.mulf %78, %83 : vector<64x16xf32>
    %c0_32 = arith.constant 0 : index
    %c0_33 = arith.constant 0 : index
    %85 = vector.load %arg9[%c0_32, %c0_33] : memref<16x4xf32, #tpu.memory_space<vmem>>, vector<16x4xf32>
    %cst_34 = arith.constant dense<0.000000e+00> : vector<64x4xf32>
    %86 = tpu.matmul %84, %85, %cst_34 {dimension_numbers = #tpu.dot_dimension_numbers<[1], [0], [0], [1], [0, 0, 1, 1], [], []>} : vector<64x16xf32>, vector<16x4xf32>, vector<64x4xf32> -> vector<64x4xf32>
    %c0_35 = arith.constant 0 : index
    %c0_36 = arith.constant 0 : index
    %87 = vector.load %arg10[%c0_35, %c0_36] : memref<1x4xf32, #tpu.memory_space<vmem>>, vector<1x4xf32>
    %88 = vector.broadcast %87 : vector<1x4xf32> to vector<64x4xf32>
    %89 = arith.addf %86, %88 : vector<64x4xf32>
    %90 = vector.shape_cast %89 : vector<64x4xf32> to vector<8x8x4xf32>
    %91 = tpu.iota {dimensions = array<i32: 0>} : vector<8x8x4xi32>
    %c0_i32 = arith.constant 0 : i32
    %92 = vector.broadcast %c0_i32 : i32 to vector<8x8x4xi32>
    %93 = arith.cmpi sgt, %91, %92 : vector<8x8x4xi32>
    %94 = tpu.iota {dimensions = array<i32: 1>} : vector<8x8x4xi32>
    %c0_i32_37 = arith.constant 0 : i32
    %95 = vector.broadcast %c0_i32_37 : i32 to vector<8x8x4xi32>
    %96 = arith.cmpi sgt, %94, %95 : vector<8x8x4xi32>
    %97 = arith.andi %93, %96 : vector<8x8x4xi1>
    %cst_38 = arith.constant 0.000000e+00 : f32
    %98 = vector.broadcast %cst_38 : f32 to vector<8x8x4xf32>
    %99 = arith.select %97, %90, %98 : vector<8x8x4xi1>, vector<8x8x4xf32>
    %c0_i32_39 = arith.constant 0 : i32
    %100 = arith.cmpi sgt, %arg1, %c0_i32_39 : i32
    %cst_40 = arith.constant 0.000000e+00 : f32
    %101 = vector.broadcast %cst_40 : f32 to vector<8x8x4xf32>
    %102 = arith.select %100, %99, %101 : vector<8x8x4xf32>
    %c0_41 = arith.constant 0 : index
    %c0_42 = arith.constant 0 : index
    %c0_43 = arith.constant 0 : index
    %c0_44 = arith.constant 0 : index
    %c0_45 = arith.constant 0 : index
    %c0_46 = arith.constant 0 : index
    %103 = vector.load %arg12[%c0_41, %c0_42, %c0_43, %c0_44, %c0_45, %c0_46] : memref<1x1x8x8x8x4xf32, #tpu.memory_space<vmem>>, vector<1x1x1x8x8x4xf32>
    %104 = vector.shape_cast %103 : vector<1x1x1x8x8x4xf32> to vector<8x8x4xf32>
    %105 = vector.shape_cast %102 : vector<8x8x4xf32> to vector<1x1x1x8x8x4xf32>
    tpu.vector_store %arg12[%c0_41, %c0_42, %c0_43, %c0_44, %c0_45, %c0_46], %105 {strides = array<i32>} : memref<1x1x8x8x8x4xf32, #tpu.memory_space<vmem>>, vector<1x1x1x8x8x4xf32>,
    %cst_47 = arith.constant 0.000000e+00 : f32
    %106 = vector.broadcast %cst_47 : f32 to vector<8x8x8xf32>
    %107 = vector.extract_strided_slice %1 {offsets = [0, 1, 0], sizes = [8, 8, 8], strides = [1, 1, 1]} : vector<9x9x8xf32> to vector<8x8x8xf32>
    %c25 = arith.constant 25 : index
    %c0_48 = arith.constant 0 : index
    %108 = vector.load %arg4[%c25, %c0_48] : memref<27x8xf32, #tpu.memory_space<vmem>>, vector<1x8xf32>
    %109 = vector.shape_cast %108 : vector<1x8xf32> to vector<8xf32>
    %110 = vector.shape_cast %109 : vector<8xf32> to vector<1x1x8xf32>
    %111 = vector.broadcast %110 : vector<1x1x8xf32> to vector<8x8x8xf32>
    %112 = arith.mulf %107, %111 : vector<8x8x8xf32>
    %113 = arith.addf %106, %112 : vector<8x8x8xf32>
    %114 = vector.extract_strided_slice %1 {offsets = [1, 1, 0], sizes = [8, 8, 8], strides = [1, 1, 1]} : vector<9x9x8xf32> to vector<8x8x8xf32>
    %c19 = arith.constant 19 : index
    %c0_49 = arith.constant 0 : index
    %115 = vector.load %arg4[%c19, %c0_49] : memref<27x8xf32, #tpu.memory_space<vmem>>, vector<1x8xf32>
    %116 = vector.shape_cast %115 : vector<1x8xf32> to vector<8xf32>
    %117 = vector.shape_cast %116 : vector<8xf32> to vector<1x1x8xf32>
    %118 = vector.broadcast %117 : vector<1x1x8xf32> to vector<8x8x8xf32>
    %119 = arith.mulf %114, %118 : vector<8x8x8xf32>
    %120 = arith.addf %113, %119 : vector<8x8x8xf32>
    %121 = vector.extract_strided_slice %3 {offsets = [0, 1, 0], sizes = [8, 8, 8], strides = [1, 1, 1]} : vector<9x9x8xf32> to vector<8x8x8xf32>
    %c7 = arith.constant 7 : index
    %c0_50 = arith.constant 0 : index
    %122 = vector.load %arg4[%c7, %c0_50] : memref<27x8xf32, #tpu.memory_space<vmem>>, vector<1x8xf32>
    %123 = vector.shape_cast %122 : vector<1x8xf32> to vector<8xf32>
    %124 = vector.shape_cast %123 : vector<8xf32> to vector<1x1x8xf32>
    %125 = vector.broadcast %124 : vector<1x1x8xf32> to vector<8x8x8xf32>
    %126 = arith.mulf %121, %125 : vector<8x8x8xf32>
    %127 = arith.addf %120, %126 : vector<8x8x8xf32>
    %128 = vector.extract_strided_slice %3 {offsets = [1, 1, 0], sizes = [8, 8, 8], strides = [1, 1, 1]} : vector<9x9x8xf32> to vector<8x8x8xf32>
    %c1 = arith.constant 1 : index
    %c0_51 = arith.constant 0 : index
    %129 = vector.load %arg4[%c1, %c0_51] : memref<27x8xf32, #tpu.memory_space<vmem>>, vector<1x8xf32>
    %130 = vector.shape_cast %129 : vector<1x8xf32> to vector<8xf32>
    %131 = vector.shape_cast %130 : vector<8xf32> to vector<1x1x8xf32>
    %132 = vector.broadcast %131 : vector<1x1x8xf32> to vector<8x8x8xf32>
    %133 = arith.mulf %128, %132 : vector<8x8x8xf32>
    %134 = arith.addf %127, %133 : vector<8x8x8xf32>
    %135 = vector.shape_cast %5 : vector<1x8xf32> to vector<1x1x8xf32>
    %136 = vector.broadcast %135 : vector<1x1x8xf32> to vector<8x8x8xf32>
    %137 = arith.subf %134, %136 : vector<8x8x8xf32>
    %138 = vector.shape_cast %7 : vector<1x8xf32> to vector<1x1x8xf32>
    %139 = vector.broadcast %138 : vector<1x1x8xf32> to vector<8x8x8xf32>
    %140 = arith.mulf %137, %139 : vector<8x8x8xf32>
    %141 = vector.shape_cast %140 : vector<8x8x8xf32> to vector<64x8xf32>
    %c0_52 = arith.constant 0 : index
    %c0_53 = arith.constant 0 : index
    %142 = vector.load %arg7[%c0_52, %c0_53] : memref<8x16xf32, #tpu.memory_space<vmem>>, vector<8x16xf32>
    %cst_54 = arith.constant dense<0.000000e+00> : vector<64x16xf32>
    %143 = tpu.matmul %141, %142, %cst_54 {dimension_numbers = #tpu.dot_dimension_numbers<[1], [0], [0], [1], [0, 0, 1, 1], [], []>} : vector<64x8xf32>, vector<8x16xf32>, vector<64x16xf32> -> vector<64x16xf32>
    %c0_55 = arith.constant 0 : index
    %c0_56 = arith.constant 0 : index
    %144 = vector.load %arg8[%c0_55, %c0_56] : memref<1x16xf32, #tpu.memory_space<vmem>>, vector<1x16xf32>
    %145 = vector.broadcast %144 : vector<1x16xf32> to vector<64x16xf32>
    %146 = arith.addf %143, %145 : vector<64x16xf32>
    %cst_57 = arith.constant 5.000000e-01 : f32
    %147 = vector.broadcast %cst_57 : f32 to vector<64x16xf32>
    %148 = arith.mulf %147, %146 : vector<64x16xf32>
    %cst_58 = arith.constant 1.41421354 : f32
    %149 = vector.broadcast %cst_58 : f32 to vector<64x16xf32>
    %150 = arith.divf %146, %149 : vector<64x16xf32>
    %151 = math.erf %150 : vector<64x16xf32>
    %cst_59 = arith.constant 1.000000e+00 : f32
    %152 = vector.broadcast %cst_59 : f32 to vector<64x16xf32>
    %153 = arith.addf %152, %151 : vector<64x16xf32>
    %154 = arith.mulf %148, %153 : vector<64x16xf32>
    %c0_60 = arith.constant 0 : index
    %c0_61 = arith.constant 0 : index
    %155 = vector.load %arg9[%c0_60, %c0_61] : memref<16x4xf32, #tpu.memory_space<vmem>>, vector<16x4xf32>
    %cst_62 = arith.constant dense<0.000000e+00> : vector<64x4xf32>
    %156 = tpu.matmul %154, %155, %cst_62 {dimension_numbers = #tpu.dot_dimension_numbers<[1], [0], [0], [1], [0, 0, 1, 1], [], []>} : vector<64x16xf32>, vector<16x4xf32>, vector<64x4xf32> -> vector<64x4xf32>
    %c0_63 = arith.constant 0 : index
    %c0_64 = arith.constant 0 : index
    %157 = vector.load %arg10[%c0_63, %c0_64] : memref<1x4xf32, #tpu.memory_space<vmem>>, vector<1x4xf32>
    %158 = vector.broadcast %157 : vector<1x4xf32> to vector<64x4xf32>
    %159 = arith.addf %156, %158 : vector<64x4xf32>
    %160 = vector.shape_cast %159 : vector<64x4xf32> to vector<8x8x4xf32>
    %161 = tpu.iota {dimensions = array<i32: 0>} : vector<8x8x4xi32>
    %c0_i32_65 = arith.constant 0 : i32
    %162 = vector.broadcast %c0_i32_65 : i32 to vector<8x8x4xi32>
    %163 = arith.cmpi sgt, %161, %162 : vector<8x8x4xi32>
    %cst_66 = arith.constant 0.000000e+00 : f32
    %164 = vector.broadcast %cst_66 : f32 to vector<8x8x4xf32>
    %165 = arith.select %163, %160, %164 : vector<8x8x4xi1>, vector<8x8x4xf32>
    %c0_i32_67 = arith.constant 0 : i32
    %166 = arith.cmpi sgt, %arg1, %c0_i32_67 : i32
    %cst_68 = arith.constant 0.000000e+00 : f32
    %167 = vector.broadcast %cst_68 : f32 to vector<8x8x4xf32>
    %168 = arith.select %166, %165, %167 : vector<8x8x4xf32>
    %c0_69 = arith.constant 0 : index
    %c0_70 = arith.constant 0 : index
    %c1_71 = arith.constant 1 : index
    %c0_72 = arith.constant 0 : index
    %c0_73 = arith.constant 0 : index
    %c0_74 = arith.constant 0 : index
    %169 = vector.load %arg12[%c0_69, %c0_70, %c1_71, %c0_72, %c0_73, %c0_74] : memref<1x1x8x8x8x4xf32, #tpu.memory_space<vmem>>, vector<1x1x1x8x8x4xf32>
    %170 = vector.shape_cast %169 : vector<1x1x1x8x8x4xf32> to vector<8x8x4xf32>
    %171 = vector.shape_cast %168 : vector<8x8x4xf32> to vector<1x1x1x8x8x4xf32>
    tpu.vector_store %arg12[%c0_69, %c0_70, %c1_71, %c0_72, %c0_73, %c0_74], %171 {strides = array<i32>} : memref<1x1x8x8x8x4xf32, #tpu.memory_space<vmem>>, vector<1x1x1x8x8x4xf32>,
    %cst_75 = arith.constant 0.000000e+00 : f32
    %172 = vector.broadcast %cst_75 : f32 to vector<8x8x8xf32>
    %173 = vector.extract_strided_slice %1 {offsets = [1, 0, 0], sizes = [8, 8, 8], strides = [1, 1, 1]} : vector<9x9x8xf32> to vector<8x8x8xf32>
    %c23 = arith.constant 23 : index
    %c0_76 = arith.constant 0 : index
    %174 = vector.load %arg4[%c23, %c0_76] : memref<27x8xf32, #tpu.memory_space<vmem>>, vector<1x8xf32>
    %175 = vector.shape_cast %174 : vector<1x8xf32> to vector<8xf32>
    %176 = vector.shape_cast %175 : vector<8xf32> to vector<1x1x8xf32>
    %177 = vector.broadcast %176 : vector<1x1x8xf32> to vector<8x8x8xf32>
    %178 = arith.mulf %173, %177 : vector<8x8x8xf32>
    %179 = arith.addf %172, %178 : vector<8x8x8xf32>
    %180 = vector.extract_strided_slice %1 {offsets = [1, 1, 0], sizes = [8, 8, 8], strides = [1, 1, 1]} : vector<9x9x8xf32> to vector<8x8x8xf32>
    %c21 = arith.constant 21 : index
    %c0_77 = arith.constant 0 : index
    %181 = vector.load %arg4[%c21, %c0_77] : memref<27x8xf32, #tpu.memory_space<vmem>>, vector<1x8xf32>
    %182 = vector.shape_cast %181 : vector<1x8xf32> to vector<8xf32>
    %183 = vector.shape_cast %182 : vector<8xf32> to vector<1x1x8xf32>
    %184 = vector.broadcast %183 : vector<1x1x8xf32> to vector<8x8x8xf32>
    %185 = arith.mulf %180, %184 : vector<8x8x8xf32>
    %186 = arith.addf %179, %185 : vector<8x8x8xf32>
    %187 = vector.extract_strided_slice %3 {offsets = [1, 0, 0], sizes = [8, 8, 8], strides = [1, 1, 1]} : vector<9x9x8xf32> to vector<8x8x8xf32>
    %c5 = arith.constant 5 : index
    %c0_78 = arith.constant 0 : index
    %188 = vector.load %arg4[%c5, %c0_78] : memref<27x8xf32, #tpu.memory_space<vmem>>, vector<1x8xf32>
    %189 = vector.shape_cast %188 : vector<1x8xf32> to vector<8xf32>
    %190 = vector.shape_cast %189 : vector<8xf32> to vector<1x1x8xf32>
    %191 = vector.broadcast %190 : vector<1x1x8xf32> to vector<8x8x8xf32>
    %192 = arith.mulf %187, %191 : vector<8x8x8xf32>
    %193 = arith.addf %186, %192 : vector<8x8x8xf32>
    %194 = vector.extract_strided_slice %3 {offsets = [1, 1, 0], sizes = [8, 8, 8], strides = [1, 1, 1]} : vector<9x9x8xf32> to vector<8x8x8xf32>
    %c3 = arith.constant 3 : index
    %c0_79 = arith.constant 0 : index
    %195 = vector.load %arg4[%c3, %c0_79] : memref<27x8xf32, #tpu.memory_space<vmem>>, vector<1x8xf32>
    %196 = vector.shape_cast %195 : vector<1x8xf32> to vector<8xf32>
    %197 = vector.shape_cast %196 : vector<8xf32> to vector<1x1x8xf32>
    %198 = vector.broadcast %197 : vector<1x1x8xf32> to vector<8x8x8xf32>
    %199 = arith.mulf %194, %198 : vector<8x8x8xf32>
    %200 = arith.addf %193, %199 : vector<8x8x8xf32>
    %201 = vector.shape_cast %5 : vector<1x8xf32> to vector<1x1x8xf32>
    %202 = vector.broadcast %201 : vector<1x1x8xf32> to vector<8x8x8xf32>
    %203 = arith.subf %200, %202 : vector<8x8x8xf32>
    %204 = vector.shape_cast %7 : vector<1x8xf32> to vector<1x1x8xf32>
    %205 = vector.broadcast %204 : vector<1x1x8xf32> to vector<8x8x8xf32>
    %206 = arith.mulf %203, %205 : vector<8x8x8xf32>
    %207 = vector.shape_cast %206 : vector<8x8x8xf32> to vector<64x8xf32>
    %c0_80 = arith.constant 0 : index
    %c0_81 = arith.constant 0 : index
    %208 = vector.load %arg7[%c0_80, %c0_81] : memref<8x16xf32, #tpu.memory_space<vmem>>, vector<8x16xf32>
    %cst_82 = arith.constant dense<0.000000e+00> : vector<64x16xf32>
    %209 = tpu.matmul %207, %208, %cst_82 {dimension_numbers = #tpu.dot_dimension_numbers<[1], [0], [0], [1], [0, 0, 1, 1], [], []>} : vector<64x8xf32>, vector<8x16xf32>, vector<64x16xf32> -> vector<64x16xf32>
    %c0_83 = arith.constant 0 : index
    %c0_84 = arith.constant 0 : index
    %210 = vector.load %arg8[%c0_83, %c0_84] : memref<1x16xf32, #tpu.memory_space<vmem>>, vector<1x16xf32>
    %211 = vector.broadcast %210 : vector<1x16xf32> to vector<64x16xf32>
    %212 = arith.addf %209, %211 : vector<64x16xf32>
    %cst_85 = arith.constant 5.000000e-01 : f32
    %213 = vector.broadcast %cst_85 : f32 to vector<64x16xf32>
    %214 = arith.mulf %213, %212 : vector<64x16xf32>
    %cst_86 = arith.constant 1.41421354 : f32
    %215 = vector.broadcast %cst_86 : f32 to vector<64x16xf32>
    %216 = arith.divf %212, %215 : vector<64x16xf32>
    %217 = math.erf %216 : vector<64x16xf32>
    %cst_87 = arith.constant 1.000000e+00 : f32
    %218 = vector.broadcast %cst_87 : f32 to vector<64x16xf32>
    %219 = arith.addf %218, %217 : vector<64x16xf32>
    %220 = arith.mulf %214, %219 : vector<64x16xf32>
    %c0_88 = arith.constant 0 : index
    %c0_89 = arith.constant 0 : index
    %221 = vector.load %arg9[%c0_88, %c0_89] : memref<16x4xf32, #tpu.memory_space<vmem>>, vector<16x4xf32>
    %cst_90 = arith.constant dense<0.000000e+00> : vector<64x4xf32>
    %222 = tpu.matmul %220, %221, %cst_90 {dimension_numbers = #tpu.dot_dimension_numbers<[1], [0], [0], [1], [0, 0, 1, 1], [], []>} : vector<64x16xf32>, vector<16x4xf32>, vector<64x4xf32> -> vector<64x4xf32>
    %c0_91 = arith.constant 0 : index
    %c0_92 = arith.constant 0 : index
    %223 = vector.load %arg10[%c0_91, %c0_92] : memref<1x4xf32, #tpu.memory_space<vmem>>, vector<1x4xf32>
    %224 = vector.broadcast %223 : vector<1x4xf32> to vector<64x4xf32>
    %225 = arith.addf %222, %224 : vector<64x4xf32>
    %226 = vector.shape_cast %225 : vector<64x4xf32> to vector<8x8x4xf32>
    %227 = tpu.iota {dimensions = array<i32: 1>} : vector<8x8x4xi32>
    %c0_i32_93 = arith.constant 0 : i32
    %228 = vector.broadcast %c0_i32_93 : i32 to vector<8x8x4xi32>
    %229 = arith.cmpi sgt, %227, %228 : vector<8x8x4xi32>
    %cst_94 = arith.constant 0.000000e+00 : f32
    %230 = vector.broadcast %cst_94 : f32 to vector<8x8x4xf32>
    %231 = arith.select %229, %226, %230 : vector<8x8x4xi1>, vector<8x8x4xf32>
    %c0_i32_95 = arith.constant 0 : i32
    %232 = arith.cmpi sgt, %arg1, %c0_i32_95 : i32
    %cst_96 = arith.constant 0.000000e+00 : f32
    %233 = vector.broadcast %cst_96 : f32 to vector<8x8x4xf32>
    %234 = arith.select %232, %231, %233 : vector<8x8x4xf32>
    %c0_97 = arith.constant 0 : index
    %c0_98 = arith.constant 0 : index
    %c2_99 = arith.constant 2 : index
    %c0_100 = arith.constant 0 : index
    %c0_101 = arith.constant 0 : index
    %c0_102 = arith.constant 0 : index
    %235 = vector.load %arg12[%c0_97, %c0_98, %c2_99, %c0_100, %c0_101, %c0_102] : memref<1x1x8x8x8x4xf32, #tpu.memory_space<vmem>>, vector<1x1x1x8x8x4xf32>
    %236 = vector.shape_cast %235 : vector<1x1x1x8x8x4xf32> to vector<8x8x4xf32>
    %237 = vector.shape_cast %234 : vector<8x8x4xf32> to vector<1x1x1x8x8x4xf32>
    tpu.vector_store %arg12[%c0_97, %c0_98, %c2_99, %c0_100, %c0_101, %c0_102], %237 {strides = array<i32>} : memref<1x1x8x8x8x4xf32, #tpu.memory_space<vmem>>, vector<1x1x1x8x8x4xf32>,
    %cst_103 = arith.constant 0.000000e+00 : f32
    %238 = vector.broadcast %cst_103 : f32 to vector<8x8x8xf32>
    %239 = vector.extract_strided_slice %1 {offsets = [1, 1, 0], sizes = [8, 8, 8], strides = [1, 1, 1]} : vector<9x9x8xf32> to vector<8x8x8xf32>
    %c22 = arith.constant 22 : index
    %c0_104 = arith.constant 0 : index
    %240 = vector.load %arg4[%c22, %c0_104] : memref<27x8xf32, #tpu.memory_space<vmem>>, vector<1x8xf32>
    %241 = vector.shape_cast %240 : vector<1x8xf32> to vector<8xf32>
    %242 = vector.shape_cast %241 : vector<8xf32> to vector<1x1x8xf32>
    %243 = vector.broadcast %242 : vector<1x1x8xf32> to vector<8x8x8xf32>
    %244 = arith.mulf %239, %243 : vector<8x8x8xf32>
    %245 = arith.addf %238, %244 : vector<8x8x8xf32>
    %246 = vector.extract_strided_slice %3 {offsets = [1, 1, 0], sizes = [8, 8, 8], strides = [1, 1, 1]} : vector<9x9x8xf32> to vector<8x8x8xf32>
    %c4 = arith.constant 4 : index
    %c0_105 = arith.constant 0 : index
    %247 = vector.load %arg4[%c4, %c0_105] : memref<27x8xf32, #tpu.memory_space<vmem>>, vector<1x8xf32>
    %248 = vector.shape_cast %247 : vector<1x8xf32> to vector<8xf32>
    %249 = vector.shape_cast %248 : vector<8xf32> to vector<1x1x8xf32>
    %250 = vector.broadcast %249 : vector<1x1x8xf32> to vector<8x8x8xf32>
    %251 = arith.mulf %246, %250 : vector<8x8x8xf32>
    %252 = arith.addf %245, %251 : vector<8x8x8xf32>
    %253 = vector.shape_cast %5 : vector<1x8xf32> to vector<1x1x8xf32>
    %254 = vector.broadcast %253 : vector<1x1x8xf32> to vector<8x8x8xf32>
    %255 = arith.subf %252, %254 : vector<8x8x8xf32>
    %256 = vector.shape_cast %7 : vector<1x8xf32> to vector<1x1x8xf32>
    %257 = vector.broadcast %256 : vector<1x1x8xf32> to vector<8x8x8xf32>
    %258 = arith.mulf %255, %257 : vector<8x8x8xf32>
    %259 = vector.shape_cast %258 : vector<8x8x8xf32> to vector<64x8xf32>
    %c0_106 = arith.constant 0 : index
    %c0_107 = arith.constant 0 : index
    %260 = vector.load %arg7[%c0_106, %c0_107] : memref<8x16xf32, #tpu.memory_space<vmem>>, vector<8x16xf32>
    %cst_108 = arith.constant dense<0.000000e+00> : vector<64x16xf32>
    %261 = tpu.matmul %259, %260, %cst_108 {dimension_numbers = #tpu.dot_dimension_numbers<[1], [0], [0], [1], [0, 0, 1, 1], [], []>} : vector<64x8xf32>, vector<8x16xf32>, vector<64x16xf32> -> vector<64x16xf32>
    %c0_109 = arith.constant 0 : index
    %c0_110 = arith.constant 0 : index
    %262 = vector.load %arg8[%c0_109, %c0_110] : memref<1x16xf32, #tpu.memory_space<vmem>>, vector<1x16xf32>
    %263 = vector.broadcast %262 : vector<1x16xf32> to vector<64x16xf32>
    %264 = arith.addf %261, %263 : vector<64x16xf32>
    %cst_111 = arith.constant 5.000000e-01 : f32
    %265 = vector.broadcast %cst_111 : f32 to vector<64x16xf32>
    %266 = arith.mulf %265, %264 : vector<64x16xf32>
    %cst_112 = arith.constant 1.41421354 : f32
    %267 = vector.broadcast %cst_112 : f32 to vector<64x16xf32>
    %268 = arith.divf %264, %267 : vector<64x16xf32>
    %269 = math.erf %268 : vector<64x16xf32>
    %cst_113 = arith.constant 1.000000e+00 : f32
    %270 = vector.broadcast %cst_113 : f32 to vector<64x16xf32>
    %271 = arith.addf %270, %269 : vector<64x16xf32>
    %272 = arith.mulf %266, %271 : vector<64x16xf32>
    %c0_114 = arith.constant 0 : index
    %c0_115 = arith.constant 0 : index
    %273 = vector.load %arg9[%c0_114, %c0_115] : memref<16x4xf32, #tpu.memory_space<vmem>>, vector<16x4xf32>
    %cst_116 = arith.constant dense<0.000000e+00> : vector<64x4xf32>
    %274 = tpu.matmul %272, %273, %cst_116 {dimension_numbers = #tpu.dot_dimension_numbers<[1], [0], [0], [1], [0, 0, 1, 1], [], []>} : vector<64x16xf32>, vector<16x4xf32>, vector<64x4xf32> -> vector<64x4xf32>
    %c0_117 = arith.constant 0 : index
    %c0_118 = arith.constant 0 : index
    %275 = vector.load %arg10[%c0_117, %c0_118] : memref<1x4xf32, #tpu.memory_space<vmem>>, vector<1x4xf32>
    %276 = vector.broadcast %275 : vector<1x4xf32> to vector<64x4xf32>
    %277 = arith.addf %274, %276 : vector<64x4xf32>
    %278 = vector.shape_cast %277 : vector<64x4xf32> to vector<8x8x4xf32>
    %c0_i32_119 = arith.constant 0 : i32
    %279 = arith.cmpi sgt, %arg1, %c0_i32_119 : i32
    %cst_120 = arith.constant 0.000000e+00 : f32
    %280 = vector.broadcast %cst_120 : f32 to vector<8x8x4xf32>
    %281 = arith.select %279, %278, %280 : vector<8x8x4xf32>
    %c0_121 = arith.constant 0 : index
    %c0_122 = arith.constant 0 : index
    %c3_123 = arith.constant 3 : index
    %c0_124 = arith.constant 0 : index
    %c0_125 = arith.constant 0 : index
    %c0_126 = arith.constant 0 : index
    %282 = vector.load %arg12[%c0_121, %c0_122, %c3_123, %c0_124, %c0_125, %c0_126] : memref<1x1x8x8x8x4xf32, #tpu.memory_space<vmem>>, vector<1x1x1x8x8x4xf32>
    %283 = vector.shape_cast %282 : vector<1x1x1x8x8x4xf32> to vector<8x8x4xf32>
    %284 = vector.shape_cast %281 : vector<8x8x4xf32> to vector<1x1x1x8x8x4xf32>
    tpu.vector_store %arg12[%c0_121, %c0_122, %c3_123, %c0_124, %c0_125, %c0_126], %284 {strides = array<i32>} : memref<1x1x8x8x8x4xf32, #tpu.memory_space<vmem>>, vector<1x1x1x8x8x4xf32>,
    %cst_127 = arith.constant 0.000000e+00 : f32
    %285 = vector.broadcast %cst_127 : f32 to vector<8x8x8xf32>
    %286 = vector.extract_strided_slice %3 {offsets = [0, 0, 0], sizes = [8, 8, 8], strides = [1, 1, 1]} : vector<9x9x8xf32> to vector<8x8x8xf32>
    %c17 = arith.constant 17 : index
    %c0_128 = arith.constant 0 : index
    %287 = vector.load %arg4[%c17, %c0_128] : memref<27x8xf32, #tpu.memory_space<vmem>>, vector<1x8xf32>
    %288 = vector.shape_cast %287 : vector<1x8xf32> to vector<8xf32>
    %289 = vector.shape_cast %288 : vector<8xf32> to vector<1x1x8xf32>
    %290 = vector.broadcast %289 : vector<1x1x8xf32> to vector<8x8x8xf32>
    %291 = arith.mulf %286, %290 : vector<8x8x8xf32>
    %292 = arith.addf %285, %291 : vector<8x8x8xf32>
    %293 = vector.extract_strided_slice %3 {offsets = [0, 1, 0], sizes = [8, 8, 8], strides = [1, 1, 1]} : vector<9x9x8xf32> to vector<8x8x8xf32>
    %c15 = arith.constant 15 : index
    %c0_129 = arith.constant 0 : index
    %294 = vector.load %arg4[%c15, %c0_129] : memref<27x8xf32, #tpu.memory_space<vmem>>, vector<1x8xf32>
    %295 = vector.shape_cast %294 : vector<1x8xf32> to vector<8xf32>
    %296 = vector.shape_cast %295 : vector<8xf32> to vector<1x1x8xf32>
    %297 = vector.broadcast %296 : vector<1x1x8xf32> to vector<8x8x8xf32>
    %298 = arith.mulf %293, %297 : vector<8x8x8xf32>
    %299 = arith.addf %292, %298 : vector<8x8x8xf32>
    %300 = vector.extract_strided_slice %3 {offsets = [1, 0, 0], sizes = [8, 8, 8], strides = [1, 1, 1]} : vector<9x9x8xf32> to vector<8x8x8xf32>
    %c11 = arith.constant 11 : index
    %c0_130 = arith.constant 0 : index
    %301 = vector.load %arg4[%c11, %c0_130] : memref<27x8xf32, #tpu.memory_space<vmem>>, vector<1x8xf32>
    %302 = vector.shape_cast %301 : vector<1x8xf32> to vector<8xf32>
    %303 = vector.shape_cast %302 : vector<8xf32> to vector<1x1x8xf32>
    %304 = vector.broadcast %303 : vector<1x1x8xf32> to vector<8x8x8xf32>
    %305 = arith.mulf %300, %304 : vector<8x8x8xf32>
    %306 = arith.addf %299, %305 : vector<8x8x8xf32>
    %307 = vector.extract_strided_slice %3 {offsets = [1, 1, 0], sizes = [8, 8, 8], strides = [1, 1, 1]} : vector<9x9x8xf32> to vector<8x8x8xf32>
    %c9 = arith.constant 9 : index
    %c0_131 = arith.constant 0 : index
    %308 = vector.load %arg4[%c9, %c0_131] : memref<27x8xf32, #tpu.memory_space<vmem>>, vector<1x8xf32>
    %309 = vector.shape_cast %308 : vector<1x8xf32> to vector<8xf32>
    %310 = vector.shape_cast %309 : vector<8xf32> to vector<1x1x8xf32>
    %311 = vector.broadcast %310 : vector<1x1x8xf32> to vector<8x8x8xf32>
    %312 = arith.mulf %307, %311 : vector<8x8x8xf32>
    %313 = arith.addf %306, %312 : vector<8x8x8xf32>
    %314 = vector.shape_cast %5 : vector<1x8xf32> to vector<1x1x8xf32>
    %315 = vector.broadcast %314 : vector<1x1x8xf32> to vector<8x8x8xf32>
    %316 = arith.subf %313, %315 : vector<8x8x8xf32>
    %317 = vector.shape_cast %7 : vector<1x8xf32> to vector<1x1x8xf32>
    %318 = vector.broadcast %317 : vector<1x1x8xf32> to vector<8x8x8xf32>
    %319 = arith.mulf %316, %318 : vector<8x8x8xf32>
    %320 = vector.shape_cast %319 : vector<8x8x8xf32> to vector<64x8xf32>
    %c0_132 = arith.constant 0 : index
    %c0_133 = arith.constant 0 : index
    %321 = vector.load %arg7[%c0_132, %c0_133] : memref<8x16xf32, #tpu.memory_space<vmem>>, vector<8x16xf32>
    %cst_134 = arith.constant dense<0.000000e+00> : vector<64x16xf32>
    %322 = tpu.matmul %320, %321, %cst_134 {dimension_numbers = #tpu.dot_dimension_numbers<[1], [0], [0], [1], [0, 0, 1, 1], [], []>} : vector<64x8xf32>, vector<8x16xf32>, vector<64x16xf32> -> vector<64x16xf32>
    %c0_135 = arith.constant 0 : index
    %c0_136 = arith.constant 0 : index
    %323 = vector.load %arg8[%c0_135, %c0_136] : memref<1x16xf32, #tpu.memory_space<vmem>>, vector<1x16xf32>
    %324 = vector.broadcast %323 : vector<1x16xf32> to vector<64x16xf32>
    %325 = arith.addf %322, %324 : vector<64x16xf32>
    %cst_137 = arith.constant 5.000000e-01 : f32
    %326 = vector.broadcast %cst_137 : f32 to vector<64x16xf32>
    %327 = arith.mulf %326, %325 : vector<64x16xf32>
    %cst_138 = arith.constant 1.41421354 : f32
    %328 = vector.broadcast %cst_138 : f32 to vector<64x16xf32>
    %329 = arith.divf %325, %328 : vector<64x16xf32>
    %330 = math.erf %329 : vector<64x16xf32>
    %cst_139 = arith.constant 1.000000e+00 : f32
    %331 = vector.broadcast %cst_139 : f32 to vector<64x16xf32>
    %332 = arith.addf %331, %330 : vector<64x16xf32>
    %333 = arith.mulf %327, %332 : vector<64x16xf32>
    %c0_140 = arith.constant 0 : index
    %c0_141 = arith.constant 0 : index
    %334 = vector.load %arg9[%c0_140, %c0_141] : memref<16x4xf32, #tpu.memory_space<vmem>>, vector<16x4xf32>
    %cst_142 = arith.constant dense<0.000000e+00> : vector<64x4xf32>
    %335 = tpu.matmul %333, %334, %cst_142 {dimension_numbers = #tpu.dot_dimension_numbers<[1], [0], [0], [1], [0, 0, 1, 1], [], []>} : vector<64x16xf32>, vector<16x4xf32>, vector<64x4xf32> -> vector<64x4xf32>
    %c0_143 = arith.constant 0 : index
    %c0_144 = arith.constant 0 : index
    %336 = vector.load %arg10[%c0_143, %c0_144] : memref<1x4xf32, #tpu.memory_space<vmem>>, vector<1x4xf32>
    %337 = vector.broadcast %336 : vector<1x4xf32> to vector<64x4xf32>
    %338 = arith.addf %335, %337 : vector<64x4xf32>
    %339 = vector.shape_cast %338 : vector<64x4xf32> to vector<8x8x4xf32>
    %340 = tpu.iota {dimensions = array<i32: 0>} : vector<8x8x4xi32>
    %c0_i32_145 = arith.constant 0 : i32
    %341 = vector.broadcast %c0_i32_145 : i32 to vector<8x8x4xi32>
    %342 = arith.cmpi sgt, %340, %341 : vector<8x8x4xi32>
    %343 = tpu.iota {dimensions = array<i32: 1>} : vector<8x8x4xi32>
    %c0_i32_146 = arith.constant 0 : i32
    %344 = vector.broadcast %c0_i32_146 : i32 to vector<8x8x4xi32>
    %345 = arith.cmpi sgt, %343, %344 : vector<8x8x4xi32>
    %346 = arith.andi %342, %345 : vector<8x8x4xi1>
    %cst_147 = arith.constant 0.000000e+00 : f32
    %347 = vector.broadcast %cst_147 : f32 to vector<8x8x4xf32>
    %348 = arith.select %346, %339, %347 : vector<8x8x4xi1>, vector<8x8x4xf32>
    %c0_148 = arith.constant 0 : index
    %c0_149 = arith.constant 0 : index
    %c4_150 = arith.constant 4 : index
    %c0_151 = arith.constant 0 : index
    %c0_152 = arith.constant 0 : index
    %c0_153 = arith.constant 0 : index
    %349 = vector.load %arg12[%c0_148, %c0_149, %c4_150, %c0_151, %c0_152, %c0_153] : memref<1x1x8x8x8x4xf32, #tpu.memory_space<vmem>>, vector<1x1x1x8x8x4xf32>
    %350 = vector.shape_cast %349 : vector<1x1x1x8x8x4xf32> to vector<8x8x4xf32>
    %351 = vector.shape_cast %348 : vector<8x8x4xf32> to vector<1x1x1x8x8x4xf32>
    tpu.vector_store %arg12[%c0_148, %c0_149, %c4_150, %c0_151, %c0_152, %c0_153], %351 {strides = array<i32>} : memref<1x1x8x8x8x4xf32, #tpu.memory_space<vmem>>, vector<1x1x1x8x8x4xf32>,
    %cst_154 = arith.constant 0.000000e+00 : f32
    %352 = vector.broadcast %cst_154 : f32 to vector<8x8x8xf32>
    %353 = vector.extract_strided_slice %3 {offsets = [0, 1, 0], sizes = [8, 8, 8], strides = [1, 1, 1]} : vector<9x9x8xf32> to vector<8x8x8xf32>
    %c16 = arith.constant 16 : index
    %c0_155 = arith.constant 0 : index
    %354 = vector.load %arg4[%c16, %c0_155] : memref<27x8xf32, #tpu.memory_space<vmem>>, vector<1x8xf32>
    %355 = vector.shape_cast %354 : vector<1x8xf32> to vector<8xf32>
    %356 = vector.shape_cast %355 : vector<8xf32> to vector<1x1x8xf32>
    %357 = vector.broadcast %356 : vector<1x1x8xf32> to vector<8x8x8xf32>
    %358 = arith.mulf %353, %357 : vector<8x8x8xf32>
    %359 = arith.addf %352, %358 : vector<8x8x8xf32>
    %360 = vector.extract_strided_slice %3 {offsets = [1, 1, 0], sizes = [8, 8, 8], strides = [1, 1, 1]} : vector<9x9x8xf32> to vector<8x8x8xf32>
    %c10 = arith.constant 10 : index
    %c0_156 = arith.constant 0 : index
    %361 = vector.load %arg4[%c10, %c0_156] : memref<27x8xf32, #tpu.memory_space<vmem>>, vector<1x8xf32>
    %362 = vector.shape_cast %361 : vector<1x8xf32> to vector<8xf32>
    %363 = vector.shape_cast %362 : vector<8xf32> to vector<1x1x8xf32>
    %364 = vector.broadcast %363 : vector<1x1x8xf32> to vector<8x8x8xf32>
    %365 = arith.mulf %360, %364 : vector<8x8x8xf32>
    %366 = arith.addf %359, %365 : vector<8x8x8xf32>
    %367 = vector.shape_cast %5 : vector<1x8xf32> to vector<1x1x8xf32>
    %368 = vector.broadcast %367 : vector<1x1x8xf32> to vector<8x8x8xf32>
    %369 = arith.subf %366, %368 : vector<8x8x8xf32>
    %370 = vector.shape_cast %7 : vector<1x8xf32> to vector<1x1x8xf32>
    %371 = vector.broadcast %370 : vector<1x1x8xf32> to vector<8x8x8xf32>
    %372 = arith.mulf %369, %371 : vector<8x8x8xf32>
    %373 = vector.shape_cast %372 : vector<8x8x8xf32> to vector<64x8xf32>
    %c0_157 = arith.constant 0 : index
    %c0_158 = arith.constant 0 : index
    %374 = vector.load %arg7[%c0_157, %c0_158] : memref<8x16xf32, #tpu.memory_space<vmem>>, vector<8x16xf32>
    %cst_159 = arith.constant dense<0.000000e+00> : vector<64x16xf32>
    %375 = tpu.matmul %373, %374, %cst_159 {dimension_numbers = #tpu.dot_dimension_numbers<[1], [0], [0], [1], [0, 0, 1, 1], [], []>} : vector<64x8xf32>, vector<8x16xf32>, vector<64x16xf32> -> vector<64x16xf32>
    %c0_160 = arith.constant 0 : index
    %c0_161 = arith.constant 0 : index
    %376 = vector.load %arg8[%c0_160, %c0_161] : memref<1x16xf32, #tpu.memory_space<vmem>>, vector<1x16xf32>
    %377 = vector.broadcast %376 : vector<1x16xf32> to vector<64x16xf32>
    %378 = arith.addf %375, %377 : vector<64x16xf32>
    %cst_162 = arith.constant 5.000000e-01 : f32
    %379 = vector.broadcast %cst_162 : f32 to vector<64x16xf32>
    %380 = arith.mulf %379, %378 : vector<64x16xf32>
    %cst_163 = arith.constant 1.41421354 : f32
    %381 = vector.broadcast %cst_163 : f32 to vector<64x16xf32>
    %382 = arith.divf %378, %381 : vector<64x16xf32>
    %383 = math.erf %382 : vector<64x16xf32>
    %cst_164 = arith.constant 1.000000e+00 : f32
    %384 = vector.broadcast %cst_164 : f32 to vector<64x16xf32>
    %385 = arith.addf %384, %383 : vector<64x16xf32>
    %386 = arith.mulf %380, %385 : vector<64x16xf32>
    %c0_165 = arith.constant 0 : index
    %c0_166 = arith.constant 0 : index
    %387 = vector.load %arg9[%c0_165, %c0_166] : memref<16x4xf32, #tpu.memory_space<vmem>>, vector<16x4xf32>
    %cst_167 = arith.constant dense<0.000000e+00> : vector<64x4xf32>
    %388 = tpu.matmul %386, %387, %cst_167 {dimension_numbers = #tpu.dot_dimension_numbers<[1], [0], [0], [1], [0, 0, 1, 1], [], []>} : vector<64x16xf32>, vector<16x4xf32>, vector<64x4xf32> -> vector<64x4xf32>
    %c0_168 = arith.constant 0 : index
    %c0_169 = arith.constant 0 : index
    %389 = vector.load %arg10[%c0_168, %c0_169] : memref<1x4xf32, #tpu.memory_space<vmem>>, vector<1x4xf32>
    %390 = vector.broadcast %389 : vector<1x4xf32> to vector<64x4xf32>
    %391 = arith.addf %388, %390 : vector<64x4xf32>
    %392 = vector.shape_cast %391 : vector<64x4xf32> to vector<8x8x4xf32>
    %393 = tpu.iota {dimensions = array<i32: 0>} : vector<8x8x4xi32>
    %c0_i32_170 = arith.constant 0 : i32
    %394 = vector.broadcast %c0_i32_170 : i32 to vector<8x8x4xi32>
    %395 = arith.cmpi sgt, %393, %394 : vector<8x8x4xi32>
    %cst_171 = arith.constant 0.000000e+00 : f32
    %396 = vector.broadcast %cst_171 : f32 to vector<8x8x4xf32>
    %397 = arith.select %395, %392, %396 : vector<8x8x4xi1>, vector<8x8x4xf32>
    %c0_172 = arith.constant 0 : index
    %c0_173 = arith.constant 0 : index
    %c5_174 = arith.constant 5 : index
    %c0_175 = arith.constant 0 : index
    %c0_176 = arith.constant 0 : index
    %c0_177 = arith.constant 0 : index
    %398 = vector.load %arg12[%c0_172, %c0_173, %c5_174, %c0_175, %c0_176, %c0_177] : memref<1x1x8x8x8x4xf32, #tpu.memory_space<vmem>>, vector<1x1x1x8x8x4xf32>
    %399 = vector.shape_cast %398 : vector<1x1x1x8x8x4xf32> to vector<8x8x4xf32>
    %400 = vector.shape_cast %397 : vector<8x8x4xf32> to vector<1x1x1x8x8x4xf32>
    tpu.vector_store %arg12[%c0_172, %c0_173, %c5_174, %c0_175, %c0_176, %c0_177], %400 {strides = array<i32>} : memref<1x1x8x8x8x4xf32, #tpu.memory_space<vmem>>, vector<1x1x1x8x8x4xf32>,
    %cst_178 = arith.constant 0.000000e+00 : f32
    %401 = vector.broadcast %cst_178 : f32 to vector<8x8x8xf32>
    %402 = vector.extract_strided_slice %3 {offsets = [1, 0, 0], sizes = [8, 8, 8], strides = [1, 1, 1]} : vector<9x9x8xf32> to vector<8x8x8xf32>
    %c14 = arith.constant 14 : index
    %c0_179 = arith.constant 0 : index
    %403 = vector.load %arg4[%c14, %c0_179] : memref<27x8xf32, #tpu.memory_space<vmem>>, vector<1x8xf32>
    %404 = vector.shape_cast %403 : vector<1x8xf32> to vector<8xf32>
    %405 = vector.shape_cast %404 : vector<8xf32> to vector<1x1x8xf32>
    %406 = vector.broadcast %405 : vector<1x1x8xf32> to vector<8x8x8xf32>
    %407 = arith.mulf %402, %406 : vector<8x8x8xf32>
    %408 = arith.addf %401, %407 : vector<8x8x8xf32>
    %409 = vector.extract_strided_slice %3 {offsets = [1, 1, 0], sizes = [8, 8, 8], strides = [1, 1, 1]} : vector<9x9x8xf32> to vector<8x8x8xf32>
    %c12 = arith.constant 12 : index
    %c0_180 = arith.constant 0 : index
    %410 = vector.load %arg4[%c12, %c0_180] : memref<27x8xf32, #tpu.memory_space<vmem>>, vector<1x8xf32>
    %411 = vector.shape_cast %410 : vector<1x8xf32> to vector<8xf32>
    %412 = vector.shape_cast %411 : vector<8xf32> to vector<1x1x8xf32>
    %413 = vector.broadcast %412 : vector<1x1x8xf32> to vector<8x8x8xf32>
    %414 = arith.mulf %409, %413 : vector<8x8x8xf32>
    %415 = arith.addf %408, %414 : vector<8x8x8xf32>
    %416 = vector.shape_cast %5 : vector<1x8xf32> to vector<1x1x8xf32>
    %417 = vector.broadcast %416 : vector<1x1x8xf32> to vector<8x8x8xf32>
    %418 = arith.subf %415, %417 : vector<8x8x8xf32>
    %419 = vector.shape_cast %7 : vector<1x8xf32> to vector<1x1x8xf32>
    %420 = vector.broadcast %419 : vector<1x1x8xf32> to vector<8x8x8xf32>
    %421 = arith.mulf %418, %420 : vector<8x8x8xf32>
    %422 = vector.shape_cast %421 : vector<8x8x8xf32> to vector<64x8xf32>
    %c0_181 = arith.constant 0 : index
    %c0_182 = arith.constant 0 : index
    %423 = vector.load %arg7[%c0_181, %c0_182] : memref<8x16xf32, #tpu.memory_space<vmem>>, vector<8x16xf32>
    %cst_183 = arith.constant dense<0.000000e+00> : vector<64x16xf32>
    %424 = tpu.matmul %422, %423, %cst_183 {dimension_numbers = #tpu.dot_dimension_numbers<[1], [0], [0], [1], [0, 0, 1, 1], [], []>} : vector<64x8xf32>, vector<8x16xf32>, vector<64x16xf32> -> vector<64x16xf32>
    %c0_184 = arith.constant 0 : index
    %c0_185 = arith.constant 0 : index
    %425 = vector.load %arg8[%c0_184, %c0_185] : memref<1x16xf32, #tpu.memory_space<vmem>>, vector<1x16xf32>
    %426 = vector.broadcast %425 : vector<1x16xf32> to vector<64x16xf32>
    %427 = arith.addf %424, %426 : vector<64x16xf32>
    %cst_186 = arith.constant 5.000000e-01 : f32
    %428 = vector.broadcast %cst_186 : f32 to vector<64x16xf32>
    %429 = arith.mulf %428, %427 : vector<64x16xf32>
    %cst_187 = arith.constant 1.41421354 : f32
    %430 = vector.broadcast %cst_187 : f32 to vector<64x16xf32>
    %431 = arith.divf %427, %430 : vector<64x16xf32>
    %432 = math.erf %431 : vector<64x16xf32>
    %cst_188 = arith.constant 1.000000e+00 : f32
    %433 = vector.broadcast %cst_188 : f32 to vector<64x16xf32>
    %434 = arith.addf %433, %432 : vector<64x16xf32>
    %435 = arith.mulf %429, %434 : vector<64x16xf32>
    %c0_189 = arith.constant 0 : index
    %c0_190 = arith.constant 0 : index
    %436 = vector.load %arg9[%c0_189, %c0_190] : memref<16x4xf32, #tpu.memory_space<vmem>>, vector<16x4xf32>
    %cst_191 = arith.constant dense<0.000000e+00> : vector<64x4xf32>
    %437 = tpu.matmul %435, %436, %cst_191 {dimension_numbers = #tpu.dot_dimension_numbers<[1], [0], [0], [1], [0, 0, 1, 1], [], []>} : vector<64x16xf32>, vector<16x4xf32>, vector<64x4xf32> -> vector<64x4xf32>
    %c0_192 = arith.constant 0 : index
    %c0_193 = arith.constant 0 : index
    %438 = vector.load %arg10[%c0_192, %c0_193] : memref<1x4xf32, #tpu.memory_space<vmem>>, vector<1x4xf32>
    %439 = vector.broadcast %438 : vector<1x4xf32> to vector<64x4xf32>
    %440 = arith.addf %437, %439 : vector<64x4xf32>
    %441 = vector.shape_cast %440 : vector<64x4xf32> to vector<8x8x4xf32>
    %442 = tpu.iota {dimensions = array<i32: 1>} : vector<8x8x4xi32>
    %c0_i32_194 = arith.constant 0 : i32
    %443 = vector.broadcast %c0_i32_194 : i32 to vector<8x8x4xi32>
    %444 = arith.cmpi sgt, %442, %443 : vector<8x8x4xi32>
    %cst_195 = arith.constant 0.000000e+00 : f32
    %445 = vector.broadcast %cst_195 : f32 to vector<8x8x4xf32>
    %446 = arith.select %444, %441, %445 : vector<8x8x4xi1>, vector<8x8x4xf32>
    %c0_196 = arith.constant 0 : index
    %c0_197 = arith.constant 0 : index
    %c6_198 = arith.constant 6 : index
    %c0_199 = arith.constant 0 : index
    %c0_200 = arith.constant 0 : index
    %c0_201 = arith.constant 0 : index
    %447 = vector.load %arg12[%c0_196, %c0_197, %c6_198, %c0_199, %c0_200, %c0_201] : memref<1x1x8x8x8x4xf32, #tpu.memory_space<vmem>>, vector<1x1x1x8x8x4xf32>
    %448 = vector.shape_cast %447 : vector<1x1x1x8x8x4xf32> to vector<8x8x4xf32>
    %449 = vector.shape_cast %446 : vector<8x8x4xf32> to vector<1x1x1x8x8x4xf32>
    tpu.vector_store %arg12[%c0_196, %c0_197, %c6_198, %c0_199, %c0_200, %c0_201], %449 {strides = array<i32>} : memref<1x1x8x8x8x4xf32, #tpu.memory_space<vmem>>, vector<1x1x1x8x8x4xf32>,
    %cst_202 = arith.constant 0.000000e+00 : f32
    %450 = vector.broadcast %cst_202 : f32 to vector<8x8x8xf32>
    %451 = vector.extract_strided_slice %3 {offsets = [1, 1, 0], sizes = [8, 8, 8], strides = [1, 1, 1]} : vector<9x9x8xf32> to vector<8x8x8xf32>
    %c13 = arith.constant 13 : index
    %c0_203 = arith.constant 0 : index
    %452 = vector.load %arg4[%c13, %c0_203] : memref<27x8xf32, #tpu.memory_space<vmem>>, vector<1x8xf32>
    %453 = vector.shape_cast %452 : vector<1x8xf32> to vector<8xf32>
    %454 = vector.shape_cast %453 : vector<8xf32> to vector<1x1x8xf32>
    %455 = vector.broadcast %454 : vector<1x1x8xf32> to vector<8x8x8xf32>
    %456 = arith.mulf %451, %455 : vector<8x8x8xf32>
    %457 = arith.addf %450, %456 : vector<8x8x8xf32>
    %458 = vector.shape_cast %5 : vector<1x8xf32> to vector<1x1x8xf32>
    %459 = vector.broadcast %458 : vector<1x1x8xf32> to vector<8x8x8xf32>
    %460 = arith.subf %457, %459 : vector<8x8x8xf32>
    %461 = vector.shape_cast %7 : vector<1x8xf32> to vector<1x1x8xf32>
    %462 = vector.broadcast %461 : vector<1x1x8xf32> to vector<8x8x8xf32>
    %463 = arith.mulf %460, %462 : vector<8x8x8xf32>
    %464 = vector.shape_cast %463 : vector<8x8x8xf32> to vector<64x8xf32>
    %c0_204 = arith.constant 0 : index
    %c0_205 = arith.constant 0 : index
    %465 = vector.load %arg7[%c0_204, %c0_205] : memref<8x16xf32, #tpu.memory_space<vmem>>, vector<8x16xf32>
    %cst_206 = arith.constant dense<0.000000e+00> : vector<64x16xf32>
    %466 = tpu.matmul %464, %465, %cst_206 {dimension_numbers = #tpu.dot_dimension_numbers<[1], [0], [0], [1], [0, 0, 1, 1], [], []>} : vector<64x8xf32>, vector<8x16xf32>, vector<64x16xf32> -> vector<64x16xf32>
    %c0_207 = arith.constant 0 : index
    %c0_208 = arith.constant 0 : index
    %467 = vector.load %arg8[%c0_207, %c0_208] : memref<1x16xf32, #tpu.memory_space<vmem>>, vector<1x16xf32>
    %468 = vector.broadcast %467 : vector<1x16xf32> to vector<64x16xf32>
    %469 = arith.addf %466, %468 : vector<64x16xf32>
    %cst_209 = arith.constant 5.000000e-01 : f32
    %470 = vector.broadcast %cst_209 : f32 to vector<64x16xf32>
    %471 = arith.mulf %470, %469 : vector<64x16xf32>
    %cst_210 = arith.constant 1.41421354 : f32
    %472 = vector.broadcast %cst_210 : f32 to vector<64x16xf32>
    %473 = arith.divf %469, %472 : vector<64x16xf32>
    %474 = math.erf %473 : vector<64x16xf32>
    %cst_211 = arith.constant 1.000000e+00 : f32
    %475 = vector.broadcast %cst_211 : f32 to vector<64x16xf32>
    %476 = arith.addf %475, %474 : vector<64x16xf32>
    %477 = arith.mulf %471, %476 : vector<64x16xf32>
    %c0_212 = arith.constant 0 : index
    %c0_213 = arith.constant 0 : index
    %478 = vector.load %arg9[%c0_212, %c0_213] : memref<16x4xf32, #tpu.memory_space<vmem>>, vector<16x4xf32>
    %cst_214 = arith.constant dense<0.000000e+00> : vector<64x4xf32>
    %479 = tpu.matmul %477, %478, %cst_214 {dimension_numbers = #tpu.dot_dimension_numbers<[1], [0], [0], [1], [0, 0, 1, 1], [], []>} : vector<64x16xf32>, vector<16x4xf32>, vector<64x4xf32> -> vector<64x4xf32>
    %c0_215 = arith.constant 0 : index
    %c0_216 = arith.constant 0 : index
    %480 = vector.load %arg10[%c0_215, %c0_216] : memref<1x4xf32, #tpu.memory_space<vmem>>, vector<1x4xf32>
    %481 = vector.broadcast %480 : vector<1x4xf32> to vector<64x4xf32>
    %482 = arith.addf %479, %481 : vector<64x4xf32>
    %483 = vector.extract_strided_slice %3 {offsets = [1, 1, 0], sizes = [8, 8, 8], strides = [1, 1, 1]} : vector<9x9x8xf32> to vector<8x8x8xf32>
    %484 = vector.shape_cast %483 : vector<8x8x8xf32> to vector<64x8xf32>
    %c0_217 = arith.constant 0 : index
    %c0_218 = arith.constant 0 : index
    %485 = vector.load %arg11[%c0_217, %c0_218] : memref<8x4xf32, #tpu.memory_space<vmem>>, vector<8x4xf32>
    %cst_219 = arith.constant dense<0.000000e+00> : vector<64x4xf32>
    %486 = tpu.matmul %484, %485, %cst_219 {dimension_numbers = #tpu.dot_dimension_numbers<[1], [0], [0], [1], [0, 0, 1, 1], [], []>} : vector<64x8xf32>, vector<8x4xf32>, vector<64x4xf32> -> vector<64x4xf32>
    %487 = arith.addf %482, %486 : vector<64x4xf32>
    %488 = vector.shape_cast %487 : vector<64x4xf32> to vector<8x8x4xf32>
    %c0_220 = arith.constant 0 : index
    %c0_221 = arith.constant 0 : index
    %c7_222 = arith.constant 7 : index
    %c0_223 = arith.constant 0 : index
    %c0_224 = arith.constant 0 : index
    %c0_225 = arith.constant 0 : index
    %489 = vector.load %arg12[%c0_220, %c0_221, %c7_222, %c0_223, %c0_224, %c0_225] : memref<1x1x8x8x8x4xf32, #tpu.memory_space<vmem>>, vector<1x1x1x8x8x4xf32>
    %490 = vector.shape_cast %489 : vector<1x1x1x8x8x4xf32> to vector<8x8x4xf32>
    %491 = vector.shape_cast %488 : vector<8x8x4xf32> to vector<1x1x1x8x8x4xf32>
    tpu.vector_store %arg12[%c0_220, %c0_221, %c7_222, %c0_223, %c0_224, %c0_225], %491 {strides = array<i32>} : memref<1x1x8x8x8x4xf32, #tpu.memory_space<vmem>>, vector<1x1x1x8x8x4xf32>,
    return
  }
  func.func @transform_0(%arg0: i32, %arg1: i32) -> (i32, i32, i32, i32, i32) {
    %c0_i32 = arith.constant 0 : i32
    %c0_i32_0 = arith.constant 0 : i32
    %c0_i32_1 = arith.constant 0 : i32
    %c0_i32_2 = arith.constant 0 : i32
    return %arg0, %arg1, %c0_i32, %c0_i32_0, %c0_i32_1 : i32, i32, i32, i32, i32
  }
  func.func @transform_1(%arg0: i32, %arg1: i32) -> (i32, i32, i32, i32, i32) {
    %c1_i32 = arith.constant 1 : i32
    %0 = arith.addi %arg1, %c1_i32 : i32
    %c0_i32 = arith.constant 0 : i32
    %c0_i32_0 = arith.constant 0 : i32
    %c0_i32_1 = arith.constant 0 : i32
    %c0_i32_2 = arith.constant 0 : i32
    return %arg0, %0, %c0_i32, %c0_i32_0, %c0_i32_1 : i32, i32, i32, i32, i32
  }
  func.func @transform_2(%arg0: i32, %arg1: i32) -> (i32, i32) {
    %c0_i32 = arith.constant 0 : i32
    %c0_i32_0 = arith.constant 0 : i32
    %c0_i32_1 = arith.constant 0 : i32
    return %c0_i32, %c0_i32_0 : i32, i32
  }
  func.func @transform_3(%arg0: i32, %arg1: i32) -> (i32, i32, i32) {
    %c0_i32 = arith.constant 0 : i32
    %c0_i32_0 = arith.constant 0 : i32
    %c0_i32_1 = arith.constant 0 : i32
    return %arg0, %c0_i32, %c0_i32_0 : i32, i32, i32
  }
  func.func @transform_4(%arg0: i32, %arg1: i32) -> (i32, i32, i32) {
    %c0_i32 = arith.constant 0 : i32
    %c0_i32_0 = arith.constant 0 : i32
    %c0_i32_1 = arith.constant 0 : i32
    return %arg0, %c0_i32, %c0_i32_0 : i32, i32, i32
  }
  func.func @transform_5(%arg0: i32, %arg1: i32) -> (i32, i32) {
    %c0_i32 = arith.constant 0 : i32
    %c0_i32_0 = arith.constant 0 : i32
    %c0_i32_1 = arith.constant 0 : i32
    return %c0_i32, %c0_i32_0 : i32, i32
  }
  func.func @transform_6(%arg0: i32, %arg1: i32) -> (i32, i32) {
    %c0_i32 = arith.constant 0 : i32
    %c0_i32_0 = arith.constant 0 : i32
    %c0_i32_1 = arith.constant 0 : i32
    return %c0_i32, %c0_i32_0 : i32, i32
  }
  func.func @transform_7(%arg0: i32, %arg1: i32) -> (i32, i32) {
    %c0_i32 = arith.constant 0 : i32
    %c0_i32_0 = arith.constant 0 : i32
    %c0_i32_1 = arith.constant 0 : i32
    return %c0_i32, %c0_i32_0 : i32, i32
  }
  func.func @transform_8(%arg0: i32, %arg1: i32) -> (i32, i32) {
    %c0_i32 = arith.constant 0 : i32
    %c0_i32_0 = arith.constant 0 : i32
    %c0_i32_1 = arith.constant 0 : i32
    return %c0_i32, %c0_i32_0 : i32, i32
  }
  func.func @transform_9(%arg0: i32, %arg1: i32) -> (i32, i32) {
    %c0_i32 = arith.constant 0 : i32
    %c0_i32_0 = arith.constant 0 : i32
    %c0_i32_1 = arith.constant 0 : i32
    return %c0_i32, %c0_i32_0 : i32, i32
  }
  func.func @transform_10(%arg0: i32, %arg1: i32) -> (i32, i32, i32, i32, i32, i32) {
    %c0_i32 = arith.constant 0 : i32
    %c0_i32_0 = arith.constant 0 : i32
    %c0_i32_1 = arith.constant 0 : i32
    %c0_i32_2 = arith.constant 0 : i32
    %c0_i32_3 = arith.constant 0 : i32
    return %arg0, %arg1, %c0_i32, %c0_i32_0, %c0_i32_1, %c0_i32_2 : i32, i32, i32, i32, i32, i32
  }
}

</mosaic_0001>

<llo_original>
// kernel: squeeze.1
$region0: #{squeeze.1}
  %s0 = inlined_call_operand.vmem [shape: f32[8,3,3,3], index: 0, kind: input, shape index: {}]
  %s1 = inlined_call_operand.vmem [shape: f32[8,27], index: 1, kind: output, shape index: {}]
  $region1: #{squeeze.1} parent=0
    #allocation0 [shape = 'u8[36864]{0}', space=vmem, size = 0x9000, scoped, tag = 'scoped mem for input reshape']
    %s3 = ssub.s32 16, 1
    %s4 = scalar_lea.vmem %s0, 32
    %v5 = vld [vmem:[%s4] sm:%s3]
    %s6 = scalar_lea.vmem [#allocation0], 64
    %7 = vst [vmem:[%s6] sm:%s3] %v5
    %s8 = scalar_lea.vmem %s0, 28
    %v9 = vld [vmem:[%s8] sm:%s3]
    %s10 = scalar_lea.vmem [#allocation0], 56
    %11 = vst [vmem:[%s10] sm:%s3] %v9
    %s12 = scalar_lea.vmem %s0, 24
    %v13 = vld [vmem:[%s12] sm:%s3]
    %s14 = scalar_lea.vmem [#allocation0], 48
    %15 = vst [vmem:[%s14] sm:%s3] %v13
    %s16 = scalar_lea.vmem %s0, 20
    %v17 = vld [vmem:[%s16] sm:%s3]
    %s18 = scalar_lea.vmem [#allocation0], 40
    %19 = vst [vmem:[%s18] sm:%s3] %v17
    %s20 = scalar_lea.vmem %s0, 16
    %v21 = vld [vmem:[%s20] sm:%s3]
    %s22 = scalar_lea.vmem [#allocation0], 32
    %23 = vst [vmem:[%s22] sm:%s3] %v21
    %s24 = scalar_lea.vmem %s0, 12
    %v25 = vld [vmem:[%s24] sm:%s3]
    %s26 = scalar_lea.vmem [#allocation0], 24
    %27 = vst [vmem:[%s26] sm:%s3] %v25
    %s28 = scalar_lea.vmem %s0, 8
    %v29 = vld [vmem:[%s28] sm:%s3]
    %s30 = scalar_lea.vmem [#allocation0], 16
    %31 = vst [vmem:[%s30] sm:%s3] %v29
    %s32 = scalar_lea.vmem %s0, 4
    %v33 = vld [vmem:[%s32] sm:%s3]
    %s34 = scalar_lea.vmem [#allocation0], 8
    %35 = vst [vmem:[%s34] sm:%s3] %v33
    %v36 = vld [vmem:[%s0] sm:%s3]
    %37 = vst [vmem:[#allocation0] sm:%s3] %v36
    %v38 = vld [vmem:[#allocation0] sm:$0x7]
    %vm39 = vcmask 64512
    %40 = vst.msk [vmem:[%s1] sm:$0x7] %vm39, %v38
    %s41 = scalar_lea.vmem [#allocation0], 8
    %v42 = vld [vmem:[%s41] sm:$0x7]
    %vm43 = vcmask 64512
    %s44 = scalar_lea.vmem %s1, 3
    %45 = vst.msk [vmem:[%s44] sm:$0x7] %vm43, %v42
    %s46 = scalar_lea.vmem [#allocation0], 16
    %v47 = vld [vmem:[%s46] sm:$0x7]
    %vm48 = vcmask 64512
    %s49 = scalar_lea.vmem %s1, 6
    %50 = vst.msk [vmem:[%s49] sm:$0x7] %vm48, %v47
    %s51 = scalar_lea.vmem [#allocation0], 24
    %v52 = vld [vmem:[%s51] sm:$0x7]
    %vm53 = vcmask 64512
    %s54 = scalar_lea.vmem %s1, 9
    %55 = vst.msk [vmem:[%s54] sm:$0x7] %vm53, %v52
    %s56 = scalar_lea.vmem [#allocation0], 32
    %v57 = vld [vmem:[%s56] sm:$0x7]
    %vm58 = vcmask 64512
    %s59 = scalar_lea.vmem %s1, 12
    %60 = vst.msk [vmem:[%s59] sm:$0x7] %vm58, %v57
    %s61 = scalar_lea.vmem [#allocation0], 40
    %v62 = vld [vmem:[%s61] sm:$0x7]
    %vm63 = vcmask 64512
    %s64 = scalar_lea.vmem %s1, 15
    %65 = vst.msk [vmem:[%s64] sm:$0x7] %vm63, %v62
    %s66 = scalar_lea.vmem [#allocation0], 48
    %v67 = vld [vmem:[%s66] sm:$0x7]
    %vm68 = vcmask 64512
    %s69 = scalar_lea.vmem %s1, 18
    %70 = vst.msk [vmem:[%s69] sm:$0x7] %vm68, %v67
    %s71 = scalar_lea.vmem [#allocation0], 56
    %v72 = vld [vmem:[%s71] sm:$0x7]
    %vm73 = vcmask 64512
    %s74 = scalar_lea.vmem %s1, 21
    %75 = vst.msk [vmem:[%s74] sm:$0x7] %vm73, %v72
    %s76 = scalar_lea.vmem [#allocation0], 64
    %v77 = vld [vmem:[%s76] sm:$0x7]
    %vm78 = vcmask 64512
    %s79 = scalar_lea.vmem %s1, 24
    %80 = vst.msk [vmem:[%s79] sm:$0x7] %vm78, %v77

// kernel: mednext_up_block_forward.2
$region0: #{mednext_up_block_forward.2}
  #allocation0 [shape = 'u32[]', space=smem, size = 0x4, offset = 0x4, fixed_abs, tag = 'smem constant byte address 0x4 - core index']
  #allocation1 [shape = 'u32[72,128]{1,0:T(1,128)}', space=vmem, size = 0x9000, scoped, tag = 'internal scratch']
  %s0 = inlined_call_operand.vmem [shape: f32[2,9,9,9,8], index: 0, kind: input, shape index: {}, may-alias: {0,1}]
  %s1 = inlined_call_operand.vmem [shape: f32[2,9,9,9,8], index: 1, kind: input, shape index: {}, may-alias: {0,1}]
  %s2 = inlined_call_operand.vmem [shape: f32[27,8], index: 2, kind: input, shape index: {}]
  %s3 = inlined_call_operand.vmem [shape: f32[2,1,8], index: 3, kind: output, shape index: {0}]
  %s4 = inlined_call_operand.vmem [shape: f32[2,1,8], index: 4, kind: output, shape index: {1}]
  %5 = xla_tuple %s3, %s4
  %s6 = sld [smem:[#allocation0]]
  $region57: #{mednext_up_block_forward.2} parent=0
    _
  %s8 = ssub.s32 1, %s6
  %s9 = scalar_select 0, %s8, %s6
  loop: start=0, step=1, limit=18
  $region2: #{mednext_up_block_forward.2} parent=0 // loop_pre_header
    _
  $region3: #{mednext_up_block_forward.2} parent=0 // loop_header
    %s11 = sphi 0, %s15
    %p12 = scmp.ge.s32.totalorder %s11, 18
    %s18 = sphi 0, %s30
    %s19 = sphi 0, %s26
    %s20 = sphi 0, %s18
    %s21 = sphi 0, %s19
    %s22 = sphi 0, %s20
    %s23 = sphi 0, %s21
    %s35 = sphi 0, %s37
    %s38 = sphi 0, %s35
    %s39 = sphi 0, %s38
    %s55 = sphi 0, %s39
    %s65 = sphi 0, %s67
    %s68 = sphi 0, %s65
    %s69 = sphi 0, %s68
    %s85 = sphi 0, %s69
    %s89 = sphi 0, %s89
    %s91 = sphi 0, %s89
    %s92 = sphi 0, %s91
    %s106 = sphi 0, %s92
    %s112 = sphi 0, %s114
    %s115 = sphi 0, %s112
    %s116 = sphi 0, %s115
    %s132 = sphi 0, %s116
    %s138 = sphi 0, %s140
    %s141 = sphi 0, %s138
    %s142 = sphi 0, %s141
    %s158 = sphi 0, %s142
  $region4: #{mednext_up_block_forward.2} parent=0 // loop_header_branch
    %14 = sbr.rel (%p12) target = $region8
  $region5: #{mednext_up_block_forward.2} parent=0 // loop_body
    %s16 = ssub.s32 %s11, 1
    %s17 = ssub.s32 %s11, 2
    %s24 = sadd.s32 1, %s19
    %p25 = scmp.ge.s32.totalorder %s24, 8
    %s26 = scalar_select %p25, 0, %s24
    %s27 = sadd.s32 1, %s18
    %s28 = scalar_select %p25, %s27, %s18
    %p29 = scmp.ge.s32.totalorder %s28, 2
    %s30 = scalar_select %p29, 0, %s28
    %s31 = ssub.s32 %s18, %s30
    %s32 = ssub.s32 %s19, %s26
    %s33 = sor.u32 %s31, %s32
    %p34 = scmp.eq.s32.totalorder %s33, 0
    %s36 = sadd.s32 %s35, 1
    %s37 = scalar_select %p34, %s35, %s36
    %p40 = pneg %p34
    %p41 = scmp.eq.s32.totalorder %s11, 15
    %p42 = por %p40, %p41
    %p43 = scmp.ne.s32.totalorder %s35, %s38
    %p44 = scmp.eq.s32.totalorder %s11, 0
    %p45 = por %p43, %p44
    %p46 = scmp.ne.s32.totalorder %s35, %s38
    %p47 = scmp.eq.s32.totalorder %s16, 15
    %p48 = por %p46, %p47
    %p49 = scmp.ne.s32.totalorder %s38, %s39
    %p50 = scmp.eq.s32.totalorder %s16, 0
    %p51 = por %p49, %p50
    %p52 = scmp.ne.s32.totalorder %s38, %s39
    %p53 = scmp.eq.s32.totalorder %s17, 15
    %p54 = por %p52, %p53
    %p56 = scmp.ne.s32.totalorder %s39, %s55
    %p57 = scmp.eq.s32.totalorder %s17, 0
    %p58 = por %p56, %p57
    %s59 = sadd.s32 %s19, 1
    %s60 = sadd.s32 %s26, 1
    %s61 = ssub.s32 %s18, %s30
    %s62 = ssub.s32 %s59, %s60
    %s63 = sor.u32 %s61, %s62
    %p64 = scmp.eq.s32.totalorder %s63, 0
    %s66 = sadd.s32 %s65, 1
    %s67 = scalar_select %p64, %s65, %s66
    %p70 = pneg %p64
    %p71 = scmp.eq.s32.totalorder %s11, 15
    %p72 = por %p70, %p71
    %p73 = scmp.ne.s32.totalorder %s65, %s68
    %p74 = scmp.eq.s32.totalorder %s11, 0
    %p75 = por %p73, %p74
    %p76 = scmp.ne.s32.totalorder %s65, %s68
    %p77 = scmp.eq.s32.totalorder %s16, 15
    %p78 = por %p76, %p77
    %p79 = scmp.ne.s32.totalorder %s68, %s69
    %p80 = scmp.eq.s32.totalorder %s16, 0
    %p81 = por %p79, %p80
    %p82 = scmp.ne.s32.totalorder %s68, %s69
    %p83 = scmp.eq.s32.totalorder %s17, 15
    %p84 = por %p82, %p83
    %p86 = scmp.ne.s32.totalorder %s69, %s85
    %p87 = scmp.eq.s32.totalorder %s17, 0
    %p88 = por %p86, %p87
    %s90 = sadd.s32 %s89, 1
    %p93 = scmp.eq.s32.totalorder %s11, 15
    %p94 = scmp.ne.s32.totalorder %s89, %s91
    %p95 = scmp.eq.s32.totalorder %s11, 0
    %p96 = por %p94, %p95
    %p97 = scmp.ne.s32.totalorder %s89, %s91
    %p98 = scmp.eq.s32.totalorder %s16, 15
    %p99 = por %p97, %p98
    %p100 = scmp.ne.s32.totalorder %s91, %s92
    %p101 = scmp.eq.s32.totalorder %s16, 0
    %p102 = por %p100, %p101
    %p103 = scmp.ne.s32.totalorder %s91, %s92
    %p104 = scmp.eq.s32.totalorder %s17, 15
    %p105 = por %p103, %p104
    %p107 = scmp.ne.s32.totalorder %s92, %s106
    %p108 = scmp.eq.s32.totalorder %s17, 0
    %p109 = por %p107, %p108
    %s110 = ssub.s32 %s18, %s30
    %p111 = scmp.eq.s32.totalorder %s110, 0
    %s113 = sadd.s32 %s112, 1
    %s114 = scalar_select %p111, %s112, %s113
    %p117 = pneg %p111
    %p118 = scmp.eq.s32.totalorder %s11, 15
    %p119 = por %p117, %p118
    %p120 = scmp.ne.s32.totalorder %s112, %s115
    %p121 = scmp.eq.s32.totalorder %s11, 0
    %p122 = por %p120, %p121
    %p123 = scmp.ne.s32.totalorder %s112, %s115
    %p124 = scmp.eq.s32.totalorder %s16, 15
    %p125 = por %p123, %p124
    %p126 = scmp.ne.s32.totalorder %s115, %s116
    %p127 = scmp.eq.s32.totalorder %s16, 0
    %p128 = por %p126, %p127
    %p129 = scmp.ne.s32.totalorder %s115, %s116
    %p130 = scmp.eq.s32.totalorder %s17, 15
    %p131 = por %p129, %p130
    %p133 = scmp.ne.s32.totalorder %s116, %s132
    %p134 = scmp.eq.s32.totalorder %s17, 0
    %p135 = por %p133, %p134
    %s136 = ssub.s32 %s18, %s30
    %p137 = scmp.eq.s32.totalorder %s136, 0
    %s139 = sadd.s32 %s138, 1
    %s140 = scalar_select %p137, %s138, %s139
    %p143 = pneg %p137
    %p144 = scmp.eq.s32.totalorder %s11, 15
    %p145 = por %p143, %p144
    %p146 = scmp.ne.s32.totalorder %s138, %s141
    %p147 = scmp.eq.s32.totalorder %s11, 0
    %p148 = por %p146, %p147
    %p149 = scmp.ne.s32.totalorder %s138, %s141
    %p150 = scmp.eq.s32.totalorder %s16, 15
    %p151 = por %p149, %p150
    %p152 = scmp.ne.s32.totalorder %s141, %s142
    %p153 = scmp.eq.s32.totalorder %s16, 0
    %p154 = por %p152, %p153
    %p155 = scmp.ne.s32.totalorder %s141, %s142
    %p156 = scmp.eq.s32.totalorder %s17, 15
    %p157 = por %p155, %p156
    %p159 = scmp.ne.s32.totalorder %s142, %s158
    %p160 = scmp.eq.s32.totalorder %s17, 0
    %p161 = por %p159, %p160
    %p162 = scmp.le.s32.totalorder 1, %s11
    %p163 = scmp.lt.s32.totalorder %s11, 17
    %p164 = pnand %p162, %p163
    %p165 = pneg %p164
    // Predicated region
    $region9: #{mednext_up_block_forward.2} parent=5 // pred_check
      _
    $region10: #{mednext_up_block_forward.2} parent=5 // pred_check_branch
      %167 = sbr.rel (%p164) target = $region12
    $region11: #{mednext_up_block_forward.2} parent=5 // pred_region
      %s168 = ssub.s32 %s11, 1
      // Predicated region
      $region13: #{mednext_up_block_forward.2} parent=11 // pred_check
        %p169 = pneg %p102
      $region14: #{mednext_up_block_forward.2} parent=11 // pred_check_branch
        %171 = sbr.rel (%p169) target = $region16
      $region15: #{mednext_up_block_forward.2} parent=11 // pred_region
        _
      $region16: #{mednext_up_block_forward.2} parent=11 // pred_fallthru
        _
    $region12: #{mednext_up_block_forward.2} parent=5 // pred_fallthru
      _
    %p172 = scmp.lt.s32.totalorder %s11, 16
    // Predicated region
    $region17: #{mednext_up_block_forward.2} parent=5 // pred_check
      %p173 = pneg %p172
    $region18: #{mednext_up_block_forward.2} parent=5 // pred_check_branch
      %175 = sbr.rel (%p173) target = $region20
    $region19: #{mednext_up_block_forward.2} parent=5 // pred_region
      // Predicated region
      $region21: #{mednext_up_block_forward.2} parent=19 // pred_check
        %p176 = pneg %p45
      $region22: #{mednext_up_block_forward.2} parent=19 // pred_check_branch
        %178 = sbr.rel (%p176) target = $region24
      $region23: #{mednext_up_block_forward.2} parent=19 // pred_region
        %p179 = scmp.lt.s32.totalorder %s18, 1
        %s180 = scalar_select %p179, %s18, 1
        %p181 = scmp.lt.s32.totalorder %s19, 8
        %s182 = scalar_select %p181, %s19, 8
        %s183 = smul.addr %s182, 18
        %s184 = smul.addr %s180, 162
        %s185 = sadd.s32 %s183, %s184
        %s186 = smul.addr %s185, 8
        %s187 = scalar_lea.vmem %s0, %s186
      $region24: #{mednext_up_block_forward.2} parent=19 // pred_fallthru
        _
      // Predicated region
      $region25: #{mednext_up_block_forward.2} parent=19 // pred_check
        %p188 = pneg %p75
      $region26: #{mednext_up_block_forward.2} parent=19 // pred_check_branch
        %190 = sbr.rel (%p188) target = $region28
      $region27: #{mednext_up_block_forward.2} parent=19 // pred_region
        %s191 = sadd.s32 %s19, 1
        %p192 = scmp.lt.s32.totalorder %s18, 1
        %s193 = scalar_select %p192, %s18, 1
        %p194 = scmp.lt.s32.totalorder %s191, 8
        %s195 = scalar_select %p194, %s191, 8
        %s196 = smul.addr %s195, 18
        %s197 = smul.addr %s193, 162
        %s198 = sadd.s32 %s196, %s197
        %s199 = smul.addr %s198, 8
        %s200 = scalar_lea.vmem %s1, %s199
        %s201 = sadd.s32 %s19, 1
      $region28: #{mednext_up_block_forward.2} parent=19 // pred_fallthru
        _
    $region20: #{mednext_up_block_forward.2} parent=5 // pred_fallthru
      _
    %p202 = scmp.le.s32.totalorder 1, %s11
    %p203 = scmp.lt.s32.totalorder %s11, 17
    %p204 = pnand %p202, %p203
    %p205 = pneg %p204
    // Predicated region
    $region29: #{mednext_up_block_forward.2} parent=5 // pred_check
      _
    $region30: #{mednext_up_block_forward.2} parent=5 // pred_check_branch
      %207 = sbr.rel (%p204) target = $region32
    $region31: #{mednext_up_block_forward.2} parent=5 // pred_region
      %s208 = ssub.s32 %s11, 1
      %p209 = scmp.lt.s32.totalorder %s20, 1
      %s210 = scalar_select %p209, %s20, 1
      %p211 = scmp.lt.s32.totalorder %s21, 8
      %s212 = scalar_select %p211, %s21, 8
      %s213 = smul.addr %s212, 18
      %s214 = smul.addr %s210, 162
      %s215 = sadd.s32 %s213, %s214
      %s216 = smul.addr %s215, 8
      %s217 = scalar_lea.vmem %s0, %s216
      %p218 = pneg %p51
      %p219 = pneg %p48
      %s220 = sadd.s32 %s21, 1
      %p221 = scmp.lt.s32.totalorder %s20, 1
      %s222 = scalar_select %p221, %s20, 1
      %p223 = scmp.lt.s32.totalorder %s220, 8
      %s224 = scalar_select %p223, %s220, 8
      %s225 = smul.addr %s224, 18
      %s226 = smul.addr %s222, 162
      %s227 = sadd.s32 %s225, %s226
      %s228 = smul.addr %s227, 8
      %s229 = scalar_lea.vmem %s1, %s228
      %p230 = pneg %p81
      %p231 = pneg %p78
      %p232 = pneg %p102
      %p233 = pneg %p99
      %p234 = pneg %p128
      %p235 = pneg %p125
      %p236 = scmp.lt.s32.totalorder %s20, 1
      %s237 = scalar_select %p236, %s20, 1
      %s238 = scalar_lea.vmem %s3, %s237
      %p239 = pneg %p154
      %p240 = pneg %p151
      %p241 = scmp.lt.s32.totalorder %s20, 1
      %s242 = scalar_select %p241, %s20, 1
      %s243 = scalar_lea.vmem %s4, %s242
      %p244 = scmp.lt.s32.totalorder %s20, 1
      %s245 = scalar_select %p244, %s20, 1
      %p246 = scmp.lt.s32.totalorder %s21, 8
      %s247 = scalar_select %p246, %s21, 8
      %s248 = smul.addr %s247, 18
      %s249 = smul.addr %s245, 162
      %s250 = sadd.s32 %s248, %s249
      %s251 = smul.addr %s250, 8
      %s252 = scalar_lea.vmem %s0, %s251
      %s253 = sadd.s32 %s21, 1
      %p254 = scmp.lt.s32.totalorder %s20, 1
      %s255 = scalar_select %p254, %s20, 1
      %p256 = scmp.lt.s32.totalorder %s253, 8
      %s257 = scalar_select %p256, %s253, 8
      %s258 = smul.addr %s257, 18
      %s259 = smul.addr %s255, 162
      %s260 = sadd.s32 %s258, %s259
      %s261 = smul.addr %s260, 8
      %s262 = scalar_lea.vmem %s1, %s261
      %s263 = sadd.s32 %s21, 1
      %p264 = scmp.lt.s32.totalorder %s20, 1
      %s265 = scalar_select %p264, %s20, 1
      %s266 = scalar_lea.vmem %s3, %s265
      %p267 = scmp.lt.s32.totalorder %s20, 1
      %s268 = scalar_select %p267, %s20, 1
      %s269 = scalar_lea.vmem %s4, %s268
      %p270 = scmp.eq.s32.totalorder %s21, 0
      // Predicated region
      $region33: #{mednext_up_block_forward.2} parent=31 // pred_check
        %p271 = pneg %p270
      $region34: #{mednext_up_block_forward.2} parent=31 // pred_check_branch
        %273 = sbr.rel (%p271) target = $region36
      $region35: #{mednext_up_block_forward.2} parent=31 // pred_region
        %vm274 = vcmask 57344
        %275 = vst.msk [vmem:[%s266] sm:$0x1] %vm274, 0.0
        %276 = vst.msk [vmem:[%s269] sm:$0x1] %vm274, 0.0
      $region36: #{mednext_up_block_forward.2} parent=31 // pred_fallthru
        _
      %v277 = vld [vmem:[%s252] sm:$0xff]
      %v278 = vld [vmem:[%s252 + $0x8] sm:$0x1]
      %v279 = vld [vmem:[%s252 + $0x10] sm:$0xff]
      %v280 = vld [vmem:[%s252 + $0x18] sm:$0x1]
      %v281 = vld [vmem:[%s252 + $0x20] sm:$0xff]
      %v282 = vld [vmem:[%s252 + $0x28] sm:$0x1]
      %v283 = vld [vmem:[%s252 + $0x30] sm:$0xff]
      %v284 = vld [vmem:[%s252 + $0x38] sm:$0x1]
      %v285 = vld [vmem:[%s252 + $0x40] sm:$0xff]
      %v286 = vld [vmem:[%s252 + $0x48] sm:$0x1]
      %v287 = vld [vmem:[%s252 + $0x50] sm:$0xff]
      %v288 = vld [vmem:[%s252 + $0x58] sm:$0x1]
      %v289 = vld [vmem:[%s252 + $0x60] sm:$0xff]
      %v290 = vld [vmem:[%s252 + $0x68] sm:$0x1]
      %v291 = vld [vmem:[%s252 + $0x70] sm:$0xff]
      %v292 = vld [vmem:[%s252 + $0x78] sm:$0x1]
      %v293 = vld [vmem:[%s252 + $0x80] sm:$0xff]
      %v294 = vld [vmem:[%s252 + $0x88] sm:$0x1]
      %v295 = vld [vmem:[%s262] sm:$0xff]
      %v296 = vld [vmem:[%s262 + $0x8] sm:$0x1]
      %v297 = vld [vmem:[%s262 + $0x10] sm:$0xff]
      %v298 = vld [vmem:[%s262 + $0x18] sm:$0x1]
      %v299 = vld [vmem:[%s262 + $0x20] sm:$0xff]
      %v300 = vld [vmem:[%s262 + $0x28] sm:$0x1]
      %v301 = vld [vmem:[%s262 + $0x30] sm:$0xff]
      %v302 = vld [vmem:[%s262 + $0x38] sm:$0x1]
      %v303 = vld [vmem:[%s262 + $0x40] sm:$0xff]
      %v304 = vld [vmem:[%s262 + $0x48] sm:$0x1]
      %v305 = vld [vmem:[%s262 + $0x50] sm:$0xff]
      %v306 = vld [vmem:[%s262 + $0x58] sm:$0x1]
      %v307 = vld [vmem:[%s262 + $0x60] sm:$0xff]
      %v308 = vld [vmem:[%s262 + $0x68] sm:$0x1]
      %v309 = vld [vmem:[%s262 + $0x70] sm:$0xff]
      %v310 = vld [vmem:[%s262 + $0x78] sm:$0x1]
      %v311 = vld [vmem:[%s262 + $0x80] sm:$0xff]
      %v312 = vld [vmem:[%s262 + $0x88] sm:$0x1]
      %v313 = vld [vmem:[%s2 + $0x1a] sm:$0x1]
      %v314 = vperm.slane %v313, 0
      %v315 = vmul.f32 %v277, %v314
      %v316 = vmul.f32 %v279, %v314
      %v317 = vmul.f32 %v281, %v314
      %v318 = vmul.f32 %v283, %v314
      %v319 = vmul.f32 %v285, %v314
      %v320 = vmul.f32 %v287, %v314
      %v321 = vmul.f32 %v289, %v314
      %v322 = vmul.f32 %v291, %v314
      %v323 = vadd.f32 %v315, 0.0
      %v324 = vadd.f32 %v316, 0.0
      %v325 = vadd.f32 %v317, 0.0
      %v326 = vadd.f32 %v318, 0.0
      %v327 = vadd.f32 %v319, 0.0
      %v328 = vadd.f32 %v320, 0.0
      %v329 = vadd.f32 %v321, 0.0
      %v330 = vadd.f32 %v322, 0.0
      %v331 = vld [vmem:[%s2 + $0x18] sm:$0x1]
      %v332 = vperm.slane %v331, 0
      %v333 = vmul.f32 %v277, %v332
      %v334 = vmul.f32 %v278, %v332
      %v335 = vmul.f32 %v279, %v332
      %v336 = vmul.f32 %v280, %v332
      %v337 = vmul.f32 %v281, %v332
      %v338 = vmul.f32 %v282, %v332
      %v339 = vmul.f32 %v283, %v332
      %v340 = vmul.f32 %v284, %v332
      %v341 = vmul.f32 %v285, %v332
      %v342 = vmul.f32 %v286, %v332
      %v343 = vmul.f32 %v287, %v332
      %v344 = vmul.f32 %v288, %v332
      %v345 = vmul.f32 %v289, %v332
      %v346 = vmul.f32 %v290, %v332
      %v347 = vmul.f32 %v291, %v332
      %v348 = vmul.f32 %v292, %v332
      %vm365 = vcmask 1046528
      %v366 = vrot.slane %v333, 1
      %v367 = vrot.slane %v334, 1
      %v368 = vsel %vm365, %v366, %v367
      %v369 = vrot.slane %v335, 1
      %v370 = vrot.slane %v336, 1
      %v371 = vsel %vm365, %v369, %v370
      %v372 = vrot.slane %v337, 1
      %v373 = vrot.slane %v338, 1
      %v374 = vsel %vm365, %v372, %v373
      %v375 = vrot.slane %v339, 1
      %v376 = vrot.slane %v340, 1
      %v377 = vsel %vm365, %v375, %v376
      %v378 = vrot.slane %v341, 1
      %v379 = vrot.slane %v342, 1
      %v380 = vsel %vm365, %v378, %v379
      %v381 = vrot.slane %v343, 1
      %v382 = vrot.slane %v344, 1
      %v383 = vsel %vm365, %v381, %v382
      %v384 = vrot.slane %v345, 1
      %v385 = vrot.slane %v346, 1
      %v386 = vsel %vm365, %v384, %v385
      %v387 = vrot.slane %v347, 1
      %v388 = vrot.slane %v348, 1
      %v389 = vsel %vm365, %v387, %v388
      %v398 = vadd.f32 %v323, %v368
      %v399 = vadd.f32 %v324, %v371
      %v400 = vadd.f32 %v325, %v374
      %v401 = vadd.f32 %v326, %v377
      %v402 = vadd.f32 %v327, %v380
      %v403 = vadd.f32 %v328, %v383
      %v404 = vadd.f32 %v329, %v386
      %v405 = vadd.f32 %v330, %v389
      %v406 = vld [vmem:[%s2 + $0x14] sm:$0x1]
      %v407 = vperm.slane %v406, 0
      %v408 = vmul.f32 %v279, %v407
      %v409 = vmul.f32 %v281, %v407
      %v410 = vmul.f32 %v283, %v407
      %v411 = vmul.f32 %v285, %v407
      %v412 = vmul.f32 %v287, %v407
      %v413 = vmul.f32 %v289, %v407
      %v414 = vmul.f32 %v291, %v407
      %v415 = vmul.f32 %v293, %v407
      %v416 = vadd.f32 %v398, %v408
      %v417 = vadd.f32 %v399, %v409
      %v418 = vadd.f32 %v400, %v410
      %v419 = vadd.f32 %v401, %v411
      %v420 = vadd.f32 %v402, %v412
      %v421 = vadd.f32 %v403, %v413
      %v422 = vadd.f32 %v404, %v414
      %v423 = vadd.f32 %v405, %v415
      %v424 = vld [vmem:[%s2 + $0x12] sm:$0x1]
      %v425 = vperm.slane %v424, 0
      %v426 = vmul.f32 %v279, %v425
      %v427 = vmul.f32 %v280, %v425
      %v428 = vmul.f32 %v281, %v425
      %v429 = vmul.f32 %v282, %v425
      %v430 = vmul.f32 %v283, %v425
      %v431 = vmul.f32 %v284, %v425
      %v432 = vmul.f32 %v285, %v425
      %v433 = vmul.f32 %v286, %v425
      %v434 = vmul.f32 %v287, %v425
      %v435 = vmul.f32 %v288, %v425
      %v436 = vmul.f32 %v289, %v425
      %v437 = vmul.f32 %v290, %v425
      %v438 = vmul.f32 %v291, %v425
      %v439 = vmul.f32 %v292, %v425
      %v440 = vmul.f32 %v293, %v425
      %v441 = vmul.f32 %v294, %v425
      %v458 = vrot.slane %v426, 1
      %v459 = vrot.slane %v427, 1
      %v460 = vsel %vm365, %v458, %v459
      %v461 = vrot.slane %v428, 1
      %v462 = vrot.slane %v429, 1
      %v463 = vsel %vm365, %v461, %v462
      %v464 = vrot.slane %v430, 1
      %v465 = vrot.slane %v431, 1
      %v466 = vsel %vm365, %v464, %v465
      %v467 = vrot.slane %v432, 1
      %v468 = vrot.slane %v433, 1
      %v469 = vsel %vm365, %v467, %v468
      %v470 = vrot.slane %v434, 1
      %v471 = vrot.slane %v435, 1
      %v472 = vsel %vm365, %v470, %v471
      %v473 = vrot.slane %v436, 1
      %v474 = vrot.slane %v437, 1
      %v475 = vsel %vm365, %v473, %v474
      %v476 = vrot.slane %v438, 1
      %v477 = vrot.slane %v439, 1
      %v478 = vsel %vm365, %v476, %v477
      %v479 = vrot.slane %v440, 1
      %v480 = vrot.slane %v441, 1
      %v481 = vsel %vm365, %v479, %v480
      %v490 = vadd.f32 %v416, %v460
      %v491 = vadd.f32 %v417, %v463
      %v492 = vadd.f32 %v418, %v466
      %v493 = vadd.f32 %v419, %v469
      %v494 = vadd.f32 %v420, %v472
      %v495 = vadd.f32 %v421, %v475
      %v496 = vadd.f32 %v422, %v478
      %v497 = vadd.f32 %v423, %v481
      %v498 = vld [vmem:[%s2 + $0x8] sm:$0x1]
      %v499 = vperm.slane %v498, 0
      %v500 = vmul.f32 %v295, %v499
      %v501 = vmul.f32 %v297, %v499
      %v502 = vmul.f32 %v299, %v499
      %v503 = vmul.f32 %v301, %v499
      %v504 = vmul.f32 %v303, %v499
      %v505 = vmul.f32 %v305, %v499
      %v506 = vmul.f32 %v307, %v499
      %v507 = vmul.f32 %v309, %v499
      %v508 = vadd.f32 %v490, %v500
      %v509 = vadd.f32 %v491, %v501
      %v510 = vadd.f32 %v492, %v502
      %v511 = vadd.f32 %v493, %v503
      %v512 = vadd.f32 %v494, %v504
      %v513 = vadd.f32 %v495, %v505
      %v514 = vadd.f32 %v496, %v506
      %v515 = vadd.f32 %v497, %v507
      %v516 = vld [vmem:[%s2 + $0x6] sm:$0x1]
      %v517 = vperm.slane %v516, 0
      %v518 = vmul.f32 %v295, %v517
      %v519 = vmul.f32 %v296, %v517
      %v520 = vmul.f32 %v297, %v517
      %v521 = vmul.f32 %v298, %v517
      %v522 = vmul.f32 %v299, %v517
      %v523 = vmul.f32 %v300, %v517
      %v524 = vmul.f32 %v301, %v517
      %v525 = vmul.f32 %v302, %v517
      %v526 = vmul.f32 %v303, %v517
      %v527 = vmul.f32 %v304, %v517
      %v528 = vmul.f32 %v305, %v517
      %v529 = vmul.f32 %v306, %v517
      %v530 = vmul.f32 %v307, %v517
      %v531 = vmul.f32 %v308, %v517
      %v532 = vmul.f32 %v309, %v517
      %v533 = vmul.f32 %v310, %v517
      %v550 = vrot.slane %v518, 1
      %v551 = vrot.slane %v519, 1
      %v552 = vsel %vm365, %v550, %v551
      %v553 = vrot.slane %v520, 1
      %v554 = vrot.slane %v521, 1
      %v555 = vsel %vm365, %v553, %v554
      %v556 = vrot.slane %v522, 1
      %v557 = vrot.slane %v523, 1
      %v558 = vsel %vm365, %v556, %v557
      %v559 = vrot.slane %v524, 1
      %v560 = vrot.slane %v525, 1
      %v561 = vsel %vm365, %v559, %v560
      %v562 = vrot.slane %v526, 1
      %v563 = vrot.slane %v527, 1
      %v564 = vsel %vm365, %v562, %v563
      %v565 = vrot.slane %v528, 1
      %v566 = vrot.slane %v529, 1
      %v567 = vsel %vm365, %v565, %v566
      %v568 = vrot.slane %v530, 1
      %v569 = vrot.slane %v531, 1
      %v570 = vsel %vm365, %v568, %v569
      %v571 = vrot.slane %v532, 1
      %v572 = vrot.slane %v533, 1
      %v573 = vsel %vm365, %v571, %v572
      %v582 = vadd.f32 %v508, %v552
      %v583 = vadd.f32 %v509, %v555
      %v584 = vadd.f32 %v510, %v558
      %v585 = vadd.f32 %v511, %v561
      %v586 = vadd.f32 %v512, %v564
      %v587 = vadd.f32 %v513, %v567
      %v588 = vadd.f32 %v514, %v570
      %v589 = vadd.f32 %v515, %v573
      %v590 = vld [vmem:[%s2 + $0x2] sm:$0x1]
      %v591 = vperm.slane %v590, 0
      %v592 = vmul.f32 %v297, %v591
      %v593 = vmul.f32 %v299, %v591
      %v594 = vmul.f32 %v301, %v591
      %v595 = vmul.f32 %v303, %v591
      %v596 = vmul.f32 %v305, %v591
      %v597 = vmul.f32 %v307, %v591
      %v598 = vmul.f32 %v309, %v591
      %v599 = vmul.f32 %v311, %v591
      %v600 = vadd.f32 %v582, %v592
      %v601 = vadd.f32 %v583, %v593
      %v602 = vadd.f32 %v584, %v594
      %v603 = vadd.f32 %v585, %v595
      %v604 = vadd.f32 %v586, %v596
      %v605 = vadd.f32 %v587, %v597
      %v606 = vadd.f32 %v588, %v598
      %v607 = vadd.f32 %v589, %v599
      %v608 = vld [vmem:[%s2] sm:$0x1]
      %v609 = vperm.slane %v608, 0
      %v610 = vmul.f32 %v297, %v609
      %v611 = vmul.f32 %v298, %v609
      %v612 = vmul.f32 %v299, %v609
      %v613 = vmul.f32 %v300, %v609
      %v614 = vmul.f32 %v301, %v609
      %v615 = vmul.f32 %v302, %v609
      %v616 = vmul.f32 %v303, %v609
      %v617 = vmul.f32 %v304, %v609
      %v618 = vmul.f32 %v305, %v609
      %v619 = vmul.f32 %v306, %v609
      %v620 = vmul.f32 %v307, %v609
      %v621 = vmul.f32 %v308, %v609
      %v622 = vmul.f32 %v309, %v609
      %v623 = vmul.f32 %v310, %v609
      %v624 = vmul.f32 %v311, %v609
      %v625 = vmul.f32 %v312, %v609
      %v642 = vrot.slane %v610, 1
      %v643 = vrot.slane %v611, 1
      %v644 = vsel %vm365, %v642, %v643
      %v645 = vrot.slane %v612, 1
      %v646 = vrot.slane %v613, 1
      %v647 = vsel %vm365, %v645, %v646
      %v648 = vrot.slane %v614, 1
      %v649 = vrot.slane %v615, 1
      %v650 = vsel %vm365, %v648, %v649
      %v651 = vrot.slane %v616, 1
      %v652 = vrot.slane %v617, 1
      %v653 = vsel %vm365, %v651, %v652
      %v654 = vrot.slane %v618, 1
      %v655 = vrot.slane %v619, 1
      %v656 = vsel %vm365, %v654, %v655
      %v657 = vrot.slane %v620, 1
      %v658 = vrot.slane %v621, 1
      %v659 = vsel %vm365, %v657, %v658
      %v660 = vrot.slane %v622, 1
      %v661 = vrot.slane %v623, 1
      %v662 = vsel %vm365, %v660, %v661
      %v663 = vrot.slane %v624, 1
      %v664 = vrot.slane %v625, 1
      %v665 = vsel %vm365, %v663, %v664
      %v674 = vadd.f32 %v600, %v644
      %v675 = vadd.f32 %v601, %v647
      %v676 = vadd.f32 %v602, %v650
      %v677 = vadd.f32 %v603, %v653
      %v678 = vadd.f32 %v604, %v656
      %v679 = vadd.f32 %v605, %v659
      %v680 = vadd.f32 %v606, %v662
      %v681 = vadd.f32 %v607, %v665
      %v682 = vlaneseq
      %v683 = vshrl.u32 %v682, 7
      %vm684 = vcmp.gt.s32.totalorder %v683, 0
      %vm685 = vmand 0, %vm684
      %vm686 = vmand 1, %vm684
      %v687 = vsel %vm685, %v674, 0.0
      %v688 = vsel %vm686, %v675, 0.0
      %v689 = vsel %vm686, %v676, 0.0
      %v690 = vsel %vm686, %v677, 0.0
      %v691 = vsel %vm686, %v678, 0.0
      %v692 = vsel %vm686, %v679, 0.0
      %v693 = vsel %vm686, %v680, 0.0
      %v694 = vsel %vm686, %v681, 0.0
      %vm695 = vcmask 64512
      %v696 = vsel %vm695, %v687, 0.0
      %v697 = vsel %vm695, %v688, 0.0
      %v698 = vadd.f32 %v696, %v697
      %v699 = vsel %vm695, %v689, 0.0
      %v700 = vadd.f32 %v698, %v699
      %v701 = vsel %vm695, %v690, 0.0
      %v702 = vadd.f32 %v700, %v701
      %v703 = vsel %vm695, %v691, 0.0
      %v704 = vadd.f32 %v702, %v703
      %v705 = vsel %vm695, %v692, 0.0
      %v706 = vadd.f32 %v704, %v705
      %v707 = vsel %vm695, %v693, 0.0
      %v708 = vadd.f32 %v706, %v707
      %v709 = vsel %vm695, %v694, 0.0
      %v710 = vadd.f32 %v708, %v709
      %v711 = vrot.slane %v710, 4
      %v712 = vadd.f32 %v710, %v711
      %v713 = vrot.slane %v712, 2
      %v714 = vadd.f32 %v712, %v713
      %v715 = vrot.slane %v714, 1
      %v716 = vadd.f32 %v714, %v715
      %v717 = vadd.f32 %v716, 0.0
      %v718 = vmul.f32 %v687, %v687
      %v719 = vmul.f32 %v688, %v688
      %v720 = vmul.f32 %v689, %v689
      %v721 = vmul.f32 %v690, %v690
      %v722 = vmul.f32 %v691, %v691
      %v723 = vmul.f32 %v692, %v692
      %v724 = vmul.f32 %v693, %v693
      %v725 = vmul.f32 %v694, %v694
      %v726 = vsel %vm695, %v718, 0.0
      %v727 = vsel %vm695, %v719, 0.0
      %v728 = vadd.f32 %v726, %v727
      %v729 = vsel %vm695, %v720, 0.0
      %v730 = vadd.f32 %v728, %v729
      %v731 = vsel %vm695, %v721, 0.0
      %v732 = vadd.f32 %v730, %v731
      %v733 = vsel %vm695, %v722, 0.0
      %v734 = vadd.f32 %v732, %v733
      %v735 = vsel %vm695, %v723, 0.0
      %v736 = vadd.f32 %v734, %v735
      %v737 = vsel %vm695, %v724, 0.0
      %v738 = vadd.f32 %v736, %v737
      %v739 = vsel %vm695, %v725, 0.0
      %v740 = vadd.f32 %v738, %v739
      %v741 = vrot.slane %v740, 4
      %v742 = vadd.f32 %v740, %v741
      %v743 = vrot.slane %v742, 2
      %v744 = vadd.f32 %v742, %v743
      %v745 = vrot.slane %v744, 1
      %v746 = vadd.f32 %v744, %v745
      %v747 = vadd.f32 %v746, 0.0
      %v748 = vld [vmem:[%s2 + $0x19] sm:$0x1]
      %v749 = vperm.slane %v748, 0
      %v750 = vmul.f32 %v277, %v749
      %v751 = vmul.f32 %v278, %v749
      %v752 = vmul.f32 %v279, %v749
      %v753 = vmul.f32 %v280, %v749
      %v754 = vmul.f32 %v281, %v749
      %v755 = vmul.f32 %v282, %v749
      %v756 = vmul.f32 %v283, %v749
      %v757 = vmul.f32 %v284, %v749
      %v758 = vmul.f32 %v285, %v749
      %v759 = vmul.f32 %v286, %v749
      %v760 = vmul.f32 %v287, %v749
      %v761 = vmul.f32 %v288, %v749
      %v762 = vmul.f32 %v289, %v749
      %v763 = vmul.f32 %v290, %v749
      %v764 = vmul.f32 %v291, %v749
      %v765 = vmul.f32 %v292, %v749
      %v766 = vadd.f32 %v750, 0.0
      %v767 = vadd.f32 %v751, 0.0
      %v768 = vadd.f32 %v752, 0.0
      %v769 = vadd.f32 %v753, 0.0
      %v770 = vadd.f32 %v754, 0.0
      %v771 = vadd.f32 %v755, 0.0
      %v772 = vadd.f32 %v756, 0.0
      %v773 = vadd.f32 %v757, 0.0
      %v774 = vadd.f32 %v758, 0.0
      %v775 = vadd.f32 %v759, 0.0
      %v776 = vadd.f32 %v760, 0.0
      %v777 = vadd.f32 %v761, 0.0
      %v778 = vadd.f32 %v762, 0.0
      %v779 = vadd.f32 %v763, 0.0
      %v780 = vadd.f32 %v764, 0.0
      %v781 = vadd.f32 %v765, 0.0
      %v782 = vld [vmem:[%s2 + $0x13] sm:$0x1]
      %v783 = vperm.slane %v782, 0
      %v784 = vmul.f32 %v279, %v783
      %v785 = vmul.f32 %v280, %v783
      %v786 = vmul.f32 %v281, %v783
      %v787 = vmul.f32 %v282, %v783
      %v788 = vmul.f32 %v283, %v783
      %v789 = vmul.f32 %v284, %v783
      %v790 = vmul.f32 %v285, %v783
      %v791 = vmul.f32 %v286, %v783
      %v792 = vmul.f32 %v287, %v783
      %v793 = vmul.f32 %v288, %v783
      %v794 = vmul.f32 %v289, %v783
      %v795 = vmul.f32 %v290, %v783
      %v796 = vmul.f32 %v291, %v783
      %v797 = vmul.f32 %v292, %v783
      %v798 = vmul.f32 %v293, %v783
      %v799 = vmul.f32 %v294, %v783
      %v800 = vadd.f32 %v766, %v784
      %v801 = vadd.f32 %v767, %v785
      %v802 = vadd.f32 %v768, %v786
      %v803 = vadd.f32 %v769, %v787
      %v804 = vadd.f32 %v770, %v788
      %v805 = vadd.f32 %v771, %v789
      %v806 = vadd.f32 %v772, %v790
      %v807 = vadd.f32 %v773, %v791
      %v808 = vadd.f32 %v774, %v792
      %v809 = vadd.f32 %v775, %v793
      %v810 = vadd.f32 %v776, %v794
      %v811 = vadd.f32 %v777, %v795
      %v812 = vadd.f32 %v778, %v796
      %v813 = vadd.f32 %v779, %v797
      %v814 = vadd.f32 %v780, %v798
      %v815 = vadd.f32 %v781, %v799
      %v816 = vld [vmem:[%s2 + $0x7] sm:$0x1]
      %v817 = vperm.slane %v816, 0
      %v818 = vmul.f32 %v295, %v817
      %v819 = vmul.f32 %v296, %v817
      %v820 = vmul.f32 %v297, %v817
      %v821 = vmul.f32 %v298, %v817
      %v822 = vmul.f32 %v299, %v817
      %v823 = vmul.f32 %v300, %v817
      %v824 = vmul.f32 %v301, %v817
      %v825 = vmul.f32 %v302, %v817
      %v826 = vmul.f32 %v303, %v817
      %v827 = vmul.f32 %v304, %v817
      %v828 = vmul.f32 %v305, %v817
      %v829 = vmul.f32 %v306, %v817
      %v830 = vmul.f32 %v307, %v817
      %v831 = vmul.f32 %v308, %v817
      %v832 = vmul.f32 %v309, %v817
      %v833 = vmul.f32 %v310, %v817
      %v834 = vadd.f32 %v800, %v818
      %v835 = vadd.f32 %v801, %v819
      %v836 = vadd.f32 %v802, %v820
      %v837 = vadd.f32 %v803, %v821
      %v838 = vadd.f32 %v804, %v822
      %v839 = vadd.f32 %v805, %v823
      %v840 = vadd.f32 %v806, %v824
      %v841 = vadd.f32 %v807, %v825
      %v842 = vadd.f32 %v808, %v826
      %v843 = vadd.f32 %v809, %v827
      %v844 = vadd.f32 %v810, %v828
      %v845 = vadd.f32 %v811, %v829
      %v846 = vadd.f32 %v812, %v830
      %v847 = vadd.f32 %v813, %v831
      %v848 = vadd.f32 %v814, %v832
      %v849 = vadd.f32 %v815, %v833
      %v850 = vld [vmem:[%s2 + $0x1] sm:$0x1]
      %v851 = vperm.slane %v850, 0
      %v852 = vmul.f32 %v297, %v851
      %v853 = vmul.f32 %v298, %v851
      %v854 = vmul.f32 %v299, %v851
      %v855 = vmul.f32 %v300, %v851
      %v856 = vmul.f32 %v301, %v851
      %v857 = vmul.f32 %v302, %v851
      %v858 = vmul.f32 %v303, %v851
      %v859 = vmul.f32 %v304, %v851
      %v860 = vmul.f32 %v305, %v851
      %v861 = vmul.f32 %v306, %v851
      %v862 = vmul.f32 %v307, %v851
      %v863 = vmul.f32 %v308, %v851
      %v864 = vmul.f32 %v309, %v851
      %v865 = vmul.f32 %v310, %v851
      %v866 = vmul.f32 %v311, %v851
      %v867 = vmul.f32 %v312, %v851
      %v868 = vadd.f32 %v834, %v852
      %v869 = vadd.f32 %v835, %v853
      %v870 = vadd.f32 %v836, %v854
      %v871 = vadd.f32 %v837, %v855
      %v872 = vadd.f32 %v838, %v856
      %v873 = vadd.f32 %v839, %v857
      %v874 = vadd.f32 %v840, %v858
      %v875 = vadd.f32 %v841, %v859
      %v876 = vadd.f32 %v842, %v860
      %v877 = vadd.f32 %v843, %v861
      %v878 = vadd.f32 %v844, %v862
      %v879 = vadd.f32 %v845, %v863
      %v880 = vadd.f32 %v846, %v864
      %v881 = vadd.f32 %v847, %v865
      %v882 = vadd.f32 %v848, %v866
      %v883 = vadd.f32 %v849, %v867
      %v884 = vsel 0, %v868, 0.0
      %v885 = vsel 0, %v869, 0.0
      %v886 = vsel 1, %v870, 0.0
      %v887 = vsel 1, %v871, 0.0
      %v888 = vsel 1, %v872, 0.0
      %v889 = vsel 1, %v873, 0.0
      %v890 = vsel 1, %v874, 0.0
      %v891 = vsel 1, %v875, 0.0
      %v892 = vsel 1, %v876, 0.0
      %v893 = vsel 1, %v877, 0.0
      %v894 = vsel 1, %v878, 0.0
      %v895 = vsel 1, %v879, 0.0
      %v896 = vsel 1, %v880, 0.0
      %v897 = vsel 1, %v881, 0.0
      %v898 = vsel 1, %v882, 0.0
      %v899 = vsel 1, %v883, 0.0
      %v916 = vrot.slane %v884, 1
      %v917 = vrot.slane %v885, 1
      %v918 = vsel %vm365, %v916, %v917
      %v919 = vrot.slane %v886, 1
      %v920 = vrot.slane %v887, 1
      %v921 = vsel %vm365, %v919, %v920
      %v922 = vrot.slane %v888, 1
      %v923 = vrot.slane %v889, 1
      %v924 = vsel %vm365, %v922, %v923
      %v925 = vrot.slane %v890, 1
      %v926 = vrot.slane %v891, 1
      %v927 = vsel %vm365, %v925, %v926
      %v928 = vrot.slane %v892, 1
      %v929 = vrot.slane %v893, 1
      %v930 = vsel %vm365, %v928, %v929
      %v931 = vrot.slane %v894, 1
      %v932 = vrot.slane %v895, 1
      %v933 = vsel %vm365, %v931, %v932
      %v934 = vrot.slane %v896, 1
      %v935 = vrot.slane %v897, 1
      %v936 = vsel %vm365, %v934, %v935
      %v937 = vrot.slane %v898, 1
      %v938 = vrot.slane %v899, 1
      %v939 = vsel %vm365, %v937, %v938
      %v948 = vsel %vm695, %v918, 0.0
      %v949 = vsel %vm695, %v921, 0.0
      %v950 = vadd.f32 %v948, %v949
      %v951 = vsel %vm695, %v924, 0.0
      %v952 = vadd.f32 %v950, %v951
      %v953 = vsel %vm695, %v927, 0.0
      %v954 = vadd.f32 %v952, %v953
      %v955 = vsel %vm695, %v930, 0.0
      %v956 = vadd.f32 %v954, %v955
      %v957 = vsel %vm695, %v933, 0.0
      %v958 = vadd.f32 %v956, %v957
      %v959 = vsel %vm695, %v936, 0.0
      %v960 = vadd.f32 %v958, %v959
      %v961 = vsel %vm695, %v939, 0.0
      %v962 = vadd.f32 %v960, %v961
      %v963 = vrot.slane %v962, 4
      %v964 = vadd.f32 %v962, %v963
      %v965 = vrot.slane %v964, 2
      %v966 = vadd.f32 %v964, %v965
      %v967 = vrot.slane %v966, 1
      %v968 = vadd.f32 %v966, %v967
      %v969 = vadd.f32 %v717, %v968
      %v970 = vmul.f32 %v884, %v884
      %v971 = vmul.f32 %v885, %v885
      %v972 = vmul.f32 %v886, %v886
      %v973 = vmul.f32 %v887, %v887
      %v974 = vmul.f32 %v888, %v888
      %v975 = vmul.f32 %v889, %v889
      %v976 = vmul.f32 %v890, %v890
      %v977 = vmul.f32 %v891, %v891
      %v978 = vmul.f32 %v892, %v892
      %v979 = vmul.f32 %v893, %v893
      %v980 = vmul.f32 %v894, %v894
      %v981 = vmul.f32 %v895, %v895
      %v982 = vmul.f32 %v896, %v896
      %v983 = vmul.f32 %v897, %v897
      %v984 = vmul.f32 %v898, %v898
      %v985 = vmul.f32 %v899, %v899
      %v1002 = vrot.slane %v970, 1
      %v1003 = vrot.slane %v971, 1
      %v1004 = vsel %vm365, %v1002, %v1003
      %v1005 = vrot.slane %v972, 1
      %v1006 = vrot.slane %v973, 1
      %v1007 = vsel %vm365, %v1005, %v1006
      %v1008 = vrot.slane %v974, 1
      %v1009 = vrot.slane %v975, 1
      %v1010 = vsel %vm365, %v1008, %v1009
      %v1011 = vrot.slane %v976, 1
      %v1012 = vrot.slane %v977, 1
      %v1013 = vsel %vm365, %v1011, %v1012
      %v1014 = vrot.slane %v978, 1
      %v1015 = vrot.slane %v979, 1
      %v1016 = vsel %vm365, %v1014, %v1015
      %v1017 = vrot.slane %v980, 1
      %v1018 = vrot.slane %v981, 1
      %v1019 = vsel %vm365, %v1017, %v1018
      %v1020 = vrot.slane %v982, 1
      %v1021 = vrot.slane %v983, 1
      %v1022 = vsel %vm365, %v1020, %v1021
      %v1023 = vrot.slane %v984, 1
      %v1024 = vrot.slane %v985, 1
      %v1025 = vsel %vm365, %v1023, %v1024
      %v1034 = vsel %vm695, %v1004, 0.0
      %v1035 = vsel %vm695, %v1007, 0.0
      %v1036 = vadd.f32 %v1034, %v1035
      %v1037 = vsel %vm695, %v1010, 0.0
      %v1038 = vadd.f32 %v1036, %v1037
      %v1039 = vsel %vm695, %v1013, 0.0
      %v1040 = vadd.f32 %v1038, %v1039
      %v1041 = vsel %vm695, %v1016, 0.0
      %v1042 = vadd.f32 %v1040, %v1041
      %v1043 = vsel %vm695, %v1019, 0.0
      %v1044 = vadd.f32 %v1042, %v1043
      %v1045 = vsel %vm695, %v1022, 0.0
      %v1046 = vadd.f32 %v1044, %v1045
      %v1047 = vsel %vm695, %v1025, 0.0
      %v1048 = vadd.f32 %v1046, %v1047
      %v1049 = vrot.slane %v1048, 4
      %v1050 = vadd.f32 %v1048, %v1049
      %v1051 = vrot.slane %v1050, 2
      %v1052 = vadd.f32 %v1050, %v1051
      %v1053 = vrot.slane %v1052, 1
      %v1054 = vadd.f32 %v1052, %v1053
      %v1055 = vadd.f32 %v747, %v1054
      %v1056 = vld [vmem:[%s2 + $0x17] sm:$0x1]
      %v1057 = vperm.slane %v1056, 0
      %v1058 = vmul.f32 %v279, %v1057
      %v1059 = vmul.f32 %v281, %v1057
      %v1060 = vmul.f32 %v283, %v1057
      %v1061 = vmul.f32 %v285, %v1057
      %v1062 = vmul.f32 %v287, %v1057
      %v1063 = vmul.f32 %v289, %v1057
      %v1064 = vmul.f32 %v291, %v1057
      %v1065 = vmul.f32 %v293, %v1057
      %v1066 = vadd.f32 %v1058, 0.0
      %v1067 = vadd.f32 %v1059, 0.0
      %v1068 = vadd.f32 %v1060, 0.0
      %v1069 = vadd.f32 %v1061, 0.0
      %v1070 = vadd.f32 %v1062, 0.0
      %v1071 = vadd.f32 %v1063, 0.0
      %v1072 = vadd.f32 %v1064, 0.0
      %v1073 = vadd.f32 %v1065, 0.0
      %v1074 = vld [vmem:[%s2 + $0x15] sm:$0x1]
      %v1075 = vperm.slane %v1074, 0
      %v1076 = vmul.f32 %v279, %v1075
      %v1077 = vmul.f32 %v280, %v1075
      %v1078 = vmul.f32 %v281, %v1075
      %v1079 = vmul.f32 %v282, %v1075
      %v1080 = vmul.f32 %v283, %v1075
      %v1081 = vmul.f32 %v284, %v1075
      %v1082 = vmul.f32 %v285, %v1075
      %v1083 = vmul.f32 %v286, %v1075
      %v1084 = vmul.f32 %v287, %v1075
      %v1085 = vmul.f32 %v288, %v1075
      %v1086 = vmul.f32 %v289, %v1075
      %v1087 = vmul.f32 %v290, %v1075
      %v1088 = vmul.f32 %v291, %v1075
      %v1089 = vmul.f32 %v292, %v1075
      %v1090 = vmul.f32 %v293, %v1075
      %v1091 = vmul.f32 %v294, %v1075
      %v1108 = vrot.slane %v1076, 1
      %v1109 = vrot.slane %v1077, 1
      %v1110 = vsel %vm365, %v1108, %v1109
      %v1111 = vrot.slane %v1078, 1
      %v1112 = vrot.slane %v1079, 1
      %v1113 = vsel %vm365, %v1111, %v1112
      %v1114 = vrot.slane %v1080, 1
      %v1115 = vrot.slane %v1081, 1
      %v1116 = vsel %vm365, %v1114, %v1115
      %v1117 = vrot.slane %v1082, 1
      %v1118 = vrot.slane %v1083, 1
      %v1119 = vsel %vm365, %v1117, %v1118
      %v1120 = vrot.slane %v1084, 1
      %v1121 = vrot.slane %v1085, 1
      %v1122 = vsel %vm365, %v1120, %v1121
      %v1123 = vrot.slane %v1086, 1
      %v1124 = vrot.slane %v1087, 1
      %v1125 = vsel %vm365, %v1123, %v1124
      %v1126 = vrot.slane %v1088, 1
      %v1127 = vrot.slane %v1089, 1
      %v1128 = vsel %vm365, %v1126, %v1127
      %v1129 = vrot.slane %v1090, 1
      %v1130 = vrot.slane %v1091, 1
      %v1131 = vsel %vm365, %v1129, %v1130
      %v1140 = vadd.f32 %v1066, %v1110
      %v1141 = vadd.f32 %v1067, %v1113
      %v1142 = vadd.f32 %v1068, %v1116
      %v1143 = vadd.f32 %v1069, %v1119
      %v1144 = vadd.f32 %v1070, %v1122
      %v1145 = vadd.f32 %v1071, %v1125
      %v1146 = vadd.f32 %v1072, %v1128
      %v1147 = vadd.f32 %v1073, %v1131
      %v1148 = vld [vmem:[%s2 + $0x5] sm:$0x1]
      %v1149 = vperm.slane %v1148, 0
      %v1150 = vmul.f32 %v297, %v1149
      %v1151 = vmul.f32 %v299, %v1149
      %v1152 = vmul.f32 %v301, %v1149
      %v1153 = vmul.f32 %v303, %v1149
      %v1154 = vmul.f32 %v305, %v1149
      %v1155 = vmul.f32 %v307, %v1149
      %v1156 = vmul.f32 %v309, %v1149
      %v1157 = vmul.f32 %v311, %v1149
      %v1158 = vadd.f32 %v1140, %v1150
      %v1159 = vadd.f32 %v1141, %v1151
      %v1160 = vadd.f32 %v1142, %v1152
      %v1161 = vadd.f32 %v1143, %v1153
      %v1162 = vadd.f32 %v1144, %v1154
      %v1163 = vadd.f32 %v1145, %v1155
      %v1164 = vadd.f32 %v1146, %v1156
      %v1165 = vadd.f32 %v1147, %v1157
      %v1166 = vld [vmem:[%s2 + $0x3] sm:$0x1]
      %v1167 = vperm.slane %v1166, 0
      %v1168 = vmul.f32 %v297, %v1167
      %v1169 = vmul.f32 %v298, %v1167
      %v1170 = vmul.f32 %v299, %v1167
      %v1171 = vmul.f32 %v300, %v1167
      %v1172 = vmul.f32 %v301, %v1167
      %v1173 = vmul.f32 %v302, %v1167
      %v1174 = vmul.f32 %v303, %v1167
      %v1175 = vmul.f32 %v304, %v1167
      %v1176 = vmul.f32 %v305, %v1167
      %v1177 = vmul.f32 %v306, %v1167
      %v1178 = vmul.f32 %v307, %v1167
      %v1179 = vmul.f32 %v308, %v1167
      %v1180 = vmul.f32 %v309, %v1167
      %v1181 = vmul.f32 %v310, %v1167
      %v1182 = vmul.f32 %v311, %v1167
      %v1183 = vmul.f32 %v312, %v1167
      %v1200 = vrot.slane %v1168, 1
      %v1201 = vrot.slane %v1169, 1
      %v1202 = vsel %vm365, %v1200, %v1201
      %v1203 = vrot.slane %v1170, 1
      %v1204 = vrot.slane %v1171, 1
      %v1205 = vsel %vm365, %v1203, %v1204
      %v1206 = vrot.slane %v1172, 1
      %v1207 = vrot.slane %v1173, 1
      %v1208 = vsel %vm365, %v1206, %v1207
      %v1209 = vrot.slane %v1174, 1
      %v1210 = vrot.slane %v1175, 1
      %v1211 = vsel %vm365, %v1209, %v1210
      %v1212 = vrot.slane %v1176, 1
      %v1213 = vrot.slane %v1177, 1
      %v1214 = vsel %vm365, %v1212, %v1213
      %v1215 = vrot.slane %v1178, 1
      %v1216 = vrot.slane %v1179, 1
      %v1217 = vsel %vm365, %v1215, %v1216
      %v1218 = vrot.slane %v1180, 1
      %v1219 = vrot.slane %v1181, 1
      %v1220 = vsel %vm365, %v1218, %v1219
      %v1221 = vrot.slane %v1182, 1
      %v1222 = vrot.slane %v1183, 1
      %v1223 = vsel %vm365, %v1221, %v1222
      %v1232 = vadd.f32 %v1158, %v1202
      %v1233 = vadd.f32 %v1159, %v1205
      %v1234 = vadd.f32 %v1160, %v1208
      %v1235 = vadd.f32 %v1161, %v1211
      %v1236 = vadd.f32 %v1162, %v1214
      %v1237 = vadd.f32 %v1163, %v1217
      %v1238 = vadd.f32 %v1164, %v1220
      %v1239 = vadd.f32 %v1165, %v1223
      %v1240 = vsel %vm684, %v1232, 0.0
      %v1241 = vsel %vm684, %v1233, 0.0
      %v1242 = vsel %vm684, %v1234, 0.0
      %v1243 = vsel %vm684, %v1235, 0.0
      %v1244 = vsel %vm684, %v1236, 0.0
      %v1245 = vsel %vm684, %v1237, 0.0
      %v1246 = vsel %vm684, %v1238, 0.0
      %v1247 = vsel %vm684, %v1239, 0.0
      %v1248 = vsel %vm695, %v1240, 0.0
      %v1249 = vsel %vm695, %v1241, 0.0
      %v1250 = vadd.f32 %v1248, %v1249
      %v1251 = vsel %vm695, %v1242, 0.0
      %v1252 = vadd.f32 %v1250, %v1251
      %v1253 = vsel %vm695, %v1243, 0.0
      %v1254 = vadd.f32 %v1252, %v1253
      %v1255 = vsel %vm695, %v1244, 0.0
      %v1256 = vadd.f32 %v1254, %v1255
      %v1257 = vsel %vm695, %v1245, 0.0
      %v1258 = vadd.f32 %v1256, %v1257
      %v1259 = vsel %vm695, %v1246, 0.0
      %v1260 = vadd.f32 %v1258, %v1259
      %v1261 = vsel %vm695, %v1247, 0.0
      %v1262 = vadd.f32 %v1260, %v1261
      %v1263 = vrot.slane %v1262, 4
      %v1264 = vadd.f32 %v1262, %v1263
      %v1265 = vrot.slane %v1264, 2
      %v1266 = vadd.f32 %v1264, %v1265
      %v1267 = vrot.slane %v1266, 1
      %v1268 = vadd.f32 %v1266, %v1267
      %v1269 = vadd.f32 %v969, %v1268
      %v1270 = vmul.f32 %v1240, %v1240
      %v1271 = vmul.f32 %v1241, %v1241
      %v1272 = vmul.f32 %v1242, %v1242
      %v1273 = vmul.f32 %v1243, %v1243
      %v1274 = vmul.f32 %v1244, %v1244
      %v1275 = vmul.f32 %v1245, %v1245
      %v1276 = vmul.f32 %v1246, %v1246
      %v1277 = vmul.f32 %v1247, %v1247
      %v1278 = vsel %vm695, %v1270, 0.0
      %v1279 = vsel %vm695, %v1271, 0.0
      %v1280 = vadd.f32 %v1278, %v1279
      %v1281 = vsel %vm695, %v1272, 0.0
      %v1282 = vadd.f32 %v1280, %v1281
      %v1283 = vsel %vm695, %v1273, 0.0
      %v1284 = vadd.f32 %v1282, %v1283
      %v1285 = vsel %vm695, %v1274, 0.0
      %v1286 = vadd.f32 %v1284, %v1285
      %v1287 = vsel %vm695, %v1275, 0.0
      %v1288 = vadd.f32 %v1286, %v1287
      %v1289 = vsel %vm695, %v1276, 0.0
      %v1290 = vadd.f32 %v1288, %v1289
      %v1291 = vsel %vm695, %v1277, 0.0
      %v1292 = vadd.f32 %v1290, %v1291
      %v1293 = vrot.slane %v1292, 4
      %v1294 = vadd.f32 %v1292, %v1293
      %v1295 = vrot.slane %v1294, 2
      %v1296 = vadd.f32 %v1294, %v1295
      %v1297 = vrot.slane %v1296, 1
      %v1298 = vadd.f32 %v1296, %v1297
      %v1299 = vadd.f32 %v1055, %v1298
      %v1300 = vld [vmem:[%s2 + $0x16] sm:$0x1]
      %v1301 = vperm.slane %v1300, 0
      %v1302 = vmul.f32 %v279, %v1301
      %v1303 = vmul.f32 %v280, %v1301
      %v1304 = vmul.f32 %v281, %v1301
      %v1305 = vmul.f32 %v282, %v1301
      %v1306 = vmul.f32 %v283, %v1301
      %v1307 = vmul.f32 %v284, %v1301
      %v1308 = vmul.f32 %v285, %v1301
      %v1309 = vmul.f32 %v286, %v1301
      %v1310 = vmul.f32 %v287, %v1301
      %v1311 = vmul.f32 %v288, %v1301
      %v1312 = vmul.f32 %v289, %v1301
      %v1313 = vmul.f32 %v290, %v1301
      %v1314 = vmul.f32 %v291, %v1301
      %v1315 = vmul.f32 %v292, %v1301
      %v1316 = vmul.f32 %v293, %v1301
      %v1317 = vmul.f32 %v294, %v1301
      %v1318 = vadd.f32 %v1302, 0.0
      %v1319 = vadd.f32 %v1303, 0.0
      %v1320 = vadd.f32 %v1304, 0.0
      %v1321 = vadd.f32 %v1305, 0.0
      %v1322 = vadd.f32 %v1306, 0.0
      %v1323 = vadd.f32 %v1307, 0.0
      %v1324 = vadd.f32 %v1308, 0.0
      %v1325 = vadd.f32 %v1309, 0.0
      %v1326 = vadd.f32 %v1310, 0.0
      %v1327 = vadd.f32 %v1311, 0.0
      %v1328 = vadd.f32 %v1312, 0.0
      %v1329 = vadd.f32 %v1313, 0.0
      %v1330 = vadd.f32 %v1314, 0.0
      %v1331 = vadd.f32 %v1315, 0.0
      %v1332 = vadd.f32 %v1316, 0.0
      %v1333 = vadd.f32 %v1317, 0.0
      %v1334 = vld [vmem:[%s2 + $0x4] sm:$0x1]
      %v1335 = vperm.slane %v1334, 0
      %v1336 = vmul.f32 %v297, %v1335
      %v1337 = vmul.f32 %v298, %v1335
      %v1338 = vmul.f32 %v299, %v1335
      %v1339 = vmul.f32 %v300, %v1335
      %v1340 = vmul.f32 %v301, %v1335
      %v1341 = vmul.f32 %v302, %v1335
      %v1342 = vmul.f32 %v303, %v1335
      %v1343 = vmul.f32 %v304, %v1335
      %v1344 = vmul.f32 %v305, %v1335
      %v1345 = vmul.f32 %v306, %v1335
      %v1346 = vmul.f32 %v307, %v1335
      %v1347 = vmul.f32 %v308, %v1335
      %v1348 = vmul.f32 %v309, %v1335
      %v1349 = vmul.f32 %v310, %v1335
      %v1350 = vmul.f32 %v311, %v1335
      %v1351 = vmul.f32 %v312, %v1335
      %v1352 = vadd.f32 %v1318, %v1336
      %v1353 = vadd.f32 %v1319, %v1337
      %v1354 = vadd.f32 %v1320, %v1338
      %v1355 = vadd.f32 %v1321, %v1339
      %v1356 = vadd.f32 %v1322, %v1340
      %v1357 = vadd.f32 %v1323, %v1341
      %v1358 = vadd.f32 %v1324, %v1342
      %v1359 = vadd.f32 %v1325, %v1343
      %v1360 = vadd.f32 %v1326, %v1344
      %v1361 = vadd.f32 %v1327, %v1345
      %v1362 = vadd.f32 %v1328, %v1346
      %v1363 = vadd.f32 %v1329, %v1347
      %v1364 = vadd.f32 %v1330, %v1348
      %v1365 = vadd.f32 %v1331, %v1349
      %v1366 = vadd.f32 %v1332, %v1350
      %v1367 = vadd.f32 %v1333, %v1351
      %v1384 = vrot.slane %v1352, 1
      %v1385 = vrot.slane %v1353, 1
      %v1386 = vsel %vm365, %v1384, %v1385
      %v1387 = vrot.slane %v1354, 1
      %v1388 = vrot.slane %v1355, 1
      %v1389 = vsel %vm365, %v1387, %v1388
      %v1390 = vrot.slane %v1356, 1
      %v1391 = vrot.slane %v1357, 1
      %v1392 = vsel %vm365, %v1390, %v1391
      %v1393 = vrot.slane %v1358, 1
      %v1394 = vrot.slane %v1359, 1
      %v1395 = vsel %vm365, %v1393, %v1394
      %v1396 = vrot.slane %v1360, 1
      %v1397 = vrot.slane %v1361, 1
      %v1398 = vsel %vm365, %v1396, %v1397
      %v1399 = vrot.slane %v1362, 1
      %v1400 = vrot.slane %v1363, 1
      %v1401 = vsel %vm365, %v1399, %v1400
      %v1402 = vrot.slane %v1364, 1
      %v1403 = vrot.slane %v1365, 1
      %v1404 = vsel %vm365, %v1402, %v1403
      %v1405 = vrot.slane %v1366, 1
      %v1406 = vrot.slane %v1367, 1
      %v1407 = vsel %vm365, %v1405, %v1406
      %v1416 = vsel %vm695, %v1386, 0.0
      %v1417 = vsel %vm695, %v1389, 0.0
      %v1418 = vadd.f32 %v1416, %v1417
      %v1419 = vsel %vm695, %v1392, 0.0
      %v1420 = vadd.f32 %v1418, %v1419
      %v1421 = vsel %vm695, %v1395, 0.0
      %v1422 = vadd.f32 %v1420, %v1421
      %v1423 = vsel %vm695, %v1398, 0.0
      %v1424 = vadd.f32 %v1422, %v1423
      %v1425 = vsel %vm695, %v1401, 0.0
      %v1426 = vadd.f32 %v1424, %v1425
      %v1427 = vsel %vm695, %v1404, 0.0
      %v1428 = vadd.f32 %v1426, %v1427
      %v1429 = vsel %vm695, %v1407, 0.0
      %v1430 = vadd.f32 %v1428, %v1429
      %v1431 = vrot.slane %v1430, 4
      %v1432 = vadd.f32 %v1430, %v1431
      %v1433 = vrot.slane %v1432, 2
      %v1434 = vadd.f32 %v1432, %v1433
      %v1435 = vrot.slane %v1434, 1
      %v1436 = vadd.f32 %v1434, %v1435
      %v1437 = vadd.f32 %v1269, %v1436
      %v1438 = vmul.f32 %v1352, %v1352
      %v1439 = vmul.f32 %v1353, %v1353
      %v1440 = vmul.f32 %v1354, %v1354
      %v1441 = vmul.f32 %v1355, %v1355
      %v1442 = vmul.f32 %v1356, %v1356
      %v1443 = vmul.f32 %v1357, %v1357
      %v1444 = vmul.f32 %v1358, %v1358
      %v1445 = vmul.f32 %v1359, %v1359
      %v1446 = vmul.f32 %v1360, %v1360
      %v1447 = vmul.f32 %v1361, %v1361
      %v1448 = vmul.f32 %v1362, %v1362
      %v1449 = vmul.f32 %v1363, %v1363
      %v1450 = vmul.f32 %v1364, %v1364
      %v1451 = vmul.f32 %v1365, %v1365
      %v1452 = vmul.f32 %v1366, %v1366
      %v1453 = vmul.f32 %v1367, %v1367
      %v1470 = vrot.slane %v1438, 1
      %v1471 = vrot.slane %v1439, 1
      %v1472 = vsel %vm365, %v1470, %v1471
      %v1473 = vrot.slane %v1440, 1
      %v1474 = vrot.slane %v1441, 1
      %v1475 = vsel %vm365, %v1473, %v1474
      %v1476 = vrot.slane %v1442, 1
      %v1477 = vrot.slane %v1443, 1
      %v1478 = vsel %vm365, %v1476, %v1477
      %v1479 = vrot.slane %v1444, 1
      %v1480 = vrot.slane %v1445, 1
      %v1481 = vsel %vm365, %v1479, %v1480
      %v1482 = vrot.slane %v1446, 1
      %v1483 = vrot.slane %v1447, 1
      %v1484 = vsel %vm365, %v1482, %v1483
      %v1485 = vrot.slane %v1448, 1
      %v1486 = vrot.slane %v1449, 1
      %v1487 = vsel %vm365, %v1485, %v1486
      %v1488 = vrot.slane %v1450, 1
      %v1489 = vrot.slane %v1451, 1
      %v1490 = vsel %vm365, %v1488, %v1489
      %v1491 = vrot.slane %v1452, 1
      %v1492 = vrot.slane %v1453, 1
      %v1493 = vsel %vm365, %v1491, %v1492
      %v1502 = vsel %vm695, %v1472, 0.0
      %v1503 = vsel %vm695, %v1475, 0.0
      %v1504 = vadd.f32 %v1502, %v1503
      %v1505 = vsel %vm695, %v1478, 0.0
      %v1506 = vadd.f32 %v1504, %v1505
      %v1507 = vsel %vm695, %v1481, 0.0
      %v1508 = vadd.f32 %v1506, %v1507
      %v1509 = vsel %vm695, %v1484, 0.0
      %v1510 = vadd.f32 %v1508, %v1509
      %v1511 = vsel %vm695, %v1487, 0.0
      %v1512 = vadd.f32 %v1510, %v1511
      %v1513 = vsel %vm695, %v1490, 0.0
      %v1514 = vadd.f32 %v1512, %v1513
      %v1515 = vsel %vm695, %v1493, 0.0
      %v1516 = vadd.f32 %v1514, %v1515
      %v1517 = vrot.slane %v1516, 4
      %v1518 = vadd.f32 %v1516, %v1517
      %v1519 = vrot.slane %v1518, 2
      %v1520 = vadd.f32 %v1518, %v1519
      %v1521 = vrot.slane %v1520, 1
      %v1522 = vadd.f32 %v1520, %v1521
      %v1523 = vadd.f32 %v1299, %v1522
      %p1524 = scmp.gt.s32.totalorder %s21, 0
      %s1525 = scalar_select %p1524, 1, 0
      %s1526 = scvt.s32.f32 %s1525
      %v1527 = vstv %s1526
      %v1528 = vmul.f32 %v1437, %v1527
      %v1529 = vmul.f32 %v1523, %v1527
      %v1530 = vadd.f32 %v1528, 0.0
      %v1531 = vadd.f32 %v1529, 0.0
      %v1532 = vld [vmem:[%s2 + $0x11] sm:$0x1]
      %v1533 = vperm.slane %v1532, 0
      %v1534 = vmul.f32 %v295, %v1533
      %v1535 = vmul.f32 %v297, %v1533
      %v1536 = vmul.f32 %v299, %v1533
      %v1537 = vmul.f32 %v301, %v1533
      %v1538 = vmul.f32 %v303, %v1533
      %v1539 = vmul.f32 %v305, %v1533
      %v1540 = vmul.f32 %v307, %v1533
      %v1541 = vmul.f32 %v309, %v1533
      %v1542 = vadd.f32 %v1534, 0.0
      %v1543 = vadd.f32 %v1535, 0.0
      %v1544 = vadd.f32 %v1536, 0.0
      %v1545 = vadd.f32 %v1537, 0.0
      %v1546 = vadd.f32 %v1538, 0.0
      %v1547 = vadd.f32 %v1539, 0.0
      %v1548 = vadd.f32 %v1540, 0.0
      %v1549 = vadd.f32 %v1541, 0.0
      %v1550 = vld [vmem:[%s2 + $0xf] sm:$0x1]
      %v1551 = vperm.slane %v1550, 0
      %v1552 = vmul.f32 %v295, %v1551
      %v1553 = vmul.f32 %v296, %v1551
      %v1554 = vmul.f32 %v297, %v1551
      %v1555 = vmul.f32 %v298, %v1551
      %v1556 = vmul.f32 %v299, %v1551
      %v1557 = vmul.f32 %v300, %v1551
      %v1558 = vmul.f32 %v301, %v1551
      %v1559 = vmul.f32 %v302, %v1551
      %v1560 = vmul.f32 %v303, %v1551
      %v1561 = vmul.f32 %v304, %v1551
      %v1562 = vmul.f32 %v305, %v1551
      %v1563 = vmul.f32 %v306, %v1551
      %v1564 = vmul.f32 %v307, %v1551
      %v1565 = vmul.f32 %v308, %v1551
      %v1566 = vmul.f32 %v309, %v1551
      %v1567 = vmul.f32 %v310, %v1551
      %v1584 = vrot.slane %v1552, 1
      %v1585 = vrot.slane %v1553, 1
      %v1586 = vsel %vm365, %v1584, %v1585
      %v1587 = vrot.slane %v1554, 1
      %v1588 = vrot.slane %v1555, 1
      %v1589 = vsel %vm365, %v1587, %v1588
      %v1590 = vrot.slane %v1556, 1
      %v1591 = vrot.slane %v1557, 1
      %v1592 = vsel %vm365, %v1590, %v1591
      %v1593 = vrot.slane %v1558, 1
      %v1594 = vrot.slane %v1559, 1
      %v1595 = vsel %vm365, %v1593, %v1594
      %v1596 = vrot.slane %v1560, 1
      %v1597 = vrot.slane %v1561, 1
      %v1598 = vsel %vm365, %v1596, %v1597
      %v1599 = vrot.slane %v1562, 1
      %v1600 = vrot.slane %v1563, 1
      %v1601 = vsel %vm365, %v1599, %v1600
      %v1602 = vrot.slane %v1564, 1
      %v1603 = vrot.slane %v1565, 1
      %v1604 = vsel %vm365, %v1602, %v1603
      %v1605 = vrot.slane %v1566, 1
      %v1606 = vrot.slane %v1567, 1
      %v1607 = vsel %vm365, %v1605, %v1606
      %v1616 = vadd.f32 %v1542, %v1586
      %v1617 = vadd.f32 %v1543, %v1589
      %v1618 = vadd.f32 %v1544, %v1592
      %v1619 = vadd.f32 %v1545, %v1595
      %v1620 = vadd.f32 %v1546, %v1598
      %v1621 = vadd.f32 %v1547, %v1601
      %v1622 = vadd.f32 %v1548, %v1604
      %v1623 = vadd.f32 %v1549, %v1607
      %v1624 = vld [vmem:[%s2 + $0xb] sm:$0x1]
      %v1625 = vperm.slane %v1624, 0
      %v1626 = vmul.f32 %v297, %v1625
      %v1627 = vmul.f32 %v299, %v1625
      %v1628 = vmul.f32 %v301, %v1625
      %v1629 = vmul.f32 %v303, %v1625
      %v1630 = vmul.f32 %v305, %v1625
      %v1631 = vmul.f32 %v307, %v1625
      %v1632 = vmul.f32 %v309, %v1625
      %v1633 = vmul.f32 %v311, %v1625
      %v1634 = vadd.f32 %v1616, %v1626
      %v1635 = vadd.f32 %v1617, %v1627
      %v1636 = vadd.f32 %v1618, %v1628
      %v1637 = vadd.f32 %v1619, %v1629
      %v1638 = vadd.f32 %v1620, %v1630
      %v1639 = vadd.f32 %v1621, %v1631
      %v1640 = vadd.f32 %v1622, %v1632
      %v1641 = vadd.f32 %v1623, %v1633
      %v1642 = vld [vmem:[%s2 + $0x9] sm:$0x1]
      %v1643 = vperm.slane %v1642, 0
      %v1644 = vmul.f32 %v297, %v1643
      %v1645 = vmul.f32 %v298, %v1643
      %v1646 = vmul.f32 %v299, %v1643
      %v1647 = vmul.f32 %v300, %v1643
      %v1648 = vmul.f32 %v301, %v1643
      %v1649 = vmul.f32 %v302, %v1643
      %v1650 = vmul.f32 %v303, %v1643
      %v1651 = vmul.f32 %v304, %v1643
      %v1652 = vmul.f32 %v305, %v1643
      %v1653 = vmul.f32 %v306, %v1643
      %v1654 = vmul.f32 %v307, %v1643
      %v1655 = vmul.f32 %v308, %v1643
      %v1656 = vmul.f32 %v309, %v1643
      %v1657 = vmul.f32 %v310, %v1643
      %v1658 = vmul.f32 %v311, %v1643
      %v1659 = vmul.f32 %v312, %v1643
      %v1676 = vrot.slane %v1644, 1
      %v1677 = vrot.slane %v1645, 1
      %v1678 = vsel %vm365, %v1676, %v1677
      %v1679 = vrot.slane %v1646, 1
      %v1680 = vrot.slane %v1647, 1
      %v1681 = vsel %vm365, %v1679, %v1680
      %v1682 = vrot.slane %v1648, 1
      %v1683 = vrot.slane %v1649, 1
      %v1684 = vsel %vm365, %v1682, %v1683
      %v1685 = vrot.slane %v1650, 1
      %v1686 = vrot.slane %v1651, 1
      %v1687 = vsel %vm365, %v1685, %v1686
      %v1688 = vrot.slane %v1652, 1
      %v1689 = vrot.slane %v1653, 1
      %v1690 = vsel %vm365, %v1688, %v1689
      %v1691 = vrot.slane %v1654, 1
      %v1692 = vrot.slane %v1655, 1
      %v1693 = vsel %vm365, %v1691, %v1692
      %v1694 = vrot.slane %v1656, 1
      %v1695 = vrot.slane %v1657, 1
      %v1696 = vsel %vm365, %v1694, %v1695
      %v1697 = vrot.slane %v1658, 1
      %v1698 = vrot.slane %v1659, 1
      %v1699 = vsel %vm365, %v1697, %v1698
      %v1708 = vadd.f32 %v1634, %v1678
      %v1709 = vadd.f32 %v1635, %v1681
      %v1710 = vadd.f32 %v1636, %v1684
      %v1711 = vadd.f32 %v1637, %v1687
      %v1712 = vadd.f32 %v1638, %v1690
      %v1713 = vadd.f32 %v1639, %v1693
      %v1714 = vadd.f32 %v1640, %v1696
      %v1715 = vadd.f32 %v1641, %v1699
      %v1716 = vsel %vm685, %v1708, 0.0
      %v1717 = vsel %vm686, %v1709, 0.0
      %v1718 = vsel %vm686, %v1710, 0.0
      %v1719 = vsel %vm686, %v1711, 0.0
      %v1720 = vsel %vm686, %v1712, 0.0
      %v1721 = vsel %vm686, %v1713, 0.0
      %v1722 = vsel %vm686, %v1714, 0.0
      %v1723 = vsel %vm686, %v1715, 0.0
      %v1724 = vsel %vm695, %v1716, 0.0
      %v1725 = vsel %vm695, %v1717, 0.0
      %v1726 = vadd.f32 %v1724, %v1725
      %v1727 = vsel %vm695, %v1718, 0.0
      %v1728 = vadd.f32 %v1726, %v1727
      %v1729 = vsel %vm695, %v1719, 0.0
      %v1730 = vadd.f32 %v1728, %v1729
      %v1731 = vsel %vm695, %v1720, 0.0
      %v1732 = vadd.f32 %v1730, %v1731
      %v1733 = vsel %vm695, %v1721, 0.0
      %v1734 = vadd.f32 %v1732, %v1733
      %v1735 = vsel %vm695, %v1722, 0.0
      %v1736 = vadd.f32 %v1734, %v1735
      %v1737 = vsel %vm695, %v1723, 0.0
      %v1738 = vadd.f32 %v1736, %v1737
      %v1739 = vrot.slane %v1738, 4
      %v1740 = vadd.f32 %v1738, %v1739
      %v1741 = vrot.slane %v1740, 2
      %v1742 = vadd.f32 %v1740, %v1741
      %v1743 = vrot.slane %v1742, 1
      %v1744 = vadd.f32 %v1742, %v1743
      %v1745 = vadd.f32 %v1744, 0.0
      %v1746 = vmul.f32 %v1716, %v1716
      %v1747 = vmul.f32 %v1717, %v1717
      %v1748 = vmul.f32 %v1718, %v1718
      %v1749 = vmul.f32 %v1719, %v1719
      %v1750 = vmul.f32 %v1720, %v1720
      %v1751 = vmul.f32 %v1721, %v1721
      %v1752 = vmul.f32 %v1722, %v1722
      %v1753 = vmul.f32 %v1723, %v1723
      %v1754 = vsel %vm695, %v1746, 0.0
      %v1755 = vsel %vm695, %v1747, 0.0
      %v1756 = vadd.f32 %v1754, %v1755
      %v1757 = vsel %vm695, %v1748, 0.0
      %v1758 = vadd.f32 %v1756, %v1757
      %v1759 = vsel %vm695, %v1749, 0.0
      %v1760 = vadd.f32 %v1758, %v1759
      %v1761 = vsel %vm695, %v1750, 0.0
      %v1762 = vadd.f32 %v1760, %v1761
      %v1763 = vsel %vm695, %v1751, 0.0
      %v1764 = vadd.f32 %v1762, %v1763
      %v1765 = vsel %vm695, %v1752, 0.0
      %v1766 = vadd.f32 %v1764, %v1765
      %v1767 = vsel %vm695, %v1753, 0.0
      %v1768 = vadd.f32 %v1766, %v1767
      %v1769 = vrot.slane %v1768, 4
      %v1770 = vadd.f32 %v1768, %v1769
      %v1771 = vrot.slane %v1770, 2
      %v1772 = vadd.f32 %v1770, %v1771
      %v1773 = vrot.slane %v1772, 1
      %v1774 = vadd.f32 %v1772, %v1773
      %v1775 = vadd.f32 %v1774, 0.0
      %v1776 = vld [vmem:[%s2 + $0x10] sm:$0x1]
      %v1777 = vperm.slane %v1776, 0
      %v1778 = vmul.f32 %v295, %v1777
      %v1779 = vmul.f32 %v296, %v1777
      %v1780 = vmul.f32 %v297, %v1777
      %v1781 = vmul.f32 %v298, %v1777
      %v1782 = vmul.f32 %v299, %v1777
      %v1783 = vmul.f32 %v300, %v1777
      %v1784 = vmul.f32 %v301, %v1777
      %v1785 = vmul.f32 %v302, %v1777
      %v1786 = vmul.f32 %v303, %v1777
      %v1787 = vmul.f32 %v304, %v1777
      %v1788 = vmul.f32 %v305, %v1777
      %v1789 = vmul.f32 %v306, %v1777
      %v1790 = vmul.f32 %v307, %v1777
      %v1791 = vmul.f32 %v308, %v1777
      %v1792 = vmul.f32 %v309, %v1777
      %v1793 = vmul.f32 %v310, %v1777
      %v1794 = vadd.f32 %v1778, 0.0
      %v1795 = vadd.f32 %v1779, 0.0
      %v1796 = vadd.f32 %v1780, 0.0
      %v1797 = vadd.f32 %v1781, 0.0
      %v1798 = vadd.f32 %v1782, 0.0
      %v1799 = vadd.f32 %v1783, 0.0
      %v1800 = vadd.f32 %v1784, 0.0
      %v1801 = vadd.f32 %v1785, 0.0
      %v1802 = vadd.f32 %v1786, 0.0
      %v1803 = vadd.f32 %v1787, 0.0
      %v1804 = vadd.f32 %v1788, 0.0
      %v1805 = vadd.f32 %v1789, 0.0
      %v1806 = vadd.f32 %v1790, 0.0
      %v1807 = vadd.f32 %v1791, 0.0
      %v1808 = vadd.f32 %v1792, 0.0
      %v1809 = vadd.f32 %v1793, 0.0
      %v1810 = vld [vmem:[%s2 + $0xa] sm:$0x1]
      %v1811 = vperm.slane %v1810, 0
      %v1812 = vmul.f32 %v297, %v1811
      %v1813 = vmul.f32 %v298, %v1811
      %v1814 = vmul.f32 %v299, %v1811
      %v1815 = vmul.f32 %v300, %v1811
      %v1816 = vmul.f32 %v301, %v1811
      %v1817 = vmul.f32 %v302, %v1811
      %v1818 = vmul.f32 %v303, %v1811
      %v1819 = vmul.f32 %v304, %v1811
      %v1820 = vmul.f32 %v305, %v1811
      %v1821 = vmul.f32 %v306, %v1811
      %v1822 = vmul.f32 %v307, %v1811
      %v1823 = vmul.f32 %v308, %v1811
      %v1824 = vmul.f32 %v309, %v1811
      %v1825 = vmul.f32 %v310, %v1811
      %v1826 = vmul.f32 %v311, %v1811
      %v1827 = vmul.f32 %v312, %v1811
      %v1828 = vadd.f32 %v1794, %v1812
      %v1829 = vadd.f32 %v1795, %v1813
      %v1830 = vadd.f32 %v1796, %v1814
      %v1831 = vadd.f32 %v1797, %v1815
      %v1832 = vadd.f32 %v1798, %v1816
      %v1833 = vadd.f32 %v1799, %v1817
      %v1834 = vadd.f32 %v1800, %v1818
      %v1835 = vadd.f32 %v1801, %v1819
      %v1836 = vadd.f32 %v1802, %v1820
      %v1837 = vadd.f32 %v1803, %v1821
      %v1838 = vadd.f32 %v1804, %v1822
      %v1839 = vadd.f32 %v1805, %v1823
      %v1840 = vadd.f32 %v1806, %v1824
      %v1841 = vadd.f32 %v1807, %v1825
      %v1842 = vadd.f32 %v1808, %v1826
      %v1843 = vadd.f32 %v1809, %v1827
      %v1844 = vsel 0, %v1828, 0.0
      %v1845 = vsel 0, %v1829, 0.0
      %v1846 = vsel 1, %v1830, 0.0
      %v1847 = vsel 1, %v1831, 0.0
      %v1848 = vsel 1, %v1832, 0.0
      %v1849 = vsel 1, %v1833, 0.0
      %v1850 = vsel 1, %v1834, 0.0
      %v1851 = vsel 1, %v1835, 0.0
      %v1852 = vsel 1, %v1836, 0.0
      %v1853 = vsel 1, %v1837, 0.0
      %v1854 = vsel 1, %v1838, 0.0
      %v1855 = vsel 1, %v1839, 0.0
      %v1856 = vsel 1, %v1840, 0.0
      %v1857 = vsel 1, %v1841, 0.0
      %v1858 = vsel 1, %v1842, 0.0
      %v1859 = vsel 1, %v1843, 0.0
      %v1876 = vrot.slane %v1844, 1
      %v1877 = vrot.slane %v1845, 1
      %v1878 = vsel %vm365, %v1876, %v1877
      %v1879 = vrot.slane %v1846, 1
      %v1880 = vrot.slane %v1847, 1
      %v1881 = vsel %vm365, %v1879, %v1880
      %v1882 = vrot.slane %v1848, 1
      %v1883 = vrot.slane %v1849, 1
      %v1884 = vsel %vm365, %v1882, %v1883
      %v1885 = vrot.slane %v1850, 1
      %v1886 = vrot.slane %v1851, 1
      %v1887 = vsel %vm365, %v1885, %v1886
      %v1888 = vrot.slane %v1852, 1
      %v1889 = vrot.slane %v1853, 1
      %v1890 = vsel %vm365, %v1888, %v1889
      %v1891 = vrot.slane %v1854, 1
      %v1892 = vrot.slane %v1855, 1
      %v1893 = vsel %vm365, %v1891, %v1892
      %v1894 = vrot.slane %v1856, 1
      %v1895 = vrot.slane %v1857, 1
      %v1896 = vsel %vm365, %v1894, %v1895
      %v1897 = vrot.slane %v1858, 1
      %v1898 = vrot.slane %v1859, 1
      %v1899 = vsel %vm365, %v1897, %v1898
      %v1908 = vsel %vm695, %v1878, 0.0
      %v1909 = vsel %vm695, %v1881, 0.0
      %v1910 = vadd.f32 %v1908, %v1909
      %v1911 = vsel %vm695, %v1884, 0.0
      %v1912 = vadd.f32 %v1910, %v1911
      %v1913 = vsel %vm695, %v1887, 0.0
      %v1914 = vadd.f32 %v1912, %v1913
      %v1915 = vsel %vm695, %v1890, 0.0
      %v1916 = vadd.f32 %v1914, %v1915
      %v1917 = vsel %vm695, %v1893, 0.0
      %v1918 = vadd.f32 %v1916, %v1917
      %v1919 = vsel %vm695, %v1896, 0.0
      %v1920 = vadd.f32 %v1918, %v1919
      %v1921 = vsel %vm695, %v1899, 0.0
      %v1922 = vadd.f32 %v1920, %v1921
      %v1923 = vrot.slane %v1922, 4
      %v1924 = vadd.f32 %v1922, %v1923
      %v1925 = vrot.slane %v1924, 2
      %v1926 = vadd.f32 %v1924, %v1925
      %v1927 = vrot.slane %v1926, 1
      %v1928 = vadd.f32 %v1926, %v1927
      %v1929 = vadd.f32 %v1745, %v1928
      %v1930 = vmul.f32 %v1844, %v1844
      %v1931 = vmul.f32 %v1845, %v1845
      %v1932 = vmul.f32 %v1846, %v1846
      %v1933 = vmul.f32 %v1847, %v1847
      %v1934 = vmul.f32 %v1848, %v1848
      %v1935 = vmul.f32 %v1849, %v1849
      %v1936 = vmul.f32 %v1850, %v1850
      %v1937 = vmul.f32 %v1851, %v1851
      %v1938 = vmul.f32 %v1852, %v1852
      %v1939 = vmul.f32 %v1853, %v1853
      %v1940 = vmul.f32 %v1854, %v1854
      %v1941 = vmul.f32 %v1855, %v1855
      %v1942 = vmul.f32 %v1856, %v1856
      %v1943 = vmul.f32 %v1857, %v1857
      %v1944 = vmul.f32 %v1858, %v1858
      %v1945 = vmul.f32 %v1859, %v1859
      %v1962 = vrot.slane %v1930, 1
      %v1963 = vrot.slane %v1931, 1
      %v1964 = vsel %vm365, %v1962, %v1963
      %v1965 = vrot.slane %v1932, 1
      %v1966 = vrot.slane %v1933, 1
      %v1967 = vsel %vm365, %v1965, %v1966
      %v1968 = vrot.slane %v1934, 1
      %v1969 = vrot.slane %v1935, 1
      %v1970 = vsel %vm365, %v1968, %v1969
      %v1971 = vrot.slane %v1936, 1
      %v1972 = vrot.slane %v1937, 1
      %v1973 = vsel %vm365, %v1971, %v1972
      %v1974 = vrot.slane %v1938, 1
      %v1975 = vrot.slane %v1939, 1
      %v1976 = vsel %vm365, %v1974, %v1975
      %v1977 = vrot.slane %v1940, 1
      %v1978 = vrot.slane %v1941, 1
      %v1979 = vsel %vm365, %v1977, %v1978
      %v1980 = vrot.slane %v1942, 1
      %v1981 = vrot.slane %v1943, 1
      %v1982 = vsel %vm365, %v1980, %v1981
      %v1983 = vrot.slane %v1944, 1
      %v1984 = vrot.slane %v1945, 1
      %v1985 = vsel %vm365, %v1983, %v1984
      %v1994 = vsel %vm695, %v1964, 0.0
      %v1995 = vsel %vm695, %v1967, 0.0
      %v1996 = vadd.f32 %v1994, %v1995
      %v1997 = vsel %vm695, %v1970, 0.0
      %v1998 = vadd.f32 %v1996, %v1997
      %v1999 = vsel %vm695, %v1973, 0.0
      %v2000 = vadd.f32 %v1998, %v1999
      %v2001 = vsel %vm695, %v1976, 0.0
      %v2002 = vadd.f32 %v2000, %v2001
      %v2003 = vsel %vm695, %v1979, 0.0
      %v2004 = vadd.f32 %v2002, %v2003
      %v2005 = vsel %vm695, %v1982, 0.0
      %v2006 = vadd.f32 %v2004, %v2005
      %v2007 = vsel %vm695, %v1985, 0.0
      %v2008 = vadd.f32 %v2006, %v2007
      %v2009 = vrot.slane %v2008, 4
      %v2010 = vadd.f32 %v2008, %v2009
      %v2011 = vrot.slane %v2010, 2
      %v2012 = vadd.f32 %v2010, %v2011
      %v2013 = vrot.slane %v2012, 1
      %v2014 = vadd.f32 %v2012, %v2013
      %v2015 = vadd.f32 %v1775, %v2014
      %v2016 = vld [vmem:[%s2 + $0xe] sm:$0x1]
      %v2017 = vperm.slane %v2016, 0
      %v2018 = vmul.f32 %v297, %v2017
      %v2019 = vmul.f32 %v299, %v2017
      %v2020 = vmul.f32 %v301, %v2017
      %v2021 = vmul.f32 %v303, %v2017
      %v2022 = vmul.f32 %v305, %v2017
      %v2023 = vmul.f32 %v307, %v2017
      %v2024 = vmul.f32 %v309, %v2017
      %v2025 = vmul.f32 %v311, %v2017
      %v2026 = vadd.f32 %v2018, 0.0
      %v2027 = vadd.f32 %v2019, 0.0
      %v2028 = vadd.f32 %v2020, 0.0
      %v2029 = vadd.f32 %v2021, 0.0
      %v2030 = vadd.f32 %v2022, 0.0
      %v2031 = vadd.f32 %v2023, 0.0
      %v2032 = vadd.f32 %v2024, 0.0
      %v2033 = vadd.f32 %v2025, 0.0
      %v2034 = vld [vmem:[%s2 + $0xc] sm:$0x1]
      %v2035 = vperm.slane %v2034, 0
      %v2036 = vmul.f32 %v297, %v2035
      %v2037 = vmul.f32 %v298, %v2035
      %v2038 = vmul.f32 %v299, %v2035
      %v2039 = vmul.f32 %v300, %v2035
      %v2040 = vmul.f32 %v301, %v2035
      %v2041 = vmul.f32 %v302, %v2035
      %v2042 = vmul.f32 %v303, %v2035
      %v2043 = vmul.f32 %v304, %v2035
      %v2044 = vmul.f32 %v305, %v2035
      %v2045 = vmul.f32 %v306, %v2035
      %v2046 = vmul.f32 %v307, %v2035
      %v2047 = vmul.f32 %v308, %v2035
      %v2048 = vmul.f32 %v309, %v2035
      %v2049 = vmul.f32 %v310, %v2035
      %v2050 = vmul.f32 %v311, %v2035
      %v2051 = vmul.f32 %v312, %v2035
      %v2068 = vrot.slane %v2036, 1
      %v2069 = vrot.slane %v2037, 1
      %v2070 = vsel %vm365, %v2068, %v2069
      %v2071 = vrot.slane %v2038, 1
      %v2072 = vrot.slane %v2039, 1
      %v2073 = vsel %vm365, %v2071, %v2072
      %v2074 = vrot.slane %v2040, 1
      %v2075 = vrot.slane %v2041, 1
      %v2076 = vsel %vm365, %v2074, %v2075
      %v2077 = vrot.slane %v2042, 1
      %v2078 = vrot.slane %v2043, 1
      %v2079 = vsel %vm365, %v2077, %v2078
      %v2080 = vrot.slane %v2044, 1
      %v2081 = vrot.slane %v2045, 1
      %v2082 = vsel %vm365, %v2080, %v2081
      %v2083 = vrot.slane %v2046, 1
      %v2084 = vrot.slane %v2047, 1
      %v2085 = vsel %vm365, %v2083, %v2084
      %v2086 = vrot.slane %v2048, 1
      %v2087 = vrot.slane %v2049, 1
      %v2088 = vsel %vm365, %v2086, %v2087
      %v2089 = vrot.slane %v2050, 1
      %v2090 = vrot.slane %v2051, 1
      %v2091 = vsel %vm365, %v2089, %v2090
      %v2100 = vadd.f32 %v2026, %v2070
      %v2101 = vadd.f32 %v2027, %v2073
      %v2102 = vadd.f32 %v2028, %v2076
      %v2103 = vadd.f32 %v2029, %v2079
      %v2104 = vadd.f32 %v2030, %v2082
      %v2105 = vadd.f32 %v2031, %v2085
      %v2106 = vadd.f32 %v2032, %v2088
      %v2107 = vadd.f32 %v2033, %v2091
      %v2108 = vsel %vm684, %v2100, 0.0
      %v2109 = vsel %vm684, %v2101, 0.0
      %v2110 = vsel %vm684, %v2102, 0.0
      %v2111 = vsel %vm684, %v2103, 0.0
      %v2112 = vsel %vm684, %v2104, 0.0
      %v2113 = vsel %vm684, %v2105, 0.0
      %v2114 = vsel %vm684, %v2106, 0.0
      %v2115 = vsel %vm684, %v2107, 0.0
      %v2116 = vsel %vm695, %v2108, 0.0
      %v2117 = vsel %vm695, %v2109, 0.0
      %v2118 = vadd.f32 %v2116, %v2117
      %v2119 = vsel %vm695, %v2110, 0.0
      %v2120 = vadd.f32 %v2118, %v2119
      %v2121 = vsel %vm695, %v2111, 0.0
      %v2122 = vadd.f32 %v2120, %v2121
      %v2123 = vsel %vm695, %v2112, 0.0
      %v2124 = vadd.f32 %v2122, %v2123
      %v2125 = vsel %vm695, %v2113, 0.0
      %v2126 = vadd.f32 %v2124, %v2125
      %v2127 = vsel %vm695, %v2114, 0.0
      %v2128 = vadd.f32 %v2126, %v2127
      %v2129 = vsel %vm695, %v2115, 0.0
      %v2130 = vadd.f32 %v2128, %v2129
      %v2131 = vrot.slane %v2130, 4
      %v2132 = vadd.f32 %v2130, %v2131
      %v2133 = vrot.slane %v2132, 2
      %v2134 = vadd.f32 %v2132, %v2133
      %v2135 = vrot.slane %v2134, 1
      %v2136 = vadd.f32 %v2134, %v2135
      %v2137 = vadd.f32 %v1929, %v2136
      %v2138 = vmul.f32 %v2108, %v2108
      %v2139 = vmul.f32 %v2109, %v2109
      %v2140 = vmul.f32 %v2110, %v2110
      %v2141 = vmul.f32 %v2111, %v2111
      %v2142 = vmul.f32 %v2112, %v2112
      %v2143 = vmul.f32 %v2113, %v2113
      %v2144 = vmul.f32 %v2114, %v2114
      %v2145 = vmul.f32 %v2115, %v2115
      %v2146 = vsel %vm695, %v2138, 0.0
      %v2147 = vsel %vm695, %v2139, 0.0
      %v2148 = vadd.f32 %v2146, %v2147
      %v2149 = vsel %vm695, %v2140, 0.0
      %v2150 = vadd.f32 %v2148, %v2149
      %v2151 = vsel %vm695, %v2141, 0.0
      %v2152 = vadd.f32 %v2150, %v2151
      %v2153 = vsel %vm695, %v2142, 0.0
      %v2154 = vadd.f32 %v2152, %v2153
      %v2155 = vsel %vm695, %v2143, 0.0
      %v2156 = vadd.f32 %v2154, %v2155
      %v2157 = vsel %vm695, %v2144, 0.0
      %v2158 = vadd.f32 %v2156, %v2157
      %v2159 = vsel %vm695, %v2145, 0.0
      %v2160 = vadd.f32 %v2158, %v2159
      %v2161 = vrot.slane %v2160, 4
      %v2162 = vadd.f32 %v2160, %v2161
      %v2163 = vrot.slane %v2162, 2
      %v2164 = vadd.f32 %v2162, %v2163
      %v2165 = vrot.slane %v2164, 1
      %v2166 = vadd.f32 %v2164, %v2165
      %v2167 = vadd.f32 %v2015, %v2166
      %v2168 = vld [vmem:[%s2 + $0xd] sm:$0x1]
      %v2169 = vperm.slane %v2168, 0
      %v2170 = vmul.f32 %v297, %v2169
      %v2171 = vmul.f32 %v298, %v2169
      %v2172 = vmul.f32 %v299, %v2169
      %v2173 = vmul.f32 %v300, %v2169
      %v2174 = vmul.f32 %v301, %v2169
      %v2175 = vmul.f32 %v302, %v2169
      %v2176 = vmul.f32 %v303, %v2169
      %v2177 = vmul.f32 %v304, %v2169
      %v2178 = vmul.f32 %v305, %v2169
      %v2179 = vmul.f32 %v306, %v2169
      %v2180 = vmul.f32 %v307, %v2169
      %v2181 = vmul.f32 %v308, %v2169
      %v2182 = vmul.f32 %v309, %v2169
      %v2183 = vmul.f32 %v310, %v2169
      %v2184 = vmul.f32 %v311, %v2169
      %v2185 = vmul.f32 %v312, %v2169
      %v2186 = vadd.f32 %v2170, 0.0
      %v2187 = vadd.f32 %v2171, 0.0
      %v2188 = vadd.f32 %v2172, 0.0
      %v2189 = vadd.f32 %v2173, 0.0
      %v2190 = vadd.f32 %v2174, 0.0
      %v2191 = vadd.f32 %v2175, 0.0
      %v2192 = vadd.f32 %v2176, 0.0
      %v2193 = vadd.f32 %v2177, 0.0
      %v2194 = vadd.f32 %v2178, 0.0
      %v2195 = vadd.f32 %v2179, 0.0
      %v2196 = vadd.f32 %v2180, 0.0
      %v2197 = vadd.f32 %v2181, 0.0
      %v2198 = vadd.f32 %v2182, 0.0
      %v2199 = vadd.f32 %v2183, 0.0
      %v2200 = vadd.f32 %v2184, 0.0
      %v2201 = vadd.f32 %v2185, 0.0
      %v2218 = vrot.slane %v2186, 1
      %v2219 = vrot.slane %v2187, 1
      %v2220 = vsel %vm365, %v2218, %v2219
      %v2221 = vrot.slane %v2188, 1
      %v2222 = vrot.slane %v2189, 1
      %v2223 = vsel %vm365, %v2221, %v2222
      %v2224 = vrot.slane %v2190, 1
      %v2225 = vrot.slane %v2191, 1
      %v2226 = vsel %vm365, %v2224, %v2225
      %v2227 = vrot.slane %v2192, 1
      %v2228 = vrot.slane %v2193, 1
      %v2229 = vsel %vm365, %v2227, %v2228
      %v2230 = vrot.slane %v2194, 1
      %v2231 = vrot.slane %v2195, 1
      %v2232 = vsel %vm365, %v2230, %v2231
      %v2233 = vrot.slane %v2196, 1
      %v2234 = vrot.slane %v2197, 1
      %v2235 = vsel %vm365, %v2233, %v2234
      %v2236 = vrot.slane %v2198, 1
      %v2237 = vrot.slane %v2199, 1
      %v2238 = vsel %vm365, %v2236, %v2237
      %v2239 = vrot.slane %v2200, 1
      %v2240 = vrot.slane %v2201, 1
      %v2241 = vsel %vm365, %v2239, %v2240
      %v2250 = vsel %vm695, %v2220, 0.0
      %v2251 = vsel %vm695, %v2223, 0.0
      %v2252 = vadd.f32 %v2250, %v2251
      %v2253 = vsel %vm695, %v2226, 0.0
      %v2254 = vadd.f32 %v2252, %v2253
      %v2255 = vsel %vm695, %v2229, 0.0
      %v2256 = vadd.f32 %v2254, %v2255
      %v2257 = vsel %vm695, %v2232, 0.0
      %v2258 = vadd.f32 %v2256, %v2257
      %v2259 = vsel %vm695, %v2235, 0.0
      %v2260 = vadd.f32 %v2258, %v2259
      %v2261 = vsel %vm695, %v2238, 0.0
      %v2262 = vadd.f32 %v2260, %v2261
      %v2263 = vsel %vm695, %v2241, 0.0
      %v2264 = vadd.f32 %v2262, %v2263
      %v2265 = vrot.slane %v2264, 4
      %v2266 = vadd.f32 %v2264, %v2265
      %v2267 = vrot.slane %v2266, 2
      %v2268 = vadd.f32 %v2266, %v2267
      %v2269 = vrot.slane %v2268, 1
      %v2270 = vadd.f32 %v2268, %v2269
      %v2271 = vadd.f32 %v2137, %v2270
      %v2272 = vmul.f32 %v2186, %v2186
      %v2273 = vmul.f32 %v2187, %v2187
      %v2274 = vmul.f32 %v2188, %v2188
      %v2275 = vmul.f32 %v2189, %v2189
      %v2276 = vmul.f32 %v2190, %v2190
      %v2277 = vmul.f32 %v2191, %v2191
      %v2278 = vmul.f32 %v2192, %v2192
      %v2279 = vmul.f32 %v2193, %v2193
      %v2280 = vmul.f32 %v2194, %v2194
      %v2281 = vmul.f32 %v2195, %v2195
      %v2282 = vmul.f32 %v2196, %v2196
      %v2283 = vmul.f32 %v2197, %v2197
      %v2284 = vmul.f32 %v2198, %v2198
      %v2285 = vmul.f32 %v2199, %v2199
      %v2286 = vmul.f32 %v2200, %v2200
      %v2287 = vmul.f32 %v2201, %v2201
      %v2304 = vrot.slane %v2272, 1
      %v2305 = vrot.slane %v2273, 1
      %v2306 = vsel %vm365, %v2304, %v2305
      %v2307 = vrot.slane %v2274, 1
      %v2308 = vrot.slane %v2275, 1
      %v2309 = vsel %vm365, %v2307, %v2308
      %v2310 = vrot.slane %v2276, 1
      %v2311 = vrot.slane %v2277, 1
      %v2312 = vsel %vm365, %v2310, %v2311
      %v2313 = vrot.slane %v2278, 1
      %v2314 = vrot.slane %v2279, 1
      %v2315 = vsel %vm365, %v2313, %v2314
      %v2316 = vrot.slane %v2280, 1
      %v2317 = vrot.slane %v2281, 1
      %v2318 = vsel %vm365, %v2316, %v2317
      %v2319 = vrot.slane %v2282, 1
      %v2320 = vrot.slane %v2283, 1
      %v2321 = vsel %vm365, %v2319, %v2320
      %v2322 = vrot.slane %v2284, 1
      %v2323 = vrot.slane %v2285, 1
      %v2324 = vsel %vm365, %v2322, %v2323
      %v2325 = vrot.slane %v2286, 1
      %v2326 = vrot.slane %v2287, 1
      %v2327 = vsel %vm365, %v2325, %v2326
      %v2336 = vsel %vm695, %v2306, 0.0
      %v2337 = vsel %vm695, %v2309, 0.0
      %v2338 = vadd.f32 %v2336, %v2337
      %v2339 = vsel %vm695, %v2312, 0.0
      %v2340 = vadd.f32 %v2338, %v2339
      %v2341 = vsel %vm695, %v2315, 0.0
      %v2342 = vadd.f32 %v2340, %v2341
      %v2343 = vsel %vm695, %v2318, 0.0
      %v2344 = vadd.f32 %v2342, %v2343
      %v2345 = vsel %vm695, %v2321, 0.0
      %v2346 = vadd.f32 %v2344, %v2345
      %v2347 = vsel %vm695, %v2324, 0.0
      %v2348 = vadd.f32 %v2346, %v2347
      %v2349 = vsel %vm695, %v2327, 0.0
      %v2350 = vadd.f32 %v2348, %v2349
      %v2351 = vrot.slane %v2350, 4
      %v2352 = vadd.f32 %v2350, %v2351
      %v2353 = vrot.slane %v2352, 2
      %v2354 = vadd.f32 %v2352, %v2353
      %v2355 = vrot.slane %v2354, 1
      %v2356 = vadd.f32 %v2354, %v2355
      %v2357 = vadd.f32 %v2167, %v2356
      %v2358 = vadd.f32 %v1530, %v2271
      %v2359 = vadd.f32 %v1531, %v2357
      %v2360 = vld [vmem:[%s266] sm:$0x1]
      %v2361 = vadd.f32 %v2360, %v2358
      %vm2362 = vcmask 57344
      %2363 = vst.msk [vmem:[%s266] sm:$0x1] %vm2362, %v2361
      %v2364 = vld [vmem:[%s269] sm:$0x1]
      %v2365 = vadd.f32 %v2364, %v2359
      %2366 = vst.msk [vmem:[%s269] sm:$0x1] %vm2362, %v2365
      %p2367 = scmp.lt.s32.totalorder %s20, 1
      %s2368 = scalar_select %p2367, %s20, 1
      %s2369 = scalar_lea.vmem %s3, %s2368
      %p2370 = scmp.lt.s32.totalorder %s20, 1
      %s2371 = scalar_select %p2370, %s20, 1
      %s2372 = scalar_lea.vmem %s4, %s2371
      // Predicated region
      $region37: #{mednext_up_block_forward.2} parent=31 // pred_check
        %p2373 = pneg %p125
      $region38: #{mednext_up_block_forward.2} parent=31 // pred_check_branch
        %2375 = sbr.rel (%p2373) target = $region40
      $region39: #{mednext_up_block_forward.2} parent=31 // pred_region
        _
      $region40: #{mednext_up_block_forward.2} parent=31 // pred_fallthru
        _
      // Predicated region
      $region41: #{mednext_up_block_forward.2} parent=31 // pred_check
        %p2376 = pneg %p151
      $region42: #{mednext_up_block_forward.2} parent=31 // pred_check_branch
        %2378 = sbr.rel (%p2376) target = $region44
      $region43: #{mednext_up_block_forward.2} parent=31 // pred_region
        _
      $region44: #{mednext_up_block_forward.2} parent=31 // pred_fallthru
        _
    $region32: #{mednext_up_block_forward.2} parent=5 // pred_fallthru
      _
    %p2379 = scmp.le.s32.totalorder 2, %s11
    // Predicated region
    $region45: #{mednext_up_block_forward.2} parent=5 // pred_check
      %p2380 = pneg %p2379
    $region46: #{mednext_up_block_forward.2} parent=5 // pred_check_branch
      %2382 = sbr.rel (%p2380) target = $region48
    $region47: #{mednext_up_block_forward.2} parent=5 // pred_region
      %s2383 = ssub.s32 %s11, 2
      // Predicated region
      $region49: #{mednext_up_block_forward.2} parent=47 // pred_check
        %p2384 = pneg %p131
      $region50: #{mednext_up_block_forward.2} parent=47 // pred_check_branch
        %2386 = sbr.rel (%p2384) target = $region52
      $region51: #{mednext_up_block_forward.2} parent=47 // pred_region
        %p2387 = scmp.lt.s32.totalorder %s22, 1
        %s2388 = scalar_select %p2387, %s22, 1
        %s2389 = scalar_lea.vmem %s3, %s2388
      $region52: #{mednext_up_block_forward.2} parent=47 // pred_fallthru
        _
      // Predicated region
      $region53: #{mednext_up_block_forward.2} parent=47 // pred_check
        %p2390 = pneg %p157
      $region54: #{mednext_up_block_forward.2} parent=47 // pred_check_branch
        %2392 = sbr.rel (%p2390) target = $region56
      $region55: #{mednext_up_block_forward.2} parent=47 // pred_region
        %p2393 = scmp.lt.s32.totalorder %s22, 1
        %s2394 = scalar_select %p2393, %s22, 1
        %s2395 = scalar_lea.vmem %s4, %s2394
      $region56: #{mednext_up_block_forward.2} parent=47 // pred_fallthru
        _
    $region48: #{mednext_up_block_forward.2} parent=5 // pred_fallthru
      _
  $region6: #{mednext_up_block_forward.2} parent=0 // loop_footer
    %s15 = sadd.s32 1, %s11
  $region7: #{mednext_up_block_forward.2} parent=0 // loop_footer_branch
    %10 = sbr.rel target = $region3
  $region8: #{mednext_up_block_forward.2} parent=0 // loop_exit
    _

// kernel: mednext_up_block_forward.3
$region0: #{mednext_up_block_forward.3}
  #allocation0 [shape = 'u32[]', space=smem, size = 0x4, offset = 0x4, fixed_abs, tag = 'smem constant byte address 0x4 - core index']
  #allocation1 [shape = 'u32[72,128]{1,0:T(1,128)}', space=vmem, size = 0x9000, scoped, tag = 'internal scratch']
  %s0 = inlined_call_operand.vmem [shape: f32[2,9,9,9,8], index: 0, kind: input, shape index: {}, may-alias: {0,1}]
  %s1 = inlined_call_operand.vmem [shape: f32[2,9,9,9,8], index: 1, kind: input, shape index: {}, may-alias: {0,1}]
  %s2 = inlined_call_operand.vmem [shape: f32[27,8], index: 2, kind: input, shape index: {}]
  %s3 = inlined_call_operand.vmem [shape: f32[2,1,8], index: 3, kind: input, shape index: {}]
  %s4 = inlined_call_operand.vmem [shape: f32[2,1,8], index: 4, kind: input, shape index: {}]
  %s5 = inlined_call_operand.vmem [shape: f32[8,16], index: 5, kind: input, shape index: {}]
  %s6 = inlined_call_operand.vmem [shape: f32[1,16], index: 6, kind: input, shape index: {}]
  %s7 = inlined_call_operand.vmem [shape: f32[16,4], index: 7, kind: input, shape index: {}]
  %s8 = inlined_call_operand.vmem [shape: f32[1,4], index: 8, kind: input, shape index: {}]
  %s9 = inlined_call_operand.vmem [shape: f32[8,4], index: 9, kind: input, shape index: {}]
  %s10 = inlined_call_operand.vmem [shape: f32[2,8,8,8,8,4], index: 10, kind: output, shape index: {}]
  %s11 = sld [smem:[#allocation0]]
  $region73: #{mednext_up_block_forward.3} parent=0
    _
  %s13 = ssub.s32 1, %s11
  %s14 = scalar_select 0, %s13, %s11
  loop: start=0, step=1, limit=18
  $region2: #{mednext_up_block_forward.3} parent=0 // loop_pre_header
    _
  $region3: #{mednext_up_block_forward.3} parent=0 // loop_header
    %s16 = sphi 0, %s20
    %p17 = scmp.ge.s32.totalorder %s16, 18
    %s23 = sphi 0, %s35
    %s24 = sphi 0, %s31
    %s25 = sphi 0, %s23
    %s26 = sphi 0, %s24
    %s27 = sphi 0, %s25
    %s28 = sphi 0, %s26
    %s40 = sphi 0, %s42
    %s43 = sphi 0, %s40
    %s44 = sphi 0, %s43
    %s60 = sphi 0, %s44
    %s70 = sphi 0, %s72
    %s73 = sphi 0, %s70
    %s74 = sphi 0, %s73
    %s90 = sphi 0, %s74
    %s94 = sphi 0, %s94
    %s96 = sphi 0, %s94
    %s97 = sphi 0, %s96
    %s111 = sphi 0, %s97
    %s117 = sphi 0, %s119
    %s120 = sphi 0, %s117
    %s121 = sphi 0, %s120
    %s137 = sphi 0, %s121
    %s143 = sphi 0, %s145
    %s146 = sphi 0, %s143
    %s147 = sphi 0, %s146
    %s163 = sphi 0, %s147
    %s167 = sphi 0, %s167
    %s169 = sphi 0, %s167
    %s170 = sphi 0, %s169
    %s184 = sphi 0, %s170
    %s188 = sphi 0, %s188
    %s190 = sphi 0, %s188
    %s191 = sphi 0, %s190
    %s205 = sphi 0, %s191
    %s209 = sphi 0, %s209
    %s211 = sphi 0, %s209
    %s212 = sphi 0, %s211
    %s226 = sphi 0, %s212
    %s230 = sphi 0, %s230
    %s232 = sphi 0, %s230
    %s233 = sphi 0, %s232
    %s247 = sphi 0, %s233
    %s251 = sphi 0, %s251
    %s253 = sphi 0, %s251
    %s254 = sphi 0, %s253
    %s268 = sphi 0, %s254
    %s276 = sphi 0, %s278
    %s279 = sphi 0, %s276
    %s280 = sphi 0, %s279
    %s296 = sphi 0, %s280
  $region4: #{mednext_up_block_forward.3} parent=0 // loop_header_branch
    %19 = sbr.rel (%p17) target = $region8
  $region5: #{mednext_up_block_forward.3} parent=0 // loop_body
    %s21 = ssub.s32 %s16, 1
    %s22 = ssub.s32 %s16, 2
    %s29 = sadd.s32 1, %s24
    %p30 = scmp.ge.s32.totalorder %s29, 8
    %s31 = scalar_select %p30, 0, %s29
    %s32 = sadd.s32 1, %s23
    %s33 = scalar_select %p30, %s32, %s23
    %p34 = scmp.ge.s32.totalorder %s33, 2
    %s35 = scalar_select %p34, 0, %s33
    %s36 = ssub.s32 %s23, %s35
    %s37 = ssub.s32 %s24, %s31
    %s38 = sor.u32 %s36, %s37
    %p39 = scmp.eq.s32.totalorder %s38, 0
    %s41 = sadd.s32 %s40, 1
    %s42 = scalar_select %p39, %s40, %s41
    %p45 = pneg %p39
    %p46 = scmp.eq.s32.totalorder %s16, 15
    %p47 = por %p45, %p46
    %p48 = scmp.ne.s32.totalorder %s40, %s43
    %p49 = scmp.eq.s32.totalorder %s16, 0
    %p50 = por %p48, %p49
    %p51 = scmp.ne.s32.totalorder %s40, %s43
    %p52 = scmp.eq.s32.totalorder %s21, 15
    %p53 = por %p51, %p52
    %p54 = scmp.ne.s32.totalorder %s43, %s44
    %p55 = scmp.eq.s32.totalorder %s21, 0
    %p56 = por %p54, %p55
    %p57 = scmp.ne.s32.totalorder %s43, %s44
    %p58 = scmp.eq.s32.totalorder %s22, 15
    %p59 = por %p57, %p58
    %p61 = scmp.ne.s32.totalorder %s44, %s60
    %p62 = scmp.eq.s32.totalorder %s22, 0
    %p63 = por %p61, %p62
    %s64 = sadd.s32 %s24, 1
    %s65 = sadd.s32 %s31, 1
    %s66 = ssub.s32 %s23, %s35
    %s67 = ssub.s32 %s64, %s65
    %s68 = sor.u32 %s66, %s67
    %p69 = scmp.eq.s32.totalorder %s68, 0
    %s71 = sadd.s32 %s70, 1
    %s72 = scalar_select %p69, %s70, %s71
    %p75 = pneg %p69
    %p76 = scmp.eq.s32.totalorder %s16, 15
    %p77 = por %p75, %p76
    %p78 = scmp.ne.s32.totalorder %s70, %s73
    %p79 = scmp.eq.s32.totalorder %s16, 0
    %p80 = por %p78, %p79
    %p81 = scmp.ne.s32.totalorder %s70, %s73
    %p82 = scmp.eq.s32.totalorder %s21, 15
    %p83 = por %p81, %p82
    %p84 = scmp.ne.s32.totalorder %s73, %s74
    %p85 = scmp.eq.s32.totalorder %s21, 0
    %p86 = por %p84, %p85
    %p87 = scmp.ne.s32.totalorder %s73, %s74
    %p88 = scmp.eq.s32.totalorder %s22, 15
    %p89 = por %p87, %p88
    %p91 = scmp.ne.s32.totalorder %s74, %s90
    %p92 = scmp.eq.s32.totalorder %s22, 0
    %p93 = por %p91, %p92
    %s95 = sadd.s32 %s94, 1
    %p98 = scmp.eq.s32.totalorder %s16, 15
    %p99 = scmp.ne.s32.totalorder %s94, %s96
    %p100 = scmp.eq.s32.totalorder %s16, 0
    %p101 = por %p99, %p100
    %p102 = scmp.ne.s32.totalorder %s94, %s96
    %p103 = scmp.eq.s32.totalorder %s21, 15
    %p104 = por %p102, %p103
    %p105 = scmp.ne.s32.totalorder %s96, %s97
    %p106 = scmp.eq.s32.totalorder %s21, 0
    %p107 = por %p105, %p106
    %p108 = scmp.ne.s32.totalorder %s96, %s97
    %p109 = scmp.eq.s32.totalorder %s22, 15
    %p110 = por %p108, %p109
    %p112 = scmp.ne.s32.totalorder %s97, %s111
    %p113 = scmp.eq.s32.totalorder %s22, 0
    %p114 = por %p112, %p113
    %s115 = ssub.s32 %s23, %s35
    %p116 = scmp.eq.s32.totalorder %s115, 0
    %s118 = sadd.s32 %s117, 1
    %s119 = scalar_select %p116, %s117, %s118
    %p122 = pneg %p116
    %p123 = scmp.eq.s32.totalorder %s16, 15
    %p124 = por %p122, %p123
    %p125 = scmp.ne.s32.totalorder %s117, %s120
    %p126 = scmp.eq.s32.totalorder %s16, 0
    %p127 = por %p125, %p126
    %p128 = scmp.ne.s32.totalorder %s117, %s120
    %p129 = scmp.eq.s32.totalorder %s21, 15
    %p130 = por %p128, %p129
    %p131 = scmp.ne.s32.totalorder %s120, %s121
    %p132 = scmp.eq.s32.totalorder %s21, 0
    %p133 = por %p131, %p132
    %p134 = scmp.ne.s32.totalorder %s120, %s121
    %p135 = scmp.eq.s32.totalorder %s22, 15
    %p136 = por %p134, %p135
    %p138 = scmp.ne.s32.totalorder %s121, %s137
    %p139 = scmp.eq.s32.totalorder %s22, 0
    %p140 = por %p138, %p139
    %s141 = ssub.s32 %s23, %s35
    %p142 = scmp.eq.s32.totalorder %s141, 0
    %s144 = sadd.s32 %s143, 1
    %s145 = scalar_select %p142, %s143, %s144
    %p148 = pneg %p142
    %p149 = scmp.eq.s32.totalorder %s16, 15
    %p150 = por %p148, %p149
    %p151 = scmp.ne.s32.totalorder %s143, %s146
    %p152 = scmp.eq.s32.totalorder %s16, 0
    %p153 = por %p151, %p152
    %p154 = scmp.ne.s32.totalorder %s143, %s146
    %p155 = scmp.eq.s32.totalorder %s21, 15
    %p156 = por %p154, %p155
    %p157 = scmp.ne.s32.totalorder %s146, %s147
    %p158 = scmp.eq.s32.totalorder %s21, 0
    %p159 = por %p157, %p158
    %p160 = scmp.ne.s32.totalorder %s146, %s147
    %p161 = scmp.eq.s32.totalorder %s22, 15
    %p162 = por %p160, %p161
    %p164 = scmp.ne.s32.totalorder %s147, %s163
    %p165 = scmp.eq.s32.totalorder %s22, 0
    %p166 = por %p164, %p165
    %s168 = sadd.s32 %s167, 1
    %p171 = scmp.eq.s32.totalorder %s16, 15
    %p172 = scmp.ne.s32.totalorder %s167, %s169
    %p173 = scmp.eq.s32.totalorder %s16, 0
    %p174 = por %p172, %p173
    %p175 = scmp.ne.s32.totalorder %s167, %s169
    %p176 = scmp.eq.s32.totalorder %s21, 15
    %p177 = por %p175, %p176
    %p178 = scmp.ne.s32.totalorder %s169, %s170
    %p179 = scmp.eq.s32.totalorder %s21, 0
    %p180 = por %p178, %p179
    %p181 = scmp.ne.s32.totalorder %s169, %s170
    %p182 = scmp.eq.s32.totalorder %s22, 15
    %p183 = por %p181, %p182
    %p185 = scmp.ne.s32.totalorder %s170, %s184
    %p186 = scmp.eq.s32.totalorder %s22, 0
    %p187 = por %p185, %p186
    %s189 = sadd.s32 %s188, 1
    %p192 = scmp.eq.s32.totalorder %s16, 15
    %p193 = scmp.ne.s32.totalorder %s188, %s190
    %p194 = scmp.eq.s32.totalorder %s16, 0
    %p195 = por %p193, %p194
    %p196 = scmp.ne.s32.totalorder %s188, %s190
    %p197 = scmp.eq.s32.totalorder %s21, 15
    %p198 = por %p196, %p197
    %p199 = scmp.ne.s32.totalorder %s190, %s191
    %p200 = scmp.eq.s32.totalorder %s21, 0
    %p201 = por %p199, %p200
    %p202 = scmp.ne.s32.totalorder %s190, %s191
    %p203 = scmp.eq.s32.totalorder %s22, 15
    %p204 = por %p202, %p203
    %p206 = scmp.ne.s32.totalorder %s191, %s205
    %p207 = scmp.eq.s32.totalorder %s22, 0
    %p208 = por %p206, %p207
    %s210 = sadd.s32 %s209, 1
    %p213 = scmp.eq.s32.totalorder %s16, 15
    %p214 = scmp.ne.s32.totalorder %s209, %s211
    %p215 = scmp.eq.s32.totalorder %s16, 0
    %p216 = por %p214, %p215
    %p217 = scmp.ne.s32.totalorder %s209, %s211
    %p218 = scmp.eq.s32.totalorder %s21, 15
    %p219 = por %p217, %p218
    %p220 = scmp.ne.s32.totalorder %s211, %s212
    %p221 = scmp.eq.s32.totalorder %s21, 0
    %p222 = por %p220, %p221
    %p223 = scmp.ne.s32.totalorder %s211, %s212
    %p224 = scmp.eq.s32.totalorder %s22, 15
    %p225 = por %p223, %p224
    %p227 = scmp.ne.s32.totalorder %s212, %s226
    %p228 = scmp.eq.s32.totalorder %s22, 0
    %p229 = por %p227, %p228
    %s231 = sadd.s32 %s230, 1
    %p234 = scmp.eq.s32.totalorder %s16, 15
    %p235 = scmp.ne.s32.totalorder %s230, %s232
    %p236 = scmp.eq.s32.totalorder %s16, 0
    %p237 = por %p235, %p236
    %p238 = scmp.ne.s32.totalorder %s230, %s232
    %p239 = scmp.eq.s32.totalorder %s21, 15
    %p240 = por %p238, %p239
    %p241 = scmp.ne.s32.totalorder %s232, %s233
    %p242 = scmp.eq.s32.totalorder %s21, 0
    %p243 = por %p241, %p242
    %p244 = scmp.ne.s32.totalorder %s232, %s233
    %p245 = scmp.eq.s32.totalorder %s22, 15
    %p246 = por %p244, %p245
    %p248 = scmp.ne.s32.totalorder %s233, %s247
    %p249 = scmp.eq.s32.totalorder %s22, 0
    %p250 = por %p248, %p249
    %s252 = sadd.s32 %s251, 1
    %p255 = scmp.eq.s32.totalorder %s16, 15
    %p256 = scmp.ne.s32.totalorder %s251, %s253
    %p257 = scmp.eq.s32.totalorder %s16, 0
    %p258 = por %p256, %p257
    %p259 = scmp.ne.s32.totalorder %s251, %s253
    %p260 = scmp.eq.s32.totalorder %s21, 15
    %p261 = por %p259, %p260
    %p262 = scmp.ne.s32.totalorder %s253, %s254
    %p263 = scmp.eq.s32.totalorder %s21, 0
    %p264 = por %p262, %p263
    %p265 = scmp.ne.s32.totalorder %s253, %s254
    %p266 = scmp.eq.s32.totalorder %s22, 15
    %p267 = por %p265, %p266
    %p269 = scmp.ne.s32.totalorder %s254, %s268
    %p270 = scmp.eq.s32.totalorder %s22, 0
    %p271 = por %p269, %p270
    %s272 = ssub.s32 %s23, %s35
    %s273 = ssub.s32 %s24, %s31
    %s274 = sor.u32 %s272, %s273
    %p275 = scmp.eq.s32.totalorder %s274, 0
    %s277 = sadd.s32 %s276, 1
    %s278 = scalar_select %p275, %s276, %s277
    %p281 = pneg %p275
    %p282 = scmp.eq.s32.totalorder %s16, 15
    %p283 = por %p281, %p282
    %p284 = scmp.ne.s32.totalorder %s276, %s279
    %p285 = scmp.eq.s32.totalorder %s16, 0
    %p286 = por %p284, %p285
    %p287 = scmp.ne.s32.totalorder %s276, %s279
    %p288 = scmp.eq.s32.totalorder %s21, 15
    %p289 = por %p287, %p288
    %p290 = scmp.ne.s32.totalorder %s279, %s280
    %p291 = scmp.eq.s32.totalorder %s21, 0
    %p292 = por %p290, %p291
    %p293 = scmp.ne.s32.totalorder %s279, %s280
    %p294 = scmp.eq.s32.totalorder %s22, 15
    %p295 = por %p293, %p294
    %p297 = scmp.ne.s32.totalorder %s280, %s296
    %p298 = scmp.eq.s32.totalorder %s22, 0
    %p299 = por %p297, %p298
    %p300 = scmp.le.s32.totalorder 1, %s16
    %p301 = scmp.lt.s32.totalorder %s16, 17
    %p302 = pnand %p300, %p301
    %p303 = pneg %p302
    // Predicated region
    $region9: #{mednext_up_block_forward.3} parent=5 // pred_check
      _
    $region10: #{mednext_up_block_forward.3} parent=5 // pred_check_branch
      %305 = sbr.rel (%p302) target = $region12
    $region11: #{mednext_up_block_forward.3} parent=5 // pred_region
      %s306 = ssub.s32 %s16, 1
      // Predicated region
      $region13: #{mednext_up_block_forward.3} parent=11 // pred_check
        %p307 = pneg %p107
      $region14: #{mednext_up_block_forward.3} parent=11 // pred_check_branch
        %309 = sbr.rel (%p307) target = $region16
      $region15: #{mednext_up_block_forward.3} parent=11 // pred_region
        _
      $region16: #{mednext_up_block_forward.3} parent=11 // pred_fallthru
        _
      // Predicated region
      $region17: #{mednext_up_block_forward.3} parent=11 // pred_check
        %p310 = pneg %p180
      $region18: #{mednext_up_block_forward.3} parent=11 // pred_check_branch
        %312 = sbr.rel (%p310) target = $region20
      $region19: #{mednext_up_block_forward.3} parent=11 // pred_region
        _
      $region20: #{mednext_up_block_forward.3} parent=11 // pred_fallthru
        _
      // Predicated region
      $region21: #{mednext_up_block_forward.3} parent=11 // pred_check
        %p313 = pneg %p201
      $region22: #{mednext_up_block_forward.3} parent=11 // pred_check_branch
        %315 = sbr.rel (%p313) target = $region24
      $region23: #{mednext_up_block_forward.3} parent=11 // pred_region
        _
      $region24: #{mednext_up_block_forward.3} parent=11 // pred_fallthru
        _
      // Predicated region
      $region25: #{mednext_up_block_forward.3} parent=11 // pred_check
        %p316 = pneg %p222
      $region26: #{mednext_up_block_forward.3} parent=11 // pred_check_branch
        %318 = sbr.rel (%p316) target = $region28
      $region27: #{mednext_up_block_forward.3} parent=11 // pred_region
        _
      $region28: #{mednext_up_block_forward.3} parent=11 // pred_fallthru
        _
      // Predicated region
      $region29: #{mednext_up_block_forward.3} parent=11 // pred_check
        %p319 = pneg %p243
      $region30: #{mednext_up_block_forward.3} parent=11 // pred_check_branch
        %321 = sbr.rel (%p319) target = $region32
      $region31: #{mednext_up_block_forward.3} parent=11 // pred_region
        _
      $region32: #{mednext_up_block_forward.3} parent=11 // pred_fallthru
        _
      // Predicated region
      $region33: #{mednext_up_block_forward.3} parent=11 // pred_check
        %p322 = pneg %p264
      $region34: #{mednext_up_block_forward.3} parent=11 // pred_check_branch
        %324 = sbr.rel (%p322) target = $region36
      $region35: #{mednext_up_block_forward.3} parent=11 // pred_region
        _
      $region36: #{mednext_up_block_forward.3} parent=11 // pred_fallthru
        _
    $region12: #{mednext_up_block_forward.3} parent=5 // pred_fallthru
      _
    %p325 = scmp.lt.s32.totalorder %s16, 16
    // Predicated region
    $region37: #{mednext_up_block_forward.3} parent=5 // pred_check
      %p326 = pneg %p325
    $region38: #{mednext_up_block_forward.3} parent=5 // pred_check_branch
      %328 = sbr.rel (%p326) target = $region40
    $region39: #{mednext_up_block_forward.3} parent=5 // pred_region
      // Predicated region
      $region41: #{mednext_up_block_forward.3} parent=39 // pred_check
        %p329 = pneg %p50
      $region42: #{mednext_up_block_forward.3} parent=39 // pred_check_branch
        %331 = sbr.rel (%p329) target = $region44
      $region43: #{mednext_up_block_forward.3} parent=39 // pred_region
        %p332 = scmp.lt.s32.totalorder %s23, 1
        %s333 = scalar_select %p332, %s23, 1
        %p334 = scmp.lt.s32.totalorder %s24, 8
        %s335 = scalar_select %p334, %s24, 8
        %s336 = smul.addr %s335, 18
        %s337 = smul.addr %s333, 162
        %s338 = sadd.s32 %s336, %s337
        %s339 = smul.addr %s338, 8
        %s340 = scalar_lea.vmem %s0, %s339
      $region44: #{mednext_up_block_forward.3} parent=39 // pred_fallthru
        _
      // Predicated region
      $region45: #{mednext_up_block_forward.3} parent=39 // pred_check
        %p341 = pneg %p80
      $region46: #{mednext_up_block_forward.3} parent=39 // pred_check_branch
        %343 = sbr.rel (%p341) target = $region48
      $region47: #{mednext_up_block_forward.3} parent=39 // pred_region
        %s344 = sadd.s32 %s24, 1
        %p345 = scmp.lt.s32.totalorder %s23, 1
        %s346 = scalar_select %p345, %s23, 1
        %p347 = scmp.lt.s32.totalorder %s344, 8
        %s348 = scalar_select %p347, %s344, 8
        %s349 = smul.addr %s348, 18
        %s350 = smul.addr %s346, 162
        %s351 = sadd.s32 %s349, %s350
        %s352 = smul.addr %s351, 8
        %s353 = scalar_lea.vmem %s1, %s352
        %s354 = sadd.s32 %s24, 1
      $region48: #{mednext_up_block_forward.3} parent=39 // pred_fallthru
        _
      // Predicated region
      $region49: #{mednext_up_block_forward.3} parent=39 // pred_check
        %p355 = pneg %p127
      $region50: #{mednext_up_block_forward.3} parent=39 // pred_check_branch
        %357 = sbr.rel (%p355) target = $region52
      $region51: #{mednext_up_block_forward.3} parent=39 // pred_region
        %p358 = scmp.lt.s32.totalorder %s23, 1
        %s359 = scalar_select %p358, %s23, 1
        %s360 = scalar_lea.vmem %s3, %s359
      $region52: #{mednext_up_block_forward.3} parent=39 // pred_fallthru
        _
      // Predicated region
      $region53: #{mednext_up_block_forward.3} parent=39 // pred_check
        %p361 = pneg %p153
      $region54: #{mednext_up_block_forward.3} parent=39 // pred_check_branch
        %363 = sbr.rel (%p361) target = $region56
      $region55: #{mednext_up_block_forward.3} parent=39 // pred_region
        %p364 = scmp.lt.s32.totalorder %s23, 1
        %s365 = scalar_select %p364, %s23, 1
        %s366 = scalar_lea.vmem %s4, %s365
      $region56: #{mednext_up_block_forward.3} parent=39 // pred_fallthru
        _
    $region40: #{mednext_up_block_forward.3} parent=5 // pred_fallthru
      _
    %p367 = scmp.le.s32.totalorder 1, %s16
    %p368 = scmp.lt.s32.totalorder %s16, 17
    %p369 = pnand %p367, %p368
    %p370 = pneg %p369
    // Predicated region
    $region57: #{mednext_up_block_forward.3} parent=5 // pred_check
      _
    $region58: #{mednext_up_block_forward.3} parent=5 // pred_check_branch
      %372 = sbr.rel (%p369) target = $region60
    $region59: #{mednext_up_block_forward.3} parent=5 // pred_region
      %s373 = ssub.s32 %s16, 1
      %p374 = scmp.lt.s32.totalorder %s25, 1
      %s375 = scalar_select %p374, %s25, 1
      %p376 = scmp.lt.s32.totalorder %s26, 8
      %s377 = scalar_select %p376, %s26, 8
      %s378 = smul.addr %s377, 18
      %s379 = smul.addr %s375, 162
      %s380 = sadd.s32 %s378, %s379
      %s381 = smul.addr %s380, 8
      %s382 = scalar_lea.vmem %s0, %s381
      %p383 = pneg %p56
      %p384 = pneg %p53
      %s385 = sadd.s32 %s26, 1
      %p386 = scmp.lt.s32.totalorder %s25, 1
      %s387 = scalar_select %p386, %s25, 1
      %p388 = scmp.lt.s32.totalorder %s385, 8
      %s389 = scalar_select %p388, %s385, 8
      %s390 = smul.addr %s389, 18
      %s391 = smul.addr %s387, 162
      %s392 = sadd.s32 %s390, %s391
      %s393 = smul.addr %s392, 8
      %s394 = scalar_lea.vmem %s1, %s393
      %p395 = pneg %p86
      %p396 = pneg %p83
      %p397 = pneg %p107
      %p398 = pneg %p104
      %p399 = scmp.lt.s32.totalorder %s25, 1
      %s400 = scalar_select %p399, %s25, 1
      %s401 = scalar_lea.vmem %s3, %s400
      %p402 = pneg %p133
      %p403 = pneg %p130
      %p404 = scmp.lt.s32.totalorder %s25, 1
      %s405 = scalar_select %p404, %s25, 1
      %s406 = scalar_lea.vmem %s4, %s405
      %p407 = pneg %p159
      %p408 = pneg %p156
      %p409 = pneg %p180
      %p410 = pneg %p177
      %p411 = pneg %p201
      %p412 = pneg %p198
      %p413 = pneg %p222
      %p414 = pneg %p219
      %p415 = pneg %p243
      %p416 = pneg %p240
      %p417 = pneg %p264
      %p418 = pneg %p261
      %p419 = pneg %p292
      %p420 = pneg %p289
      %p421 = scmp.lt.s32.totalorder %s25, 1
      %s422 = scalar_select %p421, %s25, 1
      %p423 = scmp.lt.s32.totalorder %s26, 7
      %s424 = scalar_select %p423, %s26, 7
      %s425 = smul.addr %s424, 64
      %s426 = smul.addr %s422, 512
      %s427 = sadd.s32 %s425, %s426
      %s428 = smul.addr %s427, 8
      %s429 = scalar_lea.vmem %s10, %s428
      %p430 = scmp.lt.s32.totalorder %s25, 1
      %s431 = scalar_select %p430, %s25, 1
      %p432 = scmp.lt.s32.totalorder %s26, 8
      %s433 = scalar_select %p432, %s26, 8
      %s434 = smul.addr %s433, 18
      %s435 = smul.addr %s431, 162
      %s436 = sadd.s32 %s434, %s435
      %s437 = smul.addr %s436, 8
      %s438 = scalar_lea.vmem %s0, %s437
      %s439 = sadd.s32 %s26, 1
      %p440 = scmp.lt.s32.totalorder %s25, 1
      %s441 = scalar_select %p440, %s25, 1
      %p442 = scmp.lt.s32.totalorder %s439, 8
      %s443 = scalar_select %p442, %s439, 8
      %s444 = smul.addr %s443, 18
      %s445 = smul.addr %s441, 162
      %s446 = sadd.s32 %s444, %s445
      %s447 = smul.addr %s446, 8
      %s448 = scalar_lea.vmem %s1, %s447
      %s449 = sadd.s32 %s26, 1
      %p450 = scmp.lt.s32.totalorder %s25, 1
      %s451 = scalar_select %p450, %s25, 1
      %s452 = scalar_lea.vmem %s3, %s451
      %p453 = scmp.lt.s32.totalorder %s25, 1
      %s454 = scalar_select %p453, %s25, 1
      %s455 = scalar_lea.vmem %s4, %s454
      %p456 = scmp.lt.s32.totalorder %s25, 1
      %s457 = scalar_select %p456, %s25, 1
      %p458 = scmp.lt.s32.totalorder %s26, 7
      %s459 = scalar_select %p458, %s26, 7
      %s460 = smul.addr %s459, 64
      %s461 = smul.addr %s457, 512
      %s462 = sadd.s32 %s460, %s461
      %s463 = smul.addr %s462, 8
      %s464 = scalar_lea.vmem %s10, %s463
      %v465 = vld [vmem:[%s438] sm:$0xff]
      %v466 = vld [vmem:[%s438 + $0x8] sm:$0x1]
      %v467 = vld [vmem:[%s438 + $0x10] sm:$0xff]
      %v468 = vld [vmem:[%s438 + $0x18] sm:$0x1]
      %v469 = vld [vmem:[%s438 + $0x20] sm:$0xff]
      %v470 = vld [vmem:[%s438 + $0x28] sm:$0x1]
      %v471 = vld [vmem:[%s438 + $0x30] sm:$0xff]
      %v472 = vld [vmem:[%s438 + $0x38] sm:$0x1]
      %v473 = vld [vmem:[%s438 + $0x40] sm:$0xff]
      %v474 = vld [vmem:[%s438 + $0x48] sm:$0x1]
      %v475 = vld [vmem:[%s438 + $0x50] sm:$0xff]
      %v476 = vld [vmem:[%s438 + $0x58] sm:$0x1]
      %v477 = vld [vmem:[%s438 + $0x60] sm:$0xff]
      %v478 = vld [vmem:[%s438 + $0x68] sm:$0x1]
      %v479 = vld [vmem:[%s438 + $0x70] sm:$0xff]
      %v480 = vld [vmem:[%s438 + $0x78] sm:$0x1]
      %v481 = vld [vmem:[%s438 + $0x80] sm:$0xff]
      %v482 = vld [vmem:[%s438 + $0x88] sm:$0x1]
      %v483 = vld [vmem:[%s448] sm:$0xff]
      %v484 = vld [vmem:[%s448 + $0x8] sm:$0x1]
      %v485 = vld [vmem:[%s448 + $0x10] sm:$0xff]
      %v486 = vld [vmem:[%s448 + $0x18] sm:$0x1]
      %v487 = vld [vmem:[%s448 + $0x20] sm:$0xff]
      %v488 = vld [vmem:[%s448 + $0x28] sm:$0x1]
      %v489 = vld [vmem:[%s448 + $0x30] sm:$0xff]
      %v490 = vld [vmem:[%s448 + $0x38] sm:$0x1]
      %v491 = vld [vmem:[%s448 + $0x40] sm:$0xff]
      %v492 = vld [vmem:[%s448 + $0x48] sm:$0x1]
      %v493 = vld [vmem:[%s448 + $0x50] sm:$0xff]
      %v494 = vld [vmem:[%s448 + $0x58] sm:$0x1]
      %v495 = vld [vmem:[%s448 + $0x60] sm:$0xff]
      %v496 = vld [vmem:[%s448 + $0x68] sm:$0x1]
      %v497 = vld [vmem:[%s448 + $0x70] sm:$0xff]
      %v498 = vld [vmem:[%s448 + $0x78] sm:$0x1]
      %v499 = vld [vmem:[%s448 + $0x80] sm:$0xff]
      %v500 = vld [vmem:[%s448 + $0x88] sm:$0x1]
      %v501 = vld [vmem:[%s452] sm:$0x1]
      %v502 = vld [vmem:[%s455] sm:$0x1]
      %v503 = vld [vmem:[%s2 + $0x1a] sm:$0x1]
      %v504 = vperm.slane %v503, 0
      %v505 = vmul.f32 %v465, %v504
      %v506 = vmul.f32 %v467, %v504
      %v507 = vmul.f32 %v469, %v504
      %v508 = vmul.f32 %v471, %v504
      %v509 = vmul.f32 %v473, %v504
      %v510 = vmul.f32 %v475, %v504
      %v511 = vmul.f32 %v477, %v504
      %v512 = vmul.f32 %v479, %v504
      %v513 = vadd.f32 %v505, 0.0
      %v514 = vadd.f32 %v506, 0.0
      %v515 = vadd.f32 %v507, 0.0
      %v516 = vadd.f32 %v508, 0.0
      %v517 = vadd.f32 %v509, 0.0
      %v518 = vadd.f32 %v510, 0.0
      %v519 = vadd.f32 %v511, 0.0
      %v520 = vadd.f32 %v512, 0.0
      %v521 = vld [vmem:[%s2 + $0x18] sm:$0x1]
      %v522 = vperm.slane %v521, 0
      %v523 = vmul.f32 %v465, %v522
      %v524 = vmul.f32 %v466, %v522
      %v525 = vmul.f32 %v467, %v522
      %v526 = vmul.f32 %v468, %v522
      %v527 = vmul.f32 %v469, %v522
      %v528 = vmul.f32 %v470, %v522
      %v529 = vmul.f32 %v471, %v522
      %v530 = vmul.f32 %v472, %v522
      %v531 = vmul.f32 %v473, %v522
      %v532 = vmul.f32 %v474, %v522
      %v533 = vmul.f32 %v475, %v522
      %v534 = vmul.f32 %v476, %v522
      %v535 = vmul.f32 %v477, %v522
      %v536 = vmul.f32 %v478, %v522
      %v537 = vmul.f32 %v479, %v522
      %v538 = vmul.f32 %v480, %v522
      %vm555 = vcmask 1046528
      %v556 = vrot.slane %v523, 1
      %v557 = vrot.slane %v524, 1
      %v558 = vsel %vm555, %v556, %v557
      %v559 = vrot.slane %v525, 1
      %v560 = vrot.slane %v526, 1
      %v561 = vsel %vm555, %v559, %v560
      %v562 = vrot.slane %v527, 1
      %v563 = vrot.slane %v528, 1
      %v564 = vsel %vm555, %v562, %v563
      %v565 = vrot.slane %v529, 1
      %v566 = vrot.slane %v530, 1
      %v567 = vsel %vm555, %v565, %v566
      %v568 = vrot.slane %v531, 1
      %v569 = vrot.slane %v532, 1
      %v570 = vsel %vm555, %v568, %v569
      %v571 = vrot.slane %v533, 1
      %v572 = vrot.slane %v534, 1
      %v573 = vsel %vm555, %v571, %v572
      %v574 = vrot.slane %v535, 1
      %v575 = vrot.slane %v536, 1
      %v576 = vsel %vm555, %v574, %v575
      %v577 = vrot.slane %v537, 1
      %v578 = vrot.slane %v538, 1
      %v579 = vsel %vm555, %v577, %v578
      %v588 = vadd.f32 %v513, %v558
      %v589 = vadd.f32 %v514, %v561
      %v590 = vadd.f32 %v515, %v564
      %v591 = vadd.f32 %v516, %v567
      %v592 = vadd.f32 %v517, %v570
      %v593 = vadd.f32 %v518, %v573
      %v594 = vadd.f32 %v519, %v576
      %v595 = vadd.f32 %v520, %v579
      %v596 = vld [vmem:[%s2 + $0x14] sm:$0x1]
      %v597 = vperm.slane %v596, 0
      %v598 = vmul.f32 %v467, %v597
      %v599 = vmul.f32 %v469, %v597
      %v600 = vmul.f32 %v471, %v597
      %v601 = vmul.f32 %v473, %v597
      %v602 = vmul.f32 %v475, %v597
      %v603 = vmul.f32 %v477, %v597
      %v604 = vmul.f32 %v479, %v597
      %v605 = vmul.f32 %v481, %v597
      %v606 = vadd.f32 %v588, %v598
      %v607 = vadd.f32 %v589, %v599
      %v608 = vadd.f32 %v590, %v600
      %v609 = vadd.f32 %v591, %v601
      %v610 = vadd.f32 %v592, %v602
      %v611 = vadd.f32 %v593, %v603
      %v612 = vadd.f32 %v594, %v604
      %v613 = vadd.f32 %v595, %v605
      %v614 = vld [vmem:[%s2 + $0x12] sm:$0x1]
      %v615 = vperm.slane %v614, 0
      %v616 = vmul.f32 %v467, %v615
      %v617 = vmul.f32 %v468, %v615
      %v618 = vmul.f32 %v469, %v615
      %v619 = vmul.f32 %v470, %v615
      %v620 = vmul.f32 %v471, %v615
      %v621 = vmul.f32 %v472, %v615
      %v622 = vmul.f32 %v473, %v615
      %v623 = vmul.f32 %v474, %v615
      %v624 = vmul.f32 %v475, %v615
      %v625 = vmul.f32 %v476, %v615
      %v626 = vmul.f32 %v477, %v615
      %v627 = vmul.f32 %v478, %v615
      %v628 = vmul.f32 %v479, %v615
      %v629 = vmul.f32 %v480, %v615
      %v630 = vmul.f32 %v481, %v615
      %v631 = vmul.f32 %v482, %v615
      %v648 = vrot.slane %v616, 1
      %v649 = vrot.slane %v617, 1
      %v650 = vsel %vm555, %v648, %v649
      %v651 = vrot.slane %v618, 1
      %v652 = vrot.slane %v619, 1
      %v653 = vsel %vm555, %v651, %v652
      %v654 = vrot.slane %v620, 1
      %v655 = vrot.slane %v621, 1
      %v656 = vsel %vm555, %v654, %v655
      %v657 = vrot.slane %v622, 1
      %v658 = vrot.slane %v623, 1
      %v659 = vsel %vm555, %v657, %v658
      %v660 = vrot.slane %v624, 1
      %v661 = vrot.slane %v625, 1
      %v662 = vsel %vm555, %v660, %v661
      %v663 = vrot.slane %v626, 1
      %v664 = vrot.slane %v627, 1
      %v665 = vsel %vm555, %v663, %v664
      %v666 = vrot.slane %v628, 1
      %v667 = vrot.slane %v629, 1
      %v668 = vsel %vm555, %v666, %v667
      %v669 = vrot.slane %v630, 1
      %v670 = vrot.slane %v631, 1
      %v671 = vsel %vm555, %v669, %v670
      %v680 = vadd.f32 %v606, %v650
      %v681 = vadd.f32 %v607, %v653
      %v682 = vadd.f32 %v608, %v656
      %v683 = vadd.f32 %v609, %v659
      %v684 = vadd.f32 %v610, %v662
      %v685 = vadd.f32 %v611, %v665
      %v686 = vadd.f32 %v612, %v668
      %v687 = vadd.f32 %v613, %v671
      %v688 = vld [vmem:[%s2 + $0x8] sm:$0x1]
      %v689 = vperm.slane %v688, 0
      %v690 = vmul.f32 %v483, %v689
      %v691 = vmul.f32 %v485, %v689
      %v692 = vmul.f32 %v487, %v689
      %v693 = vmul.f32 %v489, %v689
      %v694 = vmul.f32 %v491, %v689
      %v695 = vmul.f32 %v493, %v689
      %v696 = vmul.f32 %v495, %v689
      %v697 = vmul.f32 %v497, %v689
      %v698 = vadd.f32 %v680, %v690
      %v699 = vadd.f32 %v681, %v691
      %v700 = vadd.f32 %v682, %v692
      %v701 = vadd.f32 %v683, %v693
      %v702 = vadd.f32 %v684, %v694
      %v703 = vadd.f32 %v685, %v695
      %v704 = vadd.f32 %v686, %v696
      %v705 = vadd.f32 %v687, %v697
      %v706 = vld [vmem:[%s2 + $0x6] sm:$0x1]
      %v707 = vperm.slane %v706, 0
      %v708 = vmul.f32 %v483, %v707
      %v709 = vmul.f32 %v484, %v707
      %v710 = vmul.f32 %v485, %v707
      %v711 = vmul.f32 %v486, %v707
      %v712 = vmul.f32 %v487, %v707
      %v713 = vmul.f32 %v488, %v707
      %v714 = vmul.f32 %v489, %v707
      %v715 = vmul.f32 %v490, %v707
      %v716 = vmul.f32 %v491, %v707
      %v717 = vmul.f32 %v492, %v707
      %v718 = vmul.f32 %v493, %v707
      %v719 = vmul.f32 %v494, %v707
      %v720 = vmul.f32 %v495, %v707
      %v721 = vmul.f32 %v496, %v707
      %v722 = vmul.f32 %v497, %v707
      %v723 = vmul.f32 %v498, %v707
      %v740 = vrot.slane %v708, 1
      %v741 = vrot.slane %v709, 1
      %v742 = vsel %vm555, %v740, %v741
      %v743 = vrot.slane %v710, 1
      %v744 = vrot.slane %v711, 1
      %v745 = vsel %vm555, %v743, %v744
      %v746 = vrot.slane %v712, 1
      %v747 = vrot.slane %v713, 1
      %v748 = vsel %vm555, %v746, %v747
      %v749 = vrot.slane %v714, 1
      %v750 = vrot.slane %v715, 1
      %v751 = vsel %vm555, %v749, %v750
      %v752 = vrot.slane %v716, 1
      %v753 = vrot.slane %v717, 1
      %v754 = vsel %vm555, %v752, %v753
      %v755 = vrot.slane %v718, 1
      %v756 = vrot.slane %v719, 1
      %v757 = vsel %vm555, %v755, %v756
      %v758 = vrot.slane %v720, 1
      %v759 = vrot.slane %v721, 1
      %v760 = vsel %vm555, %v758, %v759
      %v761 = vrot.slane %v722, 1
      %v762 = vrot.slane %v723, 1
      %v763 = vsel %vm555, %v761, %v762
      %v772 = vadd.f32 %v698, %v742
      %v773 = vadd.f32 %v699, %v745
      %v774 = vadd.f32 %v700, %v748
      %v775 = vadd.f32 %v701, %v751
      %v776 = vadd.f32 %v702, %v754
      %v777 = vadd.f32 %v703, %v757
      %v778 = vadd.f32 %v704, %v760
      %v779 = vadd.f32 %v705, %v763
      %v780 = vld [vmem:[%s2 + $0x2] sm:$0x1]
      %v781 = vperm.slane %v780, 0
      %v782 = vmul.f32 %v485, %v781
      %v783 = vmul.f32 %v487, %v781
      %v784 = vmul.f32 %v489, %v781
      %v785 = vmul.f32 %v491, %v781
      %v786 = vmul.f32 %v493, %v781
      %v787 = vmul.f32 %v495, %v781
      %v788 = vmul.f32 %v497, %v781
      %v789 = vmul.f32 %v499, %v781
      %v790 = vadd.f32 %v772, %v782
      %v791 = vadd.f32 %v773, %v783
      %v792 = vadd.f32 %v774, %v784
      %v793 = vadd.f32 %v775, %v785
      %v794 = vadd.f32 %v776, %v786
      %v795 = vadd.f32 %v777, %v787
      %v796 = vadd.f32 %v778, %v788
      %v797 = vadd.f32 %v779, %v789
      %v798 = vld [vmem:[%s2] sm:$0x1]
      %v799 = vperm.slane %v798, 0
      %v800 = vmul.f32 %v485, %v799
      %v801 = vmul.f32 %v486, %v799
      %v802 = vmul.f32 %v487, %v799
      %v803 = vmul.f32 %v488, %v799
      %v804 = vmul.f32 %v489, %v799
      %v805 = vmul.f32 %v490, %v799
      %v806 = vmul.f32 %v491, %v799
      %v807 = vmul.f32 %v492, %v799
      %v808 = vmul.f32 %v493, %v799
      %v809 = vmul.f32 %v494, %v799
      %v810 = vmul.f32 %v495, %v799
      %v811 = vmul.f32 %v496, %v799
      %v812 = vmul.f32 %v497, %v799
      %v813 = vmul.f32 %v498, %v799
      %v814 = vmul.f32 %v499, %v799
      %v815 = vmul.f32 %v500, %v799
      %v832 = vrot.slane %v800, 1
      %v833 = vrot.slane %v801, 1
      %v834 = vsel %vm555, %v832, %v833
      %v835 = vrot.slane %v802, 1
      %v836 = vrot.slane %v803, 1
      %v837 = vsel %vm555, %v835, %v836
      %v838 = vrot.slane %v804, 1
      %v839 = vrot.slane %v805, 1
      %v840 = vsel %vm555, %v838, %v839
      %v841 = vrot.slane %v806, 1
      %v842 = vrot.slane %v807, 1
      %v843 = vsel %vm555, %v841, %v842
      %v844 = vrot.slane %v808, 1
      %v845 = vrot.slane %v809, 1
      %v846 = vsel %vm555, %v844, %v845
      %v847 = vrot.slane %v810, 1
      %v848 = vrot.slane %v811, 1
      %v849 = vsel %vm555, %v847, %v848
      %v850 = vrot.slane %v812, 1
      %v851 = vrot.slane %v813, 1
      %v852 = vsel %vm555, %v850, %v851
      %v853 = vrot.slane %v814, 1
      %v854 = vrot.slane %v815, 1
      %v855 = vsel %vm555, %v853, %v854
      %v864 = vadd.f32 %v790, %v834
      %v865 = vadd.f32 %v791, %v837
      %v866 = vadd.f32 %v792, %v840
      %v867 = vadd.f32 %v793, %v843
      %v868 = vadd.f32 %v794, %v846
      %v869 = vadd.f32 %v795, %v849
      %v870 = vadd.f32 %v796, %v852
      %v871 = vadd.f32 %v797, %v855
      %v873 = vperm.slane %v501, 0
      %v875 = vsub.f32 %v864, %v873
      %v876 = vsub.f32 %v865, %v873
      %v877 = vsub.f32 %v866, %v873
      %v878 = vsub.f32 %v867, %v873
      %v879 = vsub.f32 %v868, %v873
      %v880 = vsub.f32 %v869, %v873
      %v881 = vsub.f32 %v870, %v873
      %v882 = vsub.f32 %v871, %v873
      %v884 = vperm.slane %v502, 0
      %v886 = vmul.f32 %v875, %v884
      %v887 = vmul.f32 %v876, %v884
      %v888 = vmul.f32 %v877, %v884
      %v889 = vmul.f32 %v878, %v884
      %v890 = vmul.f32 %v879, %v884
      %v891 = vmul.f32 %v880, %v884
      %v892 = vmul.f32 %v881, %v884
      %v893 = vmul.f32 %v882, %v884
      %v894 = vld [vmem:[%s5] sm:$0xff]
      %v895 = vld [vmem:[%s6] sm:$0x1]
      %v897 = vperm.slane %v895, 0
      %vm899 = vcmask 64512
      %v901 = vsel %vm899, %v886, 0
      %v904 = vsel %vm899, %v887, 0
      %v907 = vsel %vm899, %v888, 0
      %v910 = vsel %vm899, %v889, 0
      %v913 = vsel %vm899, %v890, 0
      %v916 = vsel %vm899, %v891, 0
      %v919 = vsel %vm899, %v892, 0
      %v922 = vsel %vm899, %v893, 0
      %924 = vmatpush.msra.mxu0 0.0
      %925 = vmatpush.msra.mxu0 0.0
      %926 = vmatpush.msra.mxu0 0.0
      %927 = vmatpush.msra.mxu0 0.0
      %928 = vmatpush.msra.mxu0 0.0
      %929 = vmatpush.msra.mxu0 0.0
      %930 = vmatpush.msra.mxu0 0.0
      %931 = vmatpush.msra.mxu0 0.0
      %932 = vmatpush.msra.mxu0 0.0
      %933 = vmatpush.msra.mxu0 0.0
      %934 = vmatpush.msra.mxu0 0.0
      %935 = vmatpush.msra.mxu0 0.0
      %936 = vmatpush.msra.mxu0 0.0
      %937 = vmatpush.msra.mxu0 0.0
      %938 = vmatpush.msra.mxu0 0.0
      %939 = vmatpush.msra.mxu0 %v894
      %940 = vmatmul.f32.gmra.mxu0 %v901
      %v941 = vpop.f32.mrf.mxu0
      %v942 = vadd.f32 %v897, %v941
      %943 = vmatmul.f32.gmra.mxu0 %v904
      %v944 = vpop.f32.mrf.mxu0
      %v945 = vadd.f32 %v897, %v944
      %946 = vmatmul.f32.gmra.mxu0 %v907
      %v947 = vpop.f32.mrf.mxu0
      %v948 = vadd.f32 %v897, %v947
      %949 = vmatmul.f32.gmra.mxu0 %v910
      %v950 = vpop.f32.mrf.mxu0
      %v951 = vadd.f32 %v897, %v950
      %952 = vmatmul.f32.gmra.mxu0 %v913
      %v953 = vpop.f32.mrf.mxu0
      %v954 = vadd.f32 %v897, %v953
      %955 = vmatmul.f32.gmra.mxu0 %v916
      %v956 = vpop.f32.mrf.mxu0
      %v957 = vadd.f32 %v897, %v956
      %958 = vmatmul.f32.gmra.mxu0 %v919
      %v959 = vpop.f32.mrf.mxu0
      %v960 = vadd.f32 %v897, %v959
      %961 = vmatmul.f32.gmra.mxu0 %v922
      %v962 = vpop.f32.mrf.mxu0
      %v963 = vadd.f32 %v897, %v962
      %964 = vdwg.mxu0
      %v965 = vmul.f32 %v942, 0.5
      %v966 = vmul.f32 %v945, 0.5
      %v967 = vmul.f32 %v948, 0.5
      %v968 = vmul.f32 %v951, 0.5
      %v969 = vmul.f32 %v954, 0.5
      %v970 = vmul.f32 %v957, 0.5
      %v971 = vmul.f32 %v960, 0.5
      %v972 = vmul.f32 %v963, 0.5
      %v973 = vrcp.pop 1.4142135
      %v974 = vmul.f32 1.4142135, %v973
      %v975 = vsub.f32 1.0, %v974
      %v976 = vmul.f32 %v973, %v975
      %v977 = vadd.f32 %v973, %v976
      %vm978 = vweird.f32 %v973
      %v979 = vsel %vm978, %v973, %v977
      %v980 = vmul.f32 %v942, %v979
      %v981 = vmul.f32 %v945, %v979
      %v982 = vmul.f32 %v948, %v979
      %v983 = vmul.f32 %v951, %v979
      %v984 = vmul.f32 %v954, %v979
      %v985 = vmul.f32 %v957, %v979
      %v986 = vmul.f32 %v960, %v979
      %v987 = vmul.f32 %v963, %v979
      %v988 = vmul.f32 %v980, %v980
      %v989 = vmin.f32 16.0, %v988
      %v990 = vmul.f32 %v989, 2.1237322e-06
      %v991 = vadd.f32 %v990, 0.00028619796
      %v992 = vmul.f32 %v989, %v991
      %v993 = vadd.f32 %v992, 0.0036580483
      %v994 = vmul.f32 %v989, %v993
      %v995 = vadd.f32 %v994, 0.05243302
      %v996 = vmul.f32 %v989, %v995
      %v997 = vadd.f32 %v996, 0.18741608
      %v998 = vmul.f32 %v989, %v997
      %v999 = vadd.f32 %v998, 1.1283791
      %v1000 = vmul.f32 %v980, %v999
      %v1001 = vmul.f32 %v989, 3.8918573e-05
      %v1002 = vadd.f32 %v1001, 0.001143296
      %v1003 = vmul.f32 %v989, %v1002
      %v1004 = vadd.f32 %v1003, 0.014752088
      %v1005 = vmul.f32 %v989, %v1004
      %v1006 = vadd.f32 %v1005, 0.112945676
      %v1007 = vmul.f32 %v989, %v1006
      %v1008 = vadd.f32 %v1007, 0.4994258
      %v1009 = vmul.f32 %v989, %v1008
      %v1010 = vadd.f32 %v1009, 1.0
      %v1011 = vrcp.pop %v1010
      %v1012 = vmul.f32 %v1010, %v1011
      %v1013 = vsub.f32 1.0, %v1012
      %v1014 = vmul.f32 %v1011, %v1013
      %v1015 = vadd.f32 %v1011, %v1014
      %vm1016 = vweird.f32 %v1010
      %vm1017 = vweird.f32 %v1011
      %vm1018 = vmor %vm1016, %vm1017
      %v1019 = vsel %vm1018, %v1011, %v1015
      %v1020 = vand.u32 2147483647, %v1010
      %vm1021 = vcmp.eq.f32.partialorder %v1020, 8.507059e+37
      %v1022 = vand.u32 %v1010, 2147483648
      %v1023 = vor.u32 1.1754944e-38, %v1022
      %v1024 = vsel %vm1021, %v1023, %v1019
      %v1025 = vmul.f32 %v1000, %v1024
      %v1026 = vmin.f32 %v1025, 1.0
      %v1027 = vmax.f32 %v1026, -1.0
      %v1028 = vmul.f32 %v981, %v981
      %v1029 = vmin.f32 16.0, %v1028
      %v1030 = vmul.f32 %v1029, 2.1237322e-06
      %v1031 = vadd.f32 %v1030, 0.00028619796
      %v1032 = vmul.f32 %v1029, %v1031
      %v1033 = vadd.f32 %v1032, 0.0036580483
      %v1034 = vmul.f32 %v1029, %v1033
      %v1035 = vadd.f32 %v1034, 0.05243302
      %v1036 = vmul.f32 %v1029, %v1035
      %v1037 = vadd.f32 %v1036, 0.18741608
      %v1038 = vmul.f32 %v1029, %v1037
      %v1039 = vadd.f32 %v1038, 1.1283791
      %v1040 = vmul.f32 %v981, %v1039
      %v1041 = vmul.f32 %v1029, 3.8918573e-05
      %v1042 = vadd.f32 %v1041, 0.001143296
      %v1043 = vmul.f32 %v1029, %v1042
      %v1044 = vadd.f32 %v1043, 0.014752088
      %v1045 = vmul.f32 %v1029, %v1044
      %v1046 = vadd.f32 %v1045, 0.112945676
      %v1047 = vmul.f32 %v1029, %v1046
      %v1048 = vadd.f32 %v1047, 0.4994258
      %v1049 = vmul.f32 %v1029, %v1048
      %v1050 = vadd.f32 %v1049, 1.0
      %v1051 = vrcp.pop %v1050
      %v1052 = vmul.f32 %v1050, %v1051
      %v1053 = vsub.f32 1.0, %v1052
      %v1054 = vmul.f32 %v1051, %v1053
      %v1055 = vadd.f32 %v1051, %v1054
      %vm1056 = vweird.f32 %v1050
      %vm1057 = vweird.f32 %v1051
      %vm1058 = vmor %vm1056, %vm1057
      %v1059 = vsel %vm1058, %v1051, %v1055
      %v1060 = vand.u32 2147483647, %v1050
      %vm1061 = vcmp.eq.f32.partialorder %v1060, 8.507059e+37
      %v1062 = vand.u32 %v1050, 2147483648
      %v1063 = vor.u32 1.1754944e-38, %v1062
      %v1064 = vsel %vm1061, %v1063, %v1059
      %v1065 = vmul.f32 %v1040, %v1064
      %v1066 = vmin.f32 %v1065, 1.0
      %v1067 = vmax.f32 %v1066, -1.0
      %v1068 = vmul.f32 %v982, %v982
      %v1069 = vmin.f32 16.0, %v1068
      %v1070 = vmul.f32 %v1069, 2.1237322e-06
      %v1071 = vadd.f32 %v1070, 0.00028619796
      %v1072 = vmul.f32 %v1069, %v1071
      %v1073 = vadd.f32 %v1072, 0.0036580483
      %v1074 = vmul.f32 %v1069, %v1073
      %v1075 = vadd.f32 %v1074, 0.05243302
      %v1076 = vmul.f32 %v1069, %v1075
      %v1077 = vadd.f32 %v1076, 0.18741608
      %v1078 = vmul.f32 %v1069, %v1077
      %v1079 = vadd.f32 %v1078, 1.1283791
      %v1080 = vmul.f32 %v982, %v1079
      %v1081 = vmul.f32 %v1069, 3.8918573e-05
      %v1082 = vadd.f32 %v1081, 0.001143296
      %v1083 = vmul.f32 %v1069, %v1082
      %v1084 = vadd.f32 %v1083, 0.014752088
      %v1085 = vmul.f32 %v1069, %v1084
      %v1086 = vadd.f32 %v1085, 0.112945676
      %v1087 = vmul.f32 %v1069, %v1086
      %v1088 = vadd.f32 %v1087, 0.4994258
      %v1089 = vmul.f32 %v1069, %v1088
      %v1090 = vadd.f32 %v1089, 1.0
      %v1091 = vrcp.pop %v1090
      %v1092 = vmul.f32 %v1090, %v1091
      %v1093 = vsub.f32 1.0, %v1092
      %v1094 = vmul.f32 %v1091, %v1093
      %v1095 = vadd.f32 %v1091, %v1094
      %vm1096 = vweird.f32 %v1090
      %vm1097 = vweird.f32 %v1091
      %vm1098 = vmor %vm1096, %vm1097
      %v1099 = vsel %vm1098, %v1091, %v1095
      %v1100 = vand.u32 2147483647, %v1090
      %vm1101 = vcmp.eq.f32.partialorder %v1100, 8.507059e+37
      %v1102 = vand.u32 %v1090, 2147483648
      %v1103 = vor.u32 1.1754944e-38, %v1102
      %v1104 = vsel %vm1101, %v1103, %v1099
      %v1105 = vmul.f32 %v1080, %v1104
      %v1106 = vmin.f32 %v1105, 1.0
      %v1107 = vmax.f32 %v1106, -1.0
      %v1108 = vmul.f32 %v983, %v983
      %v1109 = vmin.f32 16.0, %v1108
      %v1110 = vmul.f32 %v1109, 2.1237322e-06
      %v1111 = vadd.f32 %v1110, 0.00028619796
      %v1112 = vmul.f32 %v1109, %v1111
      %v1113 = vadd.f32 %v1112, 0.0036580483
      %v1114 = vmul.f32 %v1109, %v1113
      %v1115 = vadd.f32 %v1114, 0.05243302
      %v1116 = vmul.f32 %v1109, %v1115
      %v1117 = vadd.f32 %v1116, 0.18741608
      %v1118 = vmul.f32 %v1109, %v1117
      %v1119 = vadd.f32 %v1118, 1.1283791
      %v1120 = vmul.f32 %v983, %v1119
      %v1121 = vmul.f32 %v1109, 3.8918573e-05
      %v1122 = vadd.f32 %v1121, 0.001143296
      %v1123 = vmul.f32 %v1109, %v1122
      %v1124 = vadd.f32 %v1123, 0.014752088
      %v1125 = vmul.f32 %v1109, %v1124
      %v1126 = vadd.f32 %v1125, 0.112945676
      %v1127 = vmul.f32 %v1109, %v1126
      %v1128 = vadd.f32 %v1127, 0.4994258
      %v1129 = vmul.f32 %v1109, %v1128
      %v1130 = vadd.f32 %v1129, 1.0
      %v1131 = vrcp.pop %v1130
      %v1132 = vmul.f32 %v1130, %v1131
      %v1133 = vsub.f32 1.0, %v1132
      %v1134 = vmul.f32 %v1131, %v1133
      %v1135 = vadd.f32 %v1131, %v1134
      %vm1136 = vweird.f32 %v1130
      %vm1137 = vweird.f32 %v1131
      %vm1138 = vmor %vm1136, %vm1137
      %v1139 = vsel %vm1138, %v1131, %v1135
      %v1140 = vand.u32 2147483647, %v1130
      %vm1141 = vcmp.eq.f32.partialorder %v1140, 8.507059e+37
      %v1142 = vand.u32 %v1130, 2147483648
      %v1143 = vor.u32 1.1754944e-38, %v1142
      %v1144 = vsel %vm1141, %v1143, %v1139
      %v1145 = vmul.f32 %v1120, %v1144
      %v1146 = vmin.f32 %v1145, 1.0
      %v1147 = vmax.f32 %v1146, -1.0
      %v1148 = vmul.f32 %v984, %v984
      %v1149 = vmin.f32 16.0, %v1148
      %v1150 = vmul.f32 %v1149, 2.1237322e-06
      %v1151 = vadd.f32 %v1150, 0.00028619796
      %v1152 = vmul.f32 %v1149, %v1151
      %v1153 = vadd.f32 %v1152, 0.0036580483
      %v1154 = vmul.f32 %v1149, %v1153
      %v1155 = vadd.f32 %v1154, 0.05243302
      %v1156 = vmul.f32 %v1149, %v1155
      %v1157 = vadd.f32 %v1156, 0.18741608
      %v1158 = vmul.f32 %v1149, %v1157
      %v1159 = vadd.f32 %v1158, 1.1283791
      %v1160 = vmul.f32 %v984, %v1159
      %v1161 = vmul.f32 %v1149, 3.8918573e-05
      %v1162 = vadd.f32 %v1161, 0.001143296
      %v1163 = vmul.f32 %v1149, %v1162
      %v1164 = vadd.f32 %v1163, 0.014752088
      %v1165 = vmul.f32 %v1149, %v1164
      %v1166 = vadd.f32 %v1165, 0.112945676
      %v1167 = vmul.f32 %v1149, %v1166
      %v1168 = vadd.f32 %v1167, 0.4994258
      %v1169 = vmul.f32 %v1149, %v1168
      %v1170 = vadd.f32 %v1169, 1.0
      %v1171 = vrcp.pop %v1170
      %v1172 = vmul.f32 %v1170, %v1171
      %v1173 = vsub.f32 1.0, %v1172
      %v1174 = vmul.f32 %v1171, %v1173
      %v1175 = vadd.f32 %v1171, %v1174
      %vm1176 = vweird.f32 %v1170
      %vm1177 = vweird.f32 %v1171
      %vm1178 = vmor %vm1176, %vm1177
      %v1179 = vsel %vm1178, %v1171, %v1175
      %v1180 = vand.u32 2147483647, %v1170
      %vm1181 = vcmp.eq.f32.partialorder %v1180, 8.507059e+37
      %v1182 = vand.u32 %v1170, 2147483648
      %v1183 = vor.u32 1.1754944e-38, %v1182
      %v1184 = vsel %vm1181, %v1183, %v1179
      %v1185 = vmul.f32 %v1160, %v1184
      %v1186 = vmin.f32 %v1185, 1.0
      %v1187 = vmax.f32 %v1186, -1.0
      %v1188 = vmul.f32 %v985, %v985
      %v1189 = vmin.f32 16.0, %v1188
      %v1190 = vmul.f32 %v1189, 2.1237322e-06
      %v1191 = vadd.f32 %v1190, 0.00028619796
      %v1192 = vmul.f32 %v1189, %v1191
      %v1193 = vadd.f32 %v1192, 0.0036580483
      %v1194 = vmul.f32 %v1189, %v1193
      %v1195 = vadd.f32 %v1194, 0.05243302
      %v1196 = vmul.f32 %v1189, %v1195
      %v1197 = vadd.f32 %v1196, 0.18741608
      %v1198 = vmul.f32 %v1189, %v1197
      %v1199 = vadd.f32 %v1198, 1.1283791
      %v1200 = vmul.f32 %v985, %v1199
      %v1201 = vmul.f32 %v1189, 3.8918573e-05
      %v1202 = vadd.f32 %v1201, 0.001143296
      %v1203 = vmul.f32 %v1189, %v1202
      %v1204 = vadd.f32 %v1203, 0.014752088
      %v1205 = vmul.f32 %v1189, %v1204
      %v1206 = vadd.f32 %v1205, 0.112945676
      %v1207 = vmul.f32 %v1189, %v1206
      %v1208 = vadd.f32 %v1207, 0.4994258
      %v1209 = vmul.f32 %v1189, %v1208
      %v1210 = vadd.f32 %v1209, 1.0
      %v1211 = vrcp.pop %v1210
      %v1212 = vmul.f32 %v1210, %v1211
      %v1213 = vsub.f32 1.0, %v1212
      %v1214 = vmul.f32 %v1211, %v1213
      %v1215 = vadd.f32 %v1211, %v1214
      %vm1216 = vweird.f32 %v1210
      %vm1217 = vweird.f32 %v1211
      %vm1218 = vmor %vm1216, %vm1217
      %v1219 = vsel %vm1218, %v1211, %v1215
      %v1220 = vand.u32 2147483647, %v1210
      %vm1221 = vcmp.eq.f32.partialorder %v1220, 8.507059e+37
      %v1222 = vand.u32 %v1210, 2147483648
      %v1223 = vor.u32 1.1754944e-38, %v1222
      %v1224 = vsel %vm1221, %v1223, %v1219
      %v1225 = vmul.f32 %v1200, %v1224
      %v1226 = vmin.f32 %v1225, 1.0
      %v1227 = vmax.f32 %v1226, -1.0
      %v1228 = vmul.f32 %v986, %v986
      %v1229 = vmin.f32 16.0, %v1228
      %v1230 = vmul.f32 %v1229, 2.1237322e-06
      %v1231 = vadd.f32 %v1230, 0.00028619796
      %v1232 = vmul.f32 %v1229, %v1231
      %v1233 = vadd.f32 %v1232, 0.0036580483
      %v1234 = vmul.f32 %v1229, %v1233
      %v1235 = vadd.f32 %v1234, 0.05243302
      %v1236 = vmul.f32 %v1229, %v1235
      %v1237 = vadd.f32 %v1236, 0.18741608
      %v1238 = vmul.f32 %v1229, %v1237
      %v1239 = vadd.f32 %v1238, 1.1283791
      %v1240 = vmul.f32 %v986, %v1239
      %v1241 = vmul.f32 %v1229, 3.8918573e-05
      %v1242 = vadd.f32 %v1241, 0.001143296
      %v1243 = vmul.f32 %v1229, %v1242
      %v1244 = vadd.f32 %v1243, 0.014752088
      %v1245 = vmul.f32 %v1229, %v1244
      %v1246 = vadd.f32 %v1245, 0.112945676
      %v1247 = vmul.f32 %v1229, %v1246
      %v1248 = vadd.f32 %v1247, 0.4994258
      %v1249 = vmul.f32 %v1229, %v1248
      %v1250 = vadd.f32 %v1249, 1.0
      %v1251 = vrcp.pop %v1250
      %v1252 = vmul.f32 %v1250, %v1251
      %v1253 = vsub.f32 1.0, %v1252
      %v1254 = vmul.f32 %v1251, %v1253
      %v1255 = vadd.f32 %v1251, %v1254
      %vm1256 = vweird.f32 %v1250
      %vm1257 = vweird.f32 %v1251
      %vm1258 = vmor %vm1256, %vm1257
      %v1259 = vsel %vm1258, %v1251, %v1255
      %v1260 = vand.u32 2147483647, %v1250
      %vm1261 = vcmp.eq.f32.partialorder %v1260, 8.507059e+37
      %v1262 = vand.u32 %v1250, 2147483648
      %v1263 = vor.u32 1.1754944e-38, %v1262
      %v1264 = vsel %vm1261, %v1263, %v1259
      %v1265 = vmul.f32 %v1240, %v1264
      %v1266 = vmin.f32 %v1265, 1.0
      %v1267 = vmax.f32 %v1266, -1.0
      %v1268 = vmul.f32 %v987, %v987
      %v1269 = vmin.f32 16.0, %v1268
      %v1270 = vmul.f32 %v1269, 2.1237322e-06
      %v1271 = vadd.f32 %v1270, 0.00028619796
      %v1272 = vmul.f32 %v1269, %v1271
      %v1273 = vadd.f32 %v1272, 0.0036580483
      %v1274 = vmul.f32 %v1269, %v1273
      %v1275 = vadd.f32 %v1274, 0.05243302
      %v1276 = vmul.f32 %v1269, %v1275
      %v1277 = vadd.f32 %v1276, 0.18741608
      %v1278 = vmul.f32 %v1269, %v1277
      %v1279 = vadd.f32 %v1278, 1.1283791
      %v1280 = vmul.f32 %v987, %v1279
      %v1281 = vmul.f32 %v1269, 3.8918573e-05
      %v1282 = vadd.f32 %v1281, 0.001143296
      %v1283 = vmul.f32 %v1269, %v1282
      %v1284 = vadd.f32 %v1283, 0.014752088
      %v1285 = vmul.f32 %v1269, %v1284
      %v1286 = vadd.f32 %v1285, 0.112945676
      %v1287 = vmul.f32 %v1269, %v1286
      %v1288 = vadd.f32 %v1287, 0.4994258
      %v1289 = vmul.f32 %v1269, %v1288
      %v1290 = vadd.f32 %v1289, 1.0
      %v1291 = vrcp.pop %v1290
      %v1292 = vmul.f32 %v1290, %v1291
      %v1293 = vsub.f32 1.0, %v1292
      %v1294 = vmul.f32 %v1291, %v1293
      %v1295 = vadd.f32 %v1291, %v1294
      %vm1296 = vweird.f32 %v1290
      %vm1297 = vweird.f32 %v1291
      %vm1298 = vmor %vm1296, %vm1297
      %v1299 = vsel %vm1298, %v1291, %v1295
      %v1300 = vand.u32 2147483647, %v1290
      %vm1301 = vcmp.eq.f32.partialorder %v1300, 8.507059e+37
      %v1302 = vand.u32 %v1290, 2147483648
      %v1303 = vor.u32 1.1754944e-38, %v1302
      %v1304 = vsel %vm1301, %v1303, %v1299
      %v1305 = vmul.f32 %v1280, %v1304
      %v1306 = vmin.f32 %v1305, 1.0
      %v1307 = vmax.f32 %v1306, -1.0
      %v1308 = vadd.f32 %v1027, 1.0
      %v1309 = vadd.f32 %v1067, 1.0
      %v1310 = vadd.f32 %v1107, 1.0
      %v1311 = vadd.f32 %v1147, 1.0
      %v1312 = vadd.f32 %v1187, 1.0
      %v1313 = vadd.f32 %v1227, 1.0
      %v1314 = vadd.f32 %v1267, 1.0
      %v1315 = vadd.f32 %v1307, 1.0
      %v1316 = vmul.f32 %v965, %v1308
      %v1317 = vmul.f32 %v966, %v1309
      %v1318 = vmul.f32 %v967, %v1310
      %v1319 = vmul.f32 %v968, %v1311
      %v1320 = vmul.f32 %v969, %v1312
      %v1321 = vmul.f32 %v970, %v1313
      %v1322 = vmul.f32 %v971, %v1314
      %v1323 = vmul.f32 %v972, %v1315
      %v1324 = vld [vmem:[%s7] sm:$0xff]
      %v1325 = vld [vmem:[%s7 + $0x8] sm:$0xff]
      %v1326 = vld [vmem:[%s8] sm:$0x1]
      %v1328 = vperm.slane %v1326, 0
      %vm1330 = vcmask 130048
      %v1332 = vsel %vm1330, %v1316, 0
      %v1335 = vsel %vm1330, %v1317, 0
      %v1338 = vsel %vm1330, %v1318, 0
      %v1341 = vsel %vm1330, %v1319, 0
      %v1344 = vsel %vm1330, %v1320, 0
      %v1347 = vsel %vm1330, %v1321, 0
      %v1350 = vsel %vm1330, %v1322, 0
      %v1353 = vsel %vm1330, %v1323, 0
      %1355 = vmatpush.msra.mxu0 0.0
      %1356 = vmatpush.msra.mxu0 0.0
      %1357 = vmatpush.msra.mxu0 0.0
      %1358 = vmatpush.msra.mxu0 0.0
      %1359 = vmatpush.msra.mxu0 0.0
      %1360 = vmatpush.msra.mxu0 0.0
      %1361 = vmatpush.msra.mxu0 0.0
      %1362 = vmatpush.msra.mxu0 0.0
      %1363 = vmatpush.msra.mxu0 0.0
      %1364 = vmatpush.msra.mxu0 0.0
      %1365 = vmatpush.msra.mxu0 0.0
      %1366 = vmatpush.msra.mxu0 0.0
      %1367 = vmatpush.msra.mxu0 0.0
      %1368 = vmatpush.msra.mxu0 0.0
      %1369 = vmatpush.msra.mxu0 %v1325
      %1370 = vmatpush.msra.mxu0 %v1324
      %1371 = vmatmul.f32.gmra.mxu0 %v1332
      %v1372 = vpop.f32.mrf.mxu0
      %v1373 = vadd.f32 %v1328, %v1372
      %1374 = vmatmul.f32.gmra.mxu0 %v1335
      %v1375 = vpop.f32.mrf.mxu0
      %v1376 = vadd.f32 %v1328, %v1375
      %1377 = vmatmul.f32.gmra.mxu0 %v1338
      %v1378 = vpop.f32.mrf.mxu0
      %v1379 = vadd.f32 %v1328, %v1378
      %1380 = vmatmul.f32.gmra.mxu0 %v1341
      %v1381 = vpop.f32.mrf.mxu0
      %v1382 = vadd.f32 %v1328, %v1381
      %1383 = vmatmul.f32.gmra.mxu0 %v1344
      %v1384 = vpop.f32.mrf.mxu0
      %v1385 = vadd.f32 %v1328, %v1384
      %1386 = vmatmul.f32.gmra.mxu0 %v1347
      %v1387 = vpop.f32.mrf.mxu0
      %v1388 = vadd.f32 %v1328, %v1387
      %1389 = vmatmul.f32.gmra.mxu0 %v1350
      %v1390 = vpop.f32.mrf.mxu0
      %v1391 = vadd.f32 %v1328, %v1390
      %1392 = vmatmul.f32.gmra.mxu0 %v1353
      %v1393 = vpop.f32.mrf.mxu0
      %v1394 = vadd.f32 %v1328, %v1393
      %1395 = vdwg.mxu0
      %v1396 = vlaneseq
      %v1397 = vshrl.u32 %v1396, 7
      %vm1398 = vcmp.gt.s32.totalorder %v1397, 0
      %vm1399 = vmand 0, %vm1398
      %vm1400 = vmand 1, %vm1398
      %v1401 = vsel %vm1399, %v1373, 0.0
      %v1402 = vsel %vm1400, %v1376, 0.0
      %v1403 = vsel %vm1400, %v1379, 0.0
      %v1404 = vsel %vm1400, %v1382, 0.0
      %v1405 = vsel %vm1400, %v1385, 0.0
      %v1406 = vsel %vm1400, %v1388, 0.0
      %v1407 = vsel %vm1400, %v1391, 0.0
      %v1408 = vsel %vm1400, %v1394, 0.0
      %p1409 = scmp.gt.s32.totalorder %s26, 0
      %s1410 = scalar_select %p1409, 1, 0
      %v1411 = vstv %s1410
      %vm1412 = vcmp.eq.s32.totalorder %v1411, 1
      %v1413 = vsel %vm1412, %v1401, 0.0
      %v1414 = vsel %vm1412, %v1402, 0.0
      %v1415 = vsel %vm1412, %v1403, 0.0
      %v1416 = vsel %vm1412, %v1404, 0.0
      %v1417 = vsel %vm1412, %v1405, 0.0
      %v1418 = vsel %vm1412, %v1406, 0.0
      %v1419 = vsel %vm1412, %v1407, 0.0
      %v1420 = vsel %vm1412, %v1408, 0.0
      %vm1421 = vcmask 31744
      %1422 = vst.msk [vmem:[%s464] sm:$0xff] %vm1421, %v1413
      %1423 = vst.msk [vmem:[%s464 + $0x8] sm:$0xff] %vm1421, %v1414
      %1424 = vst.msk [vmem:[%s464 + $0x10] sm:$0xff] %vm1421, %v1415
      %1425 = vst.msk [vmem:[%s464 + $0x18] sm:$0xff] %vm1421, %v1416
      %1426 = vst.msk [vmem:[%s464 + $0x20] sm:$0xff] %vm1421, %v1417
      %1427 = vst.msk [vmem:[%s464 + $0x28] sm:$0xff] %vm1421, %v1418
      %1428 = vst.msk [vmem:[%s464 + $0x30] sm:$0xff] %vm1421, %v1419
      %1429 = vst.msk [vmem:[%s464 + $0x38] sm:$0xff] %vm1421, %v1420
      %v1430 = vld [vmem:[%s2 + $0x19] sm:$0x1]
      %v1431 = vperm.slane %v1430, 0
      %v1432 = vmul.f32 %v465, %v1431
      %v1433 = vmul.f32 %v466, %v1431
      %v1434 = vmul.f32 %v467, %v1431
      %v1435 = vmul.f32 %v468, %v1431
      %v1436 = vmul.f32 %v469, %v1431
      %v1437 = vmul.f32 %v470, %v1431
      %v1438 = vmul.f32 %v471, %v1431
      %v1439 = vmul.f32 %v472, %v1431
      %v1440 = vmul.f32 %v473, %v1431
      %v1441 = vmul.f32 %v474, %v1431
      %v1442 = vmul.f32 %v475, %v1431
      %v1443 = vmul.f32 %v476, %v1431
      %v1444 = vmul.f32 %v477, %v1431
      %v1445 = vmul.f32 %v478, %v1431
      %v1446 = vmul.f32 %v479, %v1431
      %v1447 = vmul.f32 %v480, %v1431
      %v1448 = vadd.f32 %v1432, 0.0
      %v1449 = vadd.f32 %v1433, 0.0
      %v1450 = vadd.f32 %v1434, 0.0
      %v1451 = vadd.f32 %v1435, 0.0
      %v1452 = vadd.f32 %v1436, 0.0
      %v1453 = vadd.f32 %v1437, 0.0
      %v1454 = vadd.f32 %v1438, 0.0
      %v1455 = vadd.f32 %v1439, 0.0
      %v1456 = vadd.f32 %v1440, 0.0
      %v1457 = vadd.f32 %v1441, 0.0
      %v1458 = vadd.f32 %v1442, 0.0
      %v1459 = vadd.f32 %v1443, 0.0
      %v1460 = vadd.f32 %v1444, 0.0
      %v1461 = vadd.f32 %v1445, 0.0
      %v1462 = vadd.f32 %v1446, 0.0
      %v1463 = vadd.f32 %v1447, 0.0
      %v1464 = vld [vmem:[%s2 + $0x13] sm:$0x1]
      %v1465 = vperm.slane %v1464, 0
      %v1466 = vmul.f32 %v467, %v1465
      %v1467 = vmul.f32 %v468, %v1465
      %v1468 = vmul.f32 %v469, %v1465
      %v1469 = vmul.f32 %v470, %v1465
      %v1470 = vmul.f32 %v471, %v1465
      %v1471 = vmul.f32 %v472, %v1465
      %v1472 = vmul.f32 %v473, %v1465
      %v1473 = vmul.f32 %v474, %v1465
      %v1474 = vmul.f32 %v475, %v1465
      %v1475 = vmul.f32 %v476, %v1465
      %v1476 = vmul.f32 %v477, %v1465
      %v1477 = vmul.f32 %v478, %v1465
      %v1478 = vmul.f32 %v479, %v1465
      %v1479 = vmul.f32 %v480, %v1465
      %v1480 = vmul.f32 %v481, %v1465
      %v1481 = vmul.f32 %v482, %v1465
      %v1482 = vadd.f32 %v1448, %v1466
      %v1483 = vadd.f32 %v1449, %v1467
      %v1484 = vadd.f32 %v1450, %v1468
      %v1485 = vadd.f32 %v1451, %v1469
      %v1486 = vadd.f32 %v1452, %v1470
      %v1487 = vadd.f32 %v1453, %v1471
      %v1488 = vadd.f32 %v1454, %v1472
      %v1489 = vadd.f32 %v1455, %v1473
      %v1490 = vadd.f32 %v1456, %v1474
      %v1491 = vadd.f32 %v1457, %v1475
      %v1492 = vadd.f32 %v1458, %v1476
      %v1493 = vadd.f32 %v1459, %v1477
      %v1494 = vadd.f32 %v1460, %v1478
      %v1495 = vadd.f32 %v1461, %v1479
      %v1496 = vadd.f32 %v1462, %v1480
      %v1497 = vadd.f32 %v1463, %v1481
      %v1498 = vld [vmem:[%s2 + $0x7] sm:$0x1]
      %v1499 = vperm.slane %v1498, 0
      %v1500 = vmul.f32 %v483, %v1499
      %v1501 = vmul.f32 %v484, %v1499
      %v1502 = vmul.f32 %v485, %v1499
      %v1503 = vmul.f32 %v486, %v1499
      %v1504 = vmul.f32 %v487, %v1499
      %v1505 = vmul.f32 %v488, %v1499
      %v1506 = vmul.f32 %v489, %v1499
      %v1507 = vmul.f32 %v490, %v1499
      %v1508 = vmul.f32 %v491, %v1499
      %v1509 = vmul.f32 %v492, %v1499
      %v1510 = vmul.f32 %v493, %v1499
      %v1511 = vmul.f32 %v494, %v1499
      %v1512 = vmul.f32 %v495, %v1499
      %v1513 = vmul.f32 %v496, %v1499
      %v1514 = vmul.f32 %v497, %v1499
      %v1515 = vmul.f32 %v498, %v1499
      %v1516 = vadd.f32 %v1482, %v1500
      %v1517 = vadd.f32 %v1483, %v1501
      %v1518 = vadd.f32 %v1484, %v1502
      %v1519 = vadd.f32 %v1485, %v1503
      %v1520 = vadd.f32 %v1486, %v1504
      %v1521 = vadd.f32 %v1487, %v1505
      %v1522 = vadd.f32 %v1488, %v1506
      %v1523 = vadd.f32 %v1489, %v1507
      %v1524 = vadd.f32 %v1490, %v1508
      %v1525 = vadd.f32 %v1491, %v1509
      %v1526 = vadd.f32 %v1492, %v1510
      %v1527 = vadd.f32 %v1493, %v1511
      %v1528 = vadd.f32 %v1494, %v1512
      %v1529 = vadd.f32 %v1495, %v1513
      %v1530 = vadd.f32 %v1496, %v1514
      %v1531 = vadd.f32 %v1497, %v1515
      %v1532 = vld [vmem:[%s2 + $0x1] sm:$0x1]
      %v1533 = vperm.slane %v1532, 0
      %v1534 = vmul.f32 %v485, %v1533
      %v1535 = vmul.f32 %v486, %v1533
      %v1536 = vmul.f32 %v487, %v1533
      %v1537 = vmul.f32 %v488, %v1533
      %v1538 = vmul.f32 %v489, %v1533
      %v1539 = vmul.f32 %v490, %v1533
      %v1540 = vmul.f32 %v491, %v1533
      %v1541 = vmul.f32 %v492, %v1533
      %v1542 = vmul.f32 %v493, %v1533
      %v1543 = vmul.f32 %v494, %v1533
      %v1544 = vmul.f32 %v495, %v1533
      %v1545 = vmul.f32 %v496, %v1533
      %v1546 = vmul.f32 %v497, %v1533
      %v1547 = vmul.f32 %v498, %v1533
      %v1548 = vmul.f32 %v499, %v1533
      %v1549 = vmul.f32 %v500, %v1533
      %v1550 = vadd.f32 %v1516, %v1534
      %v1551 = vadd.f32 %v1517, %v1535
      %v1552 = vadd.f32 %v1518, %v1536
      %v1553 = vadd.f32 %v1519, %v1537
      %v1554 = vadd.f32 %v1520, %v1538
      %v1555 = vadd.f32 %v1521, %v1539
      %v1556 = vadd.f32 %v1522, %v1540
      %v1557 = vadd.f32 %v1523, %v1541
      %v1558 = vadd.f32 %v1524, %v1542
      %v1559 = vadd.f32 %v1525, %v1543
      %v1560 = vadd.f32 %v1526, %v1544
      %v1561 = vadd.f32 %v1527, %v1545
      %v1562 = vadd.f32 %v1528, %v1546
      %v1563 = vadd.f32 %v1529, %v1547
      %v1564 = vadd.f32 %v1530, %v1548
      %v1565 = vadd.f32 %v1531, %v1549
      %v1566 = vsub.f32 %v1550, %v873
      %v1567 = vsub.f32 %v1551, %v873
      %v1568 = vsub.f32 %v1552, %v873
      %v1569 = vsub.f32 %v1553, %v873
      %v1570 = vsub.f32 %v1554, %v873
      %v1571 = vsub.f32 %v1555, %v873
      %v1572 = vsub.f32 %v1556, %v873
      %v1573 = vsub.f32 %v1557, %v873
      %v1574 = vsub.f32 %v1558, %v873
      %v1575 = vsub.f32 %v1559, %v873
      %v1576 = vsub.f32 %v1560, %v873
      %v1577 = vsub.f32 %v1561, %v873
      %v1578 = vsub.f32 %v1562, %v873
      %v1579 = vsub.f32 %v1563, %v873
      %v1580 = vsub.f32 %v1564, %v873
      %v1581 = vsub.f32 %v1565, %v873
      %v1582 = vmul.f32 %v1566, %v884
      %v1583 = vmul.f32 %v1567, %v884
      %v1584 = vmul.f32 %v1568, %v884
      %v1585 = vmul.f32 %v1569, %v884
      %v1586 = vmul.f32 %v1570, %v884
      %v1587 = vmul.f32 %v1571, %v884
      %v1588 = vmul.f32 %v1572, %v884
      %v1589 = vmul.f32 %v1573, %v884
      %v1590 = vmul.f32 %v1574, %v884
      %v1591 = vmul.f32 %v1575, %v884
      %v1592 = vmul.f32 %v1576, %v884
      %v1593 = vmul.f32 %v1577, %v884
      %v1594 = vmul.f32 %v1578, %v884
      %v1595 = vmul.f32 %v1579, %v884
      %v1596 = vmul.f32 %v1580, %v884
      %v1597 = vmul.f32 %v1581, %v884
      %v1614 = vrot.slane %v1582, 1
      %v1615 = vrot.slane %v1583, 1
      %v1616 = vsel %vm555, %v1614, %v1615
      %v1617 = vrot.slane %v1584, 1
      %v1618 = vrot.slane %v1585, 1
      %v1619 = vsel %vm555, %v1617, %v1618
      %v1620 = vrot.slane %v1586, 1
      %v1621 = vrot.slane %v1587, 1
      %v1622 = vsel %vm555, %v1620, %v1621
      %v1623 = vrot.slane %v1588, 1
      %v1624 = vrot.slane %v1589, 1
      %v1625 = vsel %vm555, %v1623, %v1624
      %v1626 = vrot.slane %v1590, 1
      %v1627 = vrot.slane %v1591, 1
      %v1628 = vsel %vm555, %v1626, %v1627
      %v1629 = vrot.slane %v1592, 1
      %v1630 = vrot.slane %v1593, 1
      %v1631 = vsel %vm555, %v1629, %v1630
      %v1632 = vrot.slane %v1594, 1
      %v1633 = vrot.slane %v1595, 1
      %v1634 = vsel %vm555, %v1632, %v1633
      %v1635 = vrot.slane %v1596, 1
      %v1636 = vrot.slane %v1597, 1
      %v1637 = vsel %vm555, %v1635, %v1636
      %v1638 = vld [vmem:[%s5] sm:$0xff]
      %v1639 = vld [vmem:[%s6] sm:$0x1]
      %v1641 = vperm.slane %v1639, 0
      %v1643 = vsel %vm899, %v1616, 0
      %v1645 = vsel %vm899, %v1619, 0
      %v1647 = vsel %vm899, %v1622, 0
      %v1649 = vsel %vm899, %v1625, 0
      %v1651 = vsel %vm899, %v1628, 0
      %v1653 = vsel %vm899, %v1631, 0
      %v1655 = vsel %vm899, %v1634, 0
      %v1657 = vsel %vm899, %v1637, 0
      %1659 = vmatpush.msra.mxu0 0.0
      %1660 = vmatpush.msra.mxu0 0.0
      %1661 = vmatpush.msra.mxu0 0.0
      %1662 = vmatpush.msra.mxu0 0.0
      %1663 = vmatpush.msra.mxu0 0.0
      %1664 = vmatpush.msra.mxu0 0.0
      %1665 = vmatpush.msra.mxu0 0.0
      %1666 = vmatpush.msra.mxu0 0.0
      %1667 = vmatpush.msra.mxu0 0.0
      %1668 = vmatpush.msra.mxu0 0.0
      %1669 = vmatpush.msra.mxu0 0.0
      %1670 = vmatpush.msra.mxu0 0.0
      %1671 = vmatpush.msra.mxu0 0.0
      %1672 = vmatpush.msra.mxu0 0.0
      %1673 = vmatpush.msra.mxu0 0.0
      %1674 = vmatpush.msra.mxu0 %v1638
      %1675 = vmatmul.f32.gmra.mxu0 %v1643
      %v1676 = vpop.f32.mrf.mxu0
      %v1677 = vadd.f32 %v1641, %v1676
      %1678 = vmatmul.f32.gmra.mxu0 %v1645
      %v1679 = vpop.f32.mrf.mxu0
      %v1680 = vadd.f32 %v1641, %v1679
      %1681 = vmatmul.f32.gmra.mxu0 %v1647
      %v1682 = vpop.f32.mrf.mxu0
      %v1683 = vadd.f32 %v1641, %v1682
      %1684 = vmatmul.f32.gmra.mxu0 %v1649
      %v1685 = vpop.f32.mrf.mxu0
      %v1686 = vadd.f32 %v1641, %v1685
      %1687 = vmatmul.f32.gmra.mxu0 %v1651
      %v1688 = vpop.f32.mrf.mxu0
      %v1689 = vadd.f32 %v1641, %v1688
      %1690 = vmatmul.f32.gmra.mxu0 %v1653
      %v1691 = vpop.f32.mrf.mxu0
      %v1692 = vadd.f32 %v1641, %v1691
      %1693 = vmatmul.f32.gmra.mxu0 %v1655
      %v1694 = vpop.f32.mrf.mxu0
      %v1695 = vadd.f32 %v1641, %v1694
      %1696 = vmatmul.f32.gmra.mxu0 %v1657
      %v1697 = vpop.f32.mrf.mxu0
      %v1698 = vadd.f32 %v1641, %v1697
      %1699 = vdwg.mxu0
      %v1700 = vmul.f32 %v1677, 0.5
      %v1701 = vmul.f32 %v1680, 0.5
      %v1702 = vmul.f32 %v1683, 0.5
      %v1703 = vmul.f32 %v1686, 0.5
      %v1704 = vmul.f32 %v1689, 0.5
      %v1705 = vmul.f32 %v1692, 0.5
      %v1706 = vmul.f32 %v1695, 0.5
      %v1707 = vmul.f32 %v1698, 0.5
      %v1708 = vmul.f32 %v1677, %v979
      %v1709 = vmul.f32 %v1680, %v979
      %v1710 = vmul.f32 %v1683, %v979
      %v1711 = vmul.f32 %v1686, %v979
      %v1712 = vmul.f32 %v1689, %v979
      %v1713 = vmul.f32 %v1692, %v979
      %v1714 = vmul.f32 %v1695, %v979
      %v1715 = vmul.f32 %v1698, %v979
      %v1716 = vmul.f32 %v1708, %v1708
      %v1717 = vmin.f32 16.0, %v1716
      %v1718 = vmul.f32 %v1717, 2.1237322e-06
      %v1719 = vadd.f32 %v1718, 0.00028619796
      %v1720 = vmul.f32 %v1717, %v1719
      %v1721 = vadd.f32 %v1720, 0.0036580483
      %v1722 = vmul.f32 %v1717, %v1721
      %v1723 = vadd.f32 %v1722, 0.05243302
      %v1724 = vmul.f32 %v1717, %v1723
      %v1725 = vadd.f32 %v1724, 0.18741608
      %v1726 = vmul.f32 %v1717, %v1725
      %v1727 = vadd.f32 %v1726, 1.1283791
      %v1728 = vmul.f32 %v1708, %v1727
      %v1729 = vmul.f32 %v1717, 3.8918573e-05
      %v1730 = vadd.f32 %v1729, 0.001143296
      %v1731 = vmul.f32 %v1717, %v1730
      %v1732 = vadd.f32 %v1731, 0.014752088
      %v1733 = vmul.f32 %v1717, %v1732
      %v1734 = vadd.f32 %v1733, 0.112945676
      %v1735 = vmul.f32 %v1717, %v1734
      %v1736 = vadd.f32 %v1735, 0.4994258
      %v1737 = vmul.f32 %v1717, %v1736
      %v1738 = vadd.f32 %v1737, 1.0
      %v1739 = vrcp.pop %v1738
      %v1740 = vmul.f32 %v1738, %v1739
      %v1741 = vsub.f32 1.0, %v1740
      %v1742 = vmul.f32 %v1739, %v1741
      %v1743 = vadd.f32 %v1739, %v1742
      %vm1744 = vweird.f32 %v1738
      %vm1745 = vweird.f32 %v1739
      %vm1746 = vmor %vm1744, %vm1745
      %v1747 = vsel %vm1746, %v1739, %v1743
      %v1748 = vand.u32 2147483647, %v1738
      %vm1749 = vcmp.eq.f32.partialorder %v1748, 8.507059e+37
      %v1750 = vand.u32 %v1738, 2147483648
      %v1751 = vor.u32 1.1754944e-38, %v1750
      %v1752 = vsel %vm1749, %v1751, %v1747
      %v1753 = vmul.f32 %v1728, %v1752
      %v1754 = vmin.f32 %v1753, 1.0
      %v1755 = vmax.f32 %v1754, -1.0
      %v1756 = vmul.f32 %v1709, %v1709
      %v1757 = vmin.f32 16.0, %v1756
      %v1758 = vmul.f32 %v1757, 2.1237322e-06
      %v1759 = vadd.f32 %v1758, 0.00028619796
      %v1760 = vmul.f32 %v1757, %v1759
      %v1761 = vadd.f32 %v1760, 0.0036580483
      %v1762 = vmul.f32 %v1757, %v1761
      %v1763 = vadd.f32 %v1762, 0.05243302
      %v1764 = vmul.f32 %v1757, %v1763
      %v1765 = vadd.f32 %v1764, 0.18741608
      %v1766 = vmul.f32 %v1757, %v1765
      %v1767 = vadd.f32 %v1766, 1.1283791
      %v1768 = vmul.f32 %v1709, %v1767
      %v1769 = vmul.f32 %v1757, 3.8918573e-05
      %v1770 = vadd.f32 %v1769, 0.001143296
      %v1771 = vmul.f32 %v1757, %v1770
      %v1772 = vadd.f32 %v1771, 0.014752088
      %v1773 = vmul.f32 %v1757, %v1772
      %v1774 = vadd.f32 %v1773, 0.112945676
      %v1775 = vmul.f32 %v1757, %v1774
      %v1776 = vadd.f32 %v1775, 0.4994258
      %v1777 = vmul.f32 %v1757, %v1776
      %v1778 = vadd.f32 %v1777, 1.0
      %v1779 = vrcp.pop %v1778
      %v1780 = vmul.f32 %v1778, %v1779
      %v1781 = vsub.f32 1.0, %v1780
      %v1782 = vmul.f32 %v1779, %v1781
      %v1783 = vadd.f32 %v1779, %v1782
      %vm1784 = vweird.f32 %v1778
      %vm1785 = vweird.f32 %v1779
      %vm1786 = vmor %vm1784, %vm1785
      %v1787 = vsel %vm1786, %v1779, %v1783
      %v1788 = vand.u32 2147483647, %v1778
      %vm1789 = vcmp.eq.f32.partialorder %v1788, 8.507059e+37
      %v1790 = vand.u32 %v1778, 2147483648
      %v1791 = vor.u32 1.1754944e-38, %v1790
      %v1792 = vsel %vm1789, %v1791, %v1787
      %v1793 = vmul.f32 %v1768, %v1792
      %v1794 = vmin.f32 %v1793, 1.0
      %v1795 = vmax.f32 %v1794, -1.0
      %v1796 = vmul.f32 %v1710, %v1710
      %v1797 = vmin.f32 16.0, %v1796
      %v1798 = vmul.f32 %v1797, 2.1237322e-06
      %v1799 = vadd.f32 %v1798, 0.00028619796
      %v1800 = vmul.f32 %v1797, %v1799
      %v1801 = vadd.f32 %v1800, 0.0036580483
      %v1802 = vmul.f32 %v1797, %v1801
      %v1803 = vadd.f32 %v1802, 0.05243302
      %v1804 = vmul.f32 %v1797, %v1803
      %v1805 = vadd.f32 %v1804, 0.18741608
      %v1806 = vmul.f32 %v1797, %v1805
      %v1807 = vadd.f32 %v1806, 1.1283791
      %v1808 = vmul.f32 %v1710, %v1807
      %v1809 = vmul.f32 %v1797, 3.8918573e-05
      %v1810 = vadd.f32 %v1809, 0.001143296
      %v1811 = vmul.f32 %v1797, %v1810
      %v1812 = vadd.f32 %v1811, 0.014752088
      %v1813 = vmul.f32 %v1797, %v1812
      %v1814 = vadd.f32 %v1813, 0.112945676
      %v1815 = vmul.f32 %v1797, %v1814
      %v1816 = vadd.f32 %v1815, 0.4994258
      %v1817 = vmul.f32 %v1797, %v1816
      %v1818 = vadd.f32 %v1817, 1.0
      %v1819 = vrcp.pop %v1818
      %v1820 = vmul.f32 %v1818, %v1819
      %v1821 = vsub.f32 1.0, %v1820
      %v1822 = vmul.f32 %v1819, %v1821
      %v1823 = vadd.f32 %v1819, %v1822
      %vm1824 = vweird.f32 %v1818
      %vm1825 = vweird.f32 %v1819
      %vm1826 = vmor %vm1824, %vm1825
      %v1827 = vsel %vm1826, %v1819, %v1823
      %v1828 = vand.u32 2147483647, %v1818
      %vm1829 = vcmp.eq.f32.partialorder %v1828, 8.507059e+37
      %v1830 = vand.u32 %v1818, 2147483648
      %v1831 = vor.u32 1.1754944e-38, %v1830
      %v1832 = vsel %vm1829, %v1831, %v1827
      %v1833 = vmul.f32 %v1808, %v1832
      %v1834 = vmin.f32 %v1833, 1.0
      %v1835 = vmax.f32 %v1834, -1.0
      %v1836 = vmul.f32 %v1711, %v1711
      %v1837 = vmin.f32 16.0, %v1836
      %v1838 = vmul.f32 %v1837, 2.1237322e-06
      %v1839 = vadd.f32 %v1838, 0.00028619796
      %v1840 = vmul.f32 %v1837, %v1839
      %v1841 = vadd.f32 %v1840, 0.0036580483
      %v1842 = vmul.f32 %v1837, %v1841
      %v1843 = vadd.f32 %v1842, 0.05243302
      %v1844 = vmul.f32 %v1837, %v1843
      %v1845 = vadd.f32 %v1844, 0.18741608
      %v1846 = vmul.f32 %v1837, %v1845
      %v1847 = vadd.f32 %v1846, 1.1283791
      %v1848 = vmul.f32 %v1711, %v1847
      %v1849 = vmul.f32 %v1837, 3.8918573e-05
      %v1850 = vadd.f32 %v1849, 0.001143296
      %v1851 = vmul.f32 %v1837, %v1850
      %v1852 = vadd.f32 %v1851, 0.014752088
      %v1853 = vmul.f32 %v1837, %v1852
      %v1854 = vadd.f32 %v1853, 0.112945676
      %v1855 = vmul.f32 %v1837, %v1854
      %v1856 = vadd.f32 %v1855, 0.4994258
      %v1857 = vmul.f32 %v1837, %v1856
      %v1858 = vadd.f32 %v1857, 1.0
      %v1859 = vrcp.pop %v1858
      %v1860 = vmul.f32 %v1858, %v1859
      %v1861 = vsub.f32 1.0, %v1860
      %v1862 = vmul.f32 %v1859, %v1861
      %v1863 = vadd.f32 %v1859, %v1862
      %vm1864 = vweird.f32 %v1858
      %vm1865 = vweird.f32 %v1859
      %vm1866 = vmor %vm1864, %vm1865
      %v1867 = vsel %vm1866, %v1859, %v1863
      %v1868 = vand.u32 2147483647, %v1858
      %vm1869 = vcmp.eq.f32.partialorder %v1868, 8.507059e+37
      %v1870 = vand.u32 %v1858, 2147483648
      %v1871 = vor.u32 1.1754944e-38, %v1870
      %v1872 = vsel %vm1869, %v1871, %v1867
      %v1873 = vmul.f32 %v1848, %v1872
      %v1874 = vmin.f32 %v1873, 1.0
      %v1875 = vmax.f32 %v1874, -1.0
      %v1876 = vmul.f32 %v1712, %v1712
      %v1877 = vmin.f32 16.0, %v1876
      %v1878 = vmul.f32 %v1877, 2.1237322e-06
      %v1879 = vadd.f32 %v1878, 0.00028619796
      %v1880 = vmul.f32 %v1877, %v1879
      %v1881 = vadd.f32 %v1880, 0.0036580483
      %v1882 = vmul.f32 %v1877, %v1881
      %v1883 = vadd.f32 %v1882, 0.05243302
      %v1884 = vmul.f32 %v1877, %v1883
      %v1885 = vadd.f32 %v1884, 0.18741608
      %v1886 = vmul.f32 %v1877, %v1885
      %v1887 = vadd.f32 %v1886, 1.1283791
      %v1888 = vmul.f32 %v1712, %v1887
      %v1889 = vmul.f32 %v1877, 3.8918573e-05
      %v1890 = vadd.f32 %v1889, 0.001143296
      %v1891 = vmul.f32 %v1877, %v1890
      %v1892 = vadd.f32 %v1891, 0.014752088
      %v1893 = vmul.f32 %v1877, %v1892
      %v1894 = vadd.f32 %v1893, 0.112945676
      %v1895 = vmul.f32 %v1877, %v1894
      %v1896 = vadd.f32 %v1895, 0.4994258
      %v1897 = vmul.f32 %v1877, %v1896
      %v1898 = vadd.f32 %v1897, 1.0
      %v1899 = vrcp.pop %v1898
      %v1900 = vmul.f32 %v1898, %v1899
      %v1901 = vsub.f32 1.0, %v1900
      %v1902 = vmul.f32 %v1899, %v1901
      %v1903 = vadd.f32 %v1899, %v1902
      %vm1904 = vweird.f32 %v1898
      %vm1905 = vweird.f32 %v1899
      %vm1906 = vmor %vm1904, %vm1905
      %v1907 = vsel %vm1906, %v1899, %v1903
      %v1908 = vand.u32 2147483647, %v1898
      %vm1909 = vcmp.eq.f32.partialorder %v1908, 8.507059e+37
      %v1910 = vand.u32 %v1898, 2147483648
      %v1911 = vor.u32 1.1754944e-38, %v1910
      %v1912 = vsel %vm1909, %v1911, %v1907
      %v1913 = vmul.f32 %v1888, %v1912
      %v1914 = vmin.f32 %v1913, 1.0
      %v1915 = vmax.f32 %v1914, -1.0
      %v1916 = vmul.f32 %v1713, %v1713
      %v1917 = vmin.f32 16.0, %v1916
      %v1918 = vmul.f32 %v1917, 2.1237322e-06
      %v1919 = vadd.f32 %v1918, 0.00028619796
      %v1920 = vmul.f32 %v1917, %v1919
      %v1921 = vadd.f32 %v1920, 0.0036580483
      %v1922 = vmul.f32 %v1917, %v1921
      %v1923 = vadd.f32 %v1922, 0.05243302
      %v1924 = vmul.f32 %v1917, %v1923
      %v1925 = vadd.f32 %v1924, 0.18741608
      %v1926 = vmul.f32 %v1917, %v1925
      %v1927 = vadd.f32 %v1926, 1.1283791
      %v1928 = vmul.f32 %v1713, %v1927
      %v1929 = vmul.f32 %v1917, 3.8918573e-05
      %v1930 = vadd.f32 %v1929, 0.001143296
      %v1931 = vmul.f32 %v1917, %v1930
      %v1932 = vadd.f32 %v1931, 0.014752088
      %v1933 = vmul.f32 %v1917, %v1932
      %v1934 = vadd.f32 %v1933, 0.112945676
      %v1935 = vmul.f32 %v1917, %v1934
      %v1936 = vadd.f32 %v1935, 0.4994258
      %v1937 = vmul.f32 %v1917, %v1936
      %v1938 = vadd.f32 %v1937, 1.0
      %v1939 = vrcp.pop %v1938
      %v1940 = vmul.f32 %v1938, %v1939
      %v1941 = vsub.f32 1.0, %v1940
      %v1942 = vmul.f32 %v1939, %v1941
      %v1943 = vadd.f32 %v1939, %v1942
      %vm1944 = vweird.f32 %v1938
      %vm1945 = vweird.f32 %v1939
      %vm1946 = vmor %vm1944, %vm1945
      %v1947 = vsel %vm1946, %v1939, %v1943
      %v1948 = vand.u32 2147483647, %v1938
      %vm1949 = vcmp.eq.f32.partialorder %v1948, 8.507059e+37
      %v1950 = vand.u32 %v1938, 2147483648
      %v1951 = vor.u32 1.1754944e-38, %v1950
      %v1952 = vsel %vm1949, %v1951, %v1947
      %v1953 = vmul.f32 %v1928, %v1952
      %v1954 = vmin.f32 %v1953, 1.0
      %v1955 = vmax.f32 %v1954, -1.0
      %v1956 = vmul.f32 %v1714, %v1714
      %v1957 = vmin.f32 16.0, %v1956
      %v1958 = vmul.f32 %v1957, 2.1237322e-06
      %v1959 = vadd.f32 %v1958, 0.00028619796
      %v1960 = vmul.f32 %v1957, %v1959
      %v1961 = vadd.f32 %v1960, 0.0036580483
      %v1962 = vmul.f32 %v1957, %v1961
      %v1963 = vadd.f32 %v1962, 0.05243302
      %v1964 = vmul.f32 %v1957, %v1963
      %v1965 = vadd.f32 %v1964, 0.18741608
      %v1966 = vmul.f32 %v1957, %v1965
      %v1967 = vadd.f32 %v1966, 1.1283791
      %v1968 = vmul.f32 %v1714, %v1967
      %v1969 = vmul.f32 %v1957, 3.8918573e-05
      %v1970 = vadd.f32 %v1969, 0.001143296
      %v1971 = vmul.f32 %v1957, %v1970
      %v1972 = vadd.f32 %v1971, 0.014752088
      %v1973 = vmul.f32 %v1957, %v1972
      %v1974 = vadd.f32 %v1973, 0.112945676
      %v1975 = vmul.f32 %v1957, %v1974
      %v1976 = vadd.f32 %v1975, 0.4994258
      %v1977 = vmul.f32 %v1957, %v1976
      %v1978 = vadd.f32 %v1977, 1.0
      %v1979 = vrcp.pop %v1978
      %v1980 = vmul.f32 %v1978, %v1979
      %v1981 = vsub.f32 1.0, %v1980
      %v1982 = vmul.f32 %v1979, %v1981
      %v1983 = vadd.f32 %v1979, %v1982
      %vm1984 = vweird.f32 %v1978
      %vm1985 = vweird.f32 %v1979
      %vm1986 = vmor %vm1984, %vm1985
      %v1987 = vsel %vm1986, %v1979, %v1983
      %v1988 = vand.u32 2147483647, %v1978
      %vm1989 = vcmp.eq.f32.partialorder %v1988, 8.507059e+37
      %v1990 = vand.u32 %v1978, 2147483648
      %v1991 = vor.u32 1.1754944e-38, %v1990
      %v1992 = vsel %vm1989, %v1991, %v1987
      %v1993 = vmul.f32 %v1968, %v1992
      %v1994 = vmin.f32 %v1993, 1.0
      %v1995 = vmax.f32 %v1994, -1.0
      %v1996 = vmul.f32 %v1715, %v1715
      %v1997 = vmin.f32 16.0, %v1996
      %v1998 = vmul.f32 %v1997, 2.1237322e-06
      %v1999 = vadd.f32 %v1998, 0.00028619796
      %v2000 = vmul.f32 %v1997, %v1999
      %v2001 = vadd.f32 %v2000, 0.0036580483
      %v2002 = vmul.f32 %v1997, %v2001
      %v2003 = vadd.f32 %v2002, 0.05243302
      %v2004 = vmul.f32 %v1997, %v2003
      %v2005 = vadd.f32 %v2004, 0.18741608
      %v2006 = vmul.f32 %v1997, %v2005
      %v2007 = vadd.f32 %v2006, 1.1283791
      %v2008 = vmul.f32 %v1715, %v2007
      %v2009 = vmul.f32 %v1997, 3.8918573e-05
      %v2010 = vadd.f32 %v2009, 0.001143296
      %v2011 = vmul.f32 %v1997, %v2010
      %v2012 = vadd.f32 %v2011, 0.014752088
      %v2013 = vmul.f32 %v1997, %v2012
      %v2014 = vadd.f32 %v2013, 0.112945676
      %v2015 = vmul.f32 %v1997, %v2014
      %v2016 = vadd.f32 %v2015, 0.4994258
      %v2017 = vmul.f32 %v1997, %v2016
      %v2018 = vadd.f32 %v2017, 1.0
      %v2019 = vrcp.pop %v2018
      %v2020 = vmul.f32 %v2018, %v2019
      %v2021 = vsub.f32 1.0, %v2020
      %v2022 = vmul.f32 %v2019, %v2021
      %v2023 = vadd.f32 %v2019, %v2022
      %vm2024 = vweird.f32 %v2018
      %vm2025 = vweird.f32 %v2019
      %vm2026 = vmor %vm2024, %vm2025
      %v2027 = vsel %vm2026, %v2019, %v2023
      %v2028 = vand.u32 2147483647, %v2018
      %vm2029 = vcmp.eq.f32.partialorder %v2028, 8.507059e+37
      %v2030 = vand.u32 %v2018, 2147483648
      %v2031 = vor.u32 1.1754944e-38, %v2030
      %v2032 = vsel %vm2029, %v2031, %v2027
      %v2033 = vmul.f32 %v2008, %v2032
      %v2034 = vmin.f32 %v2033, 1.0
      %v2035 = vmax.f32 %v2034, -1.0
      %v2036 = vadd.f32 %v1755, 1.0
      %v2037 = vadd.f32 %v1795, 1.0
      %v2038 = vadd.f32 %v1835, 1.0
      %v2039 = vadd.f32 %v1875, 1.0
      %v2040 = vadd.f32 %v1915, 1.0
      %v2041 = vadd.f32 %v1955, 1.0
      %v2042 = vadd.f32 %v1995, 1.0
      %v2043 = vadd.f32 %v2035, 1.0
      %v2044 = vmul.f32 %v1700, %v2036
      %v2045 = vmul.f32 %v1701, %v2037
      %v2046 = vmul.f32 %v1702, %v2038
      %v2047 = vmul.f32 %v1703, %v2039
      %v2048 = vmul.f32 %v1704, %v2040
      %v2049 = vmul.f32 %v1705, %v2041
      %v2050 = vmul.f32 %v1706, %v2042
      %v2051 = vmul.f32 %v1707, %v2043
      %v2052 = vld [vmem:[%s7] sm:$0xff]
      %v2053 = vld [vmem:[%s7 + $0x8] sm:$0xff]
      %v2054 = vld [vmem:[%s8] sm:$0x1]
      %v2056 = vperm.slane %v2054, 0
      %v2059 = vsel %vm1330, %v2044, 0
      %v2062 = vsel %vm1330, %v2045, 0
      %v2065 = vsel %vm1330, %v2046, 0
      %v2068 = vsel %vm1330, %v2047, 0
      %v2071 = vsel %vm1330, %v2048, 0
      %v2074 = vsel %vm1330, %v2049, 0
      %v2077 = vsel %vm1330, %v2050, 0
      %v2080 = vsel %vm1330, %v2051, 0
      %2082 = vmatpush.msra.mxu0 0.0
      %2083 = vmatpush.msra.mxu0 0.0
      %2084 = vmatpush.msra.mxu0 0.0
      %2085 = vmatpush.msra.mxu0 0.0
      %2086 = vmatpush.msra.mxu0 0.0
      %2087 = vmatpush.msra.mxu0 0.0
      %2088 = vmatpush.msra.mxu0 0.0
      %2089 = vmatpush.msra.mxu0 0.0
      %2090 = vmatpush.msra.mxu0 0.0
      %2091 = vmatpush.msra.mxu0 0.0
      %2092 = vmatpush.msra.mxu0 0.0
      %2093 = vmatpush.msra.mxu0 0.0
      %2094 = vmatpush.msra.mxu0 0.0
      %2095 = vmatpush.msra.mxu0 0.0
      %2096 = vmatpush.msra.mxu0 %v2053
      %2097 = vmatpush.msra.mxu0 %v2052
      %2098 = vmatmul.f32.gmra.mxu0 %v2059
      %v2099 = vpop.f32.mrf.mxu0
      %v2100 = vadd.f32 %v2056, %v2099
      %2101 = vmatmul.f32.gmra.mxu0 %v2062
      %v2102 = vpop.f32.mrf.mxu0
      %v2103 = vadd.f32 %v2056, %v2102
      %2104 = vmatmul.f32.gmra.mxu0 %v2065
      %v2105 = vpop.f32.mrf.mxu0
      %v2106 = vadd.f32 %v2056, %v2105
      %2107 = vmatmul.f32.gmra.mxu0 %v2068
      %v2108 = vpop.f32.mrf.mxu0
      %v2109 = vadd.f32 %v2056, %v2108
      %2110 = vmatmul.f32.gmra.mxu0 %v2071
      %v2111 = vpop.f32.mrf.mxu0
      %v2112 = vadd.f32 %v2056, %v2111
      %2113 = vmatmul.f32.gmra.mxu0 %v2074
      %v2114 = vpop.f32.mrf.mxu0
      %v2115 = vadd.f32 %v2056, %v2114
      %2116 = vmatmul.f32.gmra.mxu0 %v2077
      %v2117 = vpop.f32.mrf.mxu0
      %v2118 = vadd.f32 %v2056, %v2117
      %2119 = vmatmul.f32.gmra.mxu0 %v2080
      %v2120 = vpop.f32.mrf.mxu0
      %v2121 = vadd.f32 %v2056, %v2120
      %2122 = vdwg.mxu0
      %v2123 = vsel 0, %v2100, 0.0
      %v2124 = vsel 1, %v2103, 0.0
      %v2125 = vsel 1, %v2106, 0.0
      %v2126 = vsel 1, %v2109, 0.0
      %v2127 = vsel 1, %v2112, 0.0
      %v2128 = vsel 1, %v2115, 0.0
      %v2129 = vsel 1, %v2118, 0.0
      %v2130 = vsel 1, %v2121, 0.0
      %v2131 = vsel %vm1412, %v2123, 0.0
      %v2132 = vsel %vm1412, %v2124, 0.0
      %v2133 = vsel %vm1412, %v2125, 0.0
      %v2134 = vsel %vm1412, %v2126, 0.0
      %v2135 = vsel %vm1412, %v2127, 0.0
      %v2136 = vsel %vm1412, %v2128, 0.0
      %v2137 = vsel %vm1412, %v2129, 0.0
      %v2138 = vsel %vm1412, %v2130, 0.0
      %s2139 = scalar_lea.vmem %s464, 64
      %2140 = vst.msk [vmem:[%s2139] sm:$0xff] %vm1421, %v2131
      %2141 = vst.msk [vmem:[%s2139 + $0x8] sm:$0xff] %vm1421, %v2132
      %2142 = vst.msk [vmem:[%s2139 + $0x10] sm:$0xff] %vm1421, %v2133
      %2143 = vst.msk [vmem:[%s2139 + $0x18] sm:$0xff] %vm1421, %v2134
      %2144 = vst.msk [vmem:[%s2139 + $0x20] sm:$0xff] %vm1421, %v2135
      %2145 = vst.msk [vmem:[%s2139 + $0x28] sm:$0xff] %vm1421, %v2136
      %2146 = vst.msk [vmem:[%s2139 + $0x30] sm:$0xff] %vm1421, %v2137
      %2147 = vst.msk [vmem:[%s2139 + $0x38] sm:$0xff] %vm1421, %v2138
      %v2148 = vld [vmem:[%s2 + $0x17] sm:$0x1]
      %v2149 = vperm.slane %v2148, 0
      %v2150 = vmul.f32 %v467, %v2149
      %v2151 = vmul.f32 %v469, %v2149
      %v2152 = vmul.f32 %v471, %v2149
      %v2153 = vmul.f32 %v473, %v2149
      %v2154 = vmul.f32 %v475, %v2149
      %v2155 = vmul.f32 %v477, %v2149
      %v2156 = vmul.f32 %v479, %v2149
      %v2157 = vmul.f32 %v481, %v2149
      %v2158 = vadd.f32 %v2150, 0.0
      %v2159 = vadd.f32 %v2151, 0.0
      %v2160 = vadd.f32 %v2152, 0.0
      %v2161 = vadd.f32 %v2153, 0.0
      %v2162 = vadd.f32 %v2154, 0.0
      %v2163 = vadd.f32 %v2155, 0.0
      %v2164 = vadd.f32 %v2156, 0.0
      %v2165 = vadd.f32 %v2157, 0.0
      %v2166 = vld [vmem:[%s2 + $0x15] sm:$0x1]
      %v2167 = vperm.slane %v2166, 0
      %v2168 = vmul.f32 %v467, %v2167
      %v2169 = vmul.f32 %v468, %v2167
      %v2170 = vmul.f32 %v469, %v2167
      %v2171 = vmul.f32 %v470, %v2167
      %v2172 = vmul.f32 %v471, %v2167
      %v2173 = vmul.f32 %v472, %v2167
      %v2174 = vmul.f32 %v473, %v2167
      %v2175 = vmul.f32 %v474, %v2167
      %v2176 = vmul.f32 %v475, %v2167
      %v2177 = vmul.f32 %v476, %v2167
      %v2178 = vmul.f32 %v477, %v2167
      %v2179 = vmul.f32 %v478, %v2167
      %v2180 = vmul.f32 %v479, %v2167
      %v2181 = vmul.f32 %v480, %v2167
      %v2182 = vmul.f32 %v481, %v2167
      %v2183 = vmul.f32 %v482, %v2167
      %v2200 = vrot.slane %v2168, 1
      %v2201 = vrot.slane %v2169, 1
      %v2202 = vsel %vm555, %v2200, %v2201
      %v2203 = vrot.slane %v2170, 1
      %v2204 = vrot.slane %v2171, 1
      %v2205 = vsel %vm555, %v2203, %v2204
      %v2206 = vrot.slane %v2172, 1
      %v2207 = vrot.slane %v2173, 1
      %v2208 = vsel %vm555, %v2206, %v2207
      %v2209 = vrot.slane %v2174, 1
      %v2210 = vrot.slane %v2175, 1
      %v2211 = vsel %vm555, %v2209, %v2210
      %v2212 = vrot.slane %v2176, 1
      %v2213 = vrot.slane %v2177, 1
      %v2214 = vsel %vm555, %v2212, %v2213
      %v2215 = vrot.slane %v2178, 1
      %v2216 = vrot.slane %v2179, 1
      %v2217 = vsel %vm555, %v2215, %v2216
      %v2218 = vrot.slane %v2180, 1
      %v2219 = vrot.slane %v2181, 1
      %v2220 = vsel %vm555, %v2218, %v2219
      %v2221 = vrot.slane %v2182, 1
      %v2222 = vrot.slane %v2183, 1
      %v2223 = vsel %vm555, %v2221, %v2222
      %v2232 = vadd.f32 %v2158, %v2202
      %v2233 = vadd.f32 %v2159, %v2205
      %v2234 = vadd.f32 %v2160, %v2208
      %v2235 = vadd.f32 %v2161, %v2211
      %v2236 = vadd.f32 %v2162, %v2214
      %v2237 = vadd.f32 %v2163, %v2217
      %v2238 = vadd.f32 %v2164, %v2220
      %v2239 = vadd.f32 %v2165, %v2223
      %v2240 = vld [vmem:[%s2 + $0x5] sm:$0x1]
      %v2241 = vperm.slane %v2240, 0
      %v2242 = vmul.f32 %v485, %v2241
      %v2243 = vmul.f32 %v487, %v2241
      %v2244 = vmul.f32 %v489, %v2241
      %v2245 = vmul.f32 %v491, %v2241
      %v2246 = vmul.f32 %v493, %v2241
      %v2247 = vmul.f32 %v495, %v2241
      %v2248 = vmul.f32 %v497, %v2241
      %v2249 = vmul.f32 %v499, %v2241
      %v2250 = vadd.f32 %v2232, %v2242
      %v2251 = vadd.f32 %v2233, %v2243
      %v2252 = vadd.f32 %v2234, %v2244
      %v2253 = vadd.f32 %v2235, %v2245
      %v2254 = vadd.f32 %v2236, %v2246
      %v2255 = vadd.f32 %v2237, %v2247
      %v2256 = vadd.f32 %v2238, %v2248
      %v2257 = vadd.f32 %v2239, %v2249
      %v2258 = vld [vmem:[%s2 + $0x3] sm:$0x1]
      %v2259 = vperm.slane %v2258, 0
      %v2260 = vmul.f32 %v485, %v2259
      %v2261 = vmul.f32 %v486, %v2259
      %v2262 = vmul.f32 %v487, %v2259
      %v2263 = vmul.f32 %v488, %v2259
      %v2264 = vmul.f32 %v489, %v2259
      %v2265 = vmul.f32 %v490, %v2259
      %v2266 = vmul.f32 %v491, %v2259
      %v2267 = vmul.f32 %v492, %v2259
      %v2268 = vmul.f32 %v493, %v2259
      %v2269 = vmul.f32 %v494, %v2259
      %v2270 = vmul.f32 %v495, %v2259
      %v2271 = vmul.f32 %v496, %v2259
      %v2272 = vmul.f32 %v497, %v2259
      %v2273 = vmul.f32 %v498, %v2259
      %v2274 = vmul.f32 %v499, %v2259
      %v2275 = vmul.f32 %v500, %v2259
      %v2292 = vrot.slane %v2260, 1
      %v2293 = vrot.slane %v2261, 1
      %v2294 = vsel %vm555, %v2292, %v2293
      %v2295 = vrot.slane %v2262, 1
      %v2296 = vrot.slane %v2263, 1
      %v2297 = vsel %vm555, %v2295, %v2296
      %v2298 = vrot.slane %v2264, 1
      %v2299 = vrot.slane %v2265, 1
      %v2300 = vsel %vm555, %v2298, %v2299
      %v2301 = vrot.slane %v2266, 1
      %v2302 = vrot.slane %v2267, 1
      %v2303 = vsel %vm555, %v2301, %v2302
      %v2304 = vrot.slane %v2268, 1
      %v2305 = vrot.slane %v2269, 1
      %v2306 = vsel %vm555, %v2304, %v2305
      %v2307 = vrot.slane %v2270, 1
      %v2308 = vrot.slane %v2271, 1
      %v2309 = vsel %vm555, %v2307, %v2308
      %v2310 = vrot.slane %v2272, 1
      %v2311 = vrot.slane %v2273, 1
      %v2312 = vsel %vm555, %v2310, %v2311
      %v2313 = vrot.slane %v2274, 1
      %v2314 = vrot.slane %v2275, 1
      %v2315 = vsel %vm555, %v2313, %v2314
      %v2324 = vadd.f32 %v2250, %v2294
      %v2325 = vadd.f32 %v2251, %v2297
      %v2326 = vadd.f32 %v2252, %v2300
      %v2327 = vadd.f32 %v2253, %v2303
      %v2328 = vadd.f32 %v2254, %v2306
      %v2329 = vadd.f32 %v2255, %v2309
      %v2330 = vadd.f32 %v2256, %v2312
      %v2331 = vadd.f32 %v2257, %v2315
      %v2332 = vsub.f32 %v2324, %v873
      %v2333 = vsub.f32 %v2325, %v873
      %v2334 = vsub.f32 %v2326, %v873
      %v2335 = vsub.f32 %v2327, %v873
      %v2336 = vsub.f32 %v2328, %v873
      %v2337 = vsub.f32 %v2329, %v873
      %v2338 = vsub.f32 %v2330, %v873
      %v2339 = vsub.f32 %v2331, %v873
      %v2340 = vmul.f32 %v2332, %v884
      %v2341 = vmul.f32 %v2333, %v884
      %v2342 = vmul.f32 %v2334, %v884
      %v2343 = vmul.f32 %v2335, %v884
      %v2344 = vmul.f32 %v2336, %v884
      %v2345 = vmul.f32 %v2337, %v884
      %v2346 = vmul.f32 %v2338, %v884
      %v2347 = vmul.f32 %v2339, %v884
      %v2348 = vld [vmem:[%s5] sm:$0xff]
      %v2349 = vld [vmem:[%s6] sm:$0x1]
      %v2351 = vperm.slane %v2349, 0
      %v2354 = vsel %vm899, %v2340, 0
      %v2357 = vsel %vm899, %v2341, 0
      %v2360 = vsel %vm899, %v2342, 0
      %v2363 = vsel %vm899, %v2343, 0
      %v2366 = vsel %vm899, %v2344, 0
      %v2369 = vsel %vm899, %v2345, 0
      %v2372 = vsel %vm899, %v2346, 0
      %v2375 = vsel %vm899, %v2347, 0
      %2377 = vmatpush.msra.mxu0 0.0
      %2378 = vmatpush.msra.mxu0 0.0
      %2379 = vmatpush.msra.mxu0 0.0
      %2380 = vmatpush.msra.mxu0 0.0
      %2381 = vmatpush.msra.mxu0 0.0
      %2382 = vmatpush.msra.mxu0 0.0
      %2383 = vmatpush.msra.mxu0 0.0
      %2384 = vmatpush.msra.mxu0 0.0
      %2385 = vmatpush.msra.mxu0 0.0
      %2386 = vmatpush.msra.mxu0 0.0
      %2387 = vmatpush.msra.mxu0 0.0
      %2388 = vmatpush.msra.mxu0 0.0
      %2389 = vmatpush.msra.mxu0 0.0
      %2390 = vmatpush.msra.mxu0 0.0
      %2391 = vmatpush.msra.mxu0 0.0
      %2392 = vmatpush.msra.mxu0 %v2348
      %2393 = vmatmul.f32.gmra.mxu0 %v2354
      %v2394 = vpop.f32.mrf.mxu0
      %v2395 = vadd.f32 %v2351, %v2394
      %2396 = vmatmul.f32.gmra.mxu0 %v2357
      %v2397 = vpop.f32.mrf.mxu0
      %v2398 = vadd.f32 %v2351, %v2397
      %2399 = vmatmul.f32.gmra.mxu0 %v2360
      %v2400 = vpop.f32.mrf.mxu0
      %v2401 = vadd.f32 %v2351, %v2400
      %2402 = vmatmul.f32.gmra.mxu0 %v2363
      %v2403 = vpop.f32.mrf.mxu0
      %v2404 = vadd.f32 %v2351, %v2403
      %2405 = vmatmul.f32.gmra.mxu0 %v2366
      %v2406 = vpop.f32.mrf.mxu0
      %v2407 = vadd.f32 %v2351, %v2406
      %2408 = vmatmul.f32.gmra.mxu0 %v2369
      %v2409 = vpop.f32.mrf.mxu0
      %v2410 = vadd.f32 %v2351, %v2409
      %2411 = vmatmul.f32.gmra.mxu0 %v2372
      %v2412 = vpop.f32.mrf.mxu0
      %v2413 = vadd.f32 %v2351, %v2412
      %2414 = vmatmul.f32.gmra.mxu0 %v2375
      %v2415 = vpop.f32.mrf.mxu0
      %v2416 = vadd.f32 %v2351, %v2415
      %2417 = vdwg.mxu0
      %v2418 = vmul.f32 %v2395, 0.5
      %v2419 = vmul.f32 %v2398, 0.5
      %v2420 = vmul.f32 %v2401, 0.5
      %v2421 = vmul.f32 %v2404, 0.5
      %v2422 = vmul.f32 %v2407, 0.5
      %v2423 = vmul.f32 %v2410, 0.5
      %v2424 = vmul.f32 %v2413, 0.5
      %v2425 = vmul.f32 %v2416, 0.5
      %v2426 = vmul.f32 %v2395, %v979
      %v2427 = vmul.f32 %v2398, %v979
      %v2428 = vmul.f32 %v2401, %v979
      %v2429 = vmul.f32 %v2404, %v979
      %v2430 = vmul.f32 %v2407, %v979
      %v2431 = vmul.f32 %v2410, %v979
      %v2432 = vmul.f32 %v2413, %v979
      %v2433 = vmul.f32 %v2416, %v979
      %v2434 = vmul.f32 %v2426, %v2426
      %v2435 = vmin.f32 16.0, %v2434
      %v2436 = vmul.f32 %v2435, 2.1237322e-06
      %v2437 = vadd.f32 %v2436, 0.00028619796
      %v2438 = vmul.f32 %v2435, %v2437
      %v2439 = vadd.f32 %v2438, 0.0036580483
      %v2440 = vmul.f32 %v2435, %v2439
      %v2441 = vadd.f32 %v2440, 0.05243302
      %v2442 = vmul.f32 %v2435, %v2441
      %v2443 = vadd.f32 %v2442, 0.18741608
      %v2444 = vmul.f32 %v2435, %v2443
      %v2445 = vadd.f32 %v2444, 1.1283791
      %v2446 = vmul.f32 %v2426, %v2445
      %v2447 = vmul.f32 %v2435, 3.8918573e-05
      %v2448 = vadd.f32 %v2447, 0.001143296
      %v2449 = vmul.f32 %v2435, %v2448
      %v2450 = vadd.f32 %v2449, 0.014752088
      %v2451 = vmul.f32 %v2435, %v2450
      %v2452 = vadd.f32 %v2451, 0.112945676
      %v2453 = vmul.f32 %v2435, %v2452
      %v2454 = vadd.f32 %v2453, 0.4994258
      %v2455 = vmul.f32 %v2435, %v2454
      %v2456 = vadd.f32 %v2455, 1.0
      %v2457 = vrcp.pop %v2456
      %v2458 = vmul.f32 %v2456, %v2457
      %v2459 = vsub.f32 1.0, %v2458
      %v2460 = vmul.f32 %v2457, %v2459
      %v2461 = vadd.f32 %v2457, %v2460
      %vm2462 = vweird.f32 %v2456
      %vm2463 = vweird.f32 %v2457
      %vm2464 = vmor %vm2462, %vm2463
      %v2465 = vsel %vm2464, %v2457, %v2461
      %v2466 = vand.u32 2147483647, %v2456
      %vm2467 = vcmp.eq.f32.partialorder %v2466, 8.507059e+37
      %v2468 = vand.u32 %v2456, 2147483648
      %v2469 = vor.u32 1.1754944e-38, %v2468
      %v2470 = vsel %vm2467, %v2469, %v2465
      %v2471 = vmul.f32 %v2446, %v2470
      %v2472 = vmin.f32 %v2471, 1.0
      %v2473 = vmax.f32 %v2472, -1.0
      %v2474 = vmul.f32 %v2427, %v2427
      %v2475 = vmin.f32 16.0, %v2474
      %v2476 = vmul.f32 %v2475, 2.1237322e-06
      %v2477 = vadd.f32 %v2476, 0.00028619796
      %v2478 = vmul.f32 %v2475, %v2477
      %v2479 = vadd.f32 %v2478, 0.0036580483
      %v2480 = vmul.f32 %v2475, %v2479
      %v2481 = vadd.f32 %v2480, 0.05243302
      %v2482 = vmul.f32 %v2475, %v2481
      %v2483 = vadd.f32 %v2482, 0.18741608
      %v2484 = vmul.f32 %v2475, %v2483
      %v2485 = vadd.f32 %v2484, 1.1283791
      %v2486 = vmul.f32 %v2427, %v2485
      %v2487 = vmul.f32 %v2475, 3.8918573e-05
      %v2488 = vadd.f32 %v2487, 0.001143296
      %v2489 = vmul.f32 %v2475, %v2488
      %v2490 = vadd.f32 %v2489, 0.014752088
      %v2491 = vmul.f32 %v2475, %v2490
      %v2492 = vadd.f32 %v2491, 0.112945676
      %v2493 = vmul.f32 %v2475, %v2492
      %v2494 = vadd.f32 %v2493, 0.4994258
      %v2495 = vmul.f32 %v2475, %v2494
      %v2496 = vadd.f32 %v2495, 1.0
      %v2497 = vrcp.pop %v2496
      %v2498 = vmul.f32 %v2496, %v2497
      %v2499 = vsub.f32 1.0, %v2498
      %v2500 = vmul.f32 %v2497, %v2499
      %v2501 = vadd.f32 %v2497, %v2500
      %vm2502 = vweird.f32 %v2496
      %vm2503 = vweird.f32 %v2497
      %vm2504 = vmor %vm2502, %vm2503
      %v2505 = vsel %vm2504, %v2497, %v2501
      %v2506 = vand.u32 2147483647, %v2496
      %vm2507 = vcmp.eq.f32.partialorder %v2506, 8.507059e+37
      %v2508 = vand.u32 %v2496, 2147483648
      %v2509 = vor.u32 1.1754944e-38, %v2508
      %v2510 = vsel %vm2507, %v2509, %v2505
      %v2511 = vmul.f32 %v2486, %v2510
      %v2512 = vmin.f32 %v2511, 1.0
      %v2513 = vmax.f32 %v2512, -1.0
      %v2514 = vmul.f32 %v2428, %v2428
      %v2515 = vmin.f32 16.0, %v2514
      %v2516 = vmul.f32 %v2515, 2.1237322e-06
      %v2517 = vadd.f32 %v2516, 0.00028619796
      %v2518 = vmul.f32 %v2515, %v2517
      %v2519 = vadd.f32 %v2518, 0.0036580483
      %v2520 = vmul.f32 %v2515, %v2519
      %v2521 = vadd.f32 %v2520, 0.05243302
      %v2522 = vmul.f32 %v2515, %v2521
      %v2523 = vadd.f32 %v2522, 0.18741608
      %v2524 = vmul.f32 %v2515, %v2523
      %v2525 = vadd.f32 %v2524, 1.1283791
      %v2526 = vmul.f32 %v2428, %v2525
      %v2527 = vmul.f32 %v2515, 3.8918573e-05
      %v2528 = vadd.f32 %v2527, 0.001143296
      %v2529 = vmul.f32 %v2515, %v2528
      %v2530 = vadd.f32 %v2529, 0.014752088
      %v2531 = vmul.f32 %v2515, %v2530
      %v2532 = vadd.f32 %v2531, 0.112945676
      %v2533 = vmul.f32 %v2515, %v2532
      %v2534 = vadd.f32 %v2533, 0.4994258
      %v2535 = vmul.f32 %v2515, %v2534
      %v2536 = vadd.f32 %v2535, 1.0
      %v2537 = vrcp.pop %v2536
      %v2538 = vmul.f32 %v2536, %v2537
      %v2539 = vsub.f32 1.0, %v2538
      %v2540 = vmul.f32 %v2537, %v2539
      %v2541 = vadd.f32 %v2537, %v2540
      %vm2542 = vweird.f32 %v2536
      %vm2543 = vweird.f32 %v2537
      %vm2544 = vmor %vm2542, %vm2543
      %v2545 = vsel %vm2544, %v2537, %v2541
      %v2546 = vand.u32 2147483647, %v2536
      %vm2547 = vcmp.eq.f32.partialorder %v2546, 8.507059e+37
      %v2548 = vand.u32 %v2536, 2147483648
      %v2549 = vor.u32 1.1754944e-38, %v2548
      %v2550 = vsel %vm2547, %v2549, %v2545
      %v2551 = vmul.f32 %v2526, %v2550
      %v2552 = vmin.f32 %v2551, 1.0
      %v2553 = vmax.f32 %v2552, -1.0
      %v2554 = vmul.f32 %v2429, %v2429
      %v2555 = vmin.f32 16.0, %v2554
      %v2556 = vmul.f32 %v2555, 2.1237322e-06
      %v2557 = vadd.f32 %v2556, 0.00028619796
      %v2558 = vmul.f32 %v2555, %v2557
      %v2559 = vadd.f32 %v2558, 0.0036580483
      %v2560 = vmul.f32 %v2555, %v2559
      %v2561 = vadd.f32 %v2560, 0.05243302
      %v2562 = vmul.f32 %v2555, %v2561
      %v2563 = vadd.f32 %v2562, 0.18741608
      %v2564 = vmul.f32 %v2555, %v2563
      %v2565 = vadd.f32 %v2564, 1.1283791
      %v2566 = vmul.f32 %v2429, %v2565
      %v2567 = vmul.f32 %v2555, 3.8918573e-05
      %v2568 = vadd.f32 %v2567, 0.001143296
      %v2569 = vmul.f32 %v2555, %v2568
      %v2570 = vadd.f32 %v2569, 0.014752088
      %v2571 = vmul.f32 %v2555, %v2570
      %v2572 = vadd.f32 %v2571, 0.112945676
      %v2573 = vmul.f32 %v2555, %v2572
      %v2574 = vadd.f32 %v2573, 0.4994258
      %v2575 = vmul.f32 %v2555, %v2574
      %v2576 = vadd.f32 %v2575, 1.0
      %v2577 = vrcp.pop %v2576
      %v2578 = vmul.f32 %v2576, %v2577
      %v2579 = vsub.f32 1.0, %v2578
      %v2580 = vmul.f32 %v2577, %v2579
      %v2581 = vadd.f32 %v2577, %v2580
      %vm2582 = vweird.f32 %v2576
      %vm2583 = vweird.f32 %v2577
      %vm2584 = vmor %vm2582, %vm2583
      %v2585 = vsel %vm2584, %v2577, %v2581
      %v2586 = vand.u32 2147483647, %v2576
      %vm2587 = vcmp.eq.f32.partialorder %v2586, 8.507059e+37
      %v2588 = vand.u32 %v2576, 2147483648
      %v2589 = vor.u32 1.1754944e-38, %v2588
      %v2590 = vsel %vm2587, %v2589, %v2585
      %v2591 = vmul.f32 %v2566, %v2590
      %v2592 = vmin.f32 %v2591, 1.0
      %v2593 = vmax.f32 %v2592, -1.0
      %v2594 = vmul.f32 %v2430, %v2430
      %v2595 = vmin.f32 16.0, %v2594
      %v2596 = vmul.f32 %v2595, 2.1237322e-06
      %v2597 = vadd.f32 %v2596, 0.00028619796
      %v2598 = vmul.f32 %v2595, %v2597
      %v2599 = vadd.f32 %v2598, 0.0036580483
      %v2600 = vmul.f32 %v2595, %v2599
      %v2601 = vadd.f32 %v2600, 0.05243302
      %v2602 = vmul.f32 %v2595, %v2601
      %v2603 = vadd.f32 %v2602, 0.18741608
      %v2604 = vmul.f32 %v2595, %v2603
      %v2605 = vadd.f32 %v2604, 1.1283791
      %v2606 = vmul.f32 %v2430, %v2605
      %v2607 = vmul.f32 %v2595, 3.8918573e-05
      %v2608 = vadd.f32 %v2607, 0.001143296
      %v2609 = vmul.f32 %v2595, %v2608
      %v2610 = vadd.f32 %v2609, 0.014752088
      %v2611 = vmul.f32 %v2595, %v2610
      %v2612 = vadd.f32 %v2611, 0.112945676
      %v2613 = vmul.f32 %v2595, %v2612
      %v2614 = vadd.f32 %v2613, 0.4994258
      %v2615 = vmul.f32 %v2595, %v2614
      %v2616 = vadd.f32 %v2615, 1.0
      %v2617 = vrcp.pop %v2616
      %v2618 = vmul.f32 %v2616, %v2617
      %v2619 = vsub.f32 1.0, %v2618
      %v2620 = vmul.f32 %v2617, %v2619
      %v2621 = vadd.f32 %v2617, %v2620
      %vm2622 = vweird.f32 %v2616
      %vm2623 = vweird.f32 %v2617
      %vm2624 = vmor %vm2622, %vm2623
      %v2625 = vsel %vm2624, %v2617, %v2621
      %v2626 = vand.u32 2147483647, %v2616
      %vm2627 = vcmp.eq.f32.partialorder %v2626, 8.507059e+37
      %v2628 = vand.u32 %v2616, 2147483648
      %v2629 = vor.u32 1.1754944e-38, %v2628
      %v2630 = vsel %vm2627, %v2629, %v2625
      %v2631 = vmul.f32 %v2606, %v2630
      %v2632 = vmin.f32 %v2631, 1.0
      %v2633 = vmax.f32 %v2632, -1.0
      %v2634 = vmul.f32 %v2431, %v2431
      %v2635 = vmin.f32 16.0, %v2634
      %v2636 = vmul.f32 %v2635, 2.1237322e-06
      %v2637 = vadd.f32 %v2636, 0.00028619796
      %v2638 = vmul.f32 %v2635, %v2637
      %v2639 = vadd.f32 %v2638, 0.0036580483
      %v2640 = vmul.f32 %v2635, %v2639
      %v2641 = vadd.f32 %v2640, 0.05243302
      %v2642 = vmul.f32 %v2635, %v2641
      %v2643 = vadd.f32 %v2642, 0.18741608
      %v2644 = vmul.f32 %v2635, %v2643
      %v2645 = vadd.f32 %v2644, 1.1283791
      %v2646 = vmul.f32 %v2431, %v2645
      %v2647 = vmul.f32 %v2635, 3.8918573e-05
      %v2648 = vadd.f32 %v2647, 0.001143296
      %v2649 = vmul.f32 %v2635, %v2648
      %v2650 = vadd.f32 %v2649, 0.014752088
      %v2651 = vmul.f32 %v2635, %v2650
      %v2652 = vadd.f32 %v2651, 0.112945676
      %v2653 = vmul.f32 %v2635, %v2652
      %v2654 = vadd.f32 %v2653, 0.4994258
      %v2655 = vmul.f32 %v2635, %v2654
      %v2656 = vadd.f32 %v2655, 1.0
      %v2657 = vrcp.pop %v2656
      %v2658 = vmul.f32 %v2656, %v2657
      %v2659 = vsub.f32 1.0, %v2658
      %v2660 = vmul.f32 %v2657, %v2659
      %v2661 = vadd.f32 %v2657, %v2660
      %vm2662 = vweird.f32 %v2656
      %vm2663 = vweird.f32 %v2657
      %vm2664 = vmor %vm2662, %vm2663
      %v2665 = vsel %vm2664, %v2657, %v2661
      %v2666 = vand.u32 2147483647, %v2656
      %vm2667 = vcmp.eq.f32.partialorder %v2666, 8.507059e+37
      %v2668 = vand.u32 %v2656, 2147483648
      %v2669 = vor.u32 1.1754944e-38, %v2668
      %v2670 = vsel %vm2667, %v2669, %v2665
      %v2671 = vmul.f32 %v2646, %v2670
      %v2672 = vmin.f32 %v2671, 1.0
      %v2673 = vmax.f32 %v2672, -1.0
      %v2674 = vmul.f32 %v2432, %v2432
      %v2675 = vmin.f32 16.0, %v2674
      %v2676 = vmul.f32 %v2675, 2.1237322e-06
      %v2677 = vadd.f32 %v2676, 0.00028619796
      %v2678 = vmul.f32 %v2675, %v2677
      %v2679 = vadd.f32 %v2678, 0.0036580483
      %v2680 = vmul.f32 %v2675, %v2679
      %v2681 = vadd.f32 %v2680, 0.05243302
      %v2682 = vmul.f32 %v2675, %v2681
      %v2683 = vadd.f32 %v2682, 0.18741608
      %v2684 = vmul.f32 %v2675, %v2683
      %v2685 = vadd.f32 %v2684, 1.1283791
      %v2686 = vmul.f32 %v2432, %v2685
      %v2687 = vmul.f32 %v2675, 3.8918573e-05
      %v2688 = vadd.f32 %v2687, 0.001143296
      %v2689 = vmul.f32 %v2675, %v2688
      %v2690 = vadd.f32 %v2689, 0.014752088
      %v2691 = vmul.f32 %v2675, %v2690
      %v2692 = vadd.f32 %v2691, 0.112945676
      %v2693 = vmul.f32 %v2675, %v2692
      %v2694 = vadd.f32 %v2693, 0.4994258
      %v2695 = vmul.f32 %v2675, %v2694
      %v2696 = vadd.f32 %v2695, 1.0
      %v2697 = vrcp.pop %v2696
      %v2698 = vmul.f32 %v2696, %v2697
      %v2699 = vsub.f32 1.0, %v2698
      %v2700 = vmul.f32 %v2697, %v2699
      %v2701 = vadd.f32 %v2697, %v2700
      %vm2702 = vweird.f32 %v2696
      %vm2703 = vweird.f32 %v2697
      %vm2704 = vmor %vm2702, %vm2703
      %v2705 = vsel %vm2704, %v2697, %v2701
      %v2706 = vand.u32 2147483647, %v2696
      %vm2707 = vcmp.eq.f32.partialorder %v2706, 8.507059e+37
      %v2708 = vand.u32 %v2696, 2147483648
      %v2709 = vor.u32 1.1754944e-38, %v2708
      %v2710 = vsel %vm2707, %v2709, %v2705
      %v2711 = vmul.f32 %v2686, %v2710
      %v2712 = vmin.f32 %v2711, 1.0
      %v2713 = vmax.f32 %v2712, -1.0
      %v2714 = vmul.f32 %v2433, %v2433
      %v2715 = vmin.f32 16.0, %v2714
      %v2716 = vmul.f32 %v2715, 2.1237322e-06
      %v2717 = vadd.f32 %v2716, 0.00028619796
      %v2718 = vmul.f32 %v2715, %v2717
      %v2719 = vadd.f32 %v2718, 0.0036580483
      %v2720 = vmul.f32 %v2715, %v2719
      %v2721 = vadd.f32 %v2720, 0.05243302
      %v2722 = vmul.f32 %v2715, %v2721
      %v2723 = vadd.f32 %v2722, 0.18741608
      %v2724 = vmul.f32 %v2715, %v2723
      %v2725 = vadd.f32 %v2724, 1.1283791
      %v2726 = vmul.f32 %v2433, %v2725
      %v2727 = vmul.f32 %v2715, 3.8918573e-05
      %v2728 = vadd.f32 %v2727, 0.001143296
      %v2729 = vmul.f32 %v2715, %v2728
      %v2730 = vadd.f32 %v2729, 0.014752088
      %v2731 = vmul.f32 %v2715, %v2730
      %v2732 = vadd.f32 %v2731, 0.112945676
      %v2733 = vmul.f32 %v2715, %v2732
      %v2734 = vadd.f32 %v2733, 0.4994258
      %v2735 = vmul.f32 %v2715, %v2734
      %v2736 = vadd.f32 %v2735, 1.0
      %v2737 = vrcp.pop %v2736
      %v2738 = vmul.f32 %v2736, %v2737
      %v2739 = vsub.f32 1.0, %v2738
      %v2740 = vmul.f32 %v2737, %v2739
      %v2741 = vadd.f32 %v2737, %v2740
      %vm2742 = vweird.f32 %v2736
      %vm2743 = vweird.f32 %v2737
      %vm2744 = vmor %vm2742, %vm2743
      %v2745 = vsel %vm2744, %v2737, %v2741
      %v2746 = vand.u32 2147483647, %v2736
      %vm2747 = vcmp.eq.f32.partialorder %v2746, 8.507059e+37
      %v2748 = vand.u32 %v2736, 2147483648
      %v2749 = vor.u32 1.1754944e-38, %v2748
      %v2750 = vsel %vm2747, %v2749, %v2745
      %v2751 = vmul.f32 %v2726, %v2750
      %v2752 = vmin.f32 %v2751, 1.0
      %v2753 = vmax.f32 %v2752, -1.0
      %v2754 = vadd.f32 %v2473, 1.0
      %v2755 = vadd.f32 %v2513, 1.0
      %v2756 = vadd.f32 %v2553, 1.0
      %v2757 = vadd.f32 %v2593, 1.0
      %v2758 = vadd.f32 %v2633, 1.0
      %v2759 = vadd.f32 %v2673, 1.0
      %v2760 = vadd.f32 %v2713, 1.0
      %v2761 = vadd.f32 %v2753, 1.0
      %v2762 = vmul.f32 %v2418, %v2754
      %v2763 = vmul.f32 %v2419, %v2755
      %v2764 = vmul.f32 %v2420, %v2756
      %v2765 = vmul.f32 %v2421, %v2757
      %v2766 = vmul.f32 %v2422, %v2758
      %v2767 = vmul.f32 %v2423, %v2759
      %v2768 = vmul.f32 %v2424, %v2760
      %v2769 = vmul.f32 %v2425, %v2761
      %v2770 = vld [vmem:[%s7] sm:$0xff]
      %v2771 = vld [vmem:[%s7 + $0x8] sm:$0xff]
      %v2772 = vld [vmem:[%s8] sm:$0x1]
      %v2774 = vperm.slane %v2772, 0
      %v2777 = vsel %vm1330, %v2762, 0
      %v2780 = vsel %vm1330, %v2763, 0
      %v2783 = vsel %vm1330, %v2764, 0
      %v2786 = vsel %vm1330, %v2765, 0
      %v2789 = vsel %vm1330, %v2766, 0
      %v2792 = vsel %vm1330, %v2767, 0
      %v2795 = vsel %vm1330, %v2768, 0
      %v2798 = vsel %vm1330, %v2769, 0
      %2800 = vmatpush.msra.mxu0 0.0
      %2801 = vmatpush.msra.mxu0 0.0
      %2802 = vmatpush.msra.mxu0 0.0
      %2803 = vmatpush.msra.mxu0 0.0
      %2804 = vmatpush.msra.mxu0 0.0
      %2805 = vmatpush.msra.mxu0 0.0
      %2806 = vmatpush.msra.mxu0 0.0
      %2807 = vmatpush.msra.mxu0 0.0
      %2808 = vmatpush.msra.mxu0 0.0
      %2809 = vmatpush.msra.mxu0 0.0
      %2810 = vmatpush.msra.mxu0 0.0
      %2811 = vmatpush.msra.mxu0 0.0
      %2812 = vmatpush.msra.mxu0 0.0
      %2813 = vmatpush.msra.mxu0 0.0
      %2814 = vmatpush.msra.mxu0 %v2771
      %2815 = vmatpush.msra.mxu0 %v2770
      %2816 = vmatmul.f32.gmra.mxu0 %v2777
      %v2817 = vpop.f32.mrf.mxu0
      %v2818 = vadd.f32 %v2774, %v2817
      %2819 = vmatmul.f32.gmra.mxu0 %v2780
      %v2820 = vpop.f32.mrf.mxu0
      %v2821 = vadd.f32 %v2774, %v2820
      %2822 = vmatmul.f32.gmra.mxu0 %v2783
      %v2823 = vpop.f32.mrf.mxu0
      %v2824 = vadd.f32 %v2774, %v2823
      %2825 = vmatmul.f32.gmra.mxu0 %v2786
      %v2826 = vpop.f32.mrf.mxu0
      %v2827 = vadd.f32 %v2774, %v2826
      %2828 = vmatmul.f32.gmra.mxu0 %v2789
      %v2829 = vpop.f32.mrf.mxu0
      %v2830 = vadd.f32 %v2774, %v2829
      %2831 = vmatmul.f32.gmra.mxu0 %v2792
      %v2832 = vpop.f32.mrf.mxu0
      %v2833 = vadd.f32 %v2774, %v2832
      %2834 = vmatmul.f32.gmra.mxu0 %v2795
      %v2835 = vpop.f32.mrf.mxu0
      %v2836 = vadd.f32 %v2774, %v2835
      %2837 = vmatmul.f32.gmra.mxu0 %v2798
      %v2838 = vpop.f32.mrf.mxu0
      %v2839 = vadd.f32 %v2774, %v2838
      %2840 = vdwg.mxu0
      %v2841 = vsel %vm1398, %v2818, 0.0
      %v2842 = vsel %vm1398, %v2821, 0.0
      %v2843 = vsel %vm1398, %v2824, 0.0
      %v2844 = vsel %vm1398, %v2827, 0.0
      %v2845 = vsel %vm1398, %v2830, 0.0
      %v2846 = vsel %vm1398, %v2833, 0.0
      %v2847 = vsel %vm1398, %v2836, 0.0
      %v2848 = vsel %vm1398, %v2839, 0.0
      %v2849 = vsel %vm1412, %v2841, 0.0
      %v2850 = vsel %vm1412, %v2842, 0.0
      %v2851 = vsel %vm1412, %v2843, 0.0
      %v2852 = vsel %vm1412, %v2844, 0.0
      %v2853 = vsel %vm1412, %v2845, 0.0
      %v2854 = vsel %vm1412, %v2846, 0.0
      %v2855 = vsel %vm1412, %v2847, 0.0
      %v2856 = vsel %vm1412, %v2848, 0.0
      %s2857 = scalar_lea.vmem %s464, 128
      %2858 = vst.msk [vmem:[%s2857] sm:$0xff] %vm1421, %v2849
      %2859 = vst.msk [vmem:[%s2857 + $0x8] sm:$0xff] %vm1421, %v2850
      %2860 = vst.msk [vmem:[%s2857 + $0x10] sm:$0xff] %vm1421, %v2851
      %2861 = vst.msk [vmem:[%s2857 + $0x18] sm:$0xff] %vm1421, %v2852
      %2862 = vst.msk [vmem:[%s2857 + $0x20] sm:$0xff] %vm1421, %v2853
      %2863 = vst.msk [vmem:[%s2857 + $0x28] sm:$0xff] %vm1421, %v2854
      %2864 = vst.msk [vmem:[%s2857 + $0x30] sm:$0xff] %vm1421, %v2855
      %2865 = vst.msk [vmem:[%s2857 + $0x38] sm:$0xff] %vm1421, %v2856
      %v2866 = vld [vmem:[%s2 + $0x16] sm:$0x1]
      %v2867 = vperm.slane %v2866, 0
      %v2868 = vmul.f32 %v467, %v2867
      %v2869 = vmul.f32 %v468, %v2867
      %v2870 = vmul.f32 %v469, %v2867
      %v2871 = vmul.f32 %v470, %v2867
      %v2872 = vmul.f32 %v471, %v2867
      %v2873 = vmul.f32 %v472, %v2867
      %v2874 = vmul.f32 %v473, %v2867
      %v2875 = vmul.f32 %v474, %v2867
      %v2876 = vmul.f32 %v475, %v2867
      %v2877 = vmul.f32 %v476, %v2867
      %v2878 = vmul.f32 %v477, %v2867
      %v2879 = vmul.f32 %v478, %v2867
      %v2880 = vmul.f32 %v479, %v2867
      %v2881 = vmul.f32 %v480, %v2867
      %v2882 = vmul.f32 %v481, %v2867
      %v2883 = vmul.f32 %v482, %v2867
      %v2884 = vadd.f32 %v2868, 0.0
      %v2885 = vadd.f32 %v2869, 0.0
      %v2886 = vadd.f32 %v2870, 0.0
      %v2887 = vadd.f32 %v2871, 0.0
      %v2888 = vadd.f32 %v2872, 0.0
      %v2889 = vadd.f32 %v2873, 0.0
      %v2890 = vadd.f32 %v2874, 0.0
      %v2891 = vadd.f32 %v2875, 0.0
      %v2892 = vadd.f32 %v2876, 0.0
      %v2893 = vadd.f32 %v2877, 0.0
      %v2894 = vadd.f32 %v2878, 0.0
      %v2895 = vadd.f32 %v2879, 0.0
      %v2896 = vadd.f32 %v2880, 0.0
      %v2897 = vadd.f32 %v2881, 0.0
      %v2898 = vadd.f32 %v2882, 0.0
      %v2899 = vadd.f32 %v2883, 0.0
      %v2900 = vld [vmem:[%s2 + $0x4] sm:$0x1]
      %v2901 = vperm.slane %v2900, 0
      %v2902 = vmul.f32 %v485, %v2901
      %v2903 = vmul.f32 %v486, %v2901
      %v2904 = vmul.f32 %v487, %v2901
      %v2905 = vmul.f32 %v488, %v2901
      %v2906 = vmul.f32 %v489, %v2901
      %v2907 = vmul.f32 %v490, %v2901
      %v2908 = vmul.f32 %v491, %v2901
      %v2909 = vmul.f32 %v492, %v2901
      %v2910 = vmul.f32 %v493, %v2901
      %v2911 = vmul.f32 %v494, %v2901
      %v2912 = vmul.f32 %v495, %v2901
      %v2913 = vmul.f32 %v496, %v2901
      %v2914 = vmul.f32 %v497, %v2901
      %v2915 = vmul.f32 %v498, %v2901
      %v2916 = vmul.f32 %v499, %v2901
      %v2917 = vmul.f32 %v500, %v2901
      %v2918 = vadd.f32 %v2884, %v2902
      %v2919 = vadd.f32 %v2885, %v2903
      %v2920 = vadd.f32 %v2886, %v2904
      %v2921 = vadd.f32 %v2887, %v2905
      %v2922 = vadd.f32 %v2888, %v2906
      %v2923 = vadd.f32 %v2889, %v2907
      %v2924 = vadd.f32 %v2890, %v2908
      %v2925 = vadd.f32 %v2891, %v2909
      %v2926 = vadd.f32 %v2892, %v2910
      %v2927 = vadd.f32 %v2893, %v2911
      %v2928 = vadd.f32 %v2894, %v2912
      %v2929 = vadd.f32 %v2895, %v2913
      %v2930 = vadd.f32 %v2896, %v2914
      %v2931 = vadd.f32 %v2897, %v2915
      %v2932 = vadd.f32 %v2898, %v2916
      %v2933 = vadd.f32 %v2899, %v2917
      %v2934 = vsub.f32 %v2918, %v873
      %v2935 = vsub.f32 %v2919, %v873
      %v2936 = vsub.f32 %v2920, %v873
      %v2937 = vsub.f32 %v2921, %v873
      %v2938 = vsub.f32 %v2922, %v873
      %v2939 = vsub.f32 %v2923, %v873
      %v2940 = vsub.f32 %v2924, %v873
      %v2941 = vsub.f32 %v2925, %v873
      %v2942 = vsub.f32 %v2926, %v873
      %v2943 = vsub.f32 %v2927, %v873
      %v2944 = vsub.f32 %v2928, %v873
      %v2945 = vsub.f32 %v2929, %v873
      %v2946 = vsub.f32 %v2930, %v873
      %v2947 = vsub.f32 %v2931, %v873
      %v2948 = vsub.f32 %v2932, %v873
      %v2949 = vsub.f32 %v2933, %v873
      %v2950 = vmul.f32 %v2934, %v884
      %v2951 = vmul.f32 %v2935, %v884
      %v2952 = vmul.f32 %v2936, %v884
      %v2953 = vmul.f32 %v2937, %v884
      %v2954 = vmul.f32 %v2938, %v884
      %v2955 = vmul.f32 %v2939, %v884
      %v2956 = vmul.f32 %v2940, %v884
      %v2957 = vmul.f32 %v2941, %v884
      %v2958 = vmul.f32 %v2942, %v884
      %v2959 = vmul.f32 %v2943, %v884
      %v2960 = vmul.f32 %v2944, %v884
      %v2961 = vmul.f32 %v2945, %v884
      %v2962 = vmul.f32 %v2946, %v884
      %v2963 = vmul.f32 %v2947, %v884
      %v2964 = vmul.f32 %v2948, %v884
      %v2965 = vmul.f32 %v2949, %v884
      %v2982 = vrot.slane %v2950, 1
      %v2983 = vrot.slane %v2951, 1
      %v2984 = vsel %vm555, %v2982, %v2983
      %v2985 = vrot.slane %v2952, 1
      %v2986 = vrot.slane %v2953, 1
      %v2987 = vsel %vm555, %v2985, %v2986
      %v2988 = vrot.slane %v2954, 1
      %v2989 = vrot.slane %v2955, 1
      %v2990 = vsel %vm555, %v2988, %v2989
      %v2991 = vrot.slane %v2956, 1
      %v2992 = vrot.slane %v2957, 1
      %v2993 = vsel %vm555, %v2991, %v2992
      %v2994 = vrot.slane %v2958, 1
      %v2995 = vrot.slane %v2959, 1
      %v2996 = vsel %vm555, %v2994, %v2995
      %v2997 = vrot.slane %v2960, 1
      %v2998 = vrot.slane %v2961, 1
      %v2999 = vsel %vm555, %v2997, %v2998
      %v3000 = vrot.slane %v2962, 1
      %v3001 = vrot.slane %v2963, 1
      %v3002 = vsel %vm555, %v3000, %v3001
      %v3003 = vrot.slane %v2964, 1
      %v3004 = vrot.slane %v2965, 1
      %v3005 = vsel %vm555, %v3003, %v3004
      %v3006 = vld [vmem:[%s5] sm:$0xff]
      %v3007 = vld [vmem:[%s6] sm:$0x1]
      %v3009 = vperm.slane %v3007, 0
      %v3011 = vsel %vm899, %v2984, 0
      %v3013 = vsel %vm899, %v2987, 0
      %v3015 = vsel %vm899, %v2990, 0
      %v3017 = vsel %vm899, %v2993, 0
      %v3019 = vsel %vm899, %v2996, 0
      %v3021 = vsel %vm899, %v2999, 0
      %v3023 = vsel %vm899, %v3002, 0
      %v3025 = vsel %vm899, %v3005, 0
      %3027 = vmatpush.msra.mxu0 0.0
      %3028 = vmatpush.msra.mxu0 0.0
      %3029 = vmatpush.msra.mxu0 0.0
      %3030 = vmatpush.msra.mxu0 0.0
      %3031 = vmatpush.msra.mxu0 0.0
      %3032 = vmatpush.msra.mxu0 0.0
      %3033 = vmatpush.msra.mxu0 0.0
      %3034 = vmatpush.msra.mxu0 0.0
      %3035 = vmatpush.msra.mxu0 0.0
      %3036 = vmatpush.msra.mxu0 0.0
      %3037 = vmatpush.msra.mxu0 0.0
      %3038 = vmatpush.msra.mxu0 0.0
      %3039 = vmatpush.msra.mxu0 0.0
      %3040 = vmatpush.msra.mxu0 0.0
      %3041 = vmatpush.msra.mxu0 0.0
      %3042 = vmatpush.msra.mxu0 %v3006
      %3043 = vmatmul.f32.gmra.mxu0 %v3011
      %v3044 = vpop.f32.mrf.mxu0
      %v3045 = vadd.f32 %v3009, %v3044
      %3046 = vmatmul.f32.gmra.mxu0 %v3013
      %v3047 = vpop.f32.mrf.mxu0
      %v3048 = vadd.f32 %v3009, %v3047
      %3049 = vmatmul.f32.gmra.mxu0 %v3015
      %v3050 = vpop.f32.mrf.mxu0
      %v3051 = vadd.f32 %v3009, %v3050
      %3052 = vmatmul.f32.gmra.mxu0 %v3017
      %v3053 = vpop.f32.mrf.mxu0
      %v3054 = vadd.f32 %v3009, %v3053
      %3055 = vmatmul.f32.gmra.mxu0 %v3019
      %v3056 = vpop.f32.mrf.mxu0
      %v3057 = vadd.f32 %v3009, %v3056
      %3058 = vmatmul.f32.gmra.mxu0 %v3021
      %v3059 = vpop.f32.mrf.mxu0
      %v3060 = vadd.f32 %v3009, %v3059
      %3061 = vmatmul.f32.gmra.mxu0 %v3023
      %v3062 = vpop.f32.mrf.mxu0
      %v3063 = vadd.f32 %v3009, %v3062
      %3064 = vmatmul.f32.gmra.mxu0 %v3025
      %v3065 = vpop.f32.mrf.mxu0
      %v3066 = vadd.f32 %v3009, %v3065
      %3067 = vdwg.mxu0
      %v3068 = vmul.f32 %v3045, 0.5
      %v3069 = vmul.f32 %v3048, 0.5
      %v3070 = vmul.f32 %v3051, 0.5
      %v3071 = vmul.f32 %v3054, 0.5
      %v3072 = vmul.f32 %v3057, 0.5
      %v3073 = vmul.f32 %v3060, 0.5
      %v3074 = vmul.f32 %v3063, 0.5
      %v3075 = vmul.f32 %v3066, 0.5
      %v3076 = vmul.f32 %v3045, %v979
      %v3077 = vmul.f32 %v3048, %v979
      %v3078 = vmul.f32 %v3051, %v979
      %v3079 = vmul.f32 %v3054, %v979
      %v3080 = vmul.f32 %v3057, %v979
      %v3081 = vmul.f32 %v3060, %v979
      %v3082 = vmul.f32 %v3063, %v979
      %v3083 = vmul.f32 %v3066, %v979
      %v3084 = vmul.f32 %v3076, %v3076
      %v3085 = vmin.f32 16.0, %v3084
      %v3086 = vmul.f32 %v3085, 2.1237322e-06
      %v3087 = vadd.f32 %v3086, 0.00028619796
      %v3088 = vmul.f32 %v3085, %v3087
      %v3089 = vadd.f32 %v3088, 0.0036580483
      %v3090 = vmul.f32 %v3085, %v3089
      %v3091 = vadd.f32 %v3090, 0.05243302
      %v3092 = vmul.f32 %v3085, %v3091
      %v3093 = vadd.f32 %v3092, 0.18741608
      %v3094 = vmul.f32 %v3085, %v3093
      %v3095 = vadd.f32 %v3094, 1.1283791
      %v3096 = vmul.f32 %v3076, %v3095
      %v3097 = vmul.f32 %v3085, 3.8918573e-05
      %v3098 = vadd.f32 %v3097, 0.001143296
      %v3099 = vmul.f32 %v3085, %v3098
      %v3100 = vadd.f32 %v3099, 0.014752088
      %v3101 = vmul.f32 %v3085, %v3100
      %v3102 = vadd.f32 %v3101, 0.112945676
      %v3103 = vmul.f32 %v3085, %v3102
      %v3104 = vadd.f32 %v3103, 0.4994258
      %v3105 = vmul.f32 %v3085, %v3104
      %v3106 = vadd.f32 %v3105, 1.0
      %v3107 = vrcp.pop %v3106
      %v3108 = vmul.f32 %v3106, %v3107
      %v3109 = vsub.f32 1.0, %v3108
      %v3110 = vmul.f32 %v3107, %v3109
      %v3111 = vadd.f32 %v3107, %v3110
      %vm3112 = vweird.f32 %v3106
      %vm3113 = vweird.f32 %v3107
      %vm3114 = vmor %vm3112, %vm3113
      %v3115 = vsel %vm3114, %v3107, %v3111
      %v3116 = vand.u32 2147483647, %v3106
      %vm3117 = vcmp.eq.f32.partialorder %v3116, 8.507059e+37
      %v3118 = vand.u32 %v3106, 2147483648
      %v3119 = vor.u32 1.1754944e-38, %v3118
      %v3120 = vsel %vm3117, %v3119, %v3115
      %v3121 = vmul.f32 %v3096, %v3120
      %v3122 = vmin.f32 %v3121, 1.0
      %v3123 = vmax.f32 %v3122, -1.0
      %v3124 = vmul.f32 %v3077, %v3077
      %v3125 = vmin.f32 16.0, %v3124
      %v3126 = vmul.f32 %v3125, 2.1237322e-06
      %v3127 = vadd.f32 %v3126, 0.00028619796
      %v3128 = vmul.f32 %v3125, %v3127
      %v3129 = vadd.f32 %v3128, 0.0036580483
      %v3130 = vmul.f32 %v3125, %v3129
      %v3131 = vadd.f32 %v3130, 0.05243302
      %v3132 = vmul.f32 %v3125, %v3131
      %v3133 = vadd.f32 %v3132, 0.18741608
      %v3134 = vmul.f32 %v3125, %v3133
      %v3135 = vadd.f32 %v3134, 1.1283791
      %v3136 = vmul.f32 %v3077, %v3135
      %v3137 = vmul.f32 %v3125, 3.8918573e-05
      %v3138 = vadd.f32 %v3137, 0.001143296
      %v3139 = vmul.f32 %v3125, %v3138
      %v3140 = vadd.f32 %v3139, 0.014752088
      %v3141 = vmul.f32 %v3125, %v3140
      %v3142 = vadd.f32 %v3141, 0.112945676
      %v3143 = vmul.f32 %v3125, %v3142
      %v3144 = vadd.f32 %v3143, 0.4994258
      %v3145 = vmul.f32 %v3125, %v3144
      %v3146 = vadd.f32 %v3145, 1.0
      %v3147 = vrcp.pop %v3146
      %v3148 = vmul.f32 %v3146, %v3147
      %v3149 = vsub.f32 1.0, %v3148
      %v3150 = vmul.f32 %v3147, %v3149
      %v3151 = vadd.f32 %v3147, %v3150
      %vm3152 = vweird.f32 %v3146
      %vm3153 = vweird.f32 %v3147
      %vm3154 = vmor %vm3152, %vm3153
      %v3155 = vsel %vm3154, %v3147, %v3151
      %v3156 = vand.u32 2147483647, %v3146
      %vm3157 = vcmp.eq.f32.partialorder %v3156, 8.507059e+37
      %v3158 = vand.u32 %v3146, 2147483648
      %v3159 = vor.u32 1.1754944e-38, %v3158
      %v3160 = vsel %vm3157, %v3159, %v3155
      %v3161 = vmul.f32 %v3136, %v3160
      %v3162 = vmin.f32 %v3161, 1.0
      %v3163 = vmax.f32 %v3162, -1.0
      %v3164 = vmul.f32 %v3078, %v3078
      %v3165 = vmin.f32 16.0, %v3164
      %v3166 = vmul.f32 %v3165, 2.1237322e-06
      %v3167 = vadd.f32 %v3166, 0.00028619796
      %v3168 = vmul.f32 %v3165, %v3167
      %v3169 = vadd.f32 %v3168, 0.0036580483
      %v3170 = vmul.f32 %v3165, %v3169
      %v3171 = vadd.f32 %v3170, 0.05243302
      %v3172 = vmul.f32 %v3165, %v3171
      %v3173 = vadd.f32 %v3172, 0.18741608
      %v3174 = vmul.f32 %v3165, %v3173
      %v3175 = vadd.f32 %v3174, 1.1283791
      %v3176 = vmul.f32 %v3078, %v3175
      %v3177 = vmul.f32 %v3165, 3.8918573e-05
      %v3178 = vadd.f32 %v3177, 0.001143296
      %v3179 = vmul.f32 %v3165, %v3178
      %v3180 = vadd.f32 %v3179, 0.014752088
      %v3181 = vmul.f32 %v3165, %v3180
      %v3182 = vadd.f32 %v3181, 0.112945676
      %v3183 = vmul.f32 %v3165, %v3182
      %v3184 = vadd.f32 %v3183, 0.4994258
      %v3185 = vmul.f32 %v3165, %v3184
      %v3186 = vadd.f32 %v3185, 1.0
      %v3187 = vrcp.pop %v3186
      %v3188 = vmul.f32 %v3186, %v3187
      %v3189 = vsub.f32 1.0, %v3188
      %v3190 = vmul.f32 %v3187, %v3189
      %v3191 = vadd.f32 %v3187, %v3190
      %vm3192 = vweird.f32 %v3186
      %vm3193 = vweird.f32 %v3187
      %vm3194 = vmor %vm3192, %vm3193
      %v3195 = vsel %vm3194, %v3187, %v3191
      %v3196 = vand.u32 2147483647, %v3186
      %vm3197 = vcmp.eq.f32.partialorder %v3196, 8.507059e+37
      %v3198 = vand.u32 %v3186, 2147483648
      %v3199 = vor.u32 1.1754944e-38, %v3198
      %v3200 = vsel %vm3197, %v3199, %v3195
      %v3201 = vmul.f32 %v3176, %v3200
      %v3202 = vmin.f32 %v3201, 1.0
      %v3203 = vmax.f32 %v3202, -1.0
      %v3204 = vmul.f32 %v3079, %v3079
      %v3205 = vmin.f32 16.0, %v3204
      %v3206 = vmul.f32 %v3205, 2.1237322e-06
      %v3207 = vadd.f32 %v3206, 0.00028619796
      %v3208 = vmul.f32 %v3205, %v3207
      %v3209 = vadd.f32 %v3208, 0.0036580483
      %v3210 = vmul.f32 %v3205, %v3209
      %v3211 = vadd.f32 %v3210, 0.05243302
      %v3212 = vmul.f32 %v3205, %v3211
      %v3213 = vadd.f32 %v3212, 0.18741608
      %v3214 = vmul.f32 %v3205, %v3213
      %v3215 = vadd.f32 %v3214, 1.1283791
      %v3216 = vmul.f32 %v3079, %v3215
      %v3217 = vmul.f32 %v3205, 3.8918573e-05
      %v3218 = vadd.f32 %v3217, 0.001143296
      %v3219 = vmul.f32 %v3205, %v3218
      %v3220 = vadd.f32 %v3219, 0.014752088
      %v3221 = vmul.f32 %v3205, %v3220
      %v3222 = vadd.f32 %v3221, 0.112945676
      %v3223 = vmul.f32 %v3205, %v3222
      %v3224 = vadd.f32 %v3223, 0.4994258
      %v3225 = vmul.f32 %v3205, %v3224
      %v3226 = vadd.f32 %v3225, 1.0
      %v3227 = vrcp.pop %v3226
      %v3228 = vmul.f32 %v3226, %v3227
      %v3229 = vsub.f32 1.0, %v3228
      %v3230 = vmul.f32 %v3227, %v3229
      %v3231 = vadd.f32 %v3227, %v3230
      %vm3232 = vweird.f32 %v3226
      %vm3233 = vweird.f32 %v3227
      %vm3234 = vmor %vm3232, %vm3233
      %v3235 = vsel %vm3234, %v3227, %v3231
      %v3236 = vand.u32 2147483647, %v3226
      %vm3237 = vcmp.eq.f32.partialorder %v3236, 8.507059e+37
      %v3238 = vand.u32 %v3226, 2147483648
      %v3239 = vor.u32 1.1754944e-38, %v3238
      %v3240 = vsel %vm3237, %v3239, %v3235
      %v3241 = vmul.f32 %v3216, %v3240
      %v3242 = vmin.f32 %v3241, 1.0
      %v3243 = vmax.f32 %v3242, -1.0
      %v3244 = vmul.f32 %v3080, %v3080
      %v3245 = vmin.f32 16.0, %v3244
      %v3246 = vmul.f32 %v3245, 2.1237322e-06
      %v3247 = vadd.f32 %v3246, 0.00028619796
      %v3248 = vmul.f32 %v3245, %v3247
      %v3249 = vadd.f32 %v3248, 0.0036580483
      %v3250 = vmul.f32 %v3245, %v3249
      %v3251 = vadd.f32 %v3250, 0.05243302
      %v3252 = vmul.f32 %v3245, %v3251
      %v3253 = vadd.f32 %v3252, 0.18741608
      %v3254 = vmul.f32 %v3245, %v3253
      %v3255 = vadd.f32 %v3254, 1.1283791
      %v3256 = vmul.f32 %v3080, %v3255
      %v3257 = vmul.f32 %v3245, 3.8918573e-05
      %v3258 = vadd.f32 %v3257, 0.001143296
      %v3259 = vmul.f32 %v3245, %v3258
      %v3260 = vadd.f32 %v3259, 0.014752088
      %v3261 = vmul.f32 %v3245, %v3260
      %v3262 = vadd.f32 %v3261, 0.112945676
      %v3263 = vmul.f32 %v3245, %v3262
      %v3264 = vadd.f32 %v3263, 0.4994258
      %v3265 = vmul.f32 %v3245, %v3264
      %v3266 = vadd.f32 %v3265, 1.0
      %v3267 = vrcp.pop %v3266
      %v3268 = vmul.f32 %v3266, %v3267
      %v3269 = vsub.f32 1.0, %v3268
      %v3270 = vmul.f32 %v3267, %v3269
      %v3271 = vadd.f32 %v3267, %v3270
      %vm3272 = vweird.f32 %v3266
      %vm3273 = vweird.f32 %v3267
      %vm3274 = vmor %vm3272, %vm3273
      %v3275 = vsel %vm3274, %v3267, %v3271
      %v3276 = vand.u32 2147483647, %v3266
      %vm3277 = vcmp.eq.f32.partialorder %v3276, 8.507059e+37
      %v3278 = vand.u32 %v3266, 2147483648
      %v3279 = vor.u32 1.1754944e-38, %v3278
      %v3280 = vsel %vm3277, %v3279, %v3275
      %v3281 = vmul.f32 %v3256, %v3280
      %v3282 = vmin.f32 %v3281, 1.0
      %v3283 = vmax.f32 %v3282, -1.0
      %v3284 = vmul.f32 %v3081, %v3081
      %v3285 = vmin.f32 16.0, %v3284
      %v3286 = vmul.f32 %v3285, 2.1237322e-06
      %v3287 = vadd.f32 %v3286, 0.00028619796
      %v3288 = vmul.f32 %v3285, %v3287
      %v3289 = vadd.f32 %v3288, 0.0036580483
      %v3290 = vmul.f32 %v3285, %v3289
      %v3291 = vadd.f32 %v3290, 0.05243302
      %v3292 = vmul.f32 %v3285, %v3291
      %v3293 = vadd.f32 %v3292, 0.18741608
      %v3294 = vmul.f32 %v3285, %v3293
      %v3295 = vadd.f32 %v3294, 1.1283791
      %v3296 = vmul.f32 %v3081, %v3295
      %v3297 = vmul.f32 %v3285, 3.8918573e-05
      %v3298 = vadd.f32 %v3297, 0.001143296
      %v3299 = vmul.f32 %v3285, %v3298
      %v3300 = vadd.f32 %v3299, 0.014752088
      %v3301 = vmul.f32 %v3285, %v3300
      %v3302 = vadd.f32 %v3301, 0.112945676
      %v3303 = vmul.f32 %v3285, %v3302
      %v3304 = vadd.f32 %v3303, 0.4994258
      %v3305 = vmul.f32 %v3285, %v3304
      %v3306 = vadd.f32 %v3305, 1.0
      %v3307 = vrcp.pop %v3306
      %v3308 = vmul.f32 %v3306, %v3307
      %v3309 = vsub.f32 1.0, %v3308
      %v3310 = vmul.f32 %v3307, %v3309
      %v3311 = vadd.f32 %v3307, %v3310
      %vm3312 = vweird.f32 %v3306
      %vm3313 = vweird.f32 %v3307
      %vm3314 = vmor %vm3312, %vm3313
      %v3315 = vsel %vm3314, %v3307, %v3311
      %v3316 = vand.u32 2147483647, %v3306
      %vm3317 = vcmp.eq.f32.partialorder %v3316, 8.507059e+37
      %v3318 = vand.u32 %v3306, 2147483648
      %v3319 = vor.u32 1.1754944e-38, %v3318
      %v3320 = vsel %vm3317, %v3319, %v3315
      %v3321 = vmul.f32 %v3296, %v3320
      %v3322 = vmin.f32 %v3321, 1.0
      %v3323 = vmax.f32 %v3322, -1.0
      %v3324 = vmul.f32 %v3082, %v3082
      %v3325 = vmin.f32 16.0, %v3324
      %v3326 = vmul.f32 %v3325, 2.1237322e-06
      %v3327 = vadd.f32 %v3326, 0.00028619796
      %v3328 = vmul.f32 %v3325, %v3327
      %v3329 = vadd.f32 %v3328, 0.0036580483
      %v3330 = vmul.f32 %v3325, %v3329
      %v3331 = vadd.f32 %v3330, 0.05243302
      %v3332 = vmul.f32 %v3325, %v3331
      %v3333 = vadd.f32 %v3332, 0.18741608
      %v3334 = vmul.f32 %v3325, %v3333
      %v3335 = vadd.f32 %v3334, 1.1283791
      %v3336 = vmul.f32 %v3082, %v3335
      %v3337 = vmul.f32 %v3325, 3.8918573e-05
      %v3338 = vadd.f32 %v3337, 0.001143296
      %v3339 = vmul.f32 %v3325, %v3338
      %v3340 = vadd.f32 %v3339, 0.014752088
      %v3341 = vmul.f32 %v3325, %v3340
      %v3342 = vadd.f32 %v3341, 0.112945676
      %v3343 = vmul.f32 %v3325, %v3342
      %v3344 = vadd.f32 %v3343, 0.4994258
      %v3345 = vmul.f32 %v3325, %v3344
      %v3346 = vadd.f32 %v3345, 1.0
      %v3347 = vrcp.pop %v3346
      %v3348 = vmul.f32 %v3346, %v3347
      %v3349 = vsub.f32 1.0, %v3348
      %v3350 = vmul.f32 %v3347, %v3349
      %v3351 = vadd.f32 %v3347, %v3350
      %vm3352 = vweird.f32 %v3346
      %vm3353 = vweird.f32 %v3347
      %vm3354 = vmor %vm3352, %vm3353
      %v3355 = vsel %vm3354, %v3347, %v3351
      %v3356 = vand.u32 2147483647, %v3346
      %vm3357 = vcmp.eq.f32.partialorder %v3356, 8.507059e+37
      %v3358 = vand.u32 %v3346, 2147483648
      %v3359 = vor.u32 1.1754944e-38, %v3358
      %v3360 = vsel %vm3357, %v3359, %v3355
      %v3361 = vmul.f32 %v3336, %v3360
      %v3362 = vmin.f32 %v3361, 1.0
      %v3363 = vmax.f32 %v3362, -1.0
      %v3364 = vmul.f32 %v3083, %v3083
      %v3365 = vmin.f32 16.0, %v3364
      %v3366 = vmul.f32 %v3365, 2.1237322e-06
      %v3367 = vadd.f32 %v3366, 0.00028619796
      %v3368 = vmul.f32 %v3365, %v3367
      %v3369 = vadd.f32 %v3368, 0.0036580483
      %v3370 = vmul.f32 %v3365, %v3369
      %v3371 = vadd.f32 %v3370, 0.05243302
      %v3372 = vmul.f32 %v3365, %v3371
      %v3373 = vadd.f32 %v3372, 0.18741608
      %v3374 = vmul.f32 %v3365, %v3373
      %v3375 = vadd.f32 %v3374, 1.1283791
      %v3376 = vmul.f32 %v3083, %v3375
      %v3377 = vmul.f32 %v3365, 3.8918573e-05
      %v3378 = vadd.f32 %v3377, 0.001143296
      %v3379 = vmul.f32 %v3365, %v3378
      %v3380 = vadd.f32 %v3379, 0.014752088
      %v3381 = vmul.f32 %v3365, %v3380
      %v3382 = vadd.f32 %v3381, 0.112945676
      %v3383 = vmul.f32 %v3365, %v3382
      %v3384 = vadd.f32 %v3383, 0.4994258
      %v3385 = vmul.f32 %v3365, %v3384
      %v3386 = vadd.f32 %v3385, 1.0
      %v3387 = vrcp.pop %v3386
      %v3388 = vmul.f32 %v3386, %v3387
      %v3389 = vsub.f32 1.0, %v3388
      %v3390 = vmul.f32 %v3387, %v3389
      %v3391 = vadd.f32 %v3387, %v3390
      %vm3392 = vweird.f32 %v3386
      %vm3393 = vweird.f32 %v3387
      %vm3394 = vmor %vm3392, %vm3393
      %v3395 = vsel %vm3394, %v3387, %v3391
      %v3396 = vand.u32 2147483647, %v3386
      %vm3397 = vcmp.eq.f32.partialorder %v3396, 8.507059e+37
      %v3398 = vand.u32 %v3386, 2147483648
      %v3399 = vor.u32 1.1754944e-38, %v3398
      %v3400 = vsel %vm3397, %v3399, %v3395
      %v3401 = vmul.f32 %v3376, %v3400
      %v3402 = vmin.f32 %v3401, 1.0
      %v3403 = vmax.f32 %v3402, -1.0
      %v3404 = vadd.f32 %v3123, 1.0
      %v3405 = vadd.f32 %v3163, 1.0
      %v3406 = vadd.f32 %v3203, 1.0
      %v3407 = vadd.f32 %v3243, 1.0
      %v3408 = vadd.f32 %v3283, 1.0
      %v3409 = vadd.f32 %v3323, 1.0
      %v3410 = vadd.f32 %v3363, 1.0
      %v3411 = vadd.f32 %v3403, 1.0
      %v3412 = vmul.f32 %v3068, %v3404
      %v3413 = vmul.f32 %v3069, %v3405
      %v3414 = vmul.f32 %v3070, %v3406
      %v3415 = vmul.f32 %v3071, %v3407
      %v3416 = vmul.f32 %v3072, %v3408
      %v3417 = vmul.f32 %v3073, %v3409
      %v3418 = vmul.f32 %v3074, %v3410
      %v3419 = vmul.f32 %v3075, %v3411
      %v3420 = vld [vmem:[%s7] sm:$0xff]
      %v3421 = vld [vmem:[%s7 + $0x8] sm:$0xff]
      %v3422 = vld [vmem:[%s8] sm:$0x1]
      %v3424 = vperm.slane %v3422, 0
      %v3427 = vsel %vm1330, %v3412, 0
      %v3430 = vsel %vm1330, %v3413, 0
      %v3433 = vsel %vm1330, %v3414, 0
      %v3436 = vsel %vm1330, %v3415, 0
      %v3439 = vsel %vm1330, %v3416, 0
      %v3442 = vsel %vm1330, %v3417, 0
      %v3445 = vsel %vm1330, %v3418, 0
      %v3448 = vsel %vm1330, %v3419, 0
      %3450 = vmatpush.msra.mxu0 0.0
      %3451 = vmatpush.msra.mxu0 0.0
      %3452 = vmatpush.msra.mxu0 0.0
      %3453 = vmatpush.msra.mxu0 0.0
      %3454 = vmatpush.msra.mxu0 0.0
      %3455 = vmatpush.msra.mxu0 0.0
      %3456 = vmatpush.msra.mxu0 0.0
      %3457 = vmatpush.msra.mxu0 0.0
      %3458 = vmatpush.msra.mxu0 0.0
      %3459 = vmatpush.msra.mxu0 0.0
      %3460 = vmatpush.msra.mxu0 0.0
      %3461 = vmatpush.msra.mxu0 0.0
      %3462 = vmatpush.msra.mxu0 0.0
      %3463 = vmatpush.msra.mxu0 0.0
      %3464 = vmatpush.msra.mxu0 %v3421
      %3465 = vmatpush.msra.mxu0 %v3420
      %3466 = vmatmul.f32.gmra.mxu0 %v3427
      %v3467 = vpop.f32.mrf.mxu0
      %v3468 = vadd.f32 %v3424, %v3467
      %3469 = vmatmul.f32.gmra.mxu0 %v3430
      %v3470 = vpop.f32.mrf.mxu0
      %v3471 = vadd.f32 %v3424, %v3470
      %3472 = vmatmul.f32.gmra.mxu0 %v3433
      %v3473 = vpop.f32.mrf.mxu0
      %v3474 = vadd.f32 %v3424, %v3473
      %3475 = vmatmul.f32.gmra.mxu0 %v3436
      %v3476 = vpop.f32.mrf.mxu0
      %v3477 = vadd.f32 %v3424, %v3476
      %3478 = vmatmul.f32.gmra.mxu0 %v3439
      %v3479 = vpop.f32.mrf.mxu0
      %v3480 = vadd.f32 %v3424, %v3479
      %3481 = vmatmul.f32.gmra.mxu0 %v3442
      %v3482 = vpop.f32.mrf.mxu0
      %v3483 = vadd.f32 %v3424, %v3482
      %3484 = vmatmul.f32.gmra.mxu0 %v3445
      %v3485 = vpop.f32.mrf.mxu0
      %v3486 = vadd.f32 %v3424, %v3485
      %3487 = vmatmul.f32.gmra.mxu0 %v3448
      %v3488 = vpop.f32.mrf.mxu0
      %v3489 = vadd.f32 %v3424, %v3488
      %3490 = vdwg.mxu0
      %v3491 = vsel %vm1412, %v3468, 0.0
      %v3492 = vsel %vm1412, %v3471, 0.0
      %v3493 = vsel %vm1412, %v3474, 0.0
      %v3494 = vsel %vm1412, %v3477, 0.0
      %v3495 = vsel %vm1412, %v3480, 0.0
      %v3496 = vsel %vm1412, %v3483, 0.0
      %v3497 = vsel %vm1412, %v3486, 0.0
      %v3498 = vsel %vm1412, %v3489, 0.0
      %s3499 = scalar_lea.vmem %s464, 192
      %3500 = vst.msk [vmem:[%s3499] sm:$0xff] %vm1421, %v3491
      %3501 = vst.msk [vmem:[%s3499 + $0x8] sm:$0xff] %vm1421, %v3492
      %3502 = vst.msk [vmem:[%s3499 + $0x10] sm:$0xff] %vm1421, %v3493
      %3503 = vst.msk [vmem:[%s3499 + $0x18] sm:$0xff] %vm1421, %v3494
      %3504 = vst.msk [vmem:[%s3499 + $0x20] sm:$0xff] %vm1421, %v3495
      %3505 = vst.msk [vmem:[%s3499 + $0x28] sm:$0xff] %vm1421, %v3496
      %3506 = vst.msk [vmem:[%s3499 + $0x30] sm:$0xff] %vm1421, %v3497
      %3507 = vst.msk [vmem:[%s3499 + $0x38] sm:$0xff] %vm1421, %v3498
      %v3508 = vld [vmem:[%s2 + $0x11] sm:$0x1]
      %v3509 = vperm.slane %v3508, 0
      %v3510 = vmul.f32 %v483, %v3509
      %v3511 = vmul.f32 %v485, %v3509
      %v3512 = vmul.f32 %v487, %v3509
      %v3513 = vmul.f32 %v489, %v3509
      %v3514 = vmul.f32 %v491, %v3509
      %v3515 = vmul.f32 %v493, %v3509
      %v3516 = vmul.f32 %v495, %v3509
      %v3517 = vmul.f32 %v497, %v3509
      %v3518 = vadd.f32 %v3510, 0.0
      %v3519 = vadd.f32 %v3511, 0.0
      %v3520 = vadd.f32 %v3512, 0.0
      %v3521 = vadd.f32 %v3513, 0.0
      %v3522 = vadd.f32 %v3514, 0.0
      %v3523 = vadd.f32 %v3515, 0.0
      %v3524 = vadd.f32 %v3516, 0.0
      %v3525 = vadd.f32 %v3517, 0.0
      %v3526 = vld [vmem:[%s2 + $0xf] sm:$0x1]
      %v3527 = vperm.slane %v3526, 0
      %v3528 = vmul.f32 %v483, %v3527
      %v3529 = vmul.f32 %v484, %v3527
      %v3530 = vmul.f32 %v485, %v3527
      %v3531 = vmul.f32 %v486, %v3527
      %v3532 = vmul.f32 %v487, %v3527
      %v3533 = vmul.f32 %v488, %v3527
      %v3534 = vmul.f32 %v489, %v3527
      %v3535 = vmul.f32 %v490, %v3527
      %v3536 = vmul.f32 %v491, %v3527
      %v3537 = vmul.f32 %v492, %v3527
      %v3538 = vmul.f32 %v493, %v3527
      %v3539 = vmul.f32 %v494, %v3527
      %v3540 = vmul.f32 %v495, %v3527
      %v3541 = vmul.f32 %v496, %v3527
      %v3542 = vmul.f32 %v497, %v3527
      %v3543 = vmul.f32 %v498, %v3527
      %v3560 = vrot.slane %v3528, 1
      %v3561 = vrot.slane %v3529, 1
      %v3562 = vsel %vm555, %v3560, %v3561
      %v3563 = vrot.slane %v3530, 1
      %v3564 = vrot.slane %v3531, 1
      %v3565 = vsel %vm555, %v3563, %v3564
      %v3566 = vrot.slane %v3532, 1
      %v3567 = vrot.slane %v3533, 1
      %v3568 = vsel %vm555, %v3566, %v3567
      %v3569 = vrot.slane %v3534, 1
      %v3570 = vrot.slane %v3535, 1
      %v3571 = vsel %vm555, %v3569, %v3570
      %v3572 = vrot.slane %v3536, 1
      %v3573 = vrot.slane %v3537, 1
      %v3574 = vsel %vm555, %v3572, %v3573
      %v3575 = vrot.slane %v3538, 1
      %v3576 = vrot.slane %v3539, 1
      %v3577 = vsel %vm555, %v3575, %v3576
      %v3578 = vrot.slane %v3540, 1
      %v3579 = vrot.slane %v3541, 1
      %v3580 = vsel %vm555, %v3578, %v3579
      %v3581 = vrot.slane %v3542, 1
      %v3582 = vrot.slane %v3543, 1
      %v3583 = vsel %vm555, %v3581, %v3582
      %v3592 = vadd.f32 %v3518, %v3562
      %v3593 = vadd.f32 %v3519, %v3565
      %v3594 = vadd.f32 %v3520, %v3568
      %v3595 = vadd.f32 %v3521, %v3571
      %v3596 = vadd.f32 %v3522, %v3574
      %v3597 = vadd.f32 %v3523, %v3577
      %v3598 = vadd.f32 %v3524, %v3580
      %v3599 = vadd.f32 %v3525, %v3583
      %v3600 = vld [vmem:[%s2 + $0xb] sm:$0x1]
      %v3601 = vperm.slane %v3600, 0
      %v3602 = vmul.f32 %v485, %v3601
      %v3603 = vmul.f32 %v487, %v3601
      %v3604 = vmul.f32 %v489, %v3601
      %v3605 = vmul.f32 %v491, %v3601
      %v3606 = vmul.f32 %v493, %v3601
      %v3607 = vmul.f32 %v495, %v3601
      %v3608 = vmul.f32 %v497, %v3601
      %v3609 = vmul.f32 %v499, %v3601
      %v3610 = vadd.f32 %v3592, %v3602
      %v3611 = vadd.f32 %v3593, %v3603
      %v3612 = vadd.f32 %v3594, %v3604
      %v3613 = vadd.f32 %v3595, %v3605
      %v3614 = vadd.f32 %v3596, %v3606
      %v3615 = vadd.f32 %v3597, %v3607
      %v3616 = vadd.f32 %v3598, %v3608
      %v3617 = vadd.f32 %v3599, %v3609
      %v3618 = vld [vmem:[%s2 + $0x9] sm:$0x1]
      %v3619 = vperm.slane %v3618, 0
      %v3620 = vmul.f32 %v485, %v3619
      %v3621 = vmul.f32 %v486, %v3619
      %v3622 = vmul.f32 %v487, %v3619
      %v3623 = vmul.f32 %v488, %v3619
      %v3624 = vmul.f32 %v489, %v3619
      %v3625 = vmul.f32 %v490, %v3619
      %v3626 = vmul.f32 %v491, %v3619
      %v3627 = vmul.f32 %v492, %v3619
      %v3628 = vmul.f32 %v493, %v3619
      %v3629 = vmul.f32 %v494, %v3619
      %v3630 = vmul.f32 %v495, %v3619
      %v3631 = vmul.f32 %v496, %v3619
      %v3632 = vmul.f32 %v497, %v3619
      %v3633 = vmul.f32 %v498, %v3619
      %v3634 = vmul.f32 %v499, %v3619
      %v3635 = vmul.f32 %v500, %v3619
      %v3652 = vrot.slane %v3620, 1
      %v3653 = vrot.slane %v3621, 1
      %v3654 = vsel %vm555, %v3652, %v3653
      %v3655 = vrot.slane %v3622, 1
      %v3656 = vrot.slane %v3623, 1
      %v3657 = vsel %vm555, %v3655, %v3656
      %v3658 = vrot.slane %v3624, 1
      %v3659 = vrot.slane %v3625, 1
      %v3660 = vsel %vm555, %v3658, %v3659
      %v3661 = vrot.slane %v3626, 1
      %v3662 = vrot.slane %v3627, 1
      %v3663 = vsel %vm555, %v3661, %v3662
      %v3664 = vrot.slane %v3628, 1
      %v3665 = vrot.slane %v3629, 1
      %v3666 = vsel %vm555, %v3664, %v3665
      %v3667 = vrot.slane %v3630, 1
      %v3668 = vrot.slane %v3631, 1
      %v3669 = vsel %vm555, %v3667, %v3668
      %v3670 = vrot.slane %v3632, 1
      %v3671 = vrot.slane %v3633, 1
      %v3672 = vsel %vm555, %v3670, %v3671
      %v3673 = vrot.slane %v3634, 1
      %v3674 = vrot.slane %v3635, 1
      %v3675 = vsel %vm555, %v3673, %v3674
      %v3684 = vadd.f32 %v3610, %v3654
      %v3685 = vadd.f32 %v3611, %v3657
      %v3686 = vadd.f32 %v3612, %v3660
      %v3687 = vadd.f32 %v3613, %v3663
      %v3688 = vadd.f32 %v3614, %v3666
      %v3689 = vadd.f32 %v3615, %v3669
      %v3690 = vadd.f32 %v3616, %v3672
      %v3691 = vadd.f32 %v3617, %v3675
      %v3692 = vsub.f32 %v3684, %v873
      %v3693 = vsub.f32 %v3685, %v873
      %v3694 = vsub.f32 %v3686, %v873
      %v3695 = vsub.f32 %v3687, %v873
      %v3696 = vsub.f32 %v3688, %v873
      %v3697 = vsub.f32 %v3689, %v873
      %v3698 = vsub.f32 %v3690, %v873
      %v3699 = vsub.f32 %v3691, %v873
      %v3700 = vmul.f32 %v3692, %v884
      %v3701 = vmul.f32 %v3693, %v884
      %v3702 = vmul.f32 %v3694, %v884
      %v3703 = vmul.f32 %v3695, %v884
      %v3704 = vmul.f32 %v3696, %v884
      %v3705 = vmul.f32 %v3697, %v884
      %v3706 = vmul.f32 %v3698, %v884
      %v3707 = vmul.f32 %v3699, %v884
      %v3708 = vld [vmem:[%s5] sm:$0xff]
      %v3709 = vld [vmem:[%s6] sm:$0x1]
      %v3711 = vperm.slane %v3709, 0
      %v3714 = vsel %vm899, %v3700, 0
      %v3717 = vsel %vm899, %v3701, 0
      %v3720 = vsel %vm899, %v3702, 0
      %v3723 = vsel %vm899, %v3703, 0
      %v3726 = vsel %vm899, %v3704, 0
      %v3729 = vsel %vm899, %v3705, 0
      %v3732 = vsel %vm899, %v3706, 0
      %v3735 = vsel %vm899, %v3707, 0
      %3737 = vmatpush.msra.mxu0 0.0
      %3738 = vmatpush.msra.mxu0 0.0
      %3739 = vmatpush.msra.mxu0 0.0
      %3740 = vmatpush.msra.mxu0 0.0
      %3741 = vmatpush.msra.mxu0 0.0
      %3742 = vmatpush.msra.mxu0 0.0
      %3743 = vmatpush.msra.mxu0 0.0
      %3744 = vmatpush.msra.mxu0 0.0
      %3745 = vmatpush.msra.mxu0 0.0
      %3746 = vmatpush.msra.mxu0 0.0
      %3747 = vmatpush.msra.mxu0 0.0
      %3748 = vmatpush.msra.mxu0 0.0
      %3749 = vmatpush.msra.mxu0 0.0
      %3750 = vmatpush.msra.mxu0 0.0
      %3751 = vmatpush.msra.mxu0 0.0
      %3752 = vmatpush.msra.mxu0 %v3708
      %3753 = vmatmul.f32.gmra.mxu0 %v3714
      %v3754 = vpop.f32.mrf.mxu0
      %v3755 = vadd.f32 %v3711, %v3754
      %3756 = vmatmul.f32.gmra.mxu0 %v3717
      %v3757 = vpop.f32.mrf.mxu0
      %v3758 = vadd.f32 %v3711, %v3757
      %3759 = vmatmul.f32.gmra.mxu0 %v3720
      %v3760 = vpop.f32.mrf.mxu0
      %v3761 = vadd.f32 %v3711, %v3760
      %3762 = vmatmul.f32.gmra.mxu0 %v3723
      %v3763 = vpop.f32.mrf.mxu0
      %v3764 = vadd.f32 %v3711, %v3763
      %3765 = vmatmul.f32.gmra.mxu0 %v3726
      %v3766 = vpop.f32.mrf.mxu0
      %v3767 = vadd.f32 %v3711, %v3766
      %3768 = vmatmul.f32.gmra.mxu0 %v3729
      %v3769 = vpop.f32.mrf.mxu0
      %v3770 = vadd.f32 %v3711, %v3769
      %3771 = vmatmul.f32.gmra.mxu0 %v3732
      %v3772 = vpop.f32.mrf.mxu0
      %v3773 = vadd.f32 %v3711, %v3772
      %3774 = vmatmul.f32.gmra.mxu0 %v3735
      %v3775 = vpop.f32.mrf.mxu0
      %v3776 = vadd.f32 %v3711, %v3775
      %3777 = vdwg.mxu0
      %v3778 = vmul.f32 %v3755, 0.5
      %v3779 = vmul.f32 %v3758, 0.5
      %v3780 = vmul.f32 %v3761, 0.5
      %v3781 = vmul.f32 %v3764, 0.5
      %v3782 = vmul.f32 %v3767, 0.5
      %v3783 = vmul.f32 %v3770, 0.5
      %v3784 = vmul.f32 %v3773, 0.5
      %v3785 = vmul.f32 %v3776, 0.5
      %v3786 = vmul.f32 %v3755, %v979
      %v3787 = vmul.f32 %v3758, %v979
      %v3788 = vmul.f32 %v3761, %v979
      %v3789 = vmul.f32 %v3764, %v979
      %v3790 = vmul.f32 %v3767, %v979
      %v3791 = vmul.f32 %v3770, %v979
      %v3792 = vmul.f32 %v3773, %v979
      %v3793 = vmul.f32 %v3776, %v979
      %v3794 = vmul.f32 %v3786, %v3786
      %v3795 = vmin.f32 16.0, %v3794
      %v3796 = vmul.f32 %v3795, 2.1237322e-06
      %v3797 = vadd.f32 %v3796, 0.00028619796
      %v3798 = vmul.f32 %v3795, %v3797
      %v3799 = vadd.f32 %v3798, 0.0036580483
      %v3800 = vmul.f32 %v3795, %v3799
      %v3801 = vadd.f32 %v3800, 0.05243302
      %v3802 = vmul.f32 %v3795, %v3801
      %v3803 = vadd.f32 %v3802, 0.18741608
      %v3804 = vmul.f32 %v3795, %v3803
      %v3805 = vadd.f32 %v3804, 1.1283791
      %v3806 = vmul.f32 %v3786, %v3805
      %v3807 = vmul.f32 %v3795, 3.8918573e-05
      %v3808 = vadd.f32 %v3807, 0.001143296
      %v3809 = vmul.f32 %v3795, %v3808
      %v3810 = vadd.f32 %v3809, 0.014752088
      %v3811 = vmul.f32 %v3795, %v3810
      %v3812 = vadd.f32 %v3811, 0.112945676
      %v3813 = vmul.f32 %v3795, %v3812
      %v3814 = vadd.f32 %v3813, 0.4994258
      %v3815 = vmul.f32 %v3795, %v3814
      %v3816 = vadd.f32 %v3815, 1.0
      %v3817 = vrcp.pop %v3816
      %v3818 = vmul.f32 %v3816, %v3817
      %v3819 = vsub.f32 1.0, %v3818
      %v3820 = vmul.f32 %v3817, %v3819
      %v3821 = vadd.f32 %v3817, %v3820
      %vm3822 = vweird.f32 %v3816
      %vm3823 = vweird.f32 %v3817
      %vm3824 = vmor %vm3822, %vm3823
      %v3825 = vsel %vm3824, %v3817, %v3821
      %v3826 = vand.u32 2147483647, %v3816
      %vm3827 = vcmp.eq.f32.partialorder %v3826, 8.507059e+37
      %v3828 = vand.u32 %v3816, 2147483648
      %v3829 = vor.u32 1.1754944e-38, %v3828
      %v3830 = vsel %vm3827, %v3829, %v3825
      %v3831 = vmul.f32 %v3806, %v3830
      %v3832 = vmin.f32 %v3831, 1.0
      %v3833 = vmax.f32 %v3832, -1.0
      %v3834 = vmul.f32 %v3787, %v3787
      %v3835 = vmin.f32 16.0, %v3834
      %v3836 = vmul.f32 %v3835, 2.1237322e-06
      %v3837 = vadd.f32 %v3836, 0.00028619796
      %v3838 = vmul.f32 %v3835, %v3837
      %v3839 = vadd.f32 %v3838, 0.0036580483
      %v3840 = vmul.f32 %v3835, %v3839
      %v3841 = vadd.f32 %v3840, 0.05243302
      %v3842 = vmul.f32 %v3835, %v3841
      %v3843 = vadd.f32 %v3842, 0.18741608
      %v3844 = vmul.f32 %v3835, %v3843
      %v3845 = vadd.f32 %v3844, 1.1283791
      %v3846 = vmul.f32 %v3787, %v3845
      %v3847 = vmul.f32 %v3835, 3.8918573e-05
      %v3848 = vadd.f32 %v3847, 0.001143296
      %v3849 = vmul.f32 %v3835, %v3848
      %v3850 = vadd.f32 %v3849, 0.014752088
      %v3851 = vmul.f32 %v3835, %v3850
      %v3852 = vadd.f32 %v3851, 0.112945676
      %v3853 = vmul.f32 %v3835, %v3852
      %v3854 = vadd.f32 %v3853, 0.4994258
      %v3855 = vmul.f32 %v3835, %v3854
      %v3856 = vadd.f32 %v3855, 1.0
      %v3857 = vrcp.pop %v3856
      %v3858 = vmul.f32 %v3856, %v3857
      %v3859 = vsub.f32 1.0, %v3858
      %v3860 = vmul.f32 %v3857, %v3859
      %v3861 = vadd.f32 %v3857, %v3860
      %vm3862 = vweird.f32 %v3856
      %vm3863 = vweird.f32 %v3857
      %vm3864 = vmor %vm3862, %vm3863
      %v3865 = vsel %vm3864, %v3857, %v3861
      %v3866 = vand.u32 2147483647, %v3856
      %vm3867 = vcmp.eq.f32.partialorder %v3866, 8.507059e+37
      %v3868 = vand.u32 %v3856, 2147483648
      %v3869 = vor.u32 1.1754944e-38, %v3868
      %v3870 = vsel %vm3867, %v3869, %v3865
      %v3871 = vmul.f32 %v3846, %v3870
      %v3872 = vmin.f32 %v3871, 1.0
      %v3873 = vmax.f32 %v3872, -1.0
      %v3874 = vmul.f32 %v3788, %v3788
      %v3875 = vmin.f32 16.0, %v3874
      %v3876 = vmul.f32 %v3875, 2.1237322e-06
      %v3877 = vadd.f32 %v3876, 0.00028619796
      %v3878 = vmul.f32 %v3875, %v3877
      %v3879 = vadd.f32 %v3878, 0.0036580483
      %v3880 = vmul.f32 %v3875, %v3879
      %v3881 = vadd.f32 %v3880, 0.05243302
      %v3882 = vmul.f32 %v3875, %v3881
      %v3883 = vadd.f32 %v3882, 0.18741608
      %v3884 = vmul.f32 %v3875, %v3883
      %v3885 = vadd.f32 %v3884, 1.1283791
      %v3886 = vmul.f32 %v3788, %v3885
      %v3887 = vmul.f32 %v3875, 3.8918573e-05
      %v3888 = vadd.f32 %v3887, 0.001143296
      %v3889 = vmul.f32 %v3875, %v3888
      %v3890 = vadd.f32 %v3889, 0.014752088
      %v3891 = vmul.f32 %v3875, %v3890
      %v3892 = vadd.f32 %v3891, 0.112945676
      %v3893 = vmul.f32 %v3875, %v3892
      %v3894 = vadd.f32 %v3893, 0.4994258
      %v3895 = vmul.f32 %v3875, %v3894
      %v3896 = vadd.f32 %v3895, 1.0
      %v3897 = vrcp.pop %v3896
      %v3898 = vmul.f32 %v3896, %v3897
      %v3899 = vsub.f32 1.0, %v3898
      %v3900 = vmul.f32 %v3897, %v3899
      %v3901 = vadd.f32 %v3897, %v3900
      %vm3902 = vweird.f32 %v3896
      %vm3903 = vweird.f32 %v3897
      %vm3904 = vmor %vm3902, %vm3903
      %v3905 = vsel %vm3904, %v3897, %v3901
      %v3906 = vand.u32 2147483647, %v3896
      %vm3907 = vcmp.eq.f32.partialorder %v3906, 8.507059e+37
      %v3908 = vand.u32 %v3896, 2147483648
      %v3909 = vor.u32 1.1754944e-38, %v3908
      %v3910 = vsel %vm3907, %v3909, %v3905
      %v3911 = vmul.f32 %v3886, %v3910
      %v3912 = vmin.f32 %v3911, 1.0
      %v3913 = vmax.f32 %v3912, -1.0
      %v3914 = vmul.f32 %v3789, %v3789
      %v3915 = vmin.f32 16.0, %v3914
      %v3916 = vmul.f32 %v3915, 2.1237322e-06
      %v3917 = vadd.f32 %v3916, 0.00028619796
      %v3918 = vmul.f32 %v3915, %v3917
      %v3919 = vadd.f32 %v3918, 0.0036580483
      %v3920 = vmul.f32 %v3915, %v3919
      %v3921 = vadd.f32 %v3920, 0.05243302
      %v3922 = vmul.f32 %v3915, %v3921
      %v3923 = vadd.f32 %v3922, 0.18741608
      %v3924 = vmul.f32 %v3915, %v3923
      %v3925 = vadd.f32 %v3924, 1.1283791
      %v3926 = vmul.f32 %v3789, %v3925
      %v3927 = vmul.f32 %v3915, 3.8918573e-05
      %v3928 = vadd.f32 %v3927, 0.001143296
      %v3929 = vmul.f32 %v3915, %v3928
      %v3930 = vadd.f32 %v3929, 0.014752088
      %v3931 = vmul.f32 %v3915, %v3930
      %v3932 = vadd.f32 %v3931, 0.112945676
      %v3933 = vmul.f32 %v3915, %v3932
      %v3934 = vadd.f32 %v3933, 0.4994258
      %v3935 = vmul.f32 %v3915, %v3934
      %v3936 = vadd.f32 %v3935, 1.0
      %v3937 = vrcp.pop %v3936
      %v3938 = vmul.f32 %v3936, %v3937
      %v3939 = vsub.f32 1.0, %v3938
      %v3940 = vmul.f32 %v3937, %v3939
      %v3941 = vadd.f32 %v3937, %v3940
      %vm3942 = vweird.f32 %v3936
      %vm3943 = vweird.f32 %v3937
      %vm3944 = vmor %vm3942, %vm3943
      %v3945 = vsel %vm3944, %v3937, %v3941
      %v3946 = vand.u32 2147483647, %v3936
      %vm3947 = vcmp.eq.f32.partialorder %v3946, 8.507059e+37
      %v3948 = vand.u32 %v3936, 2147483648
      %v3949 = vor.u32 1.1754944e-38, %v3948
      %v3950 = vsel %vm3947, %v3949, %v3945
      %v3951 = vmul.f32 %v3926, %v3950
      %v3952 = vmin.f32 %v3951, 1.0
      %v3953 = vmax.f32 %v3952, -1.0
      %v3954 = vmul.f32 %v3790, %v3790
      %v3955 = vmin.f32 16.0, %v3954
      %v3956 = vmul.f32 %v3955, 2.1237322e-06
      %v3957 = vadd.f32 %v3956, 0.00028619796
      %v3958 = vmul.f32 %v3955, %v3957
      %v3959 = vadd.f32 %v3958, 0.0036580483
      %v3960 = vmul.f32 %v3955, %v3959
      %v3961 = vadd.f32 %v3960, 0.05243302
      %v3962 = vmul.f32 %v3955, %v3961
      %v3963 = vadd.f32 %v3962, 0.18741608
      %v3964 = vmul.f32 %v3955, %v3963
      %v3965 = vadd.f32 %v3964, 1.1283791
      %v3966 = vmul.f32 %v3790, %v3965
      %v3967 = vmul.f32 %v3955, 3.8918573e-05
      %v3968 = vadd.f32 %v3967, 0.001143296
      %v3969 = vmul.f32 %v3955, %v3968
      %v3970 = vadd.f32 %v3969, 0.014752088
      %v3971 = vmul.f32 %v3955, %v3970
      %v3972 = vadd.f32 %v3971, 0.112945676
      %v3973 = vmul.f32 %v3955, %v3972
      %v3974 = vadd.f32 %v3973, 0.4994258
      %v3975 = vmul.f32 %v3955, %v3974
      %v3976 = vadd.f32 %v3975, 1.0
      %v3977 = vrcp.pop %v3976
      %v3978 = vmul.f32 %v3976, %v3977
      %v3979 = vsub.f32 1.0, %v3978
      %v3980 = vmul.f32 %v3977, %v3979
      %v3981 = vadd.f32 %v3977, %v3980
      %vm3982 = vweird.f32 %v3976
      %vm3983 = vweird.f32 %v3977
      %vm3984 = vmor %vm3982, %vm3983
      %v3985 = vsel %vm3984, %v3977, %v3981
      %v3986 = vand.u32 2147483647, %v3976
      %vm3987 = vcmp.eq.f32.partialorder %v3986, 8.507059e+37
      %v3988 = vand.u32 %v3976, 2147483648
      %v3989 = vor.u32 1.1754944e-38, %v3988
      %v3990 = vsel %vm3987, %v3989, %v3985
      %v3991 = vmul.f32 %v3966, %v3990
      %v3992 = vmin.f32 %v3991, 1.0
      %v3993 = vmax.f32 %v3992, -1.0
      %v3994 = vmul.f32 %v3791, %v3791
      %v3995 = vmin.f32 16.0, %v3994
      %v3996 = vmul.f32 %v3995, 2.1237322e-06
      %v3997 = vadd.f32 %v3996, 0.00028619796
      %v3998 = vmul.f32 %v3995, %v3997
      %v3999 = vadd.f32 %v3998, 0.0036580483
      %v4000 = vmul.f32 %v3995, %v3999
      %v4001 = vadd.f32 %v4000, 0.05243302
      %v4002 = vmul.f32 %v3995, %v4001
      %v4003 = vadd.f32 %v4002, 0.18741608
      %v4004 = vmul.f32 %v3995, %v4003
      %v4005 = vadd.f32 %v4004, 1.1283791
      %v4006 = vmul.f32 %v3791, %v4005
      %v4007 = vmul.f32 %v3995, 3.8918573e-05
      %v4008 = vadd.f32 %v4007, 0.001143296
      %v4009 = vmul.f32 %v3995, %v4008
      %v4010 = vadd.f32 %v4009, 0.014752088
      %v4011 = vmul.f32 %v3995, %v4010
      %v4012 = vadd.f32 %v4011, 0.112945676
      %v4013 = vmul.f32 %v3995, %v4012
      %v4014 = vadd.f32 %v4013, 0.4994258
      %v4015 = vmul.f32 %v3995, %v4014
      %v4016 = vadd.f32 %v4015, 1.0
      %v4017 = vrcp.pop %v4016
      %v4018 = vmul.f32 %v4016, %v4017
      %v4019 = vsub.f32 1.0, %v4018
      %v4020 = vmul.f32 %v4017, %v4019
      %v4021 = vadd.f32 %v4017, %v4020
      %vm4022 = vweird.f32 %v4016
      %vm4023 = vweird.f32 %v4017
      %vm4024 = vmor %vm4022, %vm4023
      %v4025 = vsel %vm4024, %v4017, %v4021
      %v4026 = vand.u32 2147483647, %v4016
      %vm4027 = vcmp.eq.f32.partialorder %v4026, 8.507059e+37
      %v4028 = vand.u32 %v4016, 2147483648
      %v4029 = vor.u32 1.1754944e-38, %v4028
      %v4030 = vsel %vm4027, %v4029, %v4025
      %v4031 = vmul.f32 %v4006, %v4030
      %v4032 = vmin.f32 %v4031, 1.0
      %v4033 = vmax.f32 %v4032, -1.0
      %v4034 = vmul.f32 %v3792, %v3792
      %v4035 = vmin.f32 16.0, %v4034
      %v4036 = vmul.f32 %v4035, 2.1237322e-06
      %v4037 = vadd.f32 %v4036, 0.00028619796
      %v4038 = vmul.f32 %v4035, %v4037
      %v4039 = vadd.f32 %v4038, 0.0036580483
      %v4040 = vmul.f32 %v4035, %v4039
      %v4041 = vadd.f32 %v4040, 0.05243302
      %v4042 = vmul.f32 %v4035, %v4041
      %v4043 = vadd.f32 %v4042, 0.18741608
      %v4044 = vmul.f32 %v4035, %v4043
      %v4045 = vadd.f32 %v4044, 1.1283791
      %v4046 = vmul.f32 %v3792, %v4045
      %v4047 = vmul.f32 %v4035, 3.8918573e-05
      %v4048 = vadd.f32 %v4047, 0.001143296
      %v4049 = vmul.f32 %v4035, %v4048
      %v4050 = vadd.f32 %v4049, 0.014752088
      %v4051 = vmul.f32 %v4035, %v4050
      %v4052 = vadd.f32 %v4051, 0.112945676
      %v4053 = vmul.f32 %v4035, %v4052
      %v4054 = vadd.f32 %v4053, 0.4994258
      %v4055 = vmul.f32 %v4035, %v4054
      %v4056 = vadd.f32 %v4055, 1.0
      %v4057 = vrcp.pop %v4056
      %v4058 = vmul.f32 %v4056, %v4057
      %v4059 = vsub.f32 1.0, %v4058
      %v4060 = vmul.f32 %v4057, %v4059
      %v4061 = vadd.f32 %v4057, %v4060
      %vm4062 = vweird.f32 %v4056
      %vm4063 = vweird.f32 %v4057
      %vm4064 = vmor %vm4062, %vm4063
      %v4065 = vsel %vm4064, %v4057, %v4061
      %v4066 = vand.u32 2147483647, %v4056
      %vm4067 = vcmp.eq.f32.partialorder %v4066, 8.507059e+37
      %v4068 = vand.u32 %v4056, 2147483648
      %v4069 = vor.u32 1.1754944e-38, %v4068
      %v4070 = vsel %vm4067, %v4069, %v4065
      %v4071 = vmul.f32 %v4046, %v4070
      %v4072 = vmin.f32 %v4071, 1.0
      %v4073 = vmax.f32 %v4072, -1.0
      %v4074 = vmul.f32 %v3793, %v3793
      %v4075 = vmin.f32 16.0, %v4074
      %v4076 = vmul.f32 %v4075, 2.1237322e-06
      %v4077 = vadd.f32 %v4076, 0.00028619796
      %v4078 = vmul.f32 %v4075, %v4077
      %v4079 = vadd.f32 %v4078, 0.0036580483
      %v4080 = vmul.f32 %v4075, %v4079
      %v4081 = vadd.f32 %v4080, 0.05243302
      %v4082 = vmul.f32 %v4075, %v4081
      %v4083 = vadd.f32 %v4082, 0.18741608
      %v4084 = vmul.f32 %v4075, %v4083
      %v4085 = vadd.f32 %v4084, 1.1283791
      %v4086 = vmul.f32 %v3793, %v4085
      %v4087 = vmul.f32 %v4075, 3.8918573e-05
      %v4088 = vadd.f32 %v4087, 0.001143296
      %v4089 = vmul.f32 %v4075, %v4088
      %v4090 = vadd.f32 %v4089, 0.014752088
      %v4091 = vmul.f32 %v4075, %v4090
      %v4092 = vadd.f32 %v4091, 0.112945676
      %v4093 = vmul.f32 %v4075, %v4092
      %v4094 = vadd.f32 %v4093, 0.4994258
      %v4095 = vmul.f32 %v4075, %v4094
      %v4096 = vadd.f32 %v4095, 1.0
      %v4097 = vrcp.pop %v4096
      %v4098 = vmul.f32 %v4096, %v4097
      %v4099 = vsub.f32 1.0, %v4098
      %v4100 = vmul.f32 %v4097, %v4099
      %v4101 = vadd.f32 %v4097, %v4100
      %vm4102 = vweird.f32 %v4096
      %vm4103 = vweird.f32 %v4097
      %vm4104 = vmor %vm4102, %vm4103
      %v4105 = vsel %vm4104, %v4097, %v4101
      %v4106 = vand.u32 2147483647, %v4096
      %vm4107 = vcmp.eq.f32.partialorder %v4106, 8.507059e+37
      %v4108 = vand.u32 %v4096, 2147483648
      %v4109 = vor.u32 1.1754944e-38, %v4108
      %v4110 = vsel %vm4107, %v4109, %v4105
      %v4111 = vmul.f32 %v4086, %v4110
      %v4112 = vmin.f32 %v4111, 1.0
      %v4113 = vmax.f32 %v4112, -1.0
      %v4114 = vadd.f32 %v3833, 1.0
      %v4115 = vadd.f32 %v3873, 1.0
      %v4116 = vadd.f32 %v3913, 1.0
      %v4117 = vadd.f32 %v3953, 1.0
      %v4118 = vadd.f32 %v3993, 1.0
      %v4119 = vadd.f32 %v4033, 1.0
      %v4120 = vadd.f32 %v4073, 1.0
      %v4121 = vadd.f32 %v4113, 1.0
      %v4122 = vmul.f32 %v3778, %v4114
      %v4123 = vmul.f32 %v3779, %v4115
      %v4124 = vmul.f32 %v3780, %v4116
      %v4125 = vmul.f32 %v3781, %v4117
      %v4126 = vmul.f32 %v3782, %v4118
      %v4127 = vmul.f32 %v3783, %v4119
      %v4128 = vmul.f32 %v3784, %v4120
      %v4129 = vmul.f32 %v3785, %v4121
      %v4130 = vld [vmem:[%s7] sm:$0xff]
      %v4131 = vld [vmem:[%s7 + $0x8] sm:$0xff]
      %v4132 = vld [vmem:[%s8] sm:$0x1]
      %v4134 = vperm.slane %v4132, 0
      %v4137 = vsel %vm1330, %v4122, 0
      %v4140 = vsel %vm1330, %v4123, 0
      %v4143 = vsel %vm1330, %v4124, 0
      %v4146 = vsel %vm1330, %v4125, 0
      %v4149 = vsel %vm1330, %v4126, 0
      %v4152 = vsel %vm1330, %v4127, 0
      %v4155 = vsel %vm1330, %v4128, 0
      %v4158 = vsel %vm1330, %v4129, 0
      %4160 = vmatpush.msra.mxu0 0.0
      %4161 = vmatpush.msra.mxu0 0.0
      %4162 = vmatpush.msra.mxu0 0.0
      %4163 = vmatpush.msra.mxu0 0.0
      %4164 = vmatpush.msra.mxu0 0.0
      %4165 = vmatpush.msra.mxu0 0.0
      %4166 = vmatpush.msra.mxu0 0.0
      %4167 = vmatpush.msra.mxu0 0.0
      %4168 = vmatpush.msra.mxu0 0.0
      %4169 = vmatpush.msra.mxu0 0.0
      %4170 = vmatpush.msra.mxu0 0.0
      %4171 = vmatpush.msra.mxu0 0.0
      %4172 = vmatpush.msra.mxu0 0.0
      %4173 = vmatpush.msra.mxu0 0.0
      %4174 = vmatpush.msra.mxu0 %v4131
      %4175 = vmatpush.msra.mxu0 %v4130
      %4176 = vmatmul.f32.gmra.mxu0 %v4137
      %v4177 = vpop.f32.mrf.mxu0
      %v4178 = vadd.f32 %v4134, %v4177
      %4179 = vmatmul.f32.gmra.mxu0 %v4140
      %v4180 = vpop.f32.mrf.mxu0
      %v4181 = vadd.f32 %v4134, %v4180
      %4182 = vmatmul.f32.gmra.mxu0 %v4143
      %v4183 = vpop.f32.mrf.mxu0
      %v4184 = vadd.f32 %v4134, %v4183
      %4185 = vmatmul.f32.gmra.mxu0 %v4146
      %v4186 = vpop.f32.mrf.mxu0
      %v4187 = vadd.f32 %v4134, %v4186
      %4188 = vmatmul.f32.gmra.mxu0 %v4149
      %v4189 = vpop.f32.mrf.mxu0
      %v4190 = vadd.f32 %v4134, %v4189
      %4191 = vmatmul.f32.gmra.mxu0 %v4152
      %v4192 = vpop.f32.mrf.mxu0
      %v4193 = vadd.f32 %v4134, %v4192
      %4194 = vmatmul.f32.gmra.mxu0 %v4155
      %v4195 = vpop.f32.mrf.mxu0
      %v4196 = vadd.f32 %v4134, %v4195
      %4197 = vmatmul.f32.gmra.mxu0 %v4158
      %v4198 = vpop.f32.mrf.mxu0
      %v4199 = vadd.f32 %v4134, %v4198
      %4200 = vdwg.mxu0
      %v4201 = vsel %vm1399, %v4178, 0.0
      %v4202 = vsel %vm1400, %v4181, 0.0
      %v4203 = vsel %vm1400, %v4184, 0.0
      %v4204 = vsel %vm1400, %v4187, 0.0
      %v4205 = vsel %vm1400, %v4190, 0.0
      %v4206 = vsel %vm1400, %v4193, 0.0
      %v4207 = vsel %vm1400, %v4196, 0.0
      %v4208 = vsel %vm1400, %v4199, 0.0
      %s4209 = scalar_lea.vmem %s464, 256
      %4210 = vst.msk [vmem:[%s4209] sm:$0xff] %vm1421, %v4201
      %4211 = vst.msk [vmem:[%s4209 + $0x8] sm:$0xff] %vm1421, %v4202
      %4212 = vst.msk [vmem:[%s4209 + $0x10] sm:$0xff] %vm1421, %v4203
      %4213 = vst.msk [vmem:[%s4209 + $0x18] sm:$0xff] %vm1421, %v4204
      %4214 = vst.msk [vmem:[%s4209 + $0x20] sm:$0xff] %vm1421, %v4205
      %4215 = vst.msk [vmem:[%s4209 + $0x28] sm:$0xff] %vm1421, %v4206
      %4216 = vst.msk [vmem:[%s4209 + $0x30] sm:$0xff] %vm1421, %v4207
      %4217 = vst.msk [vmem:[%s4209 + $0x38] sm:$0xff] %vm1421, %v4208
      %v4218 = vld [vmem:[%s2 + $0x10] sm:$0x1]
      %v4219 = vperm.slane %v4218, 0
      %v4220 = vmul.f32 %v483, %v4219
      %v4221 = vmul.f32 %v484, %v4219
      %v4222 = vmul.f32 %v485, %v4219
      %v4223 = vmul.f32 %v486, %v4219
      %v4224 = vmul.f32 %v487, %v4219
      %v4225 = vmul.f32 %v488, %v4219
      %v4226 = vmul.f32 %v489, %v4219
      %v4227 = vmul.f32 %v490, %v4219
      %v4228 = vmul.f32 %v491, %v4219
      %v4229 = vmul.f32 %v492, %v4219
      %v4230 = vmul.f32 %v493, %v4219
      %v4231 = vmul.f32 %v494, %v4219
      %v4232 = vmul.f32 %v495, %v4219
      %v4233 = vmul.f32 %v496, %v4219
      %v4234 = vmul.f32 %v497, %v4219
      %v4235 = vmul.f32 %v498, %v4219
      %v4236 = vadd.f32 %v4220, 0.0
      %v4237 = vadd.f32 %v4221, 0.0
      %v4238 = vadd.f32 %v4222, 0.0
      %v4239 = vadd.f32 %v4223, 0.0
      %v4240 = vadd.f32 %v4224, 0.0
      %v4241 = vadd.f32 %v4225, 0.0
      %v4242 = vadd.f32 %v4226, 0.0
      %v4243 = vadd.f32 %v4227, 0.0
      %v4244 = vadd.f32 %v4228, 0.0
      %v4245 = vadd.f32 %v4229, 0.0
      %v4246 = vadd.f32 %v4230, 0.0
      %v4247 = vadd.f32 %v4231, 0.0
      %v4248 = vadd.f32 %v4232, 0.0
      %v4249 = vadd.f32 %v4233, 0.0
      %v4250 = vadd.f32 %v4234, 0.0
      %v4251 = vadd.f32 %v4235, 0.0
      %v4252 = vld [vmem:[%s2 + $0xa] sm:$0x1]
      %v4253 = vperm.slane %v4252, 0
      %v4254 = vmul.f32 %v485, %v4253
      %v4255 = vmul.f32 %v486, %v4253
      %v4256 = vmul.f32 %v487, %v4253
      %v4257 = vmul.f32 %v488, %v4253
      %v4258 = vmul.f32 %v489, %v4253
      %v4259 = vmul.f32 %v490, %v4253
      %v4260 = vmul.f32 %v491, %v4253
      %v4261 = vmul.f32 %v492, %v4253
      %v4262 = vmul.f32 %v493, %v4253
      %v4263 = vmul.f32 %v494, %v4253
      %v4264 = vmul.f32 %v495, %v4253
      %v4265 = vmul.f32 %v496, %v4253
      %v4266 = vmul.f32 %v497, %v4253
      %v4267 = vmul.f32 %v498, %v4253
      %v4268 = vmul.f32 %v499, %v4253
      %v4269 = vmul.f32 %v500, %v4253
      %v4270 = vadd.f32 %v4236, %v4254
      %v4271 = vadd.f32 %v4237, %v4255
      %v4272 = vadd.f32 %v4238, %v4256
      %v4273 = vadd.f32 %v4239, %v4257
      %v4274 = vadd.f32 %v4240, %v4258
      %v4275 = vadd.f32 %v4241, %v4259
      %v4276 = vadd.f32 %v4242, %v4260
      %v4277 = vadd.f32 %v4243, %v4261
      %v4278 = vadd.f32 %v4244, %v4262
      %v4279 = vadd.f32 %v4245, %v4263
      %v4280 = vadd.f32 %v4246, %v4264
      %v4281 = vadd.f32 %v4247, %v4265
      %v4282 = vadd.f32 %v4248, %v4266
      %v4283 = vadd.f32 %v4249, %v4267
      %v4284 = vadd.f32 %v4250, %v4268
      %v4285 = vadd.f32 %v4251, %v4269
      %v4286 = vsub.f32 %v4270, %v873
      %v4287 = vsub.f32 %v4271, %v873
      %v4288 = vsub.f32 %v4272, %v873
      %v4289 = vsub.f32 %v4273, %v873
      %v4290 = vsub.f32 %v4274, %v873
      %v4291 = vsub.f32 %v4275, %v873
      %v4292 = vsub.f32 %v4276, %v873
      %v4293 = vsub.f32 %v4277, %v873
      %v4294 = vsub.f32 %v4278, %v873
      %v4295 = vsub.f32 %v4279, %v873
      %v4296 = vsub.f32 %v4280, %v873
      %v4297 = vsub.f32 %v4281, %v873
      %v4298 = vsub.f32 %v4282, %v873
      %v4299 = vsub.f32 %v4283, %v873
      %v4300 = vsub.f32 %v4284, %v873
      %v4301 = vsub.f32 %v4285, %v873
      %v4302 = vmul.f32 %v4286, %v884
      %v4303 = vmul.f32 %v4287, %v884
      %v4304 = vmul.f32 %v4288, %v884
      %v4305 = vmul.f32 %v4289, %v884
      %v4306 = vmul.f32 %v4290, %v884
      %v4307 = vmul.f32 %v4291, %v884
      %v4308 = vmul.f32 %v4292, %v884
      %v4309 = vmul.f32 %v4293, %v884
      %v4310 = vmul.f32 %v4294, %v884
      %v4311 = vmul.f32 %v4295, %v884
      %v4312 = vmul.f32 %v4296, %v884
      %v4313 = vmul.f32 %v4297, %v884
      %v4314 = vmul.f32 %v4298, %v884
      %v4315 = vmul.f32 %v4299, %v884
      %v4316 = vmul.f32 %v4300, %v884
      %v4317 = vmul.f32 %v4301, %v884
      %v4334 = vrot.slane %v4302, 1
      %v4335 = vrot.slane %v4303, 1
      %v4336 = vsel %vm555, %v4334, %v4335
      %v4337 = vrot.slane %v4304, 1
      %v4338 = vrot.slane %v4305, 1
      %v4339 = vsel %vm555, %v4337, %v4338
      %v4340 = vrot.slane %v4306, 1
      %v4341 = vrot.slane %v4307, 1
      %v4342 = vsel %vm555, %v4340, %v4341
      %v4343 = vrot.slane %v4308, 1
      %v4344 = vrot.slane %v4309, 1
      %v4345 = vsel %vm555, %v4343, %v4344
      %v4346 = vrot.slane %v4310, 1
      %v4347 = vrot.slane %v4311, 1
      %v4348 = vsel %vm555, %v4346, %v4347
      %v4349 = vrot.slane %v4312, 1
      %v4350 = vrot.slane %v4313, 1
      %v4351 = vsel %vm555, %v4349, %v4350
      %v4352 = vrot.slane %v4314, 1
      %v4353 = vrot.slane %v4315, 1
      %v4354 = vsel %vm555, %v4352, %v4353
      %v4355 = vrot.slane %v4316, 1
      %v4356 = vrot.slane %v4317, 1
      %v4357 = vsel %vm555, %v4355, %v4356
      %v4358 = vld [vmem:[%s5] sm:$0xff]
      %v4359 = vld [vmem:[%s6] sm:$0x1]
      %v4361 = vperm.slane %v4359, 0
      %v4363 = vsel %vm899, %v4336, 0
      %v4365 = vsel %vm899, %v4339, 0
      %v4367 = vsel %vm899, %v4342, 0
      %v4369 = vsel %vm899, %v4345, 0
      %v4371 = vsel %vm899, %v4348, 0
      %v4373 = vsel %vm899, %v4351, 0
      %v4375 = vsel %vm899, %v4354, 0
      %v4377 = vsel %vm899, %v4357, 0
      %4379 = vmatpush.msra.mxu0 0.0
      %4380 = vmatpush.msra.mxu0 0.0
      %4381 = vmatpush.msra.mxu0 0.0
      %4382 = vmatpush.msra.mxu0 0.0
      %4383 = vmatpush.msra.mxu0 0.0
      %4384 = vmatpush.msra.mxu0 0.0
      %4385 = vmatpush.msra.mxu0 0.0
      %4386 = vmatpush.msra.mxu0 0.0
      %4387 = vmatpush.msra.mxu0 0.0
      %4388 = vmatpush.msra.mxu0 0.0
      %4389 = vmatpush.msra.mxu0 0.0
      %4390 = vmatpush.msra.mxu0 0.0
      %4391 = vmatpush.msra.mxu0 0.0
      %4392 = vmatpush.msra.mxu0 0.0
      %4393 = vmatpush.msra.mxu0 0.0
      %4394 = vmatpush.msra.mxu0 %v4358
      %4395 = vmatmul.f32.gmra.mxu0 %v4363
      %v4396 = vpop.f32.mrf.mxu0
      %v4397 = vadd.f32 %v4361, %v4396
      %4398 = vmatmul.f32.gmra.mxu0 %v4365
      %v4399 = vpop.f32.mrf.mxu0
      %v4400 = vadd.f32 %v4361, %v4399
      %4401 = vmatmul.f32.gmra.mxu0 %v4367
      %v4402 = vpop.f32.mrf.mxu0
      %v4403 = vadd.f32 %v4361, %v4402
      %4404 = vmatmul.f32.gmra.mxu0 %v4369
      %v4405 = vpop.f32.mrf.mxu0
      %v4406 = vadd.f32 %v4361, %v4405
      %4407 = vmatmul.f32.gmra.mxu0 %v4371
      %v4408 = vpop.f32.mrf.mxu0
      %v4409 = vadd.f32 %v4361, %v4408
      %4410 = vmatmul.f32.gmra.mxu0 %v4373
      %v4411 = vpop.f32.mrf.mxu0
      %v4412 = vadd.f32 %v4361, %v4411
      %4413 = vmatmul.f32.gmra.mxu0 %v4375
      %v4414 = vpop.f32.mrf.mxu0
      %v4415 = vadd.f32 %v4361, %v4414
      %4416 = vmatmul.f32.gmra.mxu0 %v4377
      %v4417 = vpop.f32.mrf.mxu0
      %v4418 = vadd.f32 %v4361, %v4417
      %4419 = vdwg.mxu0
      %v4420 = vmul.f32 %v4397, 0.5
      %v4421 = vmul.f32 %v4400, 0.5
      %v4422 = vmul.f32 %v4403, 0.5
      %v4423 = vmul.f32 %v4406, 0.5
      %v4424 = vmul.f32 %v4409, 0.5
      %v4425 = vmul.f32 %v4412, 0.5
      %v4426 = vmul.f32 %v4415, 0.5
      %v4427 = vmul.f32 %v4418, 0.5
      %v4428 = vmul.f32 %v4397, %v979
      %v4429 = vmul.f32 %v4400, %v979
      %v4430 = vmul.f32 %v4403, %v979
      %v4431 = vmul.f32 %v4406, %v979
      %v4432 = vmul.f32 %v4409, %v979
      %v4433 = vmul.f32 %v4412, %v979
      %v4434 = vmul.f32 %v4415, %v979
      %v4435 = vmul.f32 %v4418, %v979
      %v4436 = vmul.f32 %v4428, %v4428
      %v4437 = vmin.f32 16.0, %v4436
      %v4438 = vmul.f32 %v4437, 2.1237322e-06
      %v4439 = vadd.f32 %v4438, 0.00028619796
      %v4440 = vmul.f32 %v4437, %v4439
      %v4441 = vadd.f32 %v4440, 0.0036580483
      %v4442 = vmul.f32 %v4437, %v4441
      %v4443 = vadd.f32 %v4442, 0.05243302
      %v4444 = vmul.f32 %v4437, %v4443
      %v4445 = vadd.f32 %v4444, 0.18741608
      %v4446 = vmul.f32 %v4437, %v4445
      %v4447 = vadd.f32 %v4446, 1.1283791
      %v4448 = vmul.f32 %v4428, %v4447
      %v4449 = vmul.f32 %v4437, 3.8918573e-05
      %v4450 = vadd.f32 %v4449, 0.001143296
      %v4451 = vmul.f32 %v4437, %v4450
      %v4452 = vadd.f32 %v4451, 0.014752088
      %v4453 = vmul.f32 %v4437, %v4452
      %v4454 = vadd.f32 %v4453, 0.112945676
      %v4455 = vmul.f32 %v4437, %v4454
      %v4456 = vadd.f32 %v4455, 0.4994258
      %v4457 = vmul.f32 %v4437, %v4456
      %v4458 = vadd.f32 %v4457, 1.0
      %v4459 = vrcp.pop %v4458
      %v4460 = vmul.f32 %v4458, %v4459
      %v4461 = vsub.f32 1.0, %v4460
      %v4462 = vmul.f32 %v4459, %v4461
      %v4463 = vadd.f32 %v4459, %v4462
      %vm4464 = vweird.f32 %v4458
      %vm4465 = vweird.f32 %v4459
      %vm4466 = vmor %vm4464, %vm4465
      %v4467 = vsel %vm4466, %v4459, %v4463
      %v4468 = vand.u32 2147483647, %v4458
      %vm4469 = vcmp.eq.f32.partialorder %v4468, 8.507059e+37
      %v4470 = vand.u32 %v4458, 2147483648
      %v4471 = vor.u32 1.1754944e-38, %v4470
      %v4472 = vsel %vm4469, %v4471, %v4467
      %v4473 = vmul.f32 %v4448, %v4472
      %v4474 = vmin.f32 %v4473, 1.0
      %v4475 = vmax.f32 %v4474, -1.0
      %v4476 = vmul.f32 %v4429, %v4429
      %v4477 = vmin.f32 16.0, %v4476
      %v4478 = vmul.f32 %v4477, 2.1237322e-06
      %v4479 = vadd.f32 %v4478, 0.00028619796
      %v4480 = vmul.f32 %v4477, %v4479
      %v4481 = vadd.f32 %v4480, 0.0036580483
      %v4482 = vmul.f32 %v4477, %v4481
      %v4483 = vadd.f32 %v4482, 0.05243302
      %v4484 = vmul.f32 %v4477, %v4483
      %v4485 = vadd.f32 %v4484, 0.18741608
      %v4486 = vmul.f32 %v4477, %v4485
      %v4487 = vadd.f32 %v4486, 1.1283791
      %v4488 = vmul.f32 %v4429, %v4487
      %v4489 = vmul.f32 %v4477, 3.8918573e-05
      %v4490 = vadd.f32 %v4489, 0.001143296
      %v4491 = vmul.f32 %v4477, %v4490
      %v4492 = vadd.f32 %v4491, 0.014752088
      %v4493 = vmul.f32 %v4477, %v4492
      %v4494 = vadd.f32 %v4493, 0.112945676
      %v4495 = vmul.f32 %v4477, %v4494
      %v4496 = vadd.f32 %v4495, 0.4994258
      %v4497 = vmul.f32 %v4477, %v4496
      %v4498 = vadd.f32 %v4497, 1.0
      %v4499 = vrcp.pop %v4498
      %v4500 = vmul.f32 %v4498, %v4499
      %v4501 = vsub.f32 1.0, %v4500
      %v4502 = vmul.f32 %v4499, %v4501
      %v4503 = vadd.f32 %v4499, %v4502
      %vm4504 = vweird.f32 %v4498
      %vm4505 = vweird.f32 %v4499
      %vm4506 = vmor %vm4504, %vm4505
      %v4507 = vsel %vm4506, %v4499, %v4503
      %v4508 = vand.u32 2147483647, %v4498
      %vm4509 = vcmp.eq.f32.partialorder %v4508, 8.507059e+37
      %v4510 = vand.u32 %v4498, 2147483648
      %v4511 = vor.u32 1.1754944e-38, %v4510
      %v4512 = vsel %vm4509, %v4511, %v4507
      %v4513 = vmul.f32 %v4488, %v4512
      %v4514 = vmin.f32 %v4513, 1.0
      %v4515 = vmax.f32 %v4514, -1.0
      %v4516 = vmul.f32 %v4430, %v4430
      %v4517 = vmin.f32 16.0, %v4516
      %v4518 = vmul.f32 %v4517, 2.1237322e-06
      %v4519 = vadd.f32 %v4518, 0.00028619796
      %v4520 = vmul.f32 %v4517, %v4519
      %v4521 = vadd.f32 %v4520, 0.0036580483
      %v4522 = vmul.f32 %v4517, %v4521
      %v4523 = vadd.f32 %v4522, 0.05243302
      %v4524 = vmul.f32 %v4517, %v4523
      %v4525 = vadd.f32 %v4524, 0.18741608
      %v4526 = vmul.f32 %v4517, %v4525
      %v4527 = vadd.f32 %v4526, 1.1283791
      %v4528 = vmul.f32 %v4430, %v4527
      %v4529 = vmul.f32 %v4517, 3.8918573e-05
      %v4530 = vadd.f32 %v4529, 0.001143296
      %v4531 = vmul.f32 %v4517, %v4530
      %v4532 = vadd.f32 %v4531, 0.014752088
      %v4533 = vmul.f32 %v4517, %v4532
      %v4534 = vadd.f32 %v4533, 0.112945676
      %v4535 = vmul.f32 %v4517, %v4534
      %v4536 = vadd.f32 %v4535, 0.4994258
      %v4537 = vmul.f32 %v4517, %v4536
      %v4538 = vadd.f32 %v4537, 1.0
      %v4539 = vrcp.pop %v4538
      %v4540 = vmul.f32 %v4538, %v4539
      %v4541 = vsub.f32 1.0, %v4540
      %v4542 = vmul.f32 %v4539, %v4541
      %v4543 = vadd.f32 %v4539, %v4542
      %vm4544 = vweird.f32 %v4538
      %vm4545 = vweird.f32 %v4539
      %vm4546 = vmor %vm4544, %vm4545
      %v4547 = vsel %vm4546, %v4539, %v4543
      %v4548 = vand.u32 2147483647, %v4538
      %vm4549 = vcmp.eq.f32.partialorder %v4548, 8.507059e+37
      %v4550 = vand.u32 %v4538, 2147483648
      %v4551 = vor.u32 1.1754944e-38, %v4550
      %v4552 = vsel %vm4549, %v4551, %v4547
      %v4553 = vmul.f32 %v4528, %v4552
      %v4554 = vmin.f32 %v4553, 1.0
      %v4555 = vmax.f32 %v4554, -1.0
      %v4556 = vmul.f32 %v4431, %v4431
      %v4557 = vmin.f32 16.0, %v4556
      %v4558 = vmul.f32 %v4557, 2.1237322e-06
      %v4559 = vadd.f32 %v4558, 0.00028619796
      %v4560 = vmul.f32 %v4557, %v4559
      %v4561 = vadd.f32 %v4560, 0.0036580483
      %v4562 = vmul.f32 %v4557, %v4561
      %v4563 = vadd.f32 %v4562, 0.05243302
      %v4564 = vmul.f32 %v4557, %v4563
      %v4565 = vadd.f32 %v4564, 0.18741608
      %v4566 = vmul.f32 %v4557, %v4565
      %v4567 = vadd.f32 %v4566, 1.1283791
      %v4568 = vmul.f32 %v4431, %v4567
      %v4569 = vmul.f32 %v4557, 3.8918573e-05
      %v4570 = vadd.f32 %v4569, 0.001143296
      %v4571 = vmul.f32 %v4557, %v4570
      %v4572 = vadd.f32 %v4571, 0.014752088
      %v4573 = vmul.f32 %v4557, %v4572
      %v4574 = vadd.f32 %v4573, 0.112945676
      %v4575 = vmul.f32 %v4557, %v4574
      %v4576 = vadd.f32 %v4575, 0.4994258
      %v4577 = vmul.f32 %v4557, %v4576
      %v4578 = vadd.f32 %v4577, 1.0
      %v4579 = vrcp.pop %v4578
      %v4580 = vmul.f32 %v4578, %v4579
      %v4581 = vsub.f32 1.0, %v4580
      %v4582 = vmul.f32 %v4579, %v4581
      %v4583 = vadd.f32 %v4579, %v4582
      %vm4584 = vweird.f32 %v4578
      %vm4585 = vweird.f32 %v4579
      %vm4586 = vmor %vm4584, %vm4585
      %v4587 = vsel %vm4586, %v4579, %v4583
      %v4588 = vand.u32 2147483647, %v4578
      %vm4589 = vcmp.eq.f32.partialorder %v4588, 8.507059e+37
      %v4590 = vand.u32 %v4578, 2147483648
      %v4591 = vor.u32 1.1754944e-38, %v4590
      %v4592 = vsel %vm4589, %v4591, %v4587
      %v4593 = vmul.f32 %v4568, %v4592
      %v4594 = vmin.f32 %v4593, 1.0
      %v4595 = vmax.f32 %v4594, -1.0
      %v4596 = vmul.f32 %v4432, %v4432
      %v4597 = vmin.f32 16.0, %v4596
      %v4598 = vmul.f32 %v4597, 2.1237322e-06
      %v4599 = vadd.f32 %v4598, 0.00028619796
      %v4600 = vmul.f32 %v4597, %v4599
      %v4601 = vadd.f32 %v4600, 0.0036580483
      %v4602 = vmul.f32 %v4597, %v4601
      %v4603 = vadd.f32 %v4602, 0.05243302
      %v4604 = vmul.f32 %v4597, %v4603
      %v4605 = vadd.f32 %v4604, 0.18741608
      %v4606 = vmul.f32 %v4597, %v4605
      %v4607 = vadd.f32 %v4606, 1.1283791
      %v4608 = vmul.f32 %v4432, %v4607
      %v4609 = vmul.f32 %v4597, 3.8918573e-05
      %v4610 = vadd.f32 %v4609, 0.001143296
      %v4611 = vmul.f32 %v4597, %v4610
      %v4612 = vadd.f32 %v4611, 0.014752088
      %v4613 = vmul.f32 %v4597, %v4612
      %v4614 = vadd.f32 %v4613, 0.112945676
      %v4615 = vmul.f32 %v4597, %v4614
      %v4616 = vadd.f32 %v4615, 0.4994258
      %v4617 = vmul.f32 %v4597, %v4616
      %v4618 = vadd.f32 %v4617, 1.0
      %v4619 = vrcp.pop %v4618
      %v4620 = vmul.f32 %v4618, %v4619
      %v4621 = vsub.f32 1.0, %v4620
      %v4622 = vmul.f32 %v4619, %v4621
      %v4623 = vadd.f32 %v4619, %v4622
      %vm4624 = vweird.f32 %v4618
      %vm4625 = vweird.f32 %v4619
      %vm4626 = vmor %vm4624, %vm4625
      %v4627 = vsel %vm4626, %v4619, %v4623
      %v4628 = vand.u32 2147483647, %v4618
      %vm4629 = vcmp.eq.f32.partialorder %v4628, 8.507059e+37
      %v4630 = vand.u32 %v4618, 2147483648
      %v4631 = vor.u32 1.1754944e-38, %v4630
      %v4632 = vsel %vm4629, %v4631, %v4627
      %v4633 = vmul.f32 %v4608, %v4632
      %v4634 = vmin.f32 %v4633, 1.0
      %v4635 = vmax.f32 %v4634, -1.0
      %v4636 = vmul.f32 %v4433, %v4433
      %v4637 = vmin.f32 16.0, %v4636
      %v4638 = vmul.f32 %v4637, 2.1237322e-06
      %v4639 = vadd.f32 %v4638, 0.00028619796
      %v4640 = vmul.f32 %v4637, %v4639
      %v4641 = vadd.f32 %v4640, 0.0036580483
      %v4642 = vmul.f32 %v4637, %v4641
      %v4643 = vadd.f32 %v4642, 0.05243302
      %v4644 = vmul.f32 %v4637, %v4643
      %v4645 = vadd.f32 %v4644, 0.18741608
      %v4646 = vmul.f32 %v4637, %v4645
      %v4647 = vadd.f32 %v4646, 1.1283791
      %v4648 = vmul.f32 %v4433, %v4647
      %v4649 = vmul.f32 %v4637, 3.8918573e-05
      %v4650 = vadd.f32 %v4649, 0.001143296
      %v4651 = vmul.f32 %v4637, %v4650
      %v4652 = vadd.f32 %v4651, 0.014752088
      %v4653 = vmul.f32 %v4637, %v4652
      %v4654 = vadd.f32 %v4653, 0.112945676
      %v4655 = vmul.f32 %v4637, %v4654
      %v4656 = vadd.f32 %v4655, 0.4994258
      %v4657 = vmul.f32 %v4637, %v4656
      %v4658 = vadd.f32 %v4657, 1.0
      %v4659 = vrcp.pop %v4658
      %v4660 = vmul.f32 %v4658, %v4659
      %v4661 = vsub.f32 1.0, %v4660
      %v4662 = vmul.f32 %v4659, %v4661
      %v4663 = vadd.f32 %v4659, %v4662
      %vm4664 = vweird.f32 %v4658
      %vm4665 = vweird.f32 %v4659
      %vm4666 = vmor %vm4664, %vm4665
      %v4667 = vsel %vm4666, %v4659, %v4663
      %v4668 = vand.u32 2147483647, %v4658
      %vm4669 = vcmp.eq.f32.partialorder %v4668, 8.507059e+37
      %v4670 = vand.u32 %v4658, 2147483648
      %v4671 = vor.u32 1.1754944e-38, %v4670
      %v4672 = vsel %vm4669, %v4671, %v4667
      %v4673 = vmul.f32 %v4648, %v4672
      %v4674 = vmin.f32 %v4673, 1.0
      %v4675 = vmax.f32 %v4674, -1.0
      %v4676 = vmul.f32 %v4434, %v4434
      %v4677 = vmin.f32 16.0, %v4676
      %v4678 = vmul.f32 %v4677, 2.1237322e-06
      %v4679 = vadd.f32 %v4678, 0.00028619796
      %v4680 = vmul.f32 %v4677, %v4679
      %v4681 = vadd.f32 %v4680, 0.0036580483
      %v4682 = vmul.f32 %v4677, %v4681
      %v4683 = vadd.f32 %v4682, 0.05243302
      %v4684 = vmul.f32 %v4677, %v4683
      %v4685 = vadd.f32 %v4684, 0.18741608
      %v4686 = vmul.f32 %v4677, %v4685
      %v4687 = vadd.f32 %v4686, 1.1283791
      %v4688 = vmul.f32 %v4434, %v4687
      %v4689 = vmul.f32 %v4677, 3.8918573e-05
      %v4690 = vadd.f32 %v4689, 0.001143296
      %v4691 = vmul.f32 %v4677, %v4690
      %v4692 = vadd.f32 %v4691, 0.014752088
      %v4693 = vmul.f32 %v4677, %v4692
      %v4694 = vadd.f32 %v4693, 0.112945676
      %v4695 = vmul.f32 %v4677, %v4694
      %v4696 = vadd.f32 %v4695, 0.4994258
      %v4697 = vmul.f32 %v4677, %v4696
      %v4698 = vadd.f32 %v4697, 1.0
      %v4699 = vrcp.pop %v4698
      %v4700 = vmul.f32 %v4698, %v4699
      %v4701 = vsub.f32 1.0, %v4700
      %v4702 = vmul.f32 %v4699, %v4701
      %v4703 = vadd.f32 %v4699, %v4702
      %vm4704 = vweird.f32 %v4698
      %vm4705 = vweird.f32 %v4699
      %vm4706 = vmor %vm4704, %vm4705
      %v4707 = vsel %vm4706, %v4699, %v4703
      %v4708 = vand.u32 2147483647, %v4698
      %vm4709 = vcmp.eq.f32.partialorder %v4708, 8.507059e+37
      %v4710 = vand.u32 %v4698, 2147483648
      %v4711 = vor.u32 1.1754944e-38, %v4710
      %v4712 = vsel %vm4709, %v4711, %v4707
      %v4713 = vmul.f32 %v4688, %v4712
      %v4714 = vmin.f32 %v4713, 1.0
      %v4715 = vmax.f32 %v4714, -1.0
      %v4716 = vmul.f32 %v4435, %v4435
      %v4717 = vmin.f32 16.0, %v4716
      %v4718 = vmul.f32 %v4717, 2.1237322e-06
      %v4719 = vadd.f32 %v4718, 0.00028619796
      %v4720 = vmul.f32 %v4717, %v4719
      %v4721 = vadd.f32 %v4720, 0.0036580483
      %v4722 = vmul.f32 %v4717, %v4721
      %v4723 = vadd.f32 %v4722, 0.05243302
      %v4724 = vmul.f32 %v4717, %v4723
      %v4725 = vadd.f32 %v4724, 0.18741608
      %v4726 = vmul.f32 %v4717, %v4725
      %v4727 = vadd.f32 %v4726, 1.1283791
      %v4728 = vmul.f32 %v4435, %v4727
      %v4729 = vmul.f32 %v4717, 3.8918573e-05
      %v4730 = vadd.f32 %v4729, 0.001143296
      %v4731 = vmul.f32 %v4717, %v4730
      %v4732 = vadd.f32 %v4731, 0.014752088
      %v4733 = vmul.f32 %v4717, %v4732
      %v4734 = vadd.f32 %v4733, 0.112945676
      %v4735 = vmul.f32 %v4717, %v4734
      %v4736 = vadd.f32 %v4735, 0.4994258
      %v4737 = vmul.f32 %v4717, %v4736
      %v4738 = vadd.f32 %v4737, 1.0
      %v4739 = vrcp.pop %v4738
      %v4740 = vmul.f32 %v4738, %v4739
      %v4741 = vsub.f32 1.0, %v4740
      %v4742 = vmul.f32 %v4739, %v4741
      %v4743 = vadd.f32 %v4739, %v4742
      %vm4744 = vweird.f32 %v4738
      %vm4745 = vweird.f32 %v4739
      %vm4746 = vmor %vm4744, %vm4745
      %v4747 = vsel %vm4746, %v4739, %v4743
      %v4748 = vand.u32 2147483647, %v4738
      %vm4749 = vcmp.eq.f32.partialorder %v4748, 8.507059e+37
      %v4750 = vand.u32 %v4738, 2147483648
      %v4751 = vor.u32 1.1754944e-38, %v4750
      %v4752 = vsel %vm4749, %v4751, %v4747
      %v4753 = vmul.f32 %v4728, %v4752
      %v4754 = vmin.f32 %v4753, 1.0
      %v4755 = vmax.f32 %v4754, -1.0
      %v4756 = vadd.f32 %v4475, 1.0
      %v4757 = vadd.f32 %v4515, 1.0
      %v4758 = vadd.f32 %v4555, 1.0
      %v4759 = vadd.f32 %v4595, 1.0
      %v4760 = vadd.f32 %v4635, 1.0
      %v4761 = vadd.f32 %v4675, 1.0
      %v4762 = vadd.f32 %v4715, 1.0
      %v4763 = vadd.f32 %v4755, 1.0
      %v4764 = vmul.f32 %v4420, %v4756
      %v4765 = vmul.f32 %v4421, %v4757
      %v4766 = vmul.f32 %v4422, %v4758
      %v4767 = vmul.f32 %v4423, %v4759
      %v4768 = vmul.f32 %v4424, %v4760
      %v4769 = vmul.f32 %v4425, %v4761
      %v4770 = vmul.f32 %v4426, %v4762
      %v4771 = vmul.f32 %v4427, %v4763
      %v4772 = vld [vmem:[%s7] sm:$0xff]
      %v4773 = vld [vmem:[%s7 + $0x8] sm:$0xff]
      %v4774 = vld [vmem:[%s8] sm:$0x1]
      %v4776 = vperm.slane %v4774, 0
      %v4779 = vsel %vm1330, %v4764, 0
      %v4782 = vsel %vm1330, %v4765, 0
      %v4785 = vsel %vm1330, %v4766, 0
      %v4788 = vsel %vm1330, %v4767, 0
      %v4791 = vsel %vm1330, %v4768, 0
      %v4794 = vsel %vm1330, %v4769, 0
      %v4797 = vsel %vm1330, %v4770, 0
      %v4800 = vsel %vm1330, %v4771, 0
      %4802 = vmatpush.msra.mxu0 0.0
      %4803 = vmatpush.msra.mxu0 0.0
      %4804 = vmatpush.msra.mxu0 0.0
      %4805 = vmatpush.msra.mxu0 0.0
      %4806 = vmatpush.msra.mxu0 0.0
      %4807 = vmatpush.msra.mxu0 0.0
      %4808 = vmatpush.msra.mxu0 0.0
      %4809 = vmatpush.msra.mxu0 0.0
      %4810 = vmatpush.msra.mxu0 0.0
      %4811 = vmatpush.msra.mxu0 0.0
      %4812 = vmatpush.msra.mxu0 0.0
      %4813 = vmatpush.msra.mxu0 0.0
      %4814 = vmatpush.msra.mxu0 0.0
      %4815 = vmatpush.msra.mxu0 0.0
      %4816 = vmatpush.msra.mxu0 %v4773
      %4817 = vmatpush.msra.mxu0 %v4772
      %4818 = vmatmul.f32.gmra.mxu0 %v4779
      %v4819 = vpop.f32.mrf.mxu0
      %v4820 = vadd.f32 %v4776, %v4819
      %4821 = vmatmul.f32.gmra.mxu0 %v4782
      %v4822 = vpop.f32.mrf.mxu0
      %v4823 = vadd.f32 %v4776, %v4822
      %4824 = vmatmul.f32.gmra.mxu0 %v4785
      %v4825 = vpop.f32.mrf.mxu0
      %v4826 = vadd.f32 %v4776, %v4825
      %4827 = vmatmul.f32.gmra.mxu0 %v4788
      %v4828 = vpop.f32.mrf.mxu0
      %v4829 = vadd.f32 %v4776, %v4828
      %4830 = vmatmul.f32.gmra.mxu0 %v4791
      %v4831 = vpop.f32.mrf.mxu0
      %v4832 = vadd.f32 %v4776, %v4831
      %4833 = vmatmul.f32.gmra.mxu0 %v4794
      %v4834 = vpop.f32.mrf.mxu0
      %v4835 = vadd.f32 %v4776, %v4834
      %4836 = vmatmul.f32.gmra.mxu0 %v4797
      %v4837 = vpop.f32.mrf.mxu0
      %v4838 = vadd.f32 %v4776, %v4837
      %4839 = vmatmul.f32.gmra.mxu0 %v4800
      %v4840 = vpop.f32.mrf.mxu0
      %v4841 = vadd.f32 %v4776, %v4840
      %4842 = vdwg.mxu0
      %v4843 = vsel 0, %v4820, 0.0
      %v4844 = vsel 1, %v4823, 0.0
      %v4845 = vsel 1, %v4826, 0.0
      %v4846 = vsel 1, %v4829, 0.0
      %v4847 = vsel 1, %v4832, 0.0
      %v4848 = vsel 1, %v4835, 0.0
      %v4849 = vsel 1, %v4838, 0.0
      %v4850 = vsel 1, %v4841, 0.0
      %s4851 = scalar_lea.vmem %s464, 320
      %4852 = vst.msk [vmem:[%s4851] sm:$0xff] %vm1421, %v4843
      %4853 = vst.msk [vmem:[%s4851 + $0x8] sm:$0xff] %vm1421, %v4844
      %4854 = vst.msk [vmem:[%s4851 + $0x10] sm:$0xff] %vm1421, %v4845
      %4855 = vst.msk [vmem:[%s4851 + $0x18] sm:$0xff] %vm1421, %v4846
      %4856 = vst.msk [vmem:[%s4851 + $0x20] sm:$0xff] %vm1421, %v4847
      %4857 = vst.msk [vmem:[%s4851 + $0x28] sm:$0xff] %vm1421, %v4848
      %4858 = vst.msk [vmem:[%s4851 + $0x30] sm:$0xff] %vm1421, %v4849
      %4859 = vst.msk [vmem:[%s4851 + $0x38] sm:$0xff] %vm1421, %v4850
      %v4860 = vld [vmem:[%s2 + $0xe] sm:$0x1]
      %v4861 = vperm.slane %v4860, 0
      %v4862 = vmul.f32 %v485, %v4861
      %v4863 = vmul.f32 %v487, %v4861
      %v4864 = vmul.f32 %v489, %v4861
      %v4865 = vmul.f32 %v491, %v4861
      %v4866 = vmul.f32 %v493, %v4861
      %v4867 = vmul.f32 %v495, %v4861
      %v4868 = vmul.f32 %v497, %v4861
      %v4869 = vmul.f32 %v499, %v4861
      %v4870 = vadd.f32 %v4862, 0.0
      %v4871 = vadd.f32 %v4863, 0.0
      %v4872 = vadd.f32 %v4864, 0.0
      %v4873 = vadd.f32 %v4865, 0.0
      %v4874 = vadd.f32 %v4866, 0.0
      %v4875 = vadd.f32 %v4867, 0.0
      %v4876 = vadd.f32 %v4868, 0.0
      %v4877 = vadd.f32 %v4869, 0.0
      %v4878 = vld [vmem:[%s2 + $0xc] sm:$0x1]
      %v4879 = vperm.slane %v4878, 0
      %v4880 = vmul.f32 %v485, %v4879
      %v4881 = vmul.f32 %v486, %v4879
      %v4882 = vmul.f32 %v487, %v4879
      %v4883 = vmul.f32 %v488, %v4879
      %v4884 = vmul.f32 %v489, %v4879
      %v4885 = vmul.f32 %v490, %v4879
      %v4886 = vmul.f32 %v491, %v4879
      %v4887 = vmul.f32 %v492, %v4879
      %v4888 = vmul.f32 %v493, %v4879
      %v4889 = vmul.f32 %v494, %v4879
      %v4890 = vmul.f32 %v495, %v4879
      %v4891 = vmul.f32 %v496, %v4879
      %v4892 = vmul.f32 %v497, %v4879
      %v4893 = vmul.f32 %v498, %v4879
      %v4894 = vmul.f32 %v499, %v4879
      %v4895 = vmul.f32 %v500, %v4879
      %v4912 = vrot.slane %v4880, 1
      %v4913 = vrot.slane %v4881, 1
      %v4914 = vsel %vm555, %v4912, %v4913
      %v4915 = vrot.slane %v4882, 1
      %v4916 = vrot.slane %v4883, 1
      %v4917 = vsel %vm555, %v4915, %v4916
      %v4918 = vrot.slane %v4884, 1
      %v4919 = vrot.slane %v4885, 1
      %v4920 = vsel %vm555, %v4918, %v4919
      %v4921 = vrot.slane %v4886, 1
      %v4922 = vrot.slane %v4887, 1
      %v4923 = vsel %vm555, %v4921, %v4922
      %v4924 = vrot.slane %v4888, 1
      %v4925 = vrot.slane %v4889, 1
      %v4926 = vsel %vm555, %v4924, %v4925
      %v4927 = vrot.slane %v4890, 1
      %v4928 = vrot.slane %v4891, 1
      %v4929 = vsel %vm555, %v4927, %v4928
      %v4930 = vrot.slane %v4892, 1
      %v4931 = vrot.slane %v4893, 1
      %v4932 = vsel %vm555, %v4930, %v4931
      %v4933 = vrot.slane %v4894, 1
      %v4934 = vrot.slane %v4895, 1
      %v4935 = vsel %vm555, %v4933, %v4934
      %v4944 = vadd.f32 %v4870, %v4914
      %v4945 = vadd.f32 %v4871, %v4917
      %v4946 = vadd.f32 %v4872, %v4920
      %v4947 = vadd.f32 %v4873, %v4923
      %v4948 = vadd.f32 %v4874, %v4926
      %v4949 = vadd.f32 %v4875, %v4929
      %v4950 = vadd.f32 %v4876, %v4932
      %v4951 = vadd.f32 %v4877, %v4935
      %v4952 = vsub.f32 %v4944, %v873
      %v4953 = vsub.f32 %v4945, %v873
      %v4954 = vsub.f32 %v4946, %v873
      %v4955 = vsub.f32 %v4947, %v873
      %v4956 = vsub.f32 %v4948, %v873
      %v4957 = vsub.f32 %v4949, %v873
      %v4958 = vsub.f32 %v4950, %v873
      %v4959 = vsub.f32 %v4951, %v873
      %v4960 = vmul.f32 %v4952, %v884
      %v4961 = vmul.f32 %v4953, %v884
      %v4962 = vmul.f32 %v4954, %v884
      %v4963 = vmul.f32 %v4955, %v884
      %v4964 = vmul.f32 %v4956, %v884
      %v4965 = vmul.f32 %v4957, %v884
      %v4966 = vmul.f32 %v4958, %v884
      %v4967 = vmul.f32 %v4959, %v884
      %v4968 = vld [vmem:[%s5] sm:$0xff]
      %v4969 = vld [vmem:[%s6] sm:$0x1]
      %v4971 = vperm.slane %v4969, 0
      %v4974 = vsel %vm899, %v4960, 0
      %v4977 = vsel %vm899, %v4961, 0
      %v4980 = vsel %vm899, %v4962, 0
      %v4983 = vsel %vm899, %v4963, 0
      %v4986 = vsel %vm899, %v4964, 0
      %v4989 = vsel %vm899, %v4965, 0
      %v4992 = vsel %vm899, %v4966, 0
      %v4995 = vsel %vm899, %v4967, 0
      %4997 = vmatpush.msra.mxu0 0.0
      %4998 = vmatpush.msra.mxu0 0.0
      %4999 = vmatpush.msra.mxu0 0.0
      %5000 = vmatpush.msra.mxu0 0.0
      %5001 = vmatpush.msra.mxu0 0.0
      %5002 = vmatpush.msra.mxu0 0.0
      %5003 = vmatpush.msra.mxu0 0.0
      %5004 = vmatpush.msra.mxu0 0.0
      %5005 = vmatpush.msra.mxu0 0.0
      %5006 = vmatpush.msra.mxu0 0.0
      %5007 = vmatpush.msra.mxu0 0.0
      %5008 = vmatpush.msra.mxu0 0.0
      %5009 = vmatpush.msra.mxu0 0.0
      %5010 = vmatpush.msra.mxu0 0.0
      %5011 = vmatpush.msra.mxu0 0.0
      %5012 = vmatpush.msra.mxu0 %v4968
      %5013 = vmatmul.f32.gmra.mxu0 %v4974
      %v5014 = vpop.f32.mrf.mxu0
      %v5015 = vadd.f32 %v4971, %v5014
      %5016 = vmatmul.f32.gmra.mxu0 %v4977
      %v5017 = vpop.f32.mrf.mxu0
      %v5018 = vadd.f32 %v4971, %v5017
      %5019 = vmatmul.f32.gmra.mxu0 %v4980
      %v5020 = vpop.f32.mrf.mxu0
      %v5021 = vadd.f32 %v4971, %v5020
      %5022 = vmatmul.f32.gmra.mxu0 %v4983
      %v5023 = vpop.f32.mrf.mxu0
      %v5024 = vadd.f32 %v4971, %v5023
      %5025 = vmatmul.f32.gmra.mxu0 %v4986
      %v5026 = vpop.f32.mrf.mxu0
      %v5027 = vadd.f32 %v4971, %v5026
      %5028 = vmatmul.f32.gmra.mxu0 %v4989
      %v5029 = vpop.f32.mrf.mxu0
      %v5030 = vadd.f32 %v4971, %v5029
      %5031 = vmatmul.f32.gmra.mxu0 %v4992
      %v5032 = vpop.f32.mrf.mxu0
      %v5033 = vadd.f32 %v4971, %v5032
      %5034 = vmatmul.f32.gmra.mxu0 %v4995
      %v5035 = vpop.f32.mrf.mxu0
      %v5036 = vadd.f32 %v4971, %v5035
      %5037 = vdwg.mxu0
      %v5038 = vmul.f32 %v5015, 0.5
      %v5039 = vmul.f32 %v5018, 0.5
      %v5040 = vmul.f32 %v5021, 0.5
      %v5041 = vmul.f32 %v5024, 0.5
      %v5042 = vmul.f32 %v5027, 0.5
      %v5043 = vmul.f32 %v5030, 0.5
      %v5044 = vmul.f32 %v5033, 0.5
      %v5045 = vmul.f32 %v5036, 0.5
      %v5046 = vmul.f32 %v5015, %v979
      %v5047 = vmul.f32 %v5018, %v979
      %v5048 = vmul.f32 %v5021, %v979
      %v5049 = vmul.f32 %v5024, %v979
      %v5050 = vmul.f32 %v5027, %v979
      %v5051 = vmul.f32 %v5030, %v979
      %v5052 = vmul.f32 %v5033, %v979
      %v5053 = vmul.f32 %v5036, %v979
      %v5054 = vmul.f32 %v5046, %v5046
      %v5055 = vmin.f32 16.0, %v5054
      %v5056 = vmul.f32 %v5055, 2.1237322e-06
      %v5057 = vadd.f32 %v5056, 0.00028619796
      %v5058 = vmul.f32 %v5055, %v5057
      %v5059 = vadd.f32 %v5058, 0.0036580483
      %v5060 = vmul.f32 %v5055, %v5059
      %v5061 = vadd.f32 %v5060, 0.05243302
      %v5062 = vmul.f32 %v5055, %v5061
      %v5063 = vadd.f32 %v5062, 0.18741608
      %v5064 = vmul.f32 %v5055, %v5063
      %v5065 = vadd.f32 %v5064, 1.1283791
      %v5066 = vmul.f32 %v5046, %v5065
      %v5067 = vmul.f32 %v5055, 3.8918573e-05
      %v5068 = vadd.f32 %v5067, 0.001143296
      %v5069 = vmul.f32 %v5055, %v5068
      %v5070 = vadd.f32 %v5069, 0.014752088
      %v5071 = vmul.f32 %v5055, %v5070
      %v5072 = vadd.f32 %v5071, 0.112945676
      %v5073 = vmul.f32 %v5055, %v5072
      %v5074 = vadd.f32 %v5073, 0.4994258
      %v5075 = vmul.f32 %v5055, %v5074
      %v5076 = vadd.f32 %v5075, 1.0
      %v5077 = vrcp.pop %v5076
      %v5078 = vmul.f32 %v5076, %v5077
      %v5079 = vsub.f32 1.0, %v5078
      %v5080 = vmul.f32 %v5077, %v5079
      %v5081 = vadd.f32 %v5077, %v5080
      %vm5082 = vweird.f32 %v5076
      %vm5083 = vweird.f32 %v5077
      %vm5084 = vmor %vm5082, %vm5083
      %v5085 = vsel %vm5084, %v5077, %v5081
      %v5086 = vand.u32 2147483647, %v5076
      %vm5087 = vcmp.eq.f32.partialorder %v5086, 8.507059e+37
      %v5088 = vand.u32 %v5076, 2147483648
      %v5089 = vor.u32 1.1754944e-38, %v5088
      %v5090 = vsel %vm5087, %v5089, %v5085
      %v5091 = vmul.f32 %v5066, %v5090
      %v5092 = vmin.f32 %v5091, 1.0
      %v5093 = vmax.f32 %v5092, -1.0
      %v5094 = vmul.f32 %v5047, %v5047
      %v5095 = vmin.f32 16.0, %v5094
      %v5096 = vmul.f32 %v5095, 2.1237322e-06
      %v5097 = vadd.f32 %v5096, 0.00028619796
      %v5098 = vmul.f32 %v5095, %v5097
      %v5099 = vadd.f32 %v5098, 0.0036580483
      %v5100 = vmul.f32 %v5095, %v5099
      %v5101 = vadd.f32 %v5100, 0.05243302
      %v5102 = vmul.f32 %v5095, %v5101
      %v5103 = vadd.f32 %v5102, 0.18741608
      %v5104 = vmul.f32 %v5095, %v5103
      %v5105 = vadd.f32 %v5104, 1.1283791
      %v5106 = vmul.f32 %v5047, %v5105
      %v5107 = vmul.f32 %v5095, 3.8918573e-05
      %v5108 = vadd.f32 %v5107, 0.001143296
      %v5109 = vmul.f32 %v5095, %v5108
      %v5110 = vadd.f32 %v5109, 0.014752088
      %v5111 = vmul.f32 %v5095, %v5110
      %v5112 = vadd.f32 %v5111, 0.112945676
      %v5113 = vmul.f32 %v5095, %v5112
      %v5114 = vadd.f32 %v5113, 0.4994258
      %v5115 = vmul.f32 %v5095, %v5114
      %v5116 = vadd.f32 %v5115, 1.0
      %v5117 = vrcp.pop %v5116
      %v5118 = vmul.f32 %v5116, %v5117
      %v5119 = vsub.f32 1.0, %v5118
      %v5120 = vmul.f32 %v5117, %v5119
      %v5121 = vadd.f32 %v5117, %v5120
      %vm5122 = vweird.f32 %v5116
      %vm5123 = vweird.f32 %v5117
      %vm5124 = vmor %vm5122, %vm5123
      %v5125 = vsel %vm5124, %v5117, %v5121
      %v5126 = vand.u32 2147483647, %v5116
      %vm5127 = vcmp.eq.f32.partialorder %v5126, 8.507059e+37
      %v5128 = vand.u32 %v5116, 2147483648
      %v5129 = vor.u32 1.1754944e-38, %v5128
      %v5130 = vsel %vm5127, %v5129, %v5125
      %v5131 = vmul.f32 %v5106, %v5130
      %v5132 = vmin.f32 %v5131, 1.0
      %v5133 = vmax.f32 %v5132, -1.0
      %v5134 = vmul.f32 %v5048, %v5048
      %v5135 = vmin.f32 16.0, %v5134
      %v5136 = vmul.f32 %v5135, 2.1237322e-06
      %v5137 = vadd.f32 %v5136, 0.00028619796
      %v5138 = vmul.f32 %v5135, %v5137
      %v5139 = vadd.f32 %v5138, 0.0036580483
      %v5140 = vmul.f32 %v5135, %v5139
      %v5141 = vadd.f32 %v5140, 0.05243302
      %v5142 = vmul.f32 %v5135, %v5141
      %v5143 = vadd.f32 %v5142, 0.18741608
      %v5144 = vmul.f32 %v5135, %v5143
      %v5145 = vadd.f32 %v5144, 1.1283791
      %v5146 = vmul.f32 %v5048, %v5145
      %v5147 = vmul.f32 %v5135, 3.8918573e-05
      %v5148 = vadd.f32 %v5147, 0.001143296
      %v5149 = vmul.f32 %v5135, %v5148
      %v5150 = vadd.f32 %v5149, 0.014752088
      %v5151 = vmul.f32 %v5135, %v5150
      %v5152 = vadd.f32 %v5151, 0.112945676
      %v5153 = vmul.f32 %v5135, %v5152
      %v5154 = vadd.f32 %v5153, 0.4994258
      %v5155 = vmul.f32 %v5135, %v5154
      %v5156 = vadd.f32 %v5155, 1.0
      %v5157 = vrcp.pop %v5156
      %v5158 = vmul.f32 %v5156, %v5157
      %v5159 = vsub.f32 1.0, %v5158
      %v5160 = vmul.f32 %v5157, %v5159
      %v5161 = vadd.f32 %v5157, %v5160
      %vm5162 = vweird.f32 %v5156
      %vm5163 = vweird.f32 %v5157
      %vm5164 = vmor %vm5162, %vm5163
      %v5165 = vsel %vm5164, %v5157, %v5161
      %v5166 = vand.u32 2147483647, %v5156
      %vm5167 = vcmp.eq.f32.partialorder %v5166, 8.507059e+37
      %v5168 = vand.u32 %v5156, 2147483648
      %v5169 = vor.u32 1.1754944e-38, %v5168
      %v5170 = vsel %vm5167, %v5169, %v5165
      %v5171 = vmul.f32 %v5146, %v5170
      %v5172 = vmin.f32 %v5171, 1.0
      %v5173 = vmax.f32 %v5172, -1.0
      %v5174 = vmul.f32 %v5049, %v5049
      %v5175 = vmin.f32 16.0, %v5174
      %v5176 = vmul.f32 %v5175, 2.1237322e-06
      %v5177 = vadd.f32 %v5176, 0.00028619796
      %v5178 = vmul.f32 %v5175, %v5177
      %v5179 = vadd.f32 %v5178, 0.0036580483
      %v5180 = vmul.f32 %v5175, %v5179
      %v5181 = vadd.f32 %v5180, 0.05243302
      %v5182 = vmul.f32 %v5175, %v5181
      %v5183 = vadd.f32 %v5182, 0.18741608
      %v5184 = vmul.f32 %v5175, %v5183
      %v5185 = vadd.f32 %v5184, 1.1283791
      %v5186 = vmul.f32 %v5049, %v5185
      %v5187 = vmul.f32 %v5175, 3.8918573e-05
      %v5188 = vadd.f32 %v5187, 0.001143296
      %v5189 = vmul.f32 %v5175, %v5188
      %v5190 = vadd.f32 %v5189, 0.014752088
      %v5191 = vmul.f32 %v5175, %v5190
      %v5192 = vadd.f32 %v5191, 0.112945676
      %v5193 = vmul.f32 %v5175, %v5192
      %v5194 = vadd.f32 %v5193, 0.4994258
      %v5195 = vmul.f32 %v5175, %v5194
      %v5196 = vadd.f32 %v5195, 1.0
      %v5197 = vrcp.pop %v5196
      %v5198 = vmul.f32 %v5196, %v5197
      %v5199 = vsub.f32 1.0, %v5198
      %v5200 = vmul.f32 %v5197, %v5199
      %v5201 = vadd.f32 %v5197, %v5200
      %vm5202 = vweird.f32 %v5196
      %vm5203 = vweird.f32 %v5197
      %vm5204 = vmor %vm5202, %vm5203
      %v5205 = vsel %vm5204, %v5197, %v5201
      %v5206 = vand.u32 2147483647, %v5196
      %vm5207 = vcmp.eq.f32.partialorder %v5206, 8.507059e+37
      %v5208 = vand.u32 %v5196, 2147483648
      %v5209 = vor.u32 1.1754944e-38, %v5208
      %v5210 = vsel %vm5207, %v5209, %v5205
      %v5211 = vmul.f32 %v5186, %v5210
      %v5212 = vmin.f32 %v5211, 1.0
      %v5213 = vmax.f32 %v5212, -1.0
      %v5214 = vmul.f32 %v5050, %v5050
      %v5215 = vmin.f32 16.0, %v5214
      %v5216 = vmul.f32 %v5215, 2.1237322e-06
      %v5217 = vadd.f32 %v5216, 0.00028619796
      %v5218 = vmul.f32 %v5215, %v5217
      %v5219 = vadd.f32 %v5218, 0.0036580483
      %v5220 = vmul.f32 %v5215, %v5219
      %v5221 = vadd.f32 %v5220, 0.05243302
      %v5222 = vmul.f32 %v5215, %v5221
      %v5223 = vadd.f32 %v5222, 0.18741608
      %v5224 = vmul.f32 %v5215, %v5223
      %v5225 = vadd.f32 %v5224, 1.1283791
      %v5226 = vmul.f32 %v5050, %v5225
      %v5227 = vmul.f32 %v5215, 3.8918573e-05
      %v5228 = vadd.f32 %v5227, 0.001143296
      %v5229 = vmul.f32 %v5215, %v5228
      %v5230 = vadd.f32 %v5229, 0.014752088
      %v5231 = vmul.f32 %v5215, %v5230
      %v5232 = vadd.f32 %v5231, 0.112945676
      %v5233 = vmul.f32 %v5215, %v5232
      %v5234 = vadd.f32 %v5233, 0.4994258
      %v5235 = vmul.f32 %v5215, %v5234
      %v5236 = vadd.f32 %v5235, 1.0
      %v5237 = vrcp.pop %v5236
      %v5238 = vmul.f32 %v5236, %v5237
      %v5239 = vsub.f32 1.0, %v5238
      %v5240 = vmul.f32 %v5237, %v5239
      %v5241 = vadd.f32 %v5237, %v5240
      %vm5242 = vweird.f32 %v5236
      %vm5243 = vweird.f32 %v5237
      %vm5244 = vmor %vm5242, %vm5243
      %v5245 = vsel %vm5244, %v5237, %v5241
      %v5246 = vand.u32 2147483647, %v5236
      %vm5247 = vcmp.eq.f32.partialorder %v5246, 8.507059e+37
      %v5248 = vand.u32 %v5236, 2147483648
      %v5249 = vor.u32 1.1754944e-38, %v5248
      %v5250 = vsel %vm5247, %v5249, %v5245
      %v5251 = vmul.f32 %v5226, %v5250
      %v5252 = vmin.f32 %v5251, 1.0
      %v5253 = vmax.f32 %v5252, -1.0
      %v5254 = vmul.f32 %v5051, %v5051
      %v5255 = vmin.f32 16.0, %v5254
      %v5256 = vmul.f32 %v5255, 2.1237322e-06
      %v5257 = vadd.f32 %v5256, 0.00028619796
      %v5258 = vmul.f32 %v5255, %v5257
      %v5259 = vadd.f32 %v5258, 0.0036580483
      %v5260 = vmul.f32 %v5255, %v5259
      %v5261 = vadd.f32 %v5260, 0.05243302
      %v5262 = vmul.f32 %v5255, %v5261
      %v5263 = vadd.f32 %v5262, 0.18741608
      %v5264 = vmul.f32 %v5255, %v5263
      %v5265 = vadd.f32 %v5264, 1.1283791
      %v5266 = vmul.f32 %v5051, %v5265
      %v5267 = vmul.f32 %v5255, 3.8918573e-05
      %v5268 = vadd.f32 %v5267, 0.001143296
      %v5269 = vmul.f32 %v5255, %v5268
      %v5270 = vadd.f32 %v5269, 0.014752088
      %v5271 = vmul.f32 %v5255, %v5270
      %v5272 = vadd.f32 %v5271, 0.112945676
      %v5273 = vmul.f32 %v5255, %v5272
      %v5274 = vadd.f32 %v5273, 0.4994258
      %v5275 = vmul.f32 %v5255, %v5274
      %v5276 = vadd.f32 %v5275, 1.0
      %v5277 = vrcp.pop %v5276
      %v5278 = vmul.f32 %v5276, %v5277
      %v5279 = vsub.f32 1.0, %v5278
      %v5280 = vmul.f32 %v5277, %v5279
      %v5281 = vadd.f32 %v5277, %v5280
      %vm5282 = vweird.f32 %v5276
      %vm5283 = vweird.f32 %v5277
      %vm5284 = vmor %vm5282, %vm5283
      %v5285 = vsel %vm5284, %v5277, %v5281
      %v5286 = vand.u32 2147483647, %v5276
      %vm5287 = vcmp.eq.f32.partialorder %v5286, 8.507059e+37
      %v5288 = vand.u32 %v5276, 2147483648
      %v5289 = vor.u32 1.1754944e-38, %v5288
      %v5290 = vsel %vm5287, %v5289, %v5285
      %v5291 = vmul.f32 %v5266, %v5290
      %v5292 = vmin.f32 %v5291, 1.0
      %v5293 = vmax.f32 %v5292, -1.0
      %v5294 = vmul.f32 %v5052, %v5052
      %v5295 = vmin.f32 16.0, %v5294
      %v5296 = vmul.f32 %v5295, 2.1237322e-06
      %v5297 = vadd.f32 %v5296, 0.00028619796
      %v5298 = vmul.f32 %v5295, %v5297
      %v5299 = vadd.f32 %v5298, 0.0036580483
      %v5300 = vmul.f32 %v5295, %v5299
      %v5301 = vadd.f32 %v5300, 0.05243302
      %v5302 = vmul.f32 %v5295, %v5301
      %v5303 = vadd.f32 %v5302, 0.18741608
      %v5304 = vmul.f32 %v5295, %v5303
      %v5305 = vadd.f32 %v5304, 1.1283791
      %v5306 = vmul.f32 %v5052, %v5305
      %v5307 = vmul.f32 %v5295, 3.8918573e-05
      %v5308 = vadd.f32 %v5307, 0.001143296
      %v5309 = vmul.f32 %v5295, %v5308
      %v5310 = vadd.f32 %v5309, 0.014752088
      %v5311 = vmul.f32 %v5295, %v5310
      %v5312 = vadd.f32 %v5311, 0.112945676
      %v5313 = vmul.f32 %v5295, %v5312
      %v5314 = vadd.f32 %v5313, 0.4994258
      %v5315 = vmul.f32 %v5295, %v5314
      %v5316 = vadd.f32 %v5315, 1.0
      %v5317 = vrcp.pop %v5316
      %v5318 = vmul.f32 %v5316, %v5317
      %v5319 = vsub.f32 1.0, %v5318
      %v5320 = vmul.f32 %v5317, %v5319
      %v5321 = vadd.f32 %v5317, %v5320
      %vm5322 = vweird.f32 %v5316
      %vm5323 = vweird.f32 %v5317
      %vm5324 = vmor %vm5322, %vm5323
      %v5325 = vsel %vm5324, %v5317, %v5321
      %v5326 = vand.u32 2147483647, %v5316
      %vm5327 = vcmp.eq.f32.partialorder %v5326, 8.507059e+37
      %v5328 = vand.u32 %v5316, 2147483648
      %v5329 = vor.u32 1.1754944e-38, %v5328
      %v5330 = vsel %vm5327, %v5329, %v5325
      %v5331 = vmul.f32 %v5306, %v5330
      %v5332 = vmin.f32 %v5331, 1.0
      %v5333 = vmax.f32 %v5332, -1.0
      %v5334 = vmul.f32 %v5053, %v5053
      %v5335 = vmin.f32 16.0, %v5334
      %v5336 = vmul.f32 %v5335, 2.1237322e-06
      %v5337 = vadd.f32 %v5336, 0.00028619796
      %v5338 = vmul.f32 %v5335, %v5337
      %v5339 = vadd.f32 %v5338, 0.0036580483
      %v5340 = vmul.f32 %v5335, %v5339
      %v5341 = vadd.f32 %v5340, 0.05243302
      %v5342 = vmul.f32 %v5335, %v5341
      %v5343 = vadd.f32 %v5342, 0.18741608
      %v5344 = vmul.f32 %v5335, %v5343
      %v5345 = vadd.f32 %v5344, 1.1283791
      %v5346 = vmul.f32 %v5053, %v5345
      %v5347 = vmul.f32 %v5335, 3.8918573e-05
      %v5348 = vadd.f32 %v5347, 0.001143296
      %v5349 = vmul.f32 %v5335, %v5348
      %v5350 = vadd.f32 %v5349, 0.014752088
      %v5351 = vmul.f32 %v5335, %v5350
      %v5352 = vadd.f32 %v5351, 0.112945676
      %v5353 = vmul.f32 %v5335, %v5352
      %v5354 = vadd.f32 %v5353, 0.4994258
      %v5355 = vmul.f32 %v5335, %v5354
      %v5356 = vadd.f32 %v5355, 1.0
      %v5357 = vrcp.pop %v5356
      %v5358 = vmul.f32 %v5356, %v5357
      %v5359 = vsub.f32 1.0, %v5358
      %v5360 = vmul.f32 %v5357, %v5359
      %v5361 = vadd.f32 %v5357, %v5360
      %vm5362 = vweird.f32 %v5356
      %vm5363 = vweird.f32 %v5357
      %vm5364 = vmor %vm5362, %vm5363
      %v5365 = vsel %vm5364, %v5357, %v5361
      %v5366 = vand.u32 2147483647, %v5356
      %vm5367 = vcmp.eq.f32.partialorder %v5366, 8.507059e+37
      %v5368 = vand.u32 %v5356, 2147483648
      %v5369 = vor.u32 1.1754944e-38, %v5368
      %v5370 = vsel %vm5367, %v5369, %v5365
      %v5371 = vmul.f32 %v5346, %v5370
      %v5372 = vmin.f32 %v5371, 1.0
      %v5373 = vmax.f32 %v5372, -1.0
      %v5374 = vadd.f32 %v5093, 1.0
      %v5375 = vadd.f32 %v5133, 1.0
      %v5376 = vadd.f32 %v5173, 1.0
      %v5377 = vadd.f32 %v5213, 1.0
      %v5378 = vadd.f32 %v5253, 1.0
      %v5379 = vadd.f32 %v5293, 1.0
      %v5380 = vadd.f32 %v5333, 1.0
      %v5381 = vadd.f32 %v5373, 1.0
      %v5382 = vmul.f32 %v5038, %v5374
      %v5383 = vmul.f32 %v5039, %v5375
      %v5384 = vmul.f32 %v5040, %v5376
      %v5385 = vmul.f32 %v5041, %v5377
      %v5386 = vmul.f32 %v5042, %v5378
      %v5387 = vmul.f32 %v5043, %v5379
      %v5388 = vmul.f32 %v5044, %v5380
      %v5389 = vmul.f32 %v5045, %v5381
      %v5390 = vld [vmem:[%s7] sm:$0xff]
      %v5391 = vld [vmem:[%s7 + $0x8] sm:$0xff]
      %v5392 = vld [vmem:[%s8] sm:$0x1]
      %v5394 = vperm.slane %v5392, 0
      %v5397 = vsel %vm1330, %v5382, 0
      %v5400 = vsel %vm1330, %v5383, 0
      %v5403 = vsel %vm1330, %v5384, 0
      %v5406 = vsel %vm1330, %v5385, 0
      %v5409 = vsel %vm1330, %v5386, 0
      %v5412 = vsel %vm1330, %v5387, 0
      %v5415 = vsel %vm1330, %v5388, 0
      %v5418 = vsel %vm1330, %v5389, 0
      %5420 = vmatpush.msra.mxu0 0.0
      %5421 = vmatpush.msra.mxu0 0.0
      %5422 = vmatpush.msra.mxu0 0.0
      %5423 = vmatpush.msra.mxu0 0.0
      %5424 = vmatpush.msra.mxu0 0.0
      %5425 = vmatpush.msra.mxu0 0.0
      %5426 = vmatpush.msra.mxu0 0.0
      %5427 = vmatpush.msra.mxu0 0.0
      %5428 = vmatpush.msra.mxu0 0.0
      %5429 = vmatpush.msra.mxu0 0.0
      %5430 = vmatpush.msra.mxu0 0.0
      %5431 = vmatpush.msra.mxu0 0.0
      %5432 = vmatpush.msra.mxu0 0.0
      %5433 = vmatpush.msra.mxu0 0.0
      %5434 = vmatpush.msra.mxu0 %v5391
      %5435 = vmatpush.msra.mxu0 %v5390
      %5436 = vmatmul.f32.gmra.mxu0 %v5397
      %v5437 = vpop.f32.mrf.mxu0
      %v5438 = vadd.f32 %v5394, %v5437
      %5439 = vmatmul.f32.gmra.mxu0 %v5400
      %v5440 = vpop.f32.mrf.mxu0
      %v5441 = vadd.f32 %v5394, %v5440
      %5442 = vmatmul.f32.gmra.mxu0 %v5403
      %v5443 = vpop.f32.mrf.mxu0
      %v5444 = vadd.f32 %v5394, %v5443
      %5445 = vmatmul.f32.gmra.mxu0 %v5406
      %v5446 = vpop.f32.mrf.mxu0
      %v5447 = vadd.f32 %v5394, %v5446
      %5448 = vmatmul.f32.gmra.mxu0 %v5409
      %v5449 = vpop.f32.mrf.mxu0
      %v5450 = vadd.f32 %v5394, %v5449
      %5451 = vmatmul.f32.gmra.mxu0 %v5412
      %v5452 = vpop.f32.mrf.mxu0
      %v5453 = vadd.f32 %v5394, %v5452
      %5454 = vmatmul.f32.gmra.mxu0 %v5415
      %v5455 = vpop.f32.mrf.mxu0
      %v5456 = vadd.f32 %v5394, %v5455
      %5457 = vmatmul.f32.gmra.mxu0 %v5418
      %v5458 = vpop.f32.mrf.mxu0
      %v5459 = vadd.f32 %v5394, %v5458
      %5460 = vdwg.mxu0
      %v5461 = vsel %vm1398, %v5438, 0.0
      %v5462 = vsel %vm1398, %v5441, 0.0
      %v5463 = vsel %vm1398, %v5444, 0.0
      %v5464 = vsel %vm1398, %v5447, 0.0
      %v5465 = vsel %vm1398, %v5450, 0.0
      %v5466 = vsel %vm1398, %v5453, 0.0
      %v5467 = vsel %vm1398, %v5456, 0.0
      %v5468 = vsel %vm1398, %v5459, 0.0
      %s5469 = scalar_lea.vmem %s464, 384
      %5470 = vst.msk [vmem:[%s5469] sm:$0xff] %vm1421, %v5461
      %5471 = vst.msk [vmem:[%s5469 + $0x8] sm:$0xff] %vm1421, %v5462
      %5472 = vst.msk [vmem:[%s5469 + $0x10] sm:$0xff] %vm1421, %v5463
      %5473 = vst.msk [vmem:[%s5469 + $0x18] sm:$0xff] %vm1421, %v5464
      %5474 = vst.msk [vmem:[%s5469 + $0x20] sm:$0xff] %vm1421, %v5465
      %5475 = vst.msk [vmem:[%s5469 + $0x28] sm:$0xff] %vm1421, %v5466
      %5476 = vst.msk [vmem:[%s5469 + $0x30] sm:$0xff] %vm1421, %v5467
      %5477 = vst.msk [vmem:[%s5469 + $0x38] sm:$0xff] %vm1421, %v5468
      %v5478 = vld [vmem:[%s2 + $0xd] sm:$0x1]
      %v5479 = vperm.slane %v5478, 0
      %v5480 = vmul.f32 %v485, %v5479
      %v5481 = vmul.f32 %v486, %v5479
      %v5482 = vmul.f32 %v487, %v5479
      %v5483 = vmul.f32 %v488, %v5479
      %v5484 = vmul.f32 %v489, %v5479
      %v5485 = vmul.f32 %v490, %v5479
      %v5486 = vmul.f32 %v491, %v5479
      %v5487 = vmul.f32 %v492, %v5479
      %v5488 = vmul.f32 %v493, %v5479
      %v5489 = vmul.f32 %v494, %v5479
      %v5490 = vmul.f32 %v495, %v5479
      %v5491 = vmul.f32 %v496, %v5479
      %v5492 = vmul.f32 %v497, %v5479
      %v5493 = vmul.f32 %v498, %v5479
      %v5494 = vmul.f32 %v499, %v5479
      %v5495 = vmul.f32 %v500, %v5479
      %v5496 = vadd.f32 %v5480, 0.0
      %v5497 = vadd.f32 %v5481, 0.0
      %v5498 = vadd.f32 %v5482, 0.0
      %v5499 = vadd.f32 %v5483, 0.0
      %v5500 = vadd.f32 %v5484, 0.0
      %v5501 = vadd.f32 %v5485, 0.0
      %v5502 = vadd.f32 %v5486, 0.0
      %v5503 = vadd.f32 %v5487, 0.0
      %v5504 = vadd.f32 %v5488, 0.0
      %v5505 = vadd.f32 %v5489, 0.0
      %v5506 = vadd.f32 %v5490, 0.0
      %v5507 = vadd.f32 %v5491, 0.0
      %v5508 = vadd.f32 %v5492, 0.0
      %v5509 = vadd.f32 %v5493, 0.0
      %v5510 = vadd.f32 %v5494, 0.0
      %v5511 = vadd.f32 %v5495, 0.0
      %v5512 = vsub.f32 %v5496, %v873
      %v5513 = vsub.f32 %v5497, %v873
      %v5514 = vsub.f32 %v5498, %v873
      %v5515 = vsub.f32 %v5499, %v873
      %v5516 = vsub.f32 %v5500, %v873
      %v5517 = vsub.f32 %v5501, %v873
      %v5518 = vsub.f32 %v5502, %v873
      %v5519 = vsub.f32 %v5503, %v873
      %v5520 = vsub.f32 %v5504, %v873
      %v5521 = vsub.f32 %v5505, %v873
      %v5522 = vsub.f32 %v5506, %v873
      %v5523 = vsub.f32 %v5507, %v873
      %v5524 = vsub.f32 %v5508, %v873
      %v5525 = vsub.f32 %v5509, %v873
      %v5526 = vsub.f32 %v5510, %v873
      %v5527 = vsub.f32 %v5511, %v873
      %v5528 = vmul.f32 %v5512, %v884
      %v5529 = vmul.f32 %v5513, %v884
      %v5530 = vmul.f32 %v5514, %v884
      %v5531 = vmul.f32 %v5515, %v884
      %v5532 = vmul.f32 %v5516, %v884
      %v5533 = vmul.f32 %v5517, %v884
      %v5534 = vmul.f32 %v5518, %v884
      %v5535 = vmul.f32 %v5519, %v884
      %v5536 = vmul.f32 %v5520, %v884
      %v5537 = vmul.f32 %v5521, %v884
      %v5538 = vmul.f32 %v5522, %v884
      %v5539 = vmul.f32 %v5523, %v884
      %v5540 = vmul.f32 %v5524, %v884
      %v5541 = vmul.f32 %v5525, %v884
      %v5542 = vmul.f32 %v5526, %v884
      %v5543 = vmul.f32 %v5527, %v884
      %v5560 = vrot.slane %v5528, 1
      %v5561 = vrot.slane %v5529, 1
      %v5562 = vsel %vm555, %v5560, %v5561
      %v5563 = vrot.slane %v5530, 1
      %v5564 = vrot.slane %v5531, 1
      %v5565 = vsel %vm555, %v5563, %v5564
      %v5566 = vrot.slane %v5532, 1
      %v5567 = vrot.slane %v5533, 1
      %v5568 = vsel %vm555, %v5566, %v5567
      %v5569 = vrot.slane %v5534, 1
      %v5570 = vrot.slane %v5535, 1
      %v5571 = vsel %vm555, %v5569, %v5570
      %v5572 = vrot.slane %v5536, 1
      %v5573 = vrot.slane %v5537, 1
      %v5574 = vsel %vm555, %v5572, %v5573
      %v5575 = vrot.slane %v5538, 1
      %v5576 = vrot.slane %v5539, 1
      %v5577 = vsel %vm555, %v5575, %v5576
      %v5578 = vrot.slane %v5540, 1
      %v5579 = vrot.slane %v5541, 1
      %v5580 = vsel %vm555, %v5578, %v5579
      %v5581 = vrot.slane %v5542, 1
      %v5582 = vrot.slane %v5543, 1
      %v5583 = vsel %vm555, %v5581, %v5582
      %v5584 = vld [vmem:[%s5] sm:$0xff]
      %v5585 = vld [vmem:[%s6] sm:$0x1]
      %v5587 = vperm.slane %v5585, 0
      %v5589 = vsel %vm899, %v5562, 0
      %v5591 = vsel %vm899, %v5565, 0
      %v5593 = vsel %vm899, %v5568, 0
      %v5595 = vsel %vm899, %v5571, 0
      %v5597 = vsel %vm899, %v5574, 0
      %v5599 = vsel %vm899, %v5577, 0
      %v5601 = vsel %vm899, %v5580, 0
      %v5603 = vsel %vm899, %v5583, 0
      %5605 = vmatpush.msra.mxu0 0.0
      %5606 = vmatpush.msra.mxu0 0.0
      %5607 = vmatpush.msra.mxu0 0.0
      %5608 = vmatpush.msra.mxu0 0.0
      %5609 = vmatpush.msra.mxu0 0.0
      %5610 = vmatpush.msra.mxu0 0.0
      %5611 = vmatpush.msra.mxu0 0.0
      %5612 = vmatpush.msra.mxu0 0.0
      %5613 = vmatpush.msra.mxu0 0.0
      %5614 = vmatpush.msra.mxu0 0.0
      %5615 = vmatpush.msra.mxu0 0.0
      %5616 = vmatpush.msra.mxu0 0.0
      %5617 = vmatpush.msra.mxu0 0.0
      %5618 = vmatpush.msra.mxu0 0.0
      %5619 = vmatpush.msra.mxu0 0.0
      %5620 = vmatpush.msra.mxu0 %v5584
      %5621 = vmatmul.f32.gmra.mxu0 %v5589
      %v5622 = vpop.f32.mrf.mxu0
      %v5623 = vadd.f32 %v5587, %v5622
      %5624 = vmatmul.f32.gmra.mxu0 %v5591
      %v5625 = vpop.f32.mrf.mxu0
      %v5626 = vadd.f32 %v5587, %v5625
      %5627 = vmatmul.f32.gmra.mxu0 %v5593
      %v5628 = vpop.f32.mrf.mxu0
      %v5629 = vadd.f32 %v5587, %v5628
      %5630 = vmatmul.f32.gmra.mxu0 %v5595
      %v5631 = vpop.f32.mrf.mxu0
      %v5632 = vadd.f32 %v5587, %v5631
      %5633 = vmatmul.f32.gmra.mxu0 %v5597
      %v5634 = vpop.f32.mrf.mxu0
      %v5635 = vadd.f32 %v5587, %v5634
      %5636 = vmatmul.f32.gmra.mxu0 %v5599
      %v5637 = vpop.f32.mrf.mxu0
      %v5638 = vadd.f32 %v5587, %v5637
      %5639 = vmatmul.f32.gmra.mxu0 %v5601
      %v5640 = vpop.f32.mrf.mxu0
      %v5641 = vadd.f32 %v5587, %v5640
      %5642 = vmatmul.f32.gmra.mxu0 %v5603
      %v5643 = vpop.f32.mrf.mxu0
      %v5644 = vadd.f32 %v5587, %v5643
      %5645 = vdwg.mxu0
      %v5646 = vmul.f32 %v5623, 0.5
      %v5647 = vmul.f32 %v5626, 0.5
      %v5648 = vmul.f32 %v5629, 0.5
      %v5649 = vmul.f32 %v5632, 0.5
      %v5650 = vmul.f32 %v5635, 0.5
      %v5651 = vmul.f32 %v5638, 0.5
      %v5652 = vmul.f32 %v5641, 0.5
      %v5653 = vmul.f32 %v5644, 0.5
      %v5654 = vmul.f32 %v5623, %v979
      %v5655 = vmul.f32 %v5626, %v979
      %v5656 = vmul.f32 %v5629, %v979
      %v5657 = vmul.f32 %v5632, %v979
      %v5658 = vmul.f32 %v5635, %v979
      %v5659 = vmul.f32 %v5638, %v979
      %v5660 = vmul.f32 %v5641, %v979
      %v5661 = vmul.f32 %v5644, %v979
      %v5662 = vmul.f32 %v5654, %v5654
      %v5663 = vmin.f32 16.0, %v5662
      %v5664 = vmul.f32 %v5663, 2.1237322e-06
      %v5665 = vadd.f32 %v5664, 0.00028619796
      %v5666 = vmul.f32 %v5663, %v5665
      %v5667 = vadd.f32 %v5666, 0.0036580483
      %v5668 = vmul.f32 %v5663, %v5667
      %v5669 = vadd.f32 %v5668, 0.05243302
      %v5670 = vmul.f32 %v5663, %v5669
      %v5671 = vadd.f32 %v5670, 0.18741608
      %v5672 = vmul.f32 %v5663, %v5671
      %v5673 = vadd.f32 %v5672, 1.1283791
      %v5674 = vmul.f32 %v5654, %v5673
      %v5675 = vmul.f32 %v5663, 3.8918573e-05
      %v5676 = vadd.f32 %v5675, 0.001143296
      %v5677 = vmul.f32 %v5663, %v5676
      %v5678 = vadd.f32 %v5677, 0.014752088
      %v5679 = vmul.f32 %v5663, %v5678
      %v5680 = vadd.f32 %v5679, 0.112945676
      %v5681 = vmul.f32 %v5663, %v5680
      %v5682 = vadd.f32 %v5681, 0.4994258
      %v5683 = vmul.f32 %v5663, %v5682
      %v5684 = vadd.f32 %v5683, 1.0
      %v5685 = vrcp.pop %v5684
      %v5686 = vmul.f32 %v5684, %v5685
      %v5687 = vsub.f32 1.0, %v5686
      %v5688 = vmul.f32 %v5685, %v5687
      %v5689 = vadd.f32 %v5685, %v5688
      %vm5690 = vweird.f32 %v5684
      %vm5691 = vweird.f32 %v5685
      %vm5692 = vmor %vm5690, %vm5691
      %v5693 = vsel %vm5692, %v5685, %v5689
      %v5694 = vand.u32 2147483647, %v5684
      %vm5695 = vcmp.eq.f32.partialorder %v5694, 8.507059e+37
      %v5696 = vand.u32 %v5684, 2147483648
      %v5697 = vor.u32 1.1754944e-38, %v5696
      %v5698 = vsel %vm5695, %v5697, %v5693
      %v5699 = vmul.f32 %v5674, %v5698
      %v5700 = vmin.f32 %v5699, 1.0
      %v5701 = vmax.f32 %v5700, -1.0
      %v5702 = vmul.f32 %v5655, %v5655
      %v5703 = vmin.f32 16.0, %v5702
      %v5704 = vmul.f32 %v5703, 2.1237322e-06
      %v5705 = vadd.f32 %v5704, 0.00028619796
      %v5706 = vmul.f32 %v5703, %v5705
      %v5707 = vadd.f32 %v5706, 0.0036580483
      %v5708 = vmul.f32 %v5703, %v5707
      %v5709 = vadd.f32 %v5708, 0.05243302
      %v5710 = vmul.f32 %v5703, %v5709
      %v5711 = vadd.f32 %v5710, 0.18741608
      %v5712 = vmul.f32 %v5703, %v5711
      %v5713 = vadd.f32 %v5712, 1.1283791
      %v5714 = vmul.f32 %v5655, %v5713
      %v5715 = vmul.f32 %v5703, 3.8918573e-05
      %v5716 = vadd.f32 %v5715, 0.001143296
      %v5717 = vmul.f32 %v5703, %v5716
      %v5718 = vadd.f32 %v5717, 0.014752088
      %v5719 = vmul.f32 %v5703, %v5718
      %v5720 = vadd.f32 %v5719, 0.112945676
      %v5721 = vmul.f32 %v5703, %v5720
      %v5722 = vadd.f32 %v5721, 0.4994258
      %v5723 = vmul.f32 %v5703, %v5722
      %v5724 = vadd.f32 %v5723, 1.0
      %v5725 = vrcp.pop %v5724
      %v5726 = vmul.f32 %v5724, %v5725
      %v5727 = vsub.f32 1.0, %v5726
      %v5728 = vmul.f32 %v5725, %v5727
      %v5729 = vadd.f32 %v5725, %v5728
      %vm5730 = vweird.f32 %v5724
      %vm5731 = vweird.f32 %v5725
      %vm5732 = vmor %vm5730, %vm5731
      %v5733 = vsel %vm5732, %v5725, %v5729
      %v5734 = vand.u32 2147483647, %v5724
      %vm5735 = vcmp.eq.f32.partialorder %v5734, 8.507059e+37
      %v5736 = vand.u32 %v5724, 2147483648
      %v5737 = vor.u32 1.1754944e-38, %v5736
      %v5738 = vsel %vm5735, %v5737, %v5733
      %v5739 = vmul.f32 %v5714, %v5738
      %v5740 = vmin.f32 %v5739, 1.0
      %v5741 = vmax.f32 %v5740, -1.0
      %v5742 = vmul.f32 %v5656, %v5656
      %v5743 = vmin.f32 16.0, %v5742
      %v5744 = vmul.f32 %v5743, 2.1237322e-06
      %v5745 = vadd.f32 %v5744, 0.00028619796
      %v5746 = vmul.f32 %v5743, %v5745
      %v5747 = vadd.f32 %v5746, 0.0036580483
      %v5748 = vmul.f32 %v5743, %v5747
      %v5749 = vadd.f32 %v5748, 0.05243302
      %v5750 = vmul.f32 %v5743, %v5749
      %v5751 = vadd.f32 %v5750, 0.18741608
      %v5752 = vmul.f32 %v5743, %v5751
      %v5753 = vadd.f32 %v5752, 1.1283791
      %v5754 = vmul.f32 %v5656, %v5753
      %v5755 = vmul.f32 %v5743, 3.8918573e-05
      %v5756 = vadd.f32 %v5755, 0.001143296
      %v5757 = vmul.f32 %v5743, %v5756
      %v5758 = vadd.f32 %v5757, 0.014752088
      %v5759 = vmul.f32 %v5743, %v5758
      %v5760 = vadd.f32 %v5759, 0.112945676
      %v5761 = vmul.f32 %v5743, %v5760
      %v5762 = vadd.f32 %v5761, 0.4994258
      %v5763 = vmul.f32 %v5743, %v5762
      %v5764 = vadd.f32 %v5763, 1.0
      %v5765 = vrcp.pop %v5764
      %v5766 = vmul.f32 %v5764, %v5765
      %v5767 = vsub.f32 1.0, %v5766
      %v5768 = vmul.f32 %v5765, %v5767
      %v5769 = vadd.f32 %v5765, %v5768
      %vm5770 = vweird.f32 %v5764
      %vm5771 = vweird.f32 %v5765
      %vm5772 = vmor %vm5770, %vm5771
      %v5773 = vsel %vm5772, %v5765, %v5769
      %v5774 = vand.u32 2147483647, %v5764
      %vm5775 = vcmp.eq.f32.partialorder %v5774, 8.507059e+37
      %v5776 = vand.u32 %v5764, 2147483648
      %v5777 = vor.u32 1.1754944e-38, %v5776
      %v5778 = vsel %vm5775, %v5777, %v5773
      %v5779 = vmul.f32 %v5754, %v5778
      %v5780 = vmin.f32 %v5779, 1.0
      %v5781 = vmax.f32 %v5780, -1.0
      %v5782 = vmul.f32 %v5657, %v5657
      %v5783 = vmin.f32 16.0, %v5782
      %v5784 = vmul.f32 %v5783, 2.1237322e-06
      %v5785 = vadd.f32 %v5784, 0.00028619796
      %v5786 = vmul.f32 %v5783, %v5785
      %v5787 = vadd.f32 %v5786, 0.0036580483
      %v5788 = vmul.f32 %v5783, %v5787
      %v5789 = vadd.f32 %v5788, 0.05243302
      %v5790 = vmul.f32 %v5783, %v5789
      %v5791 = vadd.f32 %v5790, 0.18741608
      %v5792 = vmul.f32 %v5783, %v5791
      %v5793 = vadd.f32 %v5792, 1.1283791
      %v5794 = vmul.f32 %v5657, %v5793
      %v5795 = vmul.f32 %v5783, 3.8918573e-05
      %v5796 = vadd.f32 %v5795, 0.001143296
      %v5797 = vmul.f32 %v5783, %v5796
      %v5798 = vadd.f32 %v5797, 0.014752088
      %v5799 = vmul.f32 %v5783, %v5798
      %v5800 = vadd.f32 %v5799, 0.112945676
      %v5801 = vmul.f32 %v5783, %v5800
      %v5802 = vadd.f32 %v5801, 0.4994258
      %v5803 = vmul.f32 %v5783, %v5802
      %v5804 = vadd.f32 %v5803, 1.0
      %v5805 = vrcp.pop %v5804
      %v5806 = vmul.f32 %v5804, %v5805
      %v5807 = vsub.f32 1.0, %v5806
      %v5808 = vmul.f32 %v5805, %v5807
      %v5809 = vadd.f32 %v5805, %v5808
      %vm5810 = vweird.f32 %v5804
      %vm5811 = vweird.f32 %v5805
      %vm5812 = vmor %vm5810, %vm5811
      %v5813 = vsel %vm5812, %v5805, %v5809
      %v5814 = vand.u32 2147483647, %v5804
      %vm5815 = vcmp.eq.f32.partialorder %v5814, 8.507059e+37
      %v5816 = vand.u32 %v5804, 2147483648
      %v5817 = vor.u32 1.1754944e-38, %v5816
      %v5818 = vsel %vm5815, %v5817, %v5813
      %v5819 = vmul.f32 %v5794, %v5818
      %v5820 = vmin.f32 %v5819, 1.0
      %v5821 = vmax.f32 %v5820, -1.0
      %v5822 = vmul.f32 %v5658, %v5658
      %v5823 = vmin.f32 16.0, %v5822
      %v5824 = vmul.f32 %v5823, 2.1237322e-06
      %v5825 = vadd.f32 %v5824, 0.00028619796
      %v5826 = vmul.f32 %v5823, %v5825
      %v5827 = vadd.f32 %v5826, 0.0036580483
      %v5828 = vmul.f32 %v5823, %v5827
      %v5829 = vadd.f32 %v5828, 0.05243302
      %v5830 = vmul.f32 %v5823, %v5829
      %v5831 = vadd.f32 %v5830, 0.18741608
      %v5832 = vmul.f32 %v5823, %v5831
      %v5833 = vadd.f32 %v5832, 1.1283791
      %v5834 = vmul.f32 %v5658, %v5833
      %v5835 = vmul.f32 %v5823, 3.8918573e-05
      %v5836 = vadd.f32 %v5835, 0.001143296
      %v5837 = vmul.f32 %v5823, %v5836
      %v5838 = vadd.f32 %v5837, 0.014752088
      %v5839 = vmul.f32 %v5823, %v5838
      %v5840 = vadd.f32 %v5839, 0.112945676
      %v5841 = vmul.f32 %v5823, %v5840
      %v5842 = vadd.f32 %v5841, 0.4994258
      %v5843 = vmul.f32 %v5823, %v5842
      %v5844 = vadd.f32 %v5843, 1.0
      %v5845 = vrcp.pop %v5844
      %v5846 = vmul.f32 %v5844, %v5845
      %v5847 = vsub.f32 1.0, %v5846
      %v5848 = vmul.f32 %v5845, %v5847
      %v5849 = vadd.f32 %v5845, %v5848
      %vm5850 = vweird.f32 %v5844
      %vm5851 = vweird.f32 %v5845
      %vm5852 = vmor %vm5850, %vm5851
      %v5853 = vsel %vm5852, %v5845, %v5849
      %v5854 = vand.u32 2147483647, %v5844
      %vm5855 = vcmp.eq.f32.partialorder %v5854, 8.507059e+37
      %v5856 = vand.u32 %v5844, 2147483648
      %v5857 = vor.u32 1.1754944e-38, %v5856
      %v5858 = vsel %vm5855, %v5857, %v5853
      %v5859 = vmul.f32 %v5834, %v5858
      %v5860 = vmin.f32 %v5859, 1.0
      %v5861 = vmax.f32 %v5860, -1.0
      %v5862 = vmul.f32 %v5659, %v5659
      %v5863 = vmin.f32 16.0, %v5862
      %v5864 = vmul.f32 %v5863, 2.1237322e-06
      %v5865 = vadd.f32 %v5864, 0.00028619796
      %v5866 = vmul.f32 %v5863, %v5865
      %v5867 = vadd.f32 %v5866, 0.0036580483
      %v5868 = vmul.f32 %v5863, %v5867
      %v5869 = vadd.f32 %v5868, 0.05243302
      %v5870 = vmul.f32 %v5863, %v5869
      %v5871 = vadd.f32 %v5870, 0.18741608
      %v5872 = vmul.f32 %v5863, %v5871
      %v5873 = vadd.f32 %v5872, 1.1283791
      %v5874 = vmul.f32 %v5659, %v5873
      %v5875 = vmul.f32 %v5863, 3.8918573e-05
      %v5876 = vadd.f32 %v5875, 0.001143296
      %v5877 = vmul.f32 %v5863, %v5876
      %v5878 = vadd.f32 %v5877, 0.014752088
      %v5879 = vmul.f32 %v5863, %v5878
      %v5880 = vadd.f32 %v5879, 0.112945676
      %v5881 = vmul.f32 %v5863, %v5880
      %v5882 = vadd.f32 %v5881, 0.4994258
      %v5883 = vmul.f32 %v5863, %v5882
      %v5884 = vadd.f32 %v5883, 1.0
      %v5885 = vrcp.pop %v5884
      %v5886 = vmul.f32 %v5884, %v5885
      %v5887 = vsub.f32 1.0, %v5886
      %v5888 = vmul.f32 %v5885, %v5887
      %v5889 = vadd.f32 %v5885, %v5888
      %vm5890 = vweird.f32 %v5884
      %vm5891 = vweird.f32 %v5885
      %vm5892 = vmor %vm5890, %vm5891
      %v5893 = vsel %vm5892, %v5885, %v5889
      %v5894 = vand.u32 2147483647, %v5884
      %vm5895 = vcmp.eq.f32.partialorder %v5894, 8.507059e+37
      %v5896 = vand.u32 %v5884, 2147483648
      %v5897 = vor.u32 1.1754944e-38, %v5896
      %v5898 = vsel %vm5895, %v5897, %v5893
      %v5899 = vmul.f32 %v5874, %v5898
      %v5900 = vmin.f32 %v5899, 1.0
      %v5901 = vmax.f32 %v5900, -1.0
      %v5902 = vmul.f32 %v5660, %v5660
      %v5903 = vmin.f32 16.0, %v5902
      %v5904 = vmul.f32 %v5903, 2.1237322e-06
      %v5905 = vadd.f32 %v5904, 0.00028619796
      %v5906 = vmul.f32 %v5903, %v5905
      %v5907 = vadd.f32 %v5906, 0.0036580483
      %v5908 = vmul.f32 %v5903, %v5907
      %v5909 = vadd.f32 %v5908, 0.05243302
      %v5910 = vmul.f32 %v5903, %v5909
      %v5911 = vadd.f32 %v5910, 0.18741608
      %v5912 = vmul.f32 %v5903, %v5911
      %v5913 = vadd.f32 %v5912, 1.1283791
      %v5914 = vmul.f32 %v5660, %v5913
      %v5915 = vmul.f32 %v5903, 3.8918573e-05
      %v5916 = vadd.f32 %v5915, 0.001143296
      %v5917 = vmul.f32 %v5903, %v5916
      %v5918 = vadd.f32 %v5917, 0.014752088
      %v5919 = vmul.f32 %v5903, %v5918
      %v5920 = vadd.f32 %v5919, 0.112945676
      %v5921 = vmul.f32 %v5903, %v5920
      %v5922 = vadd.f32 %v5921, 0.4994258
      %v5923 = vmul.f32 %v5903, %v5922
      %v5924 = vadd.f32 %v5923, 1.0
      %v5925 = vrcp.pop %v5924
      %v5926 = vmul.f32 %v5924, %v5925
      %v5927 = vsub.f32 1.0, %v5926
      %v5928 = vmul.f32 %v5925, %v5927
      %v5929 = vadd.f32 %v5925, %v5928
      %vm5930 = vweird.f32 %v5924
      %vm5931 = vweird.f32 %v5925
      %vm5932 = vmor %vm5930, %vm5931
      %v5933 = vsel %vm5932, %v5925, %v5929
      %v5934 = vand.u32 2147483647, %v5924
      %vm5935 = vcmp.eq.f32.partialorder %v5934, 8.507059e+37
      %v5936 = vand.u32 %v5924, 2147483648
      %v5937 = vor.u32 1.1754944e-38, %v5936
      %v5938 = vsel %vm5935, %v5937, %v5933
      %v5939 = vmul.f32 %v5914, %v5938
      %v5940 = vmin.f32 %v5939, 1.0
      %v5941 = vmax.f32 %v5940, -1.0
      %v5942 = vmul.f32 %v5661, %v5661
      %v5943 = vmin.f32 16.0, %v5942
      %v5944 = vmul.f32 %v5943, 2.1237322e-06
      %v5945 = vadd.f32 %v5944, 0.00028619796
      %v5946 = vmul.f32 %v5943, %v5945
      %v5947 = vadd.f32 %v5946, 0.0036580483
      %v5948 = vmul.f32 %v5943, %v5947
      %v5949 = vadd.f32 %v5948, 0.05243302
      %v5950 = vmul.f32 %v5943, %v5949
      %v5951 = vadd.f32 %v5950, 0.18741608
      %v5952 = vmul.f32 %v5943, %v5951
      %v5953 = vadd.f32 %v5952, 1.1283791
      %v5954 = vmul.f32 %v5661, %v5953
      %v5955 = vmul.f32 %v5943, 3.8918573e-05
      %v5956 = vadd.f32 %v5955, 0.001143296
      %v5957 = vmul.f32 %v5943, %v5956
      %v5958 = vadd.f32 %v5957, 0.014752088
      %v5959 = vmul.f32 %v5943, %v5958
      %v5960 = vadd.f32 %v5959, 0.112945676
      %v5961 = vmul.f32 %v5943, %v5960
      %v5962 = vadd.f32 %v5961, 0.4994258
      %v5963 = vmul.f32 %v5943, %v5962
      %v5964 = vadd.f32 %v5963, 1.0
      %v5965 = vrcp.pop %v5964
      %v5966 = vmul.f32 %v5964, %v5965
      %v5967 = vsub.f32 1.0, %v5966
      %v5968 = vmul.f32 %v5965, %v5967
      %v5969 = vadd.f32 %v5965, %v5968
      %vm5970 = vweird.f32 %v5964
      %vm5971 = vweird.f32 %v5965
      %vm5972 = vmor %vm5970, %vm5971
      %v5973 = vsel %vm5972, %v5965, %v5969
      %v5974 = vand.u32 2147483647, %v5964
      %vm5975 = vcmp.eq.f32.partialorder %v5974, 8.507059e+37
      %v5976 = vand.u32 %v5964, 2147483648
      %v5977 = vor.u32 1.1754944e-38, %v5976
      %v5978 = vsel %vm5975, %v5977, %v5973
      %v5979 = vmul.f32 %v5954, %v5978
      %v5980 = vmin.f32 %v5979, 1.0
      %v5981 = vmax.f32 %v5980, -1.0
      %v5982 = vadd.f32 %v5701, 1.0
      %v5983 = vadd.f32 %v5741, 1.0
      %v5984 = vadd.f32 %v5781, 1.0
      %v5985 = vadd.f32 %v5821, 1.0
      %v5986 = vadd.f32 %v5861, 1.0
      %v5987 = vadd.f32 %v5901, 1.0
      %v5988 = vadd.f32 %v5941, 1.0
      %v5989 = vadd.f32 %v5981, 1.0
      %v5990 = vmul.f32 %v5646, %v5982
      %v5991 = vmul.f32 %v5647, %v5983
      %v5992 = vmul.f32 %v5648, %v5984
      %v5993 = vmul.f32 %v5649, %v5985
      %v5994 = vmul.f32 %v5650, %v5986
      %v5995 = vmul.f32 %v5651, %v5987
      %v5996 = vmul.f32 %v5652, %v5988
      %v5997 = vmul.f32 %v5653, %v5989
      %v5998 = vld [vmem:[%s7] sm:$0xff]
      %v5999 = vld [vmem:[%s7 + $0x8] sm:$0xff]
      %v6000 = vld [vmem:[%s8] sm:$0x1]
      %v6002 = vperm.slane %v6000, 0
      %v6005 = vsel %vm1330, %v5990, 0
      %v6008 = vsel %vm1330, %v5991, 0
      %v6011 = vsel %vm1330, %v5992, 0
      %v6014 = vsel %vm1330, %v5993, 0
      %v6017 = vsel %vm1330, %v5994, 0
      %v6020 = vsel %vm1330, %v5995, 0
      %v6023 = vsel %vm1330, %v5996, 0
      %v6026 = vsel %vm1330, %v5997, 0
      %6028 = vmatpush.msra.mxu0 0.0
      %6029 = vmatpush.msra.mxu0 0.0
      %6030 = vmatpush.msra.mxu0 0.0
      %6031 = vmatpush.msra.mxu0 0.0
      %6032 = vmatpush.msra.mxu0 0.0
      %6033 = vmatpush.msra.mxu0 0.0
      %6034 = vmatpush.msra.mxu0 0.0
      %6035 = vmatpush.msra.mxu0 0.0
      %6036 = vmatpush.msra.mxu0 0.0
      %6037 = vmatpush.msra.mxu0 0.0
      %6038 = vmatpush.msra.mxu0 0.0
      %6039 = vmatpush.msra.mxu0 0.0
      %6040 = vmatpush.msra.mxu0 0.0
      %6041 = vmatpush.msra.mxu0 0.0
      %6042 = vmatpush.msra.mxu0 %v5999
      %6043 = vmatpush.msra.mxu0 %v5998
      %6044 = vmatmul.f32.gmra.mxu0 %v6005
      %v6045 = vpop.f32.mrf.mxu0
      %v6046 = vadd.f32 %v6002, %v6045
      %6047 = vmatmul.f32.gmra.mxu0 %v6008
      %v6048 = vpop.f32.mrf.mxu0
      %v6049 = vadd.f32 %v6002, %v6048
      %6050 = vmatmul.f32.gmra.mxu0 %v6011
      %v6051 = vpop.f32.mrf.mxu0
      %v6052 = vadd.f32 %v6002, %v6051
      %6053 = vmatmul.f32.gmra.mxu0 %v6014
      %v6054 = vpop.f32.mrf.mxu0
      %v6055 = vadd.f32 %v6002, %v6054
      %6056 = vmatmul.f32.gmra.mxu0 %v6017
      %v6057 = vpop.f32.mrf.mxu0
      %v6058 = vadd.f32 %v6002, %v6057
      %6059 = vmatmul.f32.gmra.mxu0 %v6020
      %v6060 = vpop.f32.mrf.mxu0
      %v6061 = vadd.f32 %v6002, %v6060
      %6062 = vmatmul.f32.gmra.mxu0 %v6023
      %v6063 = vpop.f32.mrf.mxu0
      %v6064 = vadd.f32 %v6002, %v6063
      %6065 = vmatmul.f32.gmra.mxu0 %v6026
      %v6066 = vpop.f32.mrf.mxu0
      %v6067 = vadd.f32 %v6002, %v6066
      %6068 = vdwg.mxu0
      %v6085 = vrot.slane %v485, 1
      %v6086 = vrot.slane %v486, 1
      %v6087 = vsel %vm555, %v6085, %v6086
      %v6088 = vrot.slane %v487, 1
      %v6089 = vrot.slane %v488, 1
      %v6090 = vsel %vm555, %v6088, %v6089
      %v6091 = vrot.slane %v489, 1
      %v6092 = vrot.slane %v490, 1
      %v6093 = vsel %vm555, %v6091, %v6092
      %v6094 = vrot.slane %v491, 1
      %v6095 = vrot.slane %v492, 1
      %v6096 = vsel %vm555, %v6094, %v6095
      %v6097 = vrot.slane %v493, 1
      %v6098 = vrot.slane %v494, 1
      %v6099 = vsel %vm555, %v6097, %v6098
      %v6100 = vrot.slane %v495, 1
      %v6101 = vrot.slane %v496, 1
      %v6102 = vsel %vm555, %v6100, %v6101
      %v6103 = vrot.slane %v497, 1
      %v6104 = vrot.slane %v498, 1
      %v6105 = vsel %vm555, %v6103, %v6104
      %v6106 = vrot.slane %v499, 1
      %v6107 = vrot.slane %v500, 1
      %v6108 = vsel %vm555, %v6106, %v6107
      %v6109 = vld [vmem:[%s9] sm:$0xff]
      %v6110 = vsel %vm899, %v6087, 0
      %v6112 = vsel %vm899, %v6090, 0
      %v6114 = vsel %vm899, %v6093, 0
      %v6116 = vsel %vm899, %v6096, 0
      %v6118 = vsel %vm899, %v6099, 0
      %v6120 = vsel %vm899, %v6102, 0
      %v6122 = vsel %vm899, %v6105, 0
      %v6124 = vsel %vm899, %v6108, 0
      %6126 = vmatpush.msra.mxu0 0.0
      %6127 = vmatpush.msra.mxu0 0.0
      %6128 = vmatpush.msra.mxu0 0.0
      %6129 = vmatpush.msra.mxu0 0.0
      %6130 = vmatpush.msra.mxu0 0.0
      %6131 = vmatpush.msra.mxu0 0.0
      %6132 = vmatpush.msra.mxu0 0.0
      %6133 = vmatpush.msra.mxu0 0.0
      %6134 = vmatpush.msra.mxu0 0.0
      %6135 = vmatpush.msra.mxu0 0.0
      %6136 = vmatpush.msra.mxu0 0.0
      %6137 = vmatpush.msra.mxu0 0.0
      %6138 = vmatpush.msra.mxu0 0.0
      %6139 = vmatpush.msra.mxu0 0.0
      %6140 = vmatpush.msra.mxu0 0.0
      %6141 = vmatpush.msra.mxu0 %v6109
      %6142 = vmatmul.f32.gmra.mxu0 %v6110
      %v6143 = vpop.f32.mrf.mxu0
      %v6144 = vadd.f32 0.0, %v6143
      %6145 = vmatmul.f32.gmra.mxu0 %v6112
      %v6146 = vpop.f32.mrf.mxu0
      %v6147 = vadd.f32 0.0, %v6146
      %6148 = vmatmul.f32.gmra.mxu0 %v6114
      %v6149 = vpop.f32.mrf.mxu0
      %v6150 = vadd.f32 0.0, %v6149
      %6151 = vmatmul.f32.gmra.mxu0 %v6116
      %v6152 = vpop.f32.mrf.mxu0
      %v6153 = vadd.f32 0.0, %v6152
      %6154 = vmatmul.f32.gmra.mxu0 %v6118
      %v6155 = vpop.f32.mrf.mxu0
      %v6156 = vadd.f32 0.0, %v6155
      %6157 = vmatmul.f32.gmra.mxu0 %v6120
      %v6158 = vpop.f32.mrf.mxu0
      %v6159 = vadd.f32 0.0, %v6158
      %6160 = vmatmul.f32.gmra.mxu0 %v6122
      %v6161 = vpop.f32.mrf.mxu0
      %v6162 = vadd.f32 0.0, %v6161
      %6163 = vmatmul.f32.gmra.mxu0 %v6124
      %v6164 = vpop.f32.mrf.mxu0
      %v6165 = vadd.f32 0.0, %v6164
      %6166 = vdwg.mxu0
      %v6167 = vadd.f32 %v6046, %v6144
      %v6168 = vadd.f32 %v6049, %v6147
      %v6169 = vadd.f32 %v6052, %v6150
      %v6170 = vadd.f32 %v6055, %v6153
      %v6171 = vadd.f32 %v6058, %v6156
      %v6172 = vadd.f32 %v6061, %v6159
      %v6173 = vadd.f32 %v6064, %v6162
      %v6174 = vadd.f32 %v6067, %v6165
      %s6175 = scalar_lea.vmem %s464, 448
      %6176 = vst.msk [vmem:[%s6175] sm:$0xff] %vm1421, %v6167
      %6177 = vst.msk [vmem:[%s6175 + $0x8] sm:$0xff] %vm1421, %v6168
      %6178 = vst.msk [vmem:[%s6175 + $0x10] sm:$0xff] %vm1421, %v6169
      %6179 = vst.msk [vmem:[%s6175 + $0x18] sm:$0xff] %vm1421, %v6170
      %6180 = vst.msk [vmem:[%s6175 + $0x20] sm:$0xff] %vm1421, %v6171
      %6181 = vst.msk [vmem:[%s6175 + $0x28] sm:$0xff] %vm1421, %v6172
      %6182 = vst.msk [vmem:[%s6175 + $0x30] sm:$0xff] %vm1421, %v6173
      %6183 = vst.msk [vmem:[%s6175 + $0x38] sm:$0xff] %vm1421, %v6174
      %p6184 = scmp.lt.s32.totalorder %s25, 1
      %s6185 = scalar_select %p6184, %s25, 1
      %p6186 = scmp.lt.s32.totalorder %s26, 7
      %s6187 = scalar_select %p6186, %s26, 7
      %s6188 = smul.addr %s6187, 64
      %s6189 = smul.addr %s6185, 512
      %s6190 = sadd.s32 %s6188, %s6189
      %s6191 = smul.addr %s6190, 8
      %s6192 = scalar_lea.vmem %s10, %s6191
      // Predicated region
      $region61: #{mednext_up_block_forward.3} parent=59 // pred_check
        %p6193 = pneg %p289
      $region62: #{mednext_up_block_forward.3} parent=59 // pred_check_branch
        %6195 = sbr.rel (%p6193) target = $region64
      $region63: #{mednext_up_block_forward.3} parent=59 // pred_region
        _
      $region64: #{mednext_up_block_forward.3} parent=59 // pred_fallthru
        _
    $region60: #{mednext_up_block_forward.3} parent=5 // pred_fallthru
      _
    %p6196 = scmp.le.s32.totalorder 2, %s16
    // Predicated region
    $region65: #{mednext_up_block_forward.3} parent=5 // pred_check
      %p6197 = pneg %p6196
    $region66: #{mednext_up_block_forward.3} parent=5 // pred_check_branch
      %6199 = sbr.rel (%p6197) target = $region68
    $region67: #{mednext_up_block_forward.3} parent=5 // pred_region
      %s6200 = ssub.s32 %s16, 2
      // Predicated region
      $region69: #{mednext_up_block_forward.3} parent=67 // pred_check
        %p6201 = pneg %p295
      $region70: #{mednext_up_block_forward.3} parent=67 // pred_check_branch
        %6203 = sbr.rel (%p6201) target = $region72
      $region71: #{mednext_up_block_forward.3} parent=67 // pred_region
        %p6204 = scmp.lt.s32.totalorder %s27, 1
        %s6205 = scalar_select %p6204, %s27, 1
        %p6206 = scmp.lt.s32.totalorder %s28, 7
        %s6207 = scalar_select %p6206, %s28, 7
        %s6208 = smul.addr %s6207, 64
        %s6209 = smul.addr %s6205, 512
        %s6210 = sadd.s32 %s6208, %s6209
        %s6211 = smul.addr %s6210, 8
        %s6212 = scalar_lea.vmem %s10, %s6211
      $region72: #{mednext_up_block_forward.3} parent=67 // pred_fallthru
        _
    $region68: #{mednext_up_block_forward.3} parent=5 // pred_fallthru
      _
  $region6: #{mednext_up_block_forward.3} parent=0 // loop_footer
    %s20 = sadd.s32 1, %s16
  $region7: #{mednext_up_block_forward.3} parent=0 // loop_footer_branch
    %15 = sbr.rel target = $region3
  $region8: #{mednext_up_block_forward.3} parent=0 // loop_exit
    _

</llo_original>
